<compile_context>
chip_gen: v7x
topology: tpu7x:2x2x1
jax: 0.10.0
libtpu: 0.0.40
codegen_flags: <defaults>
</compile_context>

<pallas_src>
import jax
import jax.numpy as jnp
from jax import lax
from jax.experimental import pallas as pl
from jax.experimental.pallas import tpu as pltpu

BN_EPS = 1e-5    # nn.BatchNorm3d default eps
BN_IEPS = 0.1    # ResidualConvMod default bn_ieps


# ---------------------------------------------------------------------------
# In-kernel helpers
# ---------------------------------------------------------------------------
def _conv9(xp_ref, w_ref, acc_ref, D, H):
    """acc += conv3d(x_padded): 9 (D*H,(W+2)*Ch) @ ((W+2)*Ch, W*Ch) matmuls."""
    WC2 = xp_ref.shape[2]
    for t in range(9):
        kd, kh = t // 3, t % 3
        slab = xp_ref[kd:kd + D, kh:kh + H, :].reshape(D * H, WC2)
        acc_ref[...] += jnp.dot(slab, w_ref[t], preferred_element_type=jnp.float32)


def _rev_core(load_x1, load_x2, wf_ref, wg_ref, out_ref, xp_ref, acc_ref,
              D, H, WC, Ch):
    """y1 = x1 + f(x2); y2 = x2 + g(y1). Writes both halves of out_ref.
    y1 stays resident in VMEM between the f- and g-conv."""
    xp_ref[...] = jnp.zeros_like(xp_ref)                              # zero halo once
    xp_ref[1:D + 1, 1:H + 1, Ch:Ch + WC] = load_x2().reshape(D, H, WC)
    acc_ref[...] = load_x1()
    _conv9(xp_ref, wf_ref, acc_ref, D, H)
    y1 = acc_ref[...]
    out_ref[0, 0] = y1.reshape(D, H, WC).astype(out_ref.dtype)
    xp_ref[1:D + 1, 1:H + 1, Ch:Ch + WC] = y1.reshape(D, H, WC)       # halo still zero
    acc_ref[...] = load_x2()
    _conv9(xp_ref, wg_ref, acc_ref, D, H)
    y2 = acc_ref[...]
    out_ref[0, 1] = y2.reshape(D, H, WC).astype(out_ref.dtype)
    return y1, y2


# ---------------------------------------------------------------------------
# Kernel 1: reversible block 1 fused with BN statistics accumulation
# ---------------------------------------------------------------------------
def _revblock_stats_kernel(x1_ref, x2_ref, wf_ref, wg_ref, out_ref, stats_ref,
                           xp_ref, acc_ref):
    _, D, H, WC = x1_ref.shape
    Ch = (xp_ref.shape[2] - WC) // 2
    load1 = lambda: x1_ref[0].reshape(D * H, WC).astype(jnp.float32)
    load2 = lambda: x2_ref[0].reshape(D * H, WC).astype(jnp.float32)
    y1, y2 = _rev_core(load1, load2, wf_ref, wg_ref, out_ref, xp_ref, acc_ref,
                       D, H, WC, Ch)
    # Per-lane partial stats (rows 0/1: sums of y1/y2, rows 2/3: sums of squares);
    # reduced to per-channel and finalized on a tiny array in the wrapper.
    stats_ref[0] = jnp.concatenate(
        [jnp.sum(y1, axis=0, keepdims=True),
         jnp.sum(y2, axis=0, keepdims=True),
         jnp.sum(y1 * y1, axis=0, keepdims=True),
         jnp.sum(y2 * y2, axis=0, keepdims=True)], axis=0)


# ---------------------------------------------------------------------------
# Kernel 2: BN apply (fused on load) + reversible block 2
# ---------------------------------------------------------------------------
def _bn_revblock_kernel(y_ref, sc_ref, sh_ref, wf_ref, wg_ref, out_ref,
                        xp_ref, acc_ref):
    _, _, D, H, WC = y_ref.shape
    Ch = (xp_ref.shape[2] - WC) // 2
    load1 = lambda: (y_ref[0, 0].reshape(D * H, WC).astype(jnp.float32)
                     * sc_ref[0:1, :] + sh_ref[0:1, :])
    load2 = lambda: (y_ref[0, 1].reshape(D * H, WC).astype(jnp.float32)
                     * sc_ref[1:2, :] + sh_ref[1:2, :])
    _rev_core(load1, load2, wf_ref, wg_ref, out_ref, xp_ref, acc_ref, D, H, WC, Ch)


# ---------------------------------------------------------------------------
# pallas_call wrappers
# ---------------------------------------------------------------------------
def _compiler_params(D, H, WC, WC2, itemsize, n_act_blocks):
    blocks = (n_act_blocks * D * H * WC * itemsize       # activation in/out blocks
              + 2 * 9 * WC2 * WC * 4                     # both weight tensors
              + 4 * WC * 4 + 2 * 2 * WC * 4)             # stats / bn param blocks
    scratch = ((D + 2) * (H + 2) * WC2 + D * H * WC) * 4
    need = 2 * blocks + scratch + (4 << 20)              # double-buffering + headroom
    vmem = int(min(max(need, 32 << 20), 64 << 20))
    return pltpu.CompilerParams(dimension_semantics=("parallel",),
                                vmem_limit_bytes=vmem)


def _cost(N, D, H, WC, WC2, itemsize):
    flops = 2 * 2 * 9 * N * D * H * WC2 * WC             # 2 convs x 9 taps, MACs*2
    bytes_acc = N * 4 * D * H * WC * itemsize + 2 * 9 * WC2 * WC * 4
    return pl.CostEstimate(flops=int(flops), transcendentals=0,
                           bytes_accessed=int(bytes_acc))


def _rev_block_stats(x1, x2, wf_t, wg_t):
    N, D, H, WC = x1.shape
    WC2 = wf_t.shape[1]
    dt = x1.dtype
    itemsize = jnp.dtype(dt).itemsize
    return pl.pallas_call(
        _revblock_stats_kernel,
        out_shape=(jax.ShapeDtypeStruct((N, 2, D, H, WC), dt),
                   jax.ShapeDtypeStruct((N, 4, WC), jnp.float32)),
        grid=(N,),
        in_specs=[
            pl.BlockSpec((1, D, H, WC), lambda n: (n, 0, 0, 0)),
            pl.BlockSpec((1, D, H, WC), lambda n: (n, 0, 0, 0)),
            pl.BlockSpec((9, WC2, WC), lambda n: (0, 0, 0)),
            pl.BlockSpec((9, WC2, WC), lambda n: (0, 0, 0)),
        ],
        out_specs=(
            pl.BlockSpec((1, 2, D, H, WC), lambda n: (n, 0, 0, 0, 0)),
            pl.BlockSpec((1, 4, WC), lambda n: (n, 0, 0)),
        ),
        scratch_shapes=[
            pltpu.VMEM((D + 2, H + 2, WC2), jnp.float32),   # padded conv input
            pltpu.VMEM((D * H, WC), jnp.float32),           # conv accumulator
        ],
        compiler_params=_compiler_params(D, H, WC, WC2, itemsize, n_act_blocks=4),
        cost_estimate=_cost(N, D, H, WC, WC2, itemsize),
    )(x1, x2, wf_t, wg_t)


def _bn_rev_block(y, scale_l, shift_l, wf_t, wg_t):
    N, _, D, H, WC = y.shape
    WC2 = wf_t.shape[1]
    dt = y.dtype
    itemsize = jnp.dtype(dt).itemsize
    return pl.pallas_call(
        _bn_revblock_kernel,
        out_shape=jax.ShapeDtypeStruct((N, 2, D, H, WC), dt),
        grid=(N,),
        in_specs=[
            pl.BlockSpec((1, 2, D, H, WC), lambda n: (n, 0, 0, 0, 0)),
            pl.BlockSpec((2, WC), lambda n: (0, 0)),
            pl.BlockSpec((2, WC), lambda n: (0, 0)),
            pl.BlockSpec((9, WC2, WC), lambda n: (0, 0, 0)),
            pl.BlockSpec((9, WC2, WC), lambda n: (0, 0, 0)),
        ],
        out_specs=pl.BlockSpec((1, 2, D, H, WC), lambda n: (n, 0, 0, 0, 0)),
        scratch_shapes=[
            pltpu.VMEM((D + 2, H + 2, WC2), jnp.float32),
            pltpu.VMEM((D * H, WC), jnp.float32),
        ],
        compiler_params=_compiler_params(D, H, WC, WC2, itemsize, n_act_blocks=4),
        cost_estimate=_cost(N, D, H, WC, WC2, itemsize),
    )(y, scale_l, shift_l, wf_t, wg_t)


# ---------------------------------------------------------------------------
# Weight preprocessing (tiny, one-off; weights only — not on the activation path)
# ---------------------------------------------------------------------------
def _toeplitz_weight(w, W):
    """(3,3,3,Cin,Cout) DHWIO weights -> (9, (W+2)*Cin, W*Cout) block-Toeplitz
    matrices that fold the kw taps and the Cin contraction into one matmul per
    (kd, kh) slab."""
    kD, kH, kW, Cin, Cout = w.shape
    eye = jnp.eye(W, dtype=w.dtype)
    mats = []
    for kd in range(kD):
        for kh in range(kH):
            m = jnp.zeros(((W + kW - 1) * Cin, W * Cout), w.dtype)
            for kw in range(kW):
                m = m.at[kw * Cin:kw * Cin + W * Cin, :].add(jnp.kron(eye, w[kd, kh, kw]))
            mats.append(m)
    return jnp.stack(mats, axis=0)


# ---------------------------------------------------------------------------
# ResidualConvMod forward (nlayer=3): conv_rev -> bn -> conv_rev
# ---------------------------------------------------------------------------
def residual_conv_mod(x_ncdhw, params):
    N, C, D, H, W = x_ncdhw.shape
    Ch = C // 2
    WC = W * Ch

    # NCDHW -> lane-dense per-half slabs (N, D, H, W*Ch).  Boundary transform only.
    def to_slab(xh):
        return jnp.transpose(xh, (0, 2, 3, 4, 1)).reshape(N, D, H, WC)

    x1 = to_slab(x_ncdhw[:, :Ch])
    x2 = to_slab(x_ncdhw[:, Ch:])

    wf1 = _toeplitz_weight(params["conv1_f"], W)
    wg1 = _toeplitz_weight(params["conv1_g"], W)
    wf2 = _toeplitz_weight(params["conv2_f"], W)
    wg2 = _toeplitz_weight(params["conv2_g"], W)

    # Block 1 (fused rev block + BN stat partials).
    y, stats = _rev_block_stats(x1, x2, wf1, wg1)

    # Finalize BN scale/shift from the tiny (N, 4, W*Ch) partials.
    s = jnp.sum(stats, axis=0).reshape(4, W, Ch).sum(axis=1)      # (4, Ch)
    count = N * D * H * W
    mean = jnp.concatenate([s[0], s[1]]) / count                  # (C,) channel order: y1,y2
    msq = jnp.concatenate([s[2], s[3]]) / count
    var = msq - mean * mean                                       # biased batch variance
    g = jnp.abs(params["bn_gamma"]) + BN_IEPS
    scale_c = g * lax.rsqrt(var + BN_EPS)
    shift_c = params["bn_beta"] - mean * scale_c
    scale_l = jnp.stack([jnp.tile(scale_c[:Ch], W),
                         jnp.tile(scale_c[Ch:], W)]).astype(jnp.float32)   # (2, W*Ch)
    shift_l = jnp.stack([jnp.tile(shift_c[:Ch], W),
                         jnp.tile(shift_c[Ch:], W)]).astype(jnp.float32)

    # activation=None is dropped by flatten.
    # Block 2 (BN applied on load + fused rev block).
    z = _bn_rev_block(y, scale_l, shift_l, wf2, wg2)

    # (N, 2, D, H, W*Ch) -> NCDHW.  Boundary transform only.
    z = z.reshape(N, 2, D, H, W, Ch)
    return jnp.transpose(z, (0, 1, 5, 2, 3, 4)).reshape(N, C, D, H, W)


# ---------------------------------------------------------------------------
# Pure-JAX reference for validation
# ---------------------------------------------------------------------------
def _conv3d_ref(x, w):
    return lax.conv_general_dilated(
        x, w, window_strides=(1, 1, 1), padding=((1, 1), (1, 1), (1, 1)),
        dimension_numbers=("NDHWC", "DHWIO", "NDHWC"))


def _rev_block_ref(x, wf, wg):
    c = x.shape[-1] // 2
    x1, x2 = x[..., :c], x[..., c:]
    y1 = x1 + _conv3d_ref(x2, wf)
    y2 = x2 + _conv3d_ref(y1, wg)
    return jnp.concatenate([y1, y2], axis=-1)


def _bn_ref(x, gamma, beta):
    mean = jnp.mean(x, axis=(0, 1, 2, 3), keepdims=True)
    var = jnp.mean(jnp.square(x - mean), axis=(0, 1, 2, 3), keepdims=True)
    scale = jnp.abs(gamma) + BN_IEPS
    return (x - mean) / jnp.sqrt(var + BN_EPS) * scale + beta


def residual_conv_mod_ref(x_ncdhw, params):
    x = jnp.transpose(x_ncdhw, (0, 2, 3, 4, 1))
    x = _rev_block_ref(x, params["conv1_f"], params["conv1_g"])
    x = _bn_ref(x, params["bn_gamma"], params["bn_beta"])
    x = _rev_block_ref(x, params["conv2_f"], params["conv2_g"])
    return jnp.transpose(x, (0, 4, 1, 2, 3))


if __name__ == "__main__":
    N, C, D, H, W = 2, 8, 8, 8, 8          # NCDHW, channels must be even for RevBlock
    Ch = C // 2

    keys = jax.random.split(jax.random.PRNGKey(0), 7)
    x = jax.random.normal(keys[0], (N, C, D, H, W), jnp.float32)
    params = {
        "conv1_f": 0.1 * jax.random.normal(keys[1], (3, 3, 3, Ch, Ch), jnp.float32),
        "conv1_g": 0.1 * jax.random.normal(keys[2], (3, 3, 3, Ch, Ch), jnp.float32),
        "bn_gamma": jax.random.normal(keys[3], (C,), jnp.float32),
        "bn_beta": jax.random.normal(keys[4], (C,), jnp.float32),
        "conv2_f": 0.1 * jax.random.normal(keys[5], (3, 3, 3, Ch, Ch), jnp.float32),
        "conv2_g": 0.1 * jax.random.normal(keys[6], (3, 3, 3, Ch, Ch), jnp.float32),
    }

    out = jax.block_until_ready(jax.jit(residual_conv_mod)(x, params))
    ref = jax.block_until_ready(residual_conv_mod_ref(x, params))

    assert out.shape == (N, C, D, H, W), out.shape
    if not bool(jnp.allclose(out, ref, atol=2e-2, rtol=2e-2)):
        raise AssertionError(f"mismatch, max abs err={float(jnp.max(jnp.abs(out - ref)))}")

    print("KERNEL_OK")
</pallas_src>

<mosaic_0001>
module attributes {stable_mosaic.version = 11 : i64} {
  func.func @_revblock_stats_kernel(%arg0: i32, %arg1: memref<1x8x8x32xf32, #tpu.memory_space<vmem>>, %arg2: memref<1x8x8x32xf32, #tpu.memory_space<vmem>>, %arg3: memref<9x40x32xf32, #tpu.memory_space<vmem>>, %arg4: memref<9x40x32xf32, #tpu.memory_space<vmem>>, %arg5: memref<1x2x8x8x32xf32, #tpu.memory_space<vmem>>, %arg6: memref<1x4x32xf32, #tpu.memory_space<vmem>>, %arg7: memref<10x10x40xf32, #tpu.memory_space<vmem>>, %arg8: memref<64x32xf32, #tpu.memory_space<vmem>>) attributes {dimension_semantics = [#tpu.dimension_semantics<parallel>], iteration_bounds = array<i64: 2>, scalar_prefetch = 0 : i64, scratch_operands = 2 : i64, tpu.core_type = #tpu.core_type<tc>, window_params = [{transform_indices = @transform_0, window_bounds = array<i64: 1, 8, 8, 32>}, {transform_indices = @transform_1, window_bounds = array<i64: 1, 8, 8, 32>}, {pipeline_mode = #tpu.pipeline_mode<synchronous>, transform_indices = @transform_2, window_bounds = array<i64: 9, 40, 32>}, {pipeline_mode = #tpu.pipeline_mode<synchronous>, transform_indices = @transform_3, window_bounds = array<i64: 9, 40, 32>}, {transform_indices = @transform_4, window_bounds = array<i64: 1, 2, 8, 8, 32>}, {transform_indices = @transform_5, window_bounds = array<i64: 1, 4, 32>}]} {
    %cst = arith.constant 0.000000e+00 : f32
    %0 = vector.broadcast %cst : f32 to vector<10x10x40xf32>
    %c0 = arith.constant 0 : index
    %c0_0 = arith.constant 0 : index
    %c0_1 = arith.constant 0 : index
    %1 = vector.load %arg7[%c0, %c0_0, %c0_1] : memref<10x10x40xf32, #tpu.memory_space<vmem>>, vector<10x10x40xf32>
    tpu.vector_store %arg7[%c0, %c0_0, %c0_1], %0 {strides = array<i32>} : memref<10x10x40xf32, #tpu.memory_space<vmem>>, vector<10x10x40xf32>,
    %c0_2 = arith.constant 0 : index
    %c0_3 = arith.constant 0 : index
    %c0_4 = arith.constant 0 : index
    %c0_5 = arith.constant 0 : index
    %2 = vector.load %arg2[%c0_2, %c0_3, %c0_4, %c0_5] : memref<1x8x8x32xf32, #tpu.memory_space<vmem>>, vector<1x8x8x32xf32>
    %3 = vector.shape_cast %2 : vector<1x8x8x32xf32> to vector<8x8x32xf32>
    %4 = vector.shape_cast %3 : vector<8x8x32xf32> to vector<64x32xf32>
    %5 = vector.shape_cast %4 : vector<64x32xf32> to vector<8x8x32xf32>
    %c1 = arith.constant 1 : index
    %c1_6 = arith.constant 1 : index
    %c4 = arith.constant 4 : index
    %6 = vector.load %arg7[%c1, %c1_6, %c4] : memref<10x10x40xf32, #tpu.memory_space<vmem>>, vector<8x8x32xf32>
    tpu.vector_store %arg7[%c1, %c1_6, %c4], %5 {strides = array<i32>} : memref<10x10x40xf32, #tpu.memory_space<vmem>>, vector<8x8x32xf32>,
    %c0_7 = arith.constant 0 : index
    %c0_8 = arith.constant 0 : index
    %c0_9 = arith.constant 0 : index
    %c0_10 = arith.constant 0 : index
    %7 = vector.load %arg1[%c0_7, %c0_8, %c0_9, %c0_10] : memref<1x8x8x32xf32, #tpu.memory_space<vmem>>, vector<1x8x8x32xf32>
    %8 = vector.shape_cast %7 : vector<1x8x8x32xf32> to vector<8x8x32xf32>
    %9 = vector.shape_cast %8 : vector<8x8x32xf32> to vector<64x32xf32>
    %c0_11 = arith.constant 0 : index
    %c0_12 = arith.constant 0 : index
    %10 = vector.load %arg8[%c0_11, %c0_12] : memref<64x32xf32, #tpu.memory_space<vmem>>, vector<64x32xf32>
    tpu.vector_store %arg8[%c0_11, %c0_12], %9 {strides = array<i32>} : memref<64x32xf32, #tpu.memory_space<vmem>>, vector<64x32xf32>,
    %c0_13 = arith.constant 0 : index
    %c0_14 = arith.constant 0 : index
    %c0_15 = arith.constant 0 : index
    %11 = vector.load %arg7[%c0_13, %c0_14, %c0_15] : memref<10x10x40xf32, #tpu.memory_space<vmem>>, vector<8x8x40xf32>
    %12 = vector.shape_cast %11 : vector<8x8x40xf32> to vector<64x40xf32>
    %c0_16 = arith.constant 0 : index
    %c0_17 = arith.constant 0 : index
    %13 = vector.load %arg8[%c0_16, %c0_17] : memref<64x32xf32, #tpu.memory_space<vmem>>, vector<64x32xf32>
    %c0_18 = arith.constant 0 : index
    %c0_19 = arith.constant 0 : index
    %c0_20 = arith.constant 0 : index
    %14 = vector.load %arg3[%c0_18, %c0_19, %c0_20] : memref<9x40x32xf32, #tpu.memory_space<vmem>>, vector<1x40x32xf32>
    %15 = vector.shape_cast %14 : vector<1x40x32xf32> to vector<40x32xf32>
    %cst_21 = arith.constant dense<0.000000e+00> : vector<64x32xf32>
    %16 = tpu.matmul %12, %15, %cst_21 {dimension_numbers = #tpu.dot_dimension_numbers<[1], [0], [0], [1], [0, 0, 1, 1], [], []>} : vector<64x40xf32>, vector<40x32xf32>, vector<64x32xf32> -> vector<64x32xf32>
    %17 = arith.addf %13, %16 : vector<64x32xf32>
    %c0_22 = arith.constant 0 : index
    %c0_23 = arith.constant 0 : index
    %18 = vector.load %arg8[%c0_22, %c0_23] : memref<64x32xf32, #tpu.memory_space<vmem>>, vector<64x32xf32>
    tpu.vector_store %arg8[%c0_22, %c0_23], %17 {strides = array<i32>} : memref<64x32xf32, #tpu.memory_space<vmem>>, vector<64x32xf32>,
    %c0_24 = arith.constant 0 : index
    %c1_25 = arith.constant 1 : index
    %c0_26 = arith.constant 0 : index
    %19 = vector.load %arg7[%c0_24, %c1_25, %c0_26] : memref<10x10x40xf32, #tpu.memory_space<vmem>>, vector<8x8x40xf32>
    %20 = vector.shape_cast %19 : vector<8x8x40xf32> to vector<64x40xf32>
    %c0_27 = arith.constant 0 : index
    %c0_28 = arith.constant 0 : index
    %21 = vector.load %arg8[%c0_27, %c0_28] : memref<64x32xf32, #tpu.memory_space<vmem>>, vector<64x32xf32>
    %c1_29 = arith.constant 1 : index
    %c0_30 = arith.constant 0 : index
    %c0_31 = arith.constant 0 : index
    %22 = vector.load %arg3[%c1_29, %c0_30, %c0_31] : memref<9x40x32xf32, #tpu.memory_space<vmem>>, vector<1x40x32xf32>
    %23 = vector.shape_cast %22 : vector<1x40x32xf32> to vector<40x32xf32>
    %cst_32 = arith.constant dense<0.000000e+00> : vector<64x32xf32>
    %24 = tpu.matmul %20, %23, %cst_32 {dimension_numbers = #tpu.dot_dimension_numbers<[1], [0], [0], [1], [0, 0, 1, 1], [], []>} : vector<64x40xf32>, vector<40x32xf32>, vector<64x32xf32> -> vector<64x32xf32>
    %25 = arith.addf %21, %24 : vector<64x32xf32>
    %c0_33 = arith.constant 0 : index
    %c0_34 = arith.constant 0 : index
    %26 = vector.load %arg8[%c0_33, %c0_34] : memref<64x32xf32, #tpu.memory_space<vmem>>, vector<64x32xf32>
    tpu.vector_store %arg8[%c0_33, %c0_34], %25 {strides = array<i32>} : memref<64x32xf32, #tpu.memory_space<vmem>>, vector<64x32xf32>,
    %c0_35 = arith.constant 0 : index
    %c2 = arith.constant 2 : index
    %c0_36 = arith.constant 0 : index
    %27 = vector.load %arg7[%c0_35, %c2, %c0_36] : memref<10x10x40xf32, #tpu.memory_space<vmem>>, vector<8x8x40xf32>
    %28 = vector.shape_cast %27 : vector<8x8x40xf32> to vector<64x40xf32>
    %c0_37 = arith.constant 0 : index
    %c0_38 = arith.constant 0 : index
    %29 = vector.load %arg8[%c0_37, %c0_38] : memref<64x32xf32, #tpu.memory_space<vmem>>, vector<64x32xf32>
    %c2_39 = arith.constant 2 : index
    %c0_40 = arith.constant 0 : index
    %c0_41 = arith.constant 0 : index
    %30 = vector.load %arg3[%c2_39, %c0_40, %c0_41] : memref<9x40x32xf32, #tpu.memory_space<vmem>>, vector<1x40x32xf32>
    %31 = vector.shape_cast %30 : vector<1x40x32xf32> to vector<40x32xf32>
    %cst_42 = arith.constant dense<0.000000e+00> : vector<64x32xf32>
    %32 = tpu.matmul %28, %31, %cst_42 {dimension_numbers = #tpu.dot_dimension_numbers<[1], [0], [0], [1], [0, 0, 1, 1], [], []>} : vector<64x40xf32>, vector<40x32xf32>, vector<64x32xf32> -> vector<64x32xf32>
    %33 = arith.addf %29, %32 : vector<64x32xf32>
    %c0_43 = arith.constant 0 : index
    %c0_44 = arith.constant 0 : index
    %34 = vector.load %arg8[%c0_43, %c0_44] : memref<64x32xf32, #tpu.memory_space<vmem>>, vector<64x32xf32>
    tpu.vector_store %arg8[%c0_43, %c0_44], %33 {strides = array<i32>} : memref<64x32xf32, #tpu.memory_space<vmem>>, vector<64x32xf32>,
    %c1_45 = arith.constant 1 : index
    %c0_46 = arith.constant 0 : index
    %c0_47 = arith.constant 0 : index
    %35 = vector.load %arg7[%c1_45, %c0_46, %c0_47] : memref<10x10x40xf32, #tpu.memory_space<vmem>>, vector<8x8x40xf32>
    %36 = vector.shape_cast %35 : vector<8x8x40xf32> to vector<64x40xf32>
    %c0_48 = arith.constant 0 : index
    %c0_49 = arith.constant 0 : index
    %37 = vector.load %arg8[%c0_48, %c0_49] : memref<64x32xf32, #tpu.memory_space<vmem>>, vector<64x32xf32>
    %c3 = arith.constant 3 : index
    %c0_50 = arith.constant 0 : index
    %c0_51 = arith.constant 0 : index
    %38 = vector.load %arg3[%c3, %c0_50, %c0_51] : memref<9x40x32xf32, #tpu.memory_space<vmem>>, vector<1x40x32xf32>
    %39 = vector.shape_cast %38 : vector<1x40x32xf32> to vector<40x32xf32>
    %cst_52 = arith.constant dense<0.000000e+00> : vector<64x32xf32>
    %40 = tpu.matmul %36, %39, %cst_52 {dimension_numbers = #tpu.dot_dimension_numbers<[1], [0], [0], [1], [0, 0, 1, 1], [], []>} : vector<64x40xf32>, vector<40x32xf32>, vector<64x32xf32> -> vector<64x32xf32>
    %41 = arith.addf %37, %40 : vector<64x32xf32>
    %c0_53 = arith.constant 0 : index
    %c0_54 = arith.constant 0 : index
    %42 = vector.load %arg8[%c0_53, %c0_54] : memref<64x32xf32, #tpu.memory_space<vmem>>, vector<64x32xf32>
    tpu.vector_store %arg8[%c0_53, %c0_54], %41 {strides = array<i32>} : memref<64x32xf32, #tpu.memory_space<vmem>>, vector<64x32xf32>,
    %c1_55 = arith.constant 1 : index
    %c1_56 = arith.constant 1 : index
    %c0_57 = arith.constant 0 : index
    %43 = vector.load %arg7[%c1_55, %c1_56, %c0_57] : memref<10x10x40xf32, #tpu.memory_space<vmem>>, vector<8x8x40xf32>
    %44 = vector.shape_cast %43 : vector<8x8x40xf32> to vector<64x40xf32>
    %c0_58 = arith.constant 0 : index
    %c0_59 = arith.constant 0 : index
    %45 = vector.load %arg8[%c0_58, %c0_59] : memref<64x32xf32, #tpu.memory_space<vmem>>, vector<64x32xf32>
    %c4_60 = arith.constant 4 : index
    %c0_61 = arith.constant 0 : index
    %c0_62 = arith.constant 0 : index
    %46 = vector.load %arg3[%c4_60, %c0_61, %c0_62] : memref<9x40x32xf32, #tpu.memory_space<vmem>>, vector<1x40x32xf32>
    %47 = vector.shape_cast %46 : vector<1x40x32xf32> to vector<40x32xf32>
    %cst_63 = arith.constant dense<0.000000e+00> : vector<64x32xf32>
    %48 = tpu.matmul %44, %47, %cst_63 {dimension_numbers = #tpu.dot_dimension_numbers<[1], [0], [0], [1], [0, 0, 1, 1], [], []>} : vector<64x40xf32>, vector<40x32xf32>, vector<64x32xf32> -> vector<64x32xf32>
    %49 = arith.addf %45, %48 : vector<64x32xf32>
    %c0_64 = arith.constant 0 : index
    %c0_65 = arith.constant 0 : index
    %50 = vector.load %arg8[%c0_64, %c0_65] : memref<64x32xf32, #tpu.memory_space<vmem>>, vector<64x32xf32>
    tpu.vector_store %arg8[%c0_64, %c0_65], %49 {strides = array<i32>} : memref<64x32xf32, #tpu.memory_space<vmem>>, vector<64x32xf32>,
    %c1_66 = arith.constant 1 : index
    %c2_67 = arith.constant 2 : index
    %c0_68 = arith.constant 0 : index
    %51 = vector.load %arg7[%c1_66, %c2_67, %c0_68] : memref<10x10x40xf32, #tpu.memory_space<vmem>>, vector<8x8x40xf32>
    %52 = vector.shape_cast %51 : vector<8x8x40xf32> to vector<64x40xf32>
    %c0_69 = arith.constant 0 : index
    %c0_70 = arith.constant 0 : index
    %53 = vector.load %arg8[%c0_69, %c0_70] : memref<64x32xf32, #tpu.memory_space<vmem>>, vector<64x32xf32>
    %c5 = arith.constant 5 : index
    %c0_71 = arith.constant 0 : index
    %c0_72 = arith.constant 0 : index
    %54 = vector.load %arg3[%c5, %c0_71, %c0_72] : memref<9x40x32xf32, #tpu.memory_space<vmem>>, vector<1x40x32xf32>
    %55 = vector.shape_cast %54 : vector<1x40x32xf32> to vector<40x32xf32>
    %cst_73 = arith.constant dense<0.000000e+00> : vector<64x32xf32>
    %56 = tpu.matmul %52, %55, %cst_73 {dimension_numbers = #tpu.dot_dimension_numbers<[1], [0], [0], [1], [0, 0, 1, 1], [], []>} : vector<64x40xf32>, vector<40x32xf32>, vector<64x32xf32> -> vector<64x32xf32>
    %57 = arith.addf %53, %56 : vector<64x32xf32>
    %c0_74 = arith.constant 0 : index
    %c0_75 = arith.constant 0 : index
    %58 = vector.load %arg8[%c0_74, %c0_75] : memref<64x32xf32, #tpu.memory_space<vmem>>, vector<64x32xf32>
    tpu.vector_store %arg8[%c0_74, %c0_75], %57 {strides = array<i32>} : memref<64x32xf32, #tpu.memory_space<vmem>>, vector<64x32xf32>,
    %c2_76 = arith.constant 2 : index
    %c0_77 = arith.constant 0 : index
    %c0_78 = arith.constant 0 : index
    %59 = vector.load %arg7[%c2_76, %c0_77, %c0_78] : memref<10x10x40xf32, #tpu.memory_space<vmem>>, vector<8x8x40xf32>
    %60 = vector.shape_cast %59 : vector<8x8x40xf32> to vector<64x40xf32>
    %c0_79 = arith.constant 0 : index
    %c0_80 = arith.constant 0 : index
    %61 = vector.load %arg8[%c0_79, %c0_80] : memref<64x32xf32, #tpu.memory_space<vmem>>, vector<64x32xf32>
    %c6 = arith.constant 6 : index
    %c0_81 = arith.constant 0 : index
    %c0_82 = arith.constant 0 : index
    %62 = vector.load %arg3[%c6, %c0_81, %c0_82] : memref<9x40x32xf32, #tpu.memory_space<vmem>>, vector<1x40x32xf32>
    %63 = vector.shape_cast %62 : vector<1x40x32xf32> to vector<40x32xf32>
    %cst_83 = arith.constant dense<0.000000e+00> : vector<64x32xf32>
    %64 = tpu.matmul %60, %63, %cst_83 {dimension_numbers = #tpu.dot_dimension_numbers<[1], [0], [0], [1], [0, 0, 1, 1], [], []>} : vector<64x40xf32>, vector<40x32xf32>, vector<64x32xf32> -> vector<64x32xf32>
    %65 = arith.addf %61, %64 : vector<64x32xf32>
    %c0_84 = arith.constant 0 : index
    %c0_85 = arith.constant 0 : index
    %66 = vector.load %arg8[%c0_84, %c0_85] : memref<64x32xf32, #tpu.memory_space<vmem>>, vector<64x32xf32>
    tpu.vector_store %arg8[%c0_84, %c0_85], %65 {strides = array<i32>} : memref<64x32xf32, #tpu.memory_space<vmem>>, vector<64x32xf32>,
    %c2_86 = arith.constant 2 : index
    %c1_87 = arith.constant 1 : index
    %c0_88 = arith.constant 0 : index
    %67 = vector.load %arg7[%c2_86, %c1_87, %c0_88] : memref<10x10x40xf32, #tpu.memory_space<vmem>>, vector<8x8x40xf32>
    %68 = vector.shape_cast %67 : vector<8x8x40xf32> to vector<64x40xf32>
    %c0_89 = arith.constant 0 : index
    %c0_90 = arith.constant 0 : index
    %69 = vector.load %arg8[%c0_89, %c0_90] : memref<64x32xf32, #tpu.memory_space<vmem>>, vector<64x32xf32>
    %c7 = arith.constant 7 : index
    %c0_91 = arith.constant 0 : index
    %c0_92 = arith.constant 0 : index
    %70 = vector.load %arg3[%c7, %c0_91, %c0_92] : memref<9x40x32xf32, #tpu.memory_space<vmem>>, vector<1x40x32xf32>
    %71 = vector.shape_cast %70 : vector<1x40x32xf32> to vector<40x32xf32>
    %cst_93 = arith.constant dense<0.000000e+00> : vector<64x32xf32>
    %72 = tpu.matmul %68, %71, %cst_93 {dimension_numbers = #tpu.dot_dimension_numbers<[1], [0], [0], [1], [0, 0, 1, 1], [], []>} : vector<64x40xf32>, vector<40x32xf32>, vector<64x32xf32> -> vector<64x32xf32>
    %73 = arith.addf %69, %72 : vector<64x32xf32>
    %c0_94 = arith.constant 0 : index
    %c0_95 = arith.constant 0 : index
    %74 = vector.load %arg8[%c0_94, %c0_95] : memref<64x32xf32, #tpu.memory_space<vmem>>, vector<64x32xf32>
    tpu.vector_store %arg8[%c0_94, %c0_95], %73 {strides = array<i32>} : memref<64x32xf32, #tpu.memory_space<vmem>>, vector<64x32xf32>,
    %c2_96 = arith.constant 2 : index
    %c2_97 = arith.constant 2 : index
    %c0_98 = arith.constant 0 : index
    %75 = vector.load %arg7[%c2_96, %c2_97, %c0_98] : memref<10x10x40xf32, #tpu.memory_space<vmem>>, vector<8x8x40xf32>
    %76 = vector.shape_cast %75 : vector<8x8x40xf32> to vector<64x40xf32>
    %c0_99 = arith.constant 0 : index
    %c0_100 = arith.constant 0 : index
    %77 = vector.load %arg8[%c0_99, %c0_100] : memref<64x32xf32, #tpu.memory_space<vmem>>, vector<64x32xf32>
    %c8 = arith.constant 8 : index
    %c0_101 = arith.constant 0 : index
    %c0_102 = arith.constant 0 : index
    %78 = vector.load %arg3[%c8, %c0_101, %c0_102] : memref<9x40x32xf32, #tpu.memory_space<vmem>>, vector<1x40x32xf32>
    %79 = vector.shape_cast %78 : vector<1x40x32xf32> to vector<40x32xf32>
    %cst_103 = arith.constant dense<0.000000e+00> : vector<64x32xf32>
    %80 = tpu.matmul %76, %79, %cst_103 {dimension_numbers = #tpu.dot_dimension_numbers<[1], [0], [0], [1], [0, 0, 1, 1], [], []>} : vector<64x40xf32>, vector<40x32xf32>, vector<64x32xf32> -> vector<64x32xf32>
    %81 = arith.addf %77, %80 : vector<64x32xf32>
    %c0_104 = arith.constant 0 : index
    %c0_105 = arith.constant 0 : index
    %82 = vector.load %arg8[%c0_104, %c0_105] : memref<64x32xf32, #tpu.memory_space<vmem>>, vector<64x32xf32>
    tpu.vector_store %arg8[%c0_104, %c0_105], %81 {strides = array<i32>} : memref<64x32xf32, #tpu.memory_space<vmem>>, vector<64x32xf32>,
    %c0_106 = arith.constant 0 : index
    %c0_107 = arith.constant 0 : index
    %83 = vector.load %arg8[%c0_106, %c0_107] : memref<64x32xf32, #tpu.memory_space<vmem>>, vector<64x32xf32>
    %84 = vector.shape_cast %83 : vector<64x32xf32> to vector<8x8x32xf32>
    %c0_108 = arith.constant 0 : index
    %c0_109 = arith.constant 0 : index
    %c0_110 = arith.constant 0 : index
    %c0_111 = arith.constant 0 : index
    %c0_112 = arith.constant 0 : index
    %85 = vector.load %arg5[%c0_108, %c0_109, %c0_110, %c0_111, %c0_112] : memref<1x2x8x8x32xf32, #tpu.memory_space<vmem>>, vector<1x1x8x8x32xf32>
    %86 = vector.shape_cast %85 : vector<1x1x8x8x32xf32> to vector<8x8x32xf32>
    %87 = vector.shape_cast %84 : vector<8x8x32xf32> to vector<1x1x8x8x32xf32>
    tpu.vector_store %arg5[%c0_108, %c0_109, %c0_110, %c0_111, %c0_112], %87 {strides = array<i32>} : memref<1x2x8x8x32xf32, #tpu.memory_space<vmem>>, vector<1x1x8x8x32xf32>,
    %88 = vector.shape_cast %83 : vector<64x32xf32> to vector<8x8x32xf32>
    %c1_113 = arith.constant 1 : index
    %c1_114 = arith.constant 1 : index
    %c4_115 = arith.constant 4 : index
    %89 = vector.load %arg7[%c1_113, %c1_114, %c4_115] : memref<10x10x40xf32, #tpu.memory_space<vmem>>, vector<8x8x32xf32>
    tpu.vector_store %arg7[%c1_113, %c1_114, %c4_115], %88 {strides = array<i32>} : memref<10x10x40xf32, #tpu.memory_space<vmem>>, vector<8x8x32xf32>,
    %c0_116 = arith.constant 0 : index
    %c0_117 = arith.constant 0 : index
    %c0_118 = arith.constant 0 : index
    %c0_119 = arith.constant 0 : index
    %90 = vector.load %arg2[%c0_116, %c0_117, %c0_118, %c0_119] : memref<1x8x8x32xf32, #tpu.memory_space<vmem>>, vector<1x8x8x32xf32>
    %91 = vector.shape_cast %90 : vector<1x8x8x32xf32> to vector<8x8x32xf32>
    %92 = vector.shape_cast %91 : vector<8x8x32xf32> to vector<64x32xf32>
    %c0_120 = arith.constant 0 : index
    %c0_121 = arith.constant 0 : index
    %93 = vector.load %arg8[%c0_120, %c0_121] : memref<64x32xf32, #tpu.memory_space<vmem>>, vector<64x32xf32>
    tpu.vector_store %arg8[%c0_120, %c0_121], %92 {strides = array<i32>} : memref<64x32xf32, #tpu.memory_space<vmem>>, vector<64x32xf32>,
    %c0_122 = arith.constant 0 : index
    %c0_123 = arith.constant 0 : index
    %c0_124 = arith.constant 0 : index
    %94 = vector.load %arg7[%c0_122, %c0_123, %c0_124] : memref<10x10x40xf32, #tpu.memory_space<vmem>>, vector<8x8x40xf32>
    %95 = vector.shape_cast %94 : vector<8x8x40xf32> to vector<64x40xf32>
    %c0_125 = arith.constant 0 : index
    %c0_126 = arith.constant 0 : index
    %96 = vector.load %arg8[%c0_125, %c0_126] : memref<64x32xf32, #tpu.memory_space<vmem>>, vector<64x32xf32>
    %c0_127 = arith.constant 0 : index
    %c0_128 = arith.constant 0 : index
    %c0_129 = arith.constant 0 : index
    %97 = vector.load %arg4[%c0_127, %c0_128, %c0_129] : memref<9x40x32xf32, #tpu.memory_space<vmem>>, vector<1x40x32xf32>
    %98 = vector.shape_cast %97 : vector<1x40x32xf32> to vector<40x32xf32>
    %cst_130 = arith.constant dense<0.000000e+00> : vector<64x32xf32>
    %99 = tpu.matmul %95, %98, %cst_130 {dimension_numbers = #tpu.dot_dimension_numbers<[1], [0], [0], [1], [0, 0, 1, 1], [], []>} : vector<64x40xf32>, vector<40x32xf32>, vector<64x32xf32> -> vector<64x32xf32>
    %100 = arith.addf %96, %99 : vector<64x32xf32>
    %c0_131 = arith.constant 0 : index
    %c0_132 = arith.constant 0 : index
    %101 = vector.load %arg8[%c0_131, %c0_132] : memref<64x32xf32, #tpu.memory_space<vmem>>, vector<64x32xf32>
    tpu.vector_store %arg8[%c0_131, %c0_132], %100 {strides = array<i32>} : memref<64x32xf32, #tpu.memory_space<vmem>>, vector<64x32xf32>,
    %c0_133 = arith.constant 0 : index
    %c1_134 = arith.constant 1 : index
    %c0_135 = arith.constant 0 : index
    %102 = vector.load %arg7[%c0_133, %c1_134, %c0_135] : memref<10x10x40xf32, #tpu.memory_space<vmem>>, vector<8x8x40xf32>
    %103 = vector.shape_cast %102 : vector<8x8x40xf32> to vector<64x40xf32>
    %c0_136 = arith.constant 0 : index
    %c0_137 = arith.constant 0 : index
    %104 = vector.load %arg8[%c0_136, %c0_137] : memref<64x32xf32, #tpu.memory_space<vmem>>, vector<64x32xf32>
    %c1_138 = arith.constant 1 : index
    %c0_139 = arith.constant 0 : index
    %c0_140 = arith.constant 0 : index
    %105 = vector.load %arg4[%c1_138, %c0_139, %c0_140] : memref<9x40x32xf32, #tpu.memory_space<vmem>>, vector<1x40x32xf32>
    %106 = vector.shape_cast %105 : vector<1x40x32xf32> to vector<40x32xf32>
    %cst_141 = arith.constant dense<0.000000e+00> : vector<64x32xf32>
    %107 = tpu.matmul %103, %106, %cst_141 {dimension_numbers = #tpu.dot_dimension_numbers<[1], [0], [0], [1], [0, 0, 1, 1], [], []>} : vector<64x40xf32>, vector<40x32xf32>, vector<64x32xf32> -> vector<64x32xf32>
    %108 = arith.addf %104, %107 : vector<64x32xf32>
    %c0_142 = arith.constant 0 : index
    %c0_143 = arith.constant 0 : index
    %109 = vector.load %arg8[%c0_142, %c0_143] : memref<64x32xf32, #tpu.memory_space<vmem>>, vector<64x32xf32>
    tpu.vector_store %arg8[%c0_142, %c0_143], %108 {strides = array<i32>} : memref<64x32xf32, #tpu.memory_space<vmem>>, vector<64x32xf32>,
    %c0_144 = arith.constant 0 : index
    %c2_145 = arith.constant 2 : index
    %c0_146 = arith.constant 0 : index
    %110 = vector.load %arg7[%c0_144, %c2_145, %c0_146] : memref<10x10x40xf32, #tpu.memory_space<vmem>>, vector<8x8x40xf32>
    %111 = vector.shape_cast %110 : vector<8x8x40xf32> to vector<64x40xf32>
    %c0_147 = arith.constant 0 : index
    %c0_148 = arith.constant 0 : index
    %112 = vector.load %arg8[%c0_147, %c0_148] : memref<64x32xf32, #tpu.memory_space<vmem>>, vector<64x32xf32>
    %c2_149 = arith.constant 2 : index
    %c0_150 = arith.constant 0 : index
    %c0_151 = arith.constant 0 : index
    %113 = vector.load %arg4[%c2_149, %c0_150, %c0_151] : memref<9x40x32xf32, #tpu.memory_space<vmem>>, vector<1x40x32xf32>
    %114 = vector.shape_cast %113 : vector<1x40x32xf32> to vector<40x32xf32>
    %cst_152 = arith.constant dense<0.000000e+00> : vector<64x32xf32>
    %115 = tpu.matmul %111, %114, %cst_152 {dimension_numbers = #tpu.dot_dimension_numbers<[1], [0], [0], [1], [0, 0, 1, 1], [], []>} : vector<64x40xf32>, vector<40x32xf32>, vector<64x32xf32> -> vector<64x32xf32>
    %116 = arith.addf %112, %115 : vector<64x32xf32>
    %c0_153 = arith.constant 0 : index
    %c0_154 = arith.constant 0 : index
    %117 = vector.load %arg8[%c0_153, %c0_154] : memref<64x32xf32, #tpu.memory_space<vmem>>, vector<64x32xf32>
    tpu.vector_store %arg8[%c0_153, %c0_154], %116 {strides = array<i32>} : memref<64x32xf32, #tpu.memory_space<vmem>>, vector<64x32xf32>,
    %c1_155 = arith.constant 1 : index
    %c0_156 = arith.constant 0 : index
    %c0_157 = arith.constant 0 : index
    %118 = vector.load %arg7[%c1_155, %c0_156, %c0_157] : memref<10x10x40xf32, #tpu.memory_space<vmem>>, vector<8x8x40xf32>
    %119 = vector.shape_cast %118 : vector<8x8x40xf32> to vector<64x40xf32>
    %c0_158 = arith.constant 0 : index
    %c0_159 = arith.constant 0 : index
    %120 = vector.load %arg8[%c0_158, %c0_159] : memref<64x32xf32, #tpu.memory_space<vmem>>, vector<64x32xf32>
    %c3_160 = arith.constant 3 : index
    %c0_161 = arith.constant 0 : index
    %c0_162 = arith.constant 0 : index
    %121 = vector.load %arg4[%c3_160, %c0_161, %c0_162] : memref<9x40x32xf32, #tpu.memory_space<vmem>>, vector<1x40x32xf32>
    %122 = vector.shape_cast %121 : vector<1x40x32xf32> to vector<40x32xf32>
    %cst_163 = arith.constant dense<0.000000e+00> : vector<64x32xf32>
    %123 = tpu.matmul %119, %122, %cst_163 {dimension_numbers = #tpu.dot_dimension_numbers<[1], [0], [0], [1], [0, 0, 1, 1], [], []>} : vector<64x40xf32>, vector<40x32xf32>, vector<64x32xf32> -> vector<64x32xf32>
    %124 = arith.addf %120, %123 : vector<64x32xf32>
    %c0_164 = arith.constant 0 : index
    %c0_165 = arith.constant 0 : index
    %125 = vector.load %arg8[%c0_164, %c0_165] : memref<64x32xf32, #tpu.memory_space<vmem>>, vector<64x32xf32>
    tpu.vector_store %arg8[%c0_164, %c0_165], %124 {strides = array<i32>} : memref<64x32xf32, #tpu.memory_space<vmem>>, vector<64x32xf32>,
    %c1_166 = arith.constant 1 : index
    %c1_167 = arith.constant 1 : index
    %c0_168 = arith.constant 0 : index
    %126 = vector.load %arg7[%c1_166, %c1_167, %c0_168] : memref<10x10x40xf32, #tpu.memory_space<vmem>>, vector<8x8x40xf32>
    %127 = vector.shape_cast %126 : vector<8x8x40xf32> to vector<64x40xf32>
    %c0_169 = arith.constant 0 : index
    %c0_170 = arith.constant 0 : index
    %128 = vector.load %arg8[%c0_169, %c0_170] : memref<64x32xf32, #tpu.memory_space<vmem>>, vector<64x32xf32>
    %c4_171 = arith.constant 4 : index
    %c0_172 = arith.constant 0 : index
    %c0_173 = arith.constant 0 : index
    %129 = vector.load %arg4[%c4_171, %c0_172, %c0_173] : memref<9x40x32xf32, #tpu.memory_space<vmem>>, vector<1x40x32xf32>
    %130 = vector.shape_cast %129 : vector<1x40x32xf32> to vector<40x32xf32>
    %cst_174 = arith.constant dense<0.000000e+00> : vector<64x32xf32>
    %131 = tpu.matmul %127, %130, %cst_174 {dimension_numbers = #tpu.dot_dimension_numbers<[1], [0], [0], [1], [0, 0, 1, 1], [], []>} : vector<64x40xf32>, vector<40x32xf32>, vector<64x32xf32> -> vector<64x32xf32>
    %132 = arith.addf %128, %131 : vector<64x32xf32>
    %c0_175 = arith.constant 0 : index
    %c0_176 = arith.constant 0 : index
    %133 = vector.load %arg8[%c0_175, %c0_176] : memref<64x32xf32, #tpu.memory_space<vmem>>, vector<64x32xf32>
    tpu.vector_store %arg8[%c0_175, %c0_176], %132 {strides = array<i32>} : memref<64x32xf32, #tpu.memory_space<vmem>>, vector<64x32xf32>,
    %c1_177 = arith.constant 1 : index
    %c2_178 = arith.constant 2 : index
    %c0_179 = arith.constant 0 : index
    %134 = vector.load %arg7[%c1_177, %c2_178, %c0_179] : memref<10x10x40xf32, #tpu.memory_space<vmem>>, vector<8x8x40xf32>
    %135 = vector.shape_cast %134 : vector<8x8x40xf32> to vector<64x40xf32>
    %c0_180 = arith.constant 0 : index
    %c0_181 = arith.constant 0 : index
    %136 = vector.load %arg8[%c0_180, %c0_181] : memref<64x32xf32, #tpu.memory_space<vmem>>, vector<64x32xf32>
    %c5_182 = arith.constant 5 : index
    %c0_183 = arith.constant 0 : index
    %c0_184 = arith.constant 0 : index
    %137 = vector.load %arg4[%c5_182, %c0_183, %c0_184] : memref<9x40x32xf32, #tpu.memory_space<vmem>>, vector<1x40x32xf32>
    %138 = vector.shape_cast %137 : vector<1x40x32xf32> to vector<40x32xf32>
    %cst_185 = arith.constant dense<0.000000e+00> : vector<64x32xf32>
    %139 = tpu.matmul %135, %138, %cst_185 {dimension_numbers = #tpu.dot_dimension_numbers<[1], [0], [0], [1], [0, 0, 1, 1], [], []>} : vector<64x40xf32>, vector<40x32xf32>, vector<64x32xf32> -> vector<64x32xf32>
    %140 = arith.addf %136, %139 : vector<64x32xf32>
    %c0_186 = arith.constant 0 : index
    %c0_187 = arith.constant 0 : index
    %141 = vector.load %arg8[%c0_186, %c0_187] : memref<64x32xf32, #tpu.memory_space<vmem>>, vector<64x32xf32>
    tpu.vector_store %arg8[%c0_186, %c0_187], %140 {strides = array<i32>} : memref<64x32xf32, #tpu.memory_space<vmem>>, vector<64x32xf32>,
    %c2_188 = arith.constant 2 : index
    %c0_189 = arith.constant 0 : index
    %c0_190 = arith.constant 0 : index
    %142 = vector.load %arg7[%c2_188, %c0_189, %c0_190] : memref<10x10x40xf32, #tpu.memory_space<vmem>>, vector<8x8x40xf32>
    %143 = vector.shape_cast %142 : vector<8x8x40xf32> to vector<64x40xf32>
    %c0_191 = arith.constant 0 : index
    %c0_192 = arith.constant 0 : index
    %144 = vector.load %arg8[%c0_191, %c0_192] : memref<64x32xf32, #tpu.memory_space<vmem>>, vector<64x32xf32>
    %c6_193 = arith.constant 6 : index
    %c0_194 = arith.constant 0 : index
    %c0_195 = arith.constant 0 : index
    %145 = vector.load %arg4[%c6_193, %c0_194, %c0_195] : memref<9x40x32xf32, #tpu.memory_space<vmem>>, vector<1x40x32xf32>
    %146 = vector.shape_cast %145 : vector<1x40x32xf32> to vector<40x32xf32>
    %cst_196 = arith.constant dense<0.000000e+00> : vector<64x32xf32>
    %147 = tpu.matmul %143, %146, %cst_196 {dimension_numbers = #tpu.dot_dimension_numbers<[1], [0], [0], [1], [0, 0, 1, 1], [], []>} : vector<64x40xf32>, vector<40x32xf32>, vector<64x32xf32> -> vector<64x32xf32>
    %148 = arith.addf %144, %147 : vector<64x32xf32>
    %c0_197 = arith.constant 0 : index
    %c0_198 = arith.constant 0 : index
    %149 = vector.load %arg8[%c0_197, %c0_198] : memref<64x32xf32, #tpu.memory_space<vmem>>, vector<64x32xf32>
    tpu.vector_store %arg8[%c0_197, %c0_198], %148 {strides = array<i32>} : memref<64x32xf32, #tpu.memory_space<vmem>>, vector<64x32xf32>,
    %c2_199 = arith.constant 2 : index
    %c1_200 = arith.constant 1 : index
    %c0_201 = arith.constant 0 : index
    %150 = vector.load %arg7[%c2_199, %c1_200, %c0_201] : memref<10x10x40xf32, #tpu.memory_space<vmem>>, vector<8x8x40xf32>
    %151 = vector.shape_cast %150 : vector<8x8x40xf32> to vector<64x40xf32>
    %c0_202 = arith.constant 0 : index
    %c0_203 = arith.constant 0 : index
    %152 = vector.load %arg8[%c0_202, %c0_203] : memref<64x32xf32, #tpu.memory_space<vmem>>, vector<64x32xf32>
    %c7_204 = arith.constant 7 : index
    %c0_205 = arith.constant 0 : index
    %c0_206 = arith.constant 0 : index
    %153 = vector.load %arg4[%c7_204, %c0_205, %c0_206] : memref<9x40x32xf32, #tpu.memory_space<vmem>>, vector<1x40x32xf32>
    %154 = vector.shape_cast %153 : vector<1x40x32xf32> to vector<40x32xf32>
    %cst_207 = arith.constant dense<0.000000e+00> : vector<64x32xf32>
    %155 = tpu.matmul %151, %154, %cst_207 {dimension_numbers = #tpu.dot_dimension_numbers<[1], [0], [0], [1], [0, 0, 1, 1], [], []>} : vector<64x40xf32>, vector<40x32xf32>, vector<64x32xf32> -> vector<64x32xf32>
    %156 = arith.addf %152, %155 : vector<64x32xf32>
    %c0_208 = arith.constant 0 : index
    %c0_209 = arith.constant 0 : index
    %157 = vector.load %arg8[%c0_208, %c0_209] : memref<64x32xf32, #tpu.memory_space<vmem>>, vector<64x32xf32>
    tpu.vector_store %arg8[%c0_208, %c0_209], %156 {strides = array<i32>} : memref<64x32xf32, #tpu.memory_space<vmem>>, vector<64x32xf32>,
    %c2_210 = arith.constant 2 : index
    %c2_211 = arith.constant 2 : index
    %c0_212 = arith.constant 0 : index
    %158 = vector.load %arg7[%c2_210, %c2_211, %c0_212] : memref<10x10x40xf32, #tpu.memory_space<vmem>>, vector<8x8x40xf32>
    %159 = vector.shape_cast %158 : vector<8x8x40xf32> to vector<64x40xf32>
    %c0_213 = arith.constant 0 : index
    %c0_214 = arith.constant 0 : index
    %160 = vector.load %arg8[%c0_213, %c0_214] : memref<64x32xf32, #tpu.memory_space<vmem>>, vector<64x32xf32>
    %c8_215 = arith.constant 8 : index
    %c0_216 = arith.constant 0 : index
    %c0_217 = arith.constant 0 : index
    %161 = vector.load %arg4[%c8_215, %c0_216, %c0_217] : memref<9x40x32xf32, #tpu.memory_space<vmem>>, vector<1x40x32xf32>
    %162 = vector.shape_cast %161 : vector<1x40x32xf32> to vector<40x32xf32>
    %cst_218 = arith.constant dense<0.000000e+00> : vector<64x32xf32>
    %163 = tpu.matmul %159, %162, %cst_218 {dimension_numbers = #tpu.dot_dimension_numbers<[1], [0], [0], [1], [0, 0, 1, 1], [], []>} : vector<64x40xf32>, vector<40x32xf32>, vector<64x32xf32> -> vector<64x32xf32>
    %164 = arith.addf %160, %163 : vector<64x32xf32>
    %c0_219 = arith.constant 0 : index
    %c0_220 = arith.constant 0 : index
    %165 = vector.load %arg8[%c0_219, %c0_220] : memref<64x32xf32, #tpu.memory_space<vmem>>, vector<64x32xf32>
    tpu.vector_store %arg8[%c0_219, %c0_220], %164 {strides = array<i32>} : memref<64x32xf32, #tpu.memory_space<vmem>>, vector<64x32xf32>,
    %c0_221 = arith.constant 0 : index
    %c0_222 = arith.constant 0 : index
    %166 = vector.load %arg8[%c0_221, %c0_222] : memref<64x32xf32, #tpu.memory_space<vmem>>, vector<64x32xf32>
    %167 = vector.shape_cast %166 : vector<64x32xf32> to vector<8x8x32xf32>
    %c0_223 = arith.constant 0 : index
    %c1_224 = arith.constant 1 : index
    %c0_225 = arith.constant 0 : index
    %c0_226 = arith.constant 0 : index
    %c0_227 = arith.constant 0 : index
    %168 = vector.load %arg5[%c0_223, %c1_224, %c0_225, %c0_226, %c0_227] : memref<1x2x8x8x32xf32, #tpu.memory_space<vmem>>, vector<1x1x8x8x32xf32>
    %169 = vector.shape_cast %168 : vector<1x1x8x8x32xf32> to vector<8x8x32xf32>
    %170 = vector.shape_cast %167 : vector<8x8x32xf32> to vector<1x1x8x8x32xf32>
    tpu.vector_store %arg5[%c0_223, %c1_224, %c0_225, %c0_226, %c0_227], %170 {strides = array<i32>} : memref<1x2x8x8x32xf32, #tpu.memory_space<vmem>>, vector<1x1x8x8x32xf32>,
    %cst_228 = arith.constant dense<0.000000e+00> : vector<32xf32>
    %171 = vector.multi_reduction <add>, %83, %cst_228 [0] : vector<64x32xf32> to vector<32xf32>
    %172 = vector.shape_cast %171 : vector<32xf32> to vector<1x32xf32>
    %cst_229 = arith.constant dense<0.000000e+00> : vector<32xf32>
    %173 = vector.multi_reduction <add>, %166, %cst_229 [0] : vector<64x32xf32> to vector<32xf32>
    %174 = vector.shape_cast %173 : vector<32xf32> to vector<1x32xf32>
    %175 = arith.mulf %83, %83 : vector<64x32xf32>
    %cst_230 = arith.constant dense<0.000000e+00> : vector<32xf32>
    %176 = vector.multi_reduction <add>, %175, %cst_230 [0] : vector<64x32xf32> to vector<32xf32>
    %177 = vector.shape_cast %176 : vector<32xf32> to vector<1x32xf32>
    %178 = arith.mulf %166, %166 : vector<64x32xf32>
    %cst_231 = arith.constant dense<0.000000e+00> : vector<32xf32>
    %179 = vector.multi_reduction <add>, %178, %cst_231 [0] : vector<64x32xf32> to vector<32xf32>
    %180 = vector.shape_cast %179 : vector<32xf32> to vector<1x32xf32>
    %181 = tpu.concatenate %172, %174, %177, %180 in 0 : vector<1x32xf32>, vector<1x32xf32>, vector<1x32xf32>, vector<1x32xf32> -> vector<4x32xf32>
    %c0_232 = arith.constant 0 : index
    %c0_233 = arith.constant 0 : index
    %c0_234 = arith.constant 0 : index
    %182 = vector.load %arg6[%c0_232, %c0_233, %c0_234] : memref<1x4x32xf32, #tpu.memory_space<vmem>>, vector<1x4x32xf32>
    %183 = vector.shape_cast %182 : vector<1x4x32xf32> to vector<4x32xf32>
    %184 = vector.shape_cast %181 : vector<4x32xf32> to vector<1x4x32xf32>
    tpu.vector_store %arg6[%c0_232, %c0_233, %c0_234], %184 {strides = array<i32>} : memref<1x4x32xf32, #tpu.memory_space<vmem>>, vector<1x4x32xf32>,
    return
  }
  func.func @transform_0(%arg0: i32) -> (i32, i32, i32, i32) {
    %c0_i32 = arith.constant 0 : i32
    %c0_i32_0 = arith.constant 0 : i32
    %c0_i32_1 = arith.constant 0 : i32
    %c0_i32_2 = arith.constant 0 : i32
    return %arg0, %c0_i32, %c0_i32_0, %c0_i32_1 : i32, i32, i32, i32
  }
  func.func @transform_1(%arg0: i32) -> (i32, i32, i32, i32) {
    %c0_i32 = arith.constant 0 : i32
    %c0_i32_0 = arith.constant 0 : i32
    %c0_i32_1 = arith.constant 0 : i32
    %c0_i32_2 = arith.constant 0 : i32
    return %arg0, %c0_i32, %c0_i32_0, %c0_i32_1 : i32, i32, i32, i32
  }
  func.func @transform_2(%arg0: i32) -> (i32, i32, i32) {
    %c0_i32 = arith.constant 0 : i32
    %c0_i32_0 = arith.constant 0 : i32
    %c0_i32_1 = arith.constant 0 : i32
    %c0_i32_2 = arith.constant 0 : i32
    return %c0_i32, %c0_i32_0, %c0_i32_1 : i32, i32, i32
  }
  func.func @transform_3(%arg0: i32) -> (i32, i32, i32) {
    %c0_i32 = arith.constant 0 : i32
    %c0_i32_0 = arith.constant 0 : i32
    %c0_i32_1 = arith.constant 0 : i32
    %c0_i32_2 = arith.constant 0 : i32
    return %c0_i32, %c0_i32_0, %c0_i32_1 : i32, i32, i32
  }
  func.func @transform_4(%arg0: i32) -> (i32, i32, i32, i32, i32) {
    %c0_i32 = arith.constant 0 : i32
    %c0_i32_0 = arith.constant 0 : i32
    %c0_i32_1 = arith.constant 0 : i32
    %c0_i32_2 = arith.constant 0 : i32
    %c0_i32_3 = arith.constant 0 : i32
    return %arg0, %c0_i32, %c0_i32_0, %c0_i32_1, %c0_i32_2 : i32, i32, i32, i32, i32
  }
  func.func @transform_5(%arg0: i32) -> (i32, i32, i32) {
    %c0_i32 = arith.constant 0 : i32
    %c0_i32_0 = arith.constant 0 : i32
    %c0_i32_1 = arith.constant 0 : i32
    return %arg0, %c0_i32, %c0_i32_0 : i32, i32, i32
  }
}

module attributes {stable_mosaic.version = 11 : i64} {
  func.func @_bn_revblock_kernel(%arg0: i32, %arg1: memref<1x2x8x8x32xf32, #tpu.memory_space<vmem>>, %arg2: memref<2x32xf32, #tpu.memory_space<vmem>>, %arg3: memref<2x32xf32, #tpu.memory_space<vmem>>, %arg4: memref<9x40x32xf32, #tpu.memory_space<vmem>>, %arg5: memref<9x40x32xf32, #tpu.memory_space<vmem>>, %arg6: memref<1x2x8x8x32xf32, #tpu.memory_space<vmem>>, %arg7: memref<10x10x40xf32, #tpu.memory_space<vmem>>, %arg8: memref<64x32xf32, #tpu.memory_space<vmem>>) attributes {dimension_semantics = [#tpu.dimension_semantics<parallel>], iteration_bounds = array<i64: 2>, scalar_prefetch = 0 : i64, scratch_operands = 2 : i64, tpu.core_type = #tpu.core_type<tc>, window_params = [{transform_indices = @transform_0, window_bounds = array<i64: 1, 2, 8, 8, 32>}, {pipeline_mode = #tpu.pipeline_mode<synchronous>, transform_indices = @transform_1, window_bounds = array<i64: 2, 32>}, {pipeline_mode = #tpu.pipeline_mode<synchronous>, transform_indices = @transform_2, window_bounds = array<i64: 2, 32>}, {pipeline_mode = #tpu.pipeline_mode<synchronous>, transform_indices = @transform_3, window_bounds = array<i64: 9, 40, 32>}, {pipeline_mode = #tpu.pipeline_mode<synchronous>, transform_indices = @transform_4, window_bounds = array<i64: 9, 40, 32>}, {transform_indices = @transform_5, window_bounds = array<i64: 1, 2, 8, 8, 32>}]} {
    %cst = arith.constant 0.000000e+00 : f32
    %0 = vector.broadcast %cst : f32 to vector<10x10x40xf32>
    %c0 = arith.constant 0 : index
    %c0_0 = arith.constant 0 : index
    %c0_1 = arith.constant 0 : index
    %1 = vector.load %arg7[%c0, %c0_0, %c0_1] : memref<10x10x40xf32, #tpu.memory_space<vmem>>, vector<10x10x40xf32>
    tpu.vector_store %arg7[%c0, %c0_0, %c0_1], %0 {strides = array<i32>} : memref<10x10x40xf32, #tpu.memory_space<vmem>>, vector<10x10x40xf32>,
    %c0_2 = arith.constant 0 : index
    %c1 = arith.constant 1 : index
    %c0_3 = arith.constant 0 : index
    %c0_4 = arith.constant 0 : index
    %c0_5 = arith.constant 0 : index
    %2 = vector.load %arg1[%c0_2, %c1, %c0_3, %c0_4, %c0_5] : memref<1x2x8x8x32xf32, #tpu.memory_space<vmem>>, vector<1x1x8x8x32xf32>
    %3 = vector.shape_cast %2 : vector<1x1x8x8x32xf32> to vector<8x8x32xf32>
    %4 = vector.shape_cast %3 : vector<8x8x32xf32> to vector<64x32xf32>
    %c1_6 = arith.constant 1 : index
    %c0_7 = arith.constant 0 : index
    %5 = vector.load %arg2[%c1_6, %c0_7] : memref<2x32xf32, #tpu.memory_space<vmem>>, vector<1x32xf32>
    %6 = vector.broadcast %5 : vector<1x32xf32> to vector<64x32xf32>
    %7 = arith.mulf %4, %6 : vector<64x32xf32>
    %c1_8 = arith.constant 1 : index
    %c0_9 = arith.constant 0 : index
    %8 = vector.load %arg3[%c1_8, %c0_9] : memref<2x32xf32, #tpu.memory_space<vmem>>, vector<1x32xf32>
    %9 = vector.broadcast %8 : vector<1x32xf32> to vector<64x32xf32>
    %10 = arith.addf %7, %9 : vector<64x32xf32>
    %11 = vector.shape_cast %10 : vector<64x32xf32> to vector<8x8x32xf32>
    %c1_10 = arith.constant 1 : index
    %c1_11 = arith.constant 1 : index
    %c4 = arith.constant 4 : index
    %12 = vector.load %arg7[%c1_10, %c1_11, %c4] : memref<10x10x40xf32, #tpu.memory_space<vmem>>, vector<8x8x32xf32>
    tpu.vector_store %arg7[%c1_10, %c1_11, %c4], %11 {strides = array<i32>} : memref<10x10x40xf32, #tpu.memory_space<vmem>>, vector<8x8x32xf32>,
    %c0_12 = arith.constant 0 : index
    %c0_13 = arith.constant 0 : index
    %c0_14 = arith.constant 0 : index
    %c0_15 = arith.constant 0 : index
    %c0_16 = arith.constant 0 : index
    %13 = vector.load %arg1[%c0_12, %c0_13, %c0_14, %c0_15, %c0_16] : memref<1x2x8x8x32xf32, #tpu.memory_space<vmem>>, vector<1x1x8x8x32xf32>
    %14 = vector.shape_cast %13 : vector<1x1x8x8x32xf32> to vector<8x8x32xf32>
    %15 = vector.shape_cast %14 : vector<8x8x32xf32> to vector<64x32xf32>
    %c0_17 = arith.constant 0 : index
    %c0_18 = arith.constant 0 : index
    %16 = vector.load %arg2[%c0_17, %c0_18] : memref<2x32xf32, #tpu.memory_space<vmem>>, vector<1x32xf32>
    %17 = vector.broadcast %16 : vector<1x32xf32> to vector<64x32xf32>
    %18 = arith.mulf %15, %17 : vector<64x32xf32>
    %c0_19 = arith.constant 0 : index
    %c0_20 = arith.constant 0 : index
    %19 = vector.load %arg3[%c0_19, %c0_20] : memref<2x32xf32, #tpu.memory_space<vmem>>, vector<1x32xf32>
    %20 = vector.broadcast %19 : vector<1x32xf32> to vector<64x32xf32>
    %21 = arith.addf %18, %20 : vector<64x32xf32>
    %c0_21 = arith.constant 0 : index
    %c0_22 = arith.constant 0 : index
    %22 = vector.load %arg8[%c0_21, %c0_22] : memref<64x32xf32, #tpu.memory_space<vmem>>, vector<64x32xf32>
    tpu.vector_store %arg8[%c0_21, %c0_22], %21 {strides = array<i32>} : memref<64x32xf32, #tpu.memory_space<vmem>>, vector<64x32xf32>,
    %c0_23 = arith.constant 0 : index
    %c0_24 = arith.constant 0 : index
    %c0_25 = arith.constant 0 : index
    %23 = vector.load %arg7[%c0_23, %c0_24, %c0_25] : memref<10x10x40xf32, #tpu.memory_space<vmem>>, vector<8x8x40xf32>
    %24 = vector.shape_cast %23 : vector<8x8x40xf32> to vector<64x40xf32>
    %c0_26 = arith.constant 0 : index
    %c0_27 = arith.constant 0 : index
    %25 = vector.load %arg8[%c0_26, %c0_27] : memref<64x32xf32, #tpu.memory_space<vmem>>, vector<64x32xf32>
    %c0_28 = arith.constant 0 : index
    %c0_29 = arith.constant 0 : index
    %c0_30 = arith.constant 0 : index
    %26 = vector.load %arg4[%c0_28, %c0_29, %c0_30] : memref<9x40x32xf32, #tpu.memory_space<vmem>>, vector<1x40x32xf32>
    %27 = vector.shape_cast %26 : vector<1x40x32xf32> to vector<40x32xf32>
    %cst_31 = arith.constant dense<0.000000e+00> : vector<64x32xf32>
    %28 = tpu.matmul %24, %27, %cst_31 {dimension_numbers = #tpu.dot_dimension_numbers<[1], [0], [0], [1], [0, 0, 1, 1], [], []>} : vector<64x40xf32>, vector<40x32xf32>, vector<64x32xf32> -> vector<64x32xf32>
    %29 = arith.addf %25, %28 : vector<64x32xf32>
    %c0_32 = arith.constant 0 : index
    %c0_33 = arith.constant 0 : index
    %30 = vector.load %arg8[%c0_32, %c0_33] : memref<64x32xf32, #tpu.memory_space<vmem>>, vector<64x32xf32>
    tpu.vector_store %arg8[%c0_32, %c0_33], %29 {strides = array<i32>} : memref<64x32xf32, #tpu.memory_space<vmem>>, vector<64x32xf32>,
    %c0_34 = arith.constant 0 : index
    %c1_35 = arith.constant 1 : index
    %c0_36 = arith.constant 0 : index
    %31 = vector.load %arg7[%c0_34, %c1_35, %c0_36] : memref<10x10x40xf32, #tpu.memory_space<vmem>>, vector<8x8x40xf32>
    %32 = vector.shape_cast %31 : vector<8x8x40xf32> to vector<64x40xf32>
    %c0_37 = arith.constant 0 : index
    %c0_38 = arith.constant 0 : index
    %33 = vector.load %arg8[%c0_37, %c0_38] : memref<64x32xf32, #tpu.memory_space<vmem>>, vector<64x32xf32>
    %c1_39 = arith.constant 1 : index
    %c0_40 = arith.constant 0 : index
    %c0_41 = arith.constant 0 : index
    %34 = vector.load %arg4[%c1_39, %c0_40, %c0_41] : memref<9x40x32xf32, #tpu.memory_space<vmem>>, vector<1x40x32xf32>
    %35 = vector.shape_cast %34 : vector<1x40x32xf32> to vector<40x32xf32>
    %cst_42 = arith.constant dense<0.000000e+00> : vector<64x32xf32>
    %36 = tpu.matmul %32, %35, %cst_42 {dimension_numbers = #tpu.dot_dimension_numbers<[1], [0], [0], [1], [0, 0, 1, 1], [], []>} : vector<64x40xf32>, vector<40x32xf32>, vector<64x32xf32> -> vector<64x32xf32>
    %37 = arith.addf %33, %36 : vector<64x32xf32>
    %c0_43 = arith.constant 0 : index
    %c0_44 = arith.constant 0 : index
    %38 = vector.load %arg8[%c0_43, %c0_44] : memref<64x32xf32, #tpu.memory_space<vmem>>, vector<64x32xf32>
    tpu.vector_store %arg8[%c0_43, %c0_44], %37 {strides = array<i32>} : memref<64x32xf32, #tpu.memory_space<vmem>>, vector<64x32xf32>,
    %c0_45 = arith.constant 0 : index
    %c2 = arith.constant 2 : index
    %c0_46 = arith.constant 0 : index
    %39 = vector.load %arg7[%c0_45, %c2, %c0_46] : memref<10x10x40xf32, #tpu.memory_space<vmem>>, vector<8x8x40xf32>
    %40 = vector.shape_cast %39 : vector<8x8x40xf32> to vector<64x40xf32>
    %c0_47 = arith.constant 0 : index
    %c0_48 = arith.constant 0 : index
    %41 = vector.load %arg8[%c0_47, %c0_48] : memref<64x32xf32, #tpu.memory_space<vmem>>, vector<64x32xf32>
    %c2_49 = arith.constant 2 : index
    %c0_50 = arith.constant 0 : index
    %c0_51 = arith.constant 0 : index
    %42 = vector.load %arg4[%c2_49, %c0_50, %c0_51] : memref<9x40x32xf32, #tpu.memory_space<vmem>>, vector<1x40x32xf32>
    %43 = vector.shape_cast %42 : vector<1x40x32xf32> to vector<40x32xf32>
    %cst_52 = arith.constant dense<0.000000e+00> : vector<64x32xf32>
    %44 = tpu.matmul %40, %43, %cst_52 {dimension_numbers = #tpu.dot_dimension_numbers<[1], [0], [0], [1], [0, 0, 1, 1], [], []>} : vector<64x40xf32>, vector<40x32xf32>, vector<64x32xf32> -> vector<64x32xf32>
    %45 = arith.addf %41, %44 : vector<64x32xf32>
    %c0_53 = arith.constant 0 : index
    %c0_54 = arith.constant 0 : index
    %46 = vector.load %arg8[%c0_53, %c0_54] : memref<64x32xf32, #tpu.memory_space<vmem>>, vector<64x32xf32>
    tpu.vector_store %arg8[%c0_53, %c0_54], %45 {strides = array<i32>} : memref<64x32xf32, #tpu.memory_space<vmem>>, vector<64x32xf32>,
    %c1_55 = arith.constant 1 : index
    %c0_56 = arith.constant 0 : index
    %c0_57 = arith.constant 0 : index
    %47 = vector.load %arg7[%c1_55, %c0_56, %c0_57] : memref<10x10x40xf32, #tpu.memory_space<vmem>>, vector<8x8x40xf32>
    %48 = vector.shape_cast %47 : vector<8x8x40xf32> to vector<64x40xf32>
    %c0_58 = arith.constant 0 : index
    %c0_59 = arith.constant 0 : index
    %49 = vector.load %arg8[%c0_58, %c0_59] : memref<64x32xf32, #tpu.memory_space<vmem>>, vector<64x32xf32>
    %c3 = arith.constant 3 : index
    %c0_60 = arith.constant 0 : index
    %c0_61 = arith.constant 0 : index
    %50 = vector.load %arg4[%c3, %c0_60, %c0_61] : memref<9x40x32xf32, #tpu.memory_space<vmem>>, vector<1x40x32xf32>
    %51 = vector.shape_cast %50 : vector<1x40x32xf32> to vector<40x32xf32>
    %cst_62 = arith.constant dense<0.000000e+00> : vector<64x32xf32>
    %52 = tpu.matmul %48, %51, %cst_62 {dimension_numbers = #tpu.dot_dimension_numbers<[1], [0], [0], [1], [0, 0, 1, 1], [], []>} : vector<64x40xf32>, vector<40x32xf32>, vector<64x32xf32> -> vector<64x32xf32>
    %53 = arith.addf %49, %52 : vector<64x32xf32>
    %c0_63 = arith.constant 0 : index
    %c0_64 = arith.constant 0 : index
    %54 = vector.load %arg8[%c0_63, %c0_64] : memref<64x32xf32, #tpu.memory_space<vmem>>, vector<64x32xf32>
    tpu.vector_store %arg8[%c0_63, %c0_64], %53 {strides = array<i32>} : memref<64x32xf32, #tpu.memory_space<vmem>>, vector<64x32xf32>,
    %c1_65 = arith.constant 1 : index
    %c1_66 = arith.constant 1 : index
    %c0_67 = arith.constant 0 : index
    %55 = vector.load %arg7[%c1_65, %c1_66, %c0_67] : memref<10x10x40xf32, #tpu.memory_space<vmem>>, vector<8x8x40xf32>
    %56 = vector.shape_cast %55 : vector<8x8x40xf32> to vector<64x40xf32>
    %c0_68 = arith.constant 0 : index
    %c0_69 = arith.constant 0 : index
    %57 = vector.load %arg8[%c0_68, %c0_69] : memref<64x32xf32, #tpu.memory_space<vmem>>, vector<64x32xf32>
    %c4_70 = arith.constant 4 : index
    %c0_71 = arith.constant 0 : index
    %c0_72 = arith.constant 0 : index
    %58 = vector.load %arg4[%c4_70, %c0_71, %c0_72] : memref<9x40x32xf32, #tpu.memory_space<vmem>>, vector<1x40x32xf32>
    %59 = vector.shape_cast %58 : vector<1x40x32xf32> to vector<40x32xf32>
    %cst_73 = arith.constant dense<0.000000e+00> : vector<64x32xf32>
    %60 = tpu.matmul %56, %59, %cst_73 {dimension_numbers = #tpu.dot_dimension_numbers<[1], [0], [0], [1], [0, 0, 1, 1], [], []>} : vector<64x40xf32>, vector<40x32xf32>, vector<64x32xf32> -> vector<64x32xf32>
    %61 = arith.addf %57, %60 : vector<64x32xf32>
    %c0_74 = arith.constant 0 : index
    %c0_75 = arith.constant 0 : index
    %62 = vector.load %arg8[%c0_74, %c0_75] : memref<64x32xf32, #tpu.memory_space<vmem>>, vector<64x32xf32>
    tpu.vector_store %arg8[%c0_74, %c0_75], %61 {strides = array<i32>} : memref<64x32xf32, #tpu.memory_space<vmem>>, vector<64x32xf32>,
    %c1_76 = arith.constant 1 : index
    %c2_77 = arith.constant 2 : index
    %c0_78 = arith.constant 0 : index
    %63 = vector.load %arg7[%c1_76, %c2_77, %c0_78] : memref<10x10x40xf32, #tpu.memory_space<vmem>>, vector<8x8x40xf32>
    %64 = vector.shape_cast %63 : vector<8x8x40xf32> to vector<64x40xf32>
    %c0_79 = arith.constant 0 : index
    %c0_80 = arith.constant 0 : index
    %65 = vector.load %arg8[%c0_79, %c0_80] : memref<64x32xf32, #tpu.memory_space<vmem>>, vector<64x32xf32>
    %c5 = arith.constant 5 : index
    %c0_81 = arith.constant 0 : index
    %c0_82 = arith.constant 0 : index
    %66 = vector.load %arg4[%c5, %c0_81, %c0_82] : memref<9x40x32xf32, #tpu.memory_space<vmem>>, vector<1x40x32xf32>
    %67 = vector.shape_cast %66 : vector<1x40x32xf32> to vector<40x32xf32>
    %cst_83 = arith.constant dense<0.000000e+00> : vector<64x32xf32>
    %68 = tpu.matmul %64, %67, %cst_83 {dimension_numbers = #tpu.dot_dimension_numbers<[1], [0], [0], [1], [0, 0, 1, 1], [], []>} : vector<64x40xf32>, vector<40x32xf32>, vector<64x32xf32> -> vector<64x32xf32>
    %69 = arith.addf %65, %68 : vector<64x32xf32>
    %c0_84 = arith.constant 0 : index
    %c0_85 = arith.constant 0 : index
    %70 = vector.load %arg8[%c0_84, %c0_85] : memref<64x32xf32, #tpu.memory_space<vmem>>, vector<64x32xf32>
    tpu.vector_store %arg8[%c0_84, %c0_85], %69 {strides = array<i32>} : memref<64x32xf32, #tpu.memory_space<vmem>>, vector<64x32xf32>,
    %c2_86 = arith.constant 2 : index
    %c0_87 = arith.constant 0 : index
    %c0_88 = arith.constant 0 : index
    %71 = vector.load %arg7[%c2_86, %c0_87, %c0_88] : memref<10x10x40xf32, #tpu.memory_space<vmem>>, vector<8x8x40xf32>
    %72 = vector.shape_cast %71 : vector<8x8x40xf32> to vector<64x40xf32>
    %c0_89 = arith.constant 0 : index
    %c0_90 = arith.constant 0 : index
    %73 = vector.load %arg8[%c0_89, %c0_90] : memref<64x32xf32, #tpu.memory_space<vmem>>, vector<64x32xf32>
    %c6 = arith.constant 6 : index
    %c0_91 = arith.constant 0 : index
    %c0_92 = arith.constant 0 : index
    %74 = vector.load %arg4[%c6, %c0_91, %c0_92] : memref<9x40x32xf32, #tpu.memory_space<vmem>>, vector<1x40x32xf32>
    %75 = vector.shape_cast %74 : vector<1x40x32xf32> to vector<40x32xf32>
    %cst_93 = arith.constant dense<0.000000e+00> : vector<64x32xf32>
    %76 = tpu.matmul %72, %75, %cst_93 {dimension_numbers = #tpu.dot_dimension_numbers<[1], [0], [0], [1], [0, 0, 1, 1], [], []>} : vector<64x40xf32>, vector<40x32xf32>, vector<64x32xf32> -> vector<64x32xf32>
    %77 = arith.addf %73, %76 : vector<64x32xf32>
    %c0_94 = arith.constant 0 : index
    %c0_95 = arith.constant 0 : index
    %78 = vector.load %arg8[%c0_94, %c0_95] : memref<64x32xf32, #tpu.memory_space<vmem>>, vector<64x32xf32>
    tpu.vector_store %arg8[%c0_94, %c0_95], %77 {strides = array<i32>} : memref<64x32xf32, #tpu.memory_space<vmem>>, vector<64x32xf32>,
    %c2_96 = arith.constant 2 : index
    %c1_97 = arith.constant 1 : index
    %c0_98 = arith.constant 0 : index
    %79 = vector.load %arg7[%c2_96, %c1_97, %c0_98] : memref<10x10x40xf32, #tpu.memory_space<vmem>>, vector<8x8x40xf32>
    %80 = vector.shape_cast %79 : vector<8x8x40xf32> to vector<64x40xf32>
    %c0_99 = arith.constant 0 : index
    %c0_100 = arith.constant 0 : index
    %81 = vector.load %arg8[%c0_99, %c0_100] : memref<64x32xf32, #tpu.memory_space<vmem>>, vector<64x32xf32>
    %c7 = arith.constant 7 : index
    %c0_101 = arith.constant 0 : index
    %c0_102 = arith.constant 0 : index
    %82 = vector.load %arg4[%c7, %c0_101, %c0_102] : memref<9x40x32xf32, #tpu.memory_space<vmem>>, vector<1x40x32xf32>
    %83 = vector.shape_cast %82 : vector<1x40x32xf32> to vector<40x32xf32>
    %cst_103 = arith.constant dense<0.000000e+00> : vector<64x32xf32>
    %84 = tpu.matmul %80, %83, %cst_103 {dimension_numbers = #tpu.dot_dimension_numbers<[1], [0], [0], [1], [0, 0, 1, 1], [], []>} : vector<64x40xf32>, vector<40x32xf32>, vector<64x32xf32> -> vector<64x32xf32>
    %85 = arith.addf %81, %84 : vector<64x32xf32>
    %c0_104 = arith.constant 0 : index
    %c0_105 = arith.constant 0 : index
    %86 = vector.load %arg8[%c0_104, %c0_105] : memref<64x32xf32, #tpu.memory_space<vmem>>, vector<64x32xf32>
    tpu.vector_store %arg8[%c0_104, %c0_105], %85 {strides = array<i32>} : memref<64x32xf32, #tpu.memory_space<vmem>>, vector<64x32xf32>,
    %c2_106 = arith.constant 2 : index
    %c2_107 = arith.constant 2 : index
    %c0_108 = arith.constant 0 : index
    %87 = vector.load %arg7[%c2_106, %c2_107, %c0_108] : memref<10x10x40xf32, #tpu.memory_space<vmem>>, vector<8x8x40xf32>
    %88 = vector.shape_cast %87 : vector<8x8x40xf32> to vector<64x40xf32>
    %c0_109 = arith.constant 0 : index
    %c0_110 = arith.constant 0 : index
    %89 = vector.load %arg8[%c0_109, %c0_110] : memref<64x32xf32, #tpu.memory_space<vmem>>, vector<64x32xf32>
    %c8 = arith.constant 8 : index
    %c0_111 = arith.constant 0 : index
    %c0_112 = arith.constant 0 : index
    %90 = vector.load %arg4[%c8, %c0_111, %c0_112] : memref<9x40x32xf32, #tpu.memory_space<vmem>>, vector<1x40x32xf32>
    %91 = vector.shape_cast %90 : vector<1x40x32xf32> to vector<40x32xf32>
    %cst_113 = arith.constant dense<0.000000e+00> : vector<64x32xf32>
    %92 = tpu.matmul %88, %91, %cst_113 {dimension_numbers = #tpu.dot_dimension_numbers<[1], [0], [0], [1], [0, 0, 1, 1], [], []>} : vector<64x40xf32>, vector<40x32xf32>, vector<64x32xf32> -> vector<64x32xf32>
    %93 = arith.addf %89, %92 : vector<64x32xf32>
    %c0_114 = arith.constant 0 : index
    %c0_115 = arith.constant 0 : index
    %94 = vector.load %arg8[%c0_114, %c0_115] : memref<64x32xf32, #tpu.memory_space<vmem>>, vector<64x32xf32>
    tpu.vector_store %arg8[%c0_114, %c0_115], %93 {strides = array<i32>} : memref<64x32xf32, #tpu.memory_space<vmem>>, vector<64x32xf32>,
    %c0_116 = arith.constant 0 : index
    %c0_117 = arith.constant 0 : index
    %95 = vector.load %arg8[%c0_116, %c0_117] : memref<64x32xf32, #tpu.memory_space<vmem>>, vector<64x32xf32>
    %96 = vector.shape_cast %95 : vector<64x32xf32> to vector<8x8x32xf32>
    %c0_118 = arith.constant 0 : index
    %c0_119 = arith.constant 0 : index
    %c0_120 = arith.constant 0 : index
    %c0_121 = arith.constant 0 : index
    %c0_122 = arith.constant 0 : index
    %97 = vector.load %arg6[%c0_118, %c0_119, %c0_120, %c0_121, %c0_122] : memref<1x2x8x8x32xf32, #tpu.memory_space<vmem>>, vector<1x1x8x8x32xf32>
    %98 = vector.shape_cast %97 : vector<1x1x8x8x32xf32> to vector<8x8x32xf32>
    %99 = vector.shape_cast %96 : vector<8x8x32xf32> to vector<1x1x8x8x32xf32>
    tpu.vector_store %arg6[%c0_118, %c0_119, %c0_120, %c0_121, %c0_122], %99 {strides = array<i32>} : memref<1x2x8x8x32xf32, #tpu.memory_space<vmem>>, vector<1x1x8x8x32xf32>,
    %100 = vector.shape_cast %95 : vector<64x32xf32> to vector<8x8x32xf32>
    %c1_123 = arith.constant 1 : index
    %c1_124 = arith.constant 1 : index
    %c4_125 = arith.constant 4 : index
    %101 = vector.load %arg7[%c1_123, %c1_124, %c4_125] : memref<10x10x40xf32, #tpu.memory_space<vmem>>, vector<8x8x32xf32>
    tpu.vector_store %arg7[%c1_123, %c1_124, %c4_125], %100 {strides = array<i32>} : memref<10x10x40xf32, #tpu.memory_space<vmem>>, vector<8x8x32xf32>,
    %c0_126 = arith.constant 0 : index
    %c1_127 = arith.constant 1 : index
    %c0_128 = arith.constant 0 : index
    %c0_129 = arith.constant 0 : index
    %c0_130 = arith.constant 0 : index
    %102 = vector.load %arg1[%c0_126, %c1_127, %c0_128, %c0_129, %c0_130] : memref<1x2x8x8x32xf32, #tpu.memory_space<vmem>>, vector<1x1x8x8x32xf32>
    %103 = vector.shape_cast %102 : vector<1x1x8x8x32xf32> to vector<8x8x32xf32>
    %104 = vector.shape_cast %103 : vector<8x8x32xf32> to vector<64x32xf32>
    %c1_131 = arith.constant 1 : index
    %c0_132 = arith.constant 0 : index
    %105 = vector.load %arg2[%c1_131, %c0_132] : memref<2x32xf32, #tpu.memory_space<vmem>>, vector<1x32xf32>
    %106 = vector.broadcast %105 : vector<1x32xf32> to vector<64x32xf32>
    %107 = arith.mulf %104, %106 : vector<64x32xf32>
    %c1_133 = arith.constant 1 : index
    %c0_134 = arith.constant 0 : index
    %108 = vector.load %arg3[%c1_133, %c0_134] : memref<2x32xf32, #tpu.memory_space<vmem>>, vector<1x32xf32>
    %109 = vector.broadcast %108 : vector<1x32xf32> to vector<64x32xf32>
    %110 = arith.addf %107, %109 : vector<64x32xf32>
    %c0_135 = arith.constant 0 : index
    %c0_136 = arith.constant 0 : index
    %111 = vector.load %arg8[%c0_135, %c0_136] : memref<64x32xf32, #tpu.memory_space<vmem>>, vector<64x32xf32>
    tpu.vector_store %arg8[%c0_135, %c0_136], %110 {strides = array<i32>} : memref<64x32xf32, #tpu.memory_space<vmem>>, vector<64x32xf32>,
    %c0_137 = arith.constant 0 : index
    %c0_138 = arith.constant 0 : index
    %c0_139 = arith.constant 0 : index
    %112 = vector.load %arg7[%c0_137, %c0_138, %c0_139] : memref<10x10x40xf32, #tpu.memory_space<vmem>>, vector<8x8x40xf32>
    %113 = vector.shape_cast %112 : vector<8x8x40xf32> to vector<64x40xf32>
    %c0_140 = arith.constant 0 : index
    %c0_141 = arith.constant 0 : index
    %114 = vector.load %arg8[%c0_140, %c0_141] : memref<64x32xf32, #tpu.memory_space<vmem>>, vector<64x32xf32>
    %c0_142 = arith.constant 0 : index
    %c0_143 = arith.constant 0 : index
    %c0_144 = arith.constant 0 : index
    %115 = vector.load %arg5[%c0_142, %c0_143, %c0_144] : memref<9x40x32xf32, #tpu.memory_space<vmem>>, vector<1x40x32xf32>
    %116 = vector.shape_cast %115 : vector<1x40x32xf32> to vector<40x32xf32>
    %cst_145 = arith.constant dense<0.000000e+00> : vector<64x32xf32>
    %117 = tpu.matmul %113, %116, %cst_145 {dimension_numbers = #tpu.dot_dimension_numbers<[1], [0], [0], [1], [0, 0, 1, 1], [], []>} : vector<64x40xf32>, vector<40x32xf32>, vector<64x32xf32> -> vector<64x32xf32>
    %118 = arith.addf %114, %117 : vector<64x32xf32>
    %c0_146 = arith.constant 0 : index
    %c0_147 = arith.constant 0 : index
    %119 = vector.load %arg8[%c0_146, %c0_147] : memref<64x32xf32, #tpu.memory_space<vmem>>, vector<64x32xf32>
    tpu.vector_store %arg8[%c0_146, %c0_147], %118 {strides = array<i32>} : memref<64x32xf32, #tpu.memory_space<vmem>>, vector<64x32xf32>,
    %c0_148 = arith.constant 0 : index
    %c1_149 = arith.constant 1 : index
    %c0_150 = arith.constant 0 : index
    %120 = vector.load %arg7[%c0_148, %c1_149, %c0_150] : memref<10x10x40xf32, #tpu.memory_space<vmem>>, vector<8x8x40xf32>
    %121 = vector.shape_cast %120 : vector<8x8x40xf32> to vector<64x40xf32>
    %c0_151 = arith.constant 0 : index
    %c0_152 = arith.constant 0 : index
    %122 = vector.load %arg8[%c0_151, %c0_152] : memref<64x32xf32, #tpu.memory_space<vmem>>, vector<64x32xf32>
    %c1_153 = arith.constant 1 : index
    %c0_154 = arith.constant 0 : index
    %c0_155 = arith.constant 0 : index
    %123 = vector.load %arg5[%c1_153, %c0_154, %c0_155] : memref<9x40x32xf32, #tpu.memory_space<vmem>>, vector<1x40x32xf32>
    %124 = vector.shape_cast %123 : vector<1x40x32xf32> to vector<40x32xf32>
    %cst_156 = arith.constant dense<0.000000e+00> : vector<64x32xf32>
    %125 = tpu.matmul %121, %124, %cst_156 {dimension_numbers = #tpu.dot_dimension_numbers<[1], [0], [0], [1], [0, 0, 1, 1], [], []>} : vector<64x40xf32>, vector<40x32xf32>, vector<64x32xf32> -> vector<64x32xf32>
    %126 = arith.addf %122, %125 : vector<64x32xf32>
    %c0_157 = arith.constant 0 : index
    %c0_158 = arith.constant 0 : index
    %127 = vector.load %arg8[%c0_157, %c0_158] : memref<64x32xf32, #tpu.memory_space<vmem>>, vector<64x32xf32>
    tpu.vector_store %arg8[%c0_157, %c0_158], %126 {strides = array<i32>} : memref<64x32xf32, #tpu.memory_space<vmem>>, vector<64x32xf32>,
    %c0_159 = arith.constant 0 : index
    %c2_160 = arith.constant 2 : index
    %c0_161 = arith.constant 0 : index
    %128 = vector.load %arg7[%c0_159, %c2_160, %c0_161] : memref<10x10x40xf32, #tpu.memory_space<vmem>>, vector<8x8x40xf32>
    %129 = vector.shape_cast %128 : vector<8x8x40xf32> to vector<64x40xf32>
    %c0_162 = arith.constant 0 : index
    %c0_163 = arith.constant 0 : index
    %130 = vector.load %arg8[%c0_162, %c0_163] : memref<64x32xf32, #tpu.memory_space<vmem>>, vector<64x32xf32>
    %c2_164 = arith.constant 2 : index
    %c0_165 = arith.constant 0 : index
    %c0_166 = arith.constant 0 : index
    %131 = vector.load %arg5[%c2_164, %c0_165, %c0_166] : memref<9x40x32xf32, #tpu.memory_space<vmem>>, vector<1x40x32xf32>
    %132 = vector.shape_cast %131 : vector<1x40x32xf32> to vector<40x32xf32>
    %cst_167 = arith.constant dense<0.000000e+00> : vector<64x32xf32>
    %133 = tpu.matmul %129, %132, %cst_167 {dimension_numbers = #tpu.dot_dimension_numbers<[1], [0], [0], [1], [0, 0, 1, 1], [], []>} : vector<64x40xf32>, vector<40x32xf32>, vector<64x32xf32> -> vector<64x32xf32>
    %134 = arith.addf %130, %133 : vector<64x32xf32>
    %c0_168 = arith.constant 0 : index
    %c0_169 = arith.constant 0 : index
    %135 = vector.load %arg8[%c0_168, %c0_169] : memref<64x32xf32, #tpu.memory_space<vmem>>, vector<64x32xf32>
    tpu.vector_store %arg8[%c0_168, %c0_169], %134 {strides = array<i32>} : memref<64x32xf32, #tpu.memory_space<vmem>>, vector<64x32xf32>,
    %c1_170 = arith.constant 1 : index
    %c0_171 = arith.constant 0 : index
    %c0_172 = arith.constant 0 : index
    %136 = vector.load %arg7[%c1_170, %c0_171, %c0_172] : memref<10x10x40xf32, #tpu.memory_space<vmem>>, vector<8x8x40xf32>
    %137 = vector.shape_cast %136 : vector<8x8x40xf32> to vector<64x40xf32>
    %c0_173 = arith.constant 0 : index
    %c0_174 = arith.constant 0 : index
    %138 = vector.load %arg8[%c0_173, %c0_174] : memref<64x32xf32, #tpu.memory_space<vmem>>, vector<64x32xf32>
    %c3_175 = arith.constant 3 : index
    %c0_176 = arith.constant 0 : index
    %c0_177 = arith.constant 0 : index
    %139 = vector.load %arg5[%c3_175, %c0_176, %c0_177] : memref<9x40x32xf32, #tpu.memory_space<vmem>>, vector<1x40x32xf32>
    %140 = vector.shape_cast %139 : vector<1x40x32xf32> to vector<40x32xf32>
    %cst_178 = arith.constant dense<0.000000e+00> : vector<64x32xf32>
    %141 = tpu.matmul %137, %140, %cst_178 {dimension_numbers = #tpu.dot_dimension_numbers<[1], [0], [0], [1], [0, 0, 1, 1], [], []>} : vector<64x40xf32>, vector<40x32xf32>, vector<64x32xf32> -> vector<64x32xf32>
    %142 = arith.addf %138, %141 : vector<64x32xf32>
    %c0_179 = arith.constant 0 : index
    %c0_180 = arith.constant 0 : index
    %143 = vector.load %arg8[%c0_179, %c0_180] : memref<64x32xf32, #tpu.memory_space<vmem>>, vector<64x32xf32>
    tpu.vector_store %arg8[%c0_179, %c0_180], %142 {strides = array<i32>} : memref<64x32xf32, #tpu.memory_space<vmem>>, vector<64x32xf32>,
    %c1_181 = arith.constant 1 : index
    %c1_182 = arith.constant 1 : index
    %c0_183 = arith.constant 0 : index
    %144 = vector.load %arg7[%c1_181, %c1_182, %c0_183] : memref<10x10x40xf32, #tpu.memory_space<vmem>>, vector<8x8x40xf32>
    %145 = vector.shape_cast %144 : vector<8x8x40xf32> to vector<64x40xf32>
    %c0_184 = arith.constant 0 : index
    %c0_185 = arith.constant 0 : index
    %146 = vector.load %arg8[%c0_184, %c0_185] : memref<64x32xf32, #tpu.memory_space<vmem>>, vector<64x32xf32>
    %c4_186 = arith.constant 4 : index
    %c0_187 = arith.constant 0 : index
    %c0_188 = arith.constant 0 : index
    %147 = vector.load %arg5[%c4_186, %c0_187, %c0_188] : memref<9x40x32xf32, #tpu.memory_space<vmem>>, vector<1x40x32xf32>
    %148 = vector.shape_cast %147 : vector<1x40x32xf32> to vector<40x32xf32>
    %cst_189 = arith.constant dense<0.000000e+00> : vector<64x32xf32>
    %149 = tpu.matmul %145, %148, %cst_189 {dimension_numbers = #tpu.dot_dimension_numbers<[1], [0], [0], [1], [0, 0, 1, 1], [], []>} : vector<64x40xf32>, vector<40x32xf32>, vector<64x32xf32> -> vector<64x32xf32>
    %150 = arith.addf %146, %149 : vector<64x32xf32>
    %c0_190 = arith.constant 0 : index
    %c0_191 = arith.constant 0 : index
    %151 = vector.load %arg8[%c0_190, %c0_191] : memref<64x32xf32, #tpu.memory_space<vmem>>, vector<64x32xf32>
    tpu.vector_store %arg8[%c0_190, %c0_191], %150 {strides = array<i32>} : memref<64x32xf32, #tpu.memory_space<vmem>>, vector<64x32xf32>,
    %c1_192 = arith.constant 1 : index
    %c2_193 = arith.constant 2 : index
    %c0_194 = arith.constant 0 : index
    %152 = vector.load %arg7[%c1_192, %c2_193, %c0_194] : memref<10x10x40xf32, #tpu.memory_space<vmem>>, vector<8x8x40xf32>
    %153 = vector.shape_cast %152 : vector<8x8x40xf32> to vector<64x40xf32>
    %c0_195 = arith.constant 0 : index
    %c0_196 = arith.constant 0 : index
    %154 = vector.load %arg8[%c0_195, %c0_196] : memref<64x32xf32, #tpu.memory_space<vmem>>, vector<64x32xf32>
    %c5_197 = arith.constant 5 : index
    %c0_198 = arith.constant 0 : index
    %c0_199 = arith.constant 0 : index
    %155 = vector.load %arg5[%c5_197, %c0_198, %c0_199] : memref<9x40x32xf32, #tpu.memory_space<vmem>>, vector<1x40x32xf32>
    %156 = vector.shape_cast %155 : vector<1x40x32xf32> to vector<40x32xf32>
    %cst_200 = arith.constant dense<0.000000e+00> : vector<64x32xf32>
    %157 = tpu.matmul %153, %156, %cst_200 {dimension_numbers = #tpu.dot_dimension_numbers<[1], [0], [0], [1], [0, 0, 1, 1], [], []>} : vector<64x40xf32>, vector<40x32xf32>, vector<64x32xf32> -> vector<64x32xf32>
    %158 = arith.addf %154, %157 : vector<64x32xf32>
    %c0_201 = arith.constant 0 : index
    %c0_202 = arith.constant 0 : index
    %159 = vector.load %arg8[%c0_201, %c0_202] : memref<64x32xf32, #tpu.memory_space<vmem>>, vector<64x32xf32>
    tpu.vector_store %arg8[%c0_201, %c0_202], %158 {strides = array<i32>} : memref<64x32xf32, #tpu.memory_space<vmem>>, vector<64x32xf32>,
    %c2_203 = arith.constant 2 : index
    %c0_204 = arith.constant 0 : index
    %c0_205 = arith.constant 0 : index
    %160 = vector.load %arg7[%c2_203, %c0_204, %c0_205] : memref<10x10x40xf32, #tpu.memory_space<vmem>>, vector<8x8x40xf32>
    %161 = vector.shape_cast %160 : vector<8x8x40xf32> to vector<64x40xf32>
    %c0_206 = arith.constant 0 : index
    %c0_207 = arith.constant 0 : index
    %162 = vector.load %arg8[%c0_206, %c0_207] : memref<64x32xf32, #tpu.memory_space<vmem>>, vector<64x32xf32>
    %c6_208 = arith.constant 6 : index
    %c0_209 = arith.constant 0 : index
    %c0_210 = arith.constant 0 : index
    %163 = vector.load %arg5[%c6_208, %c0_209, %c0_210] : memref<9x40x32xf32, #tpu.memory_space<vmem>>, vector<1x40x32xf32>
    %164 = vector.shape_cast %163 : vector<1x40x32xf32> to vector<40x32xf32>
    %cst_211 = arith.constant dense<0.000000e+00> : vector<64x32xf32>
    %165 = tpu.matmul %161, %164, %cst_211 {dimension_numbers = #tpu.dot_dimension_numbers<[1], [0], [0], [1], [0, 0, 1, 1], [], []>} : vector<64x40xf32>, vector<40x32xf32>, vector<64x32xf32> -> vector<64x32xf32>
    %166 = arith.addf %162, %165 : vector<64x32xf32>
    %c0_212 = arith.constant 0 : index
    %c0_213 = arith.constant 0 : index
    %167 = vector.load %arg8[%c0_212, %c0_213] : memref<64x32xf32, #tpu.memory_space<vmem>>, vector<64x32xf32>
    tpu.vector_store %arg8[%c0_212, %c0_213], %166 {strides = array<i32>} : memref<64x32xf32, #tpu.memory_space<vmem>>, vector<64x32xf32>,
    %c2_214 = arith.constant 2 : index
    %c1_215 = arith.constant 1 : index
    %c0_216 = arith.constant 0 : index
    %168 = vector.load %arg7[%c2_214, %c1_215, %c0_216] : memref<10x10x40xf32, #tpu.memory_space<vmem>>, vector<8x8x40xf32>
    %169 = vector.shape_cast %168 : vector<8x8x40xf32> to vector<64x40xf32>
    %c0_217 = arith.constant 0 : index
    %c0_218 = arith.constant 0 : index
    %170 = vector.load %arg8[%c0_217, %c0_218] : memref<64x32xf32, #tpu.memory_space<vmem>>, vector<64x32xf32>
    %c7_219 = arith.constant 7 : index
    %c0_220 = arith.constant 0 : index
    %c0_221 = arith.constant 0 : index
    %171 = vector.load %arg5[%c7_219, %c0_220, %c0_221] : memref<9x40x32xf32, #tpu.memory_space<vmem>>, vector<1x40x32xf32>
    %172 = vector.shape_cast %171 : vector<1x40x32xf32> to vector<40x32xf32>
    %cst_222 = arith.constant dense<0.000000e+00> : vector<64x32xf32>
    %173 = tpu.matmul %169, %172, %cst_222 {dimension_numbers = #tpu.dot_dimension_numbers<[1], [0], [0], [1], [0, 0, 1, 1], [], []>} : vector<64x40xf32>, vector<40x32xf32>, vector<64x32xf32> -> vector<64x32xf32>
    %174 = arith.addf %170, %173 : vector<64x32xf32>
    %c0_223 = arith.constant 0 : index
    %c0_224 = arith.constant 0 : index
    %175 = vector.load %arg8[%c0_223, %c0_224] : memref<64x32xf32, #tpu.memory_space<vmem>>, vector<64x32xf32>
    tpu.vector_store %arg8[%c0_223, %c0_224], %174 {strides = array<i32>} : memref<64x32xf32, #tpu.memory_space<vmem>>, vector<64x32xf32>,
    %c2_225 = arith.constant 2 : index
    %c2_226 = arith.constant 2 : index
    %c0_227 = arith.constant 0 : index
    %176 = vector.load %arg7[%c2_225, %c2_226, %c0_227] : memref<10x10x40xf32, #tpu.memory_space<vmem>>, vector<8x8x40xf32>
    %177 = vector.shape_cast %176 : vector<8x8x40xf32> to vector<64x40xf32>
    %c0_228 = arith.constant 0 : index
    %c0_229 = arith.constant 0 : index
    %178 = vector.load %arg8[%c0_228, %c0_229] : memref<64x32xf32, #tpu.memory_space<vmem>>, vector<64x32xf32>
    %c8_230 = arith.constant 8 : index
    %c0_231 = arith.constant 0 : index
    %c0_232 = arith.constant 0 : index
    %179 = vector.load %arg5[%c8_230, %c0_231, %c0_232] : memref<9x40x32xf32, #tpu.memory_space<vmem>>, vector<1x40x32xf32>
    %180 = vector.shape_cast %179 : vector<1x40x32xf32> to vector<40x32xf32>
    %cst_233 = arith.constant dense<0.000000e+00> : vector<64x32xf32>
    %181 = tpu.matmul %177, %180, %cst_233 {dimension_numbers = #tpu.dot_dimension_numbers<[1], [0], [0], [1], [0, 0, 1, 1], [], []>} : vector<64x40xf32>, vector<40x32xf32>, vector<64x32xf32> -> vector<64x32xf32>
    %182 = arith.addf %178, %181 : vector<64x32xf32>
    %c0_234 = arith.constant 0 : index
    %c0_235 = arith.constant 0 : index
    %183 = vector.load %arg8[%c0_234, %c0_235] : memref<64x32xf32, #tpu.memory_space<vmem>>, vector<64x32xf32>
    tpu.vector_store %arg8[%c0_234, %c0_235], %182 {strides = array<i32>} : memref<64x32xf32, #tpu.memory_space<vmem>>, vector<64x32xf32>,
    %c0_236 = arith.constant 0 : index
    %c0_237 = arith.constant 0 : index
    %184 = vector.load %arg8[%c0_236, %c0_237] : memref<64x32xf32, #tpu.memory_space<vmem>>, vector<64x32xf32>
    %185 = vector.shape_cast %184 : vector<64x32xf32> to vector<8x8x32xf32>
    %c0_238 = arith.constant 0 : index
    %c1_239 = arith.constant 1 : index
    %c0_240 = arith.constant 0 : index
    %c0_241 = arith.constant 0 : index
    %c0_242 = arith.constant 0 : index
    %186 = vector.load %arg6[%c0_238, %c1_239, %c0_240, %c0_241, %c0_242] : memref<1x2x8x8x32xf32, #tpu.memory_space<vmem>>, vector<1x1x8x8x32xf32>
    %187 = vector.shape_cast %186 : vector<1x1x8x8x32xf32> to vector<8x8x32xf32>
    %188 = vector.shape_cast %185 : vector<8x8x32xf32> to vector<1x1x8x8x32xf32>
    tpu.vector_store %arg6[%c0_238, %c1_239, %c0_240, %c0_241, %c0_242], %188 {strides = array<i32>} : memref<1x2x8x8x32xf32, #tpu.memory_space<vmem>>, vector<1x1x8x8x32xf32>,
    return
  }
  func.func @transform_0(%arg0: i32) -> (i32, i32, i32, i32, i32) {
    %c0_i32 = arith.constant 0 : i32
    %c0_i32_0 = arith.constant 0 : i32
    %c0_i32_1 = arith.constant 0 : i32
    %c0_i32_2 = arith.constant 0 : i32
    %c0_i32_3 = arith.constant 0 : i32
    return %arg0, %c0_i32, %c0_i32_0, %c0_i32_1, %c0_i32_2 : i32, i32, i32, i32, i32
  }
  func.func @transform_1(%arg0: i32) -> (i32, i32) {
    %c0_i32 = arith.constant 0 : i32
    %c0_i32_0 = arith.constant 0 : i32
    %c0_i32_1 = arith.constant 0 : i32
    return %c0_i32, %c0_i32_0 : i32, i32
  }
  func.func @transform_2(%arg0: i32) -> (i32, i32) {
    %c0_i32 = arith.constant 0 : i32
    %c0_i32_0 = arith.constant 0 : i32
    %c0_i32_1 = arith.constant 0 : i32
    return %c0_i32, %c0_i32_0 : i32, i32
  }
  func.func @transform_3(%arg0: i32) -> (i32, i32, i32) {
    %c0_i32 = arith.constant 0 : i32
    %c0_i32_0 = arith.constant 0 : i32
    %c0_i32_1 = arith.constant 0 : i32
    %c0_i32_2 = arith.constant 0 : i32
    return %c0_i32, %c0_i32_0, %c0_i32_1 : i32, i32, i32
  }
  func.func @transform_4(%arg0: i32) -> (i32, i32, i32) {
    %c0_i32 = arith.constant 0 : i32
    %c0_i32_0 = arith.constant 0 : i32
    %c0_i32_1 = arith.constant 0 : i32
    %c0_i32_2 = arith.constant 0 : i32
    return %c0_i32, %c0_i32_0, %c0_i32_1 : i32, i32, i32
  }
  func.func @transform_5(%arg0: i32) -> (i32, i32, i32, i32, i32) {
    %c0_i32 = arith.constant 0 : i32
    %c0_i32_0 = arith.constant 0 : i32
    %c0_i32_1 = arith.constant 0 : i32
    %c0_i32_2 = arith.constant 0 : i32
    %c0_i32_3 = arith.constant 0 : i32
    return %arg0, %c0_i32, %c0_i32_0, %c0_i32_1, %c0_i32_2 : i32, i32, i32, i32, i32
  }
}

</mosaic_0001>

<llo_original>
// kernel: tile.23
$region0: #{tile.23}
  #allocation0 [shape = 's32[1]{0}', space=sflag, size = 0x4, scoped, tag = 'scoped memory for tile.23']
  %s0 = inlined_call_operand.vmem [shape: f32[4], index: 0, kind: input, shape index: {}]
  %s1 = inlined_call_operand.vmem [shape: f32[8,4], index: 1, kind: output, shape index: {}]
  // Predicated region
  $region2: #{tile.23} parent=0 // pred_check
    _
  $region3: #{tile.23} parent=0 // pred_check_branch
    %3 = sbr.rel (0) target = $region5
  $region4: #{tile.23} parent=0 // pred_region
    _
  $region5: #{tile.23} parent=0 // pred_fallthru
    _
  %v4 = vld [vmem:[%s0] ss:$0 sm:$0xff]
  %5 = vst [vmem:[%s1] sm:$0xff] %v4

// kernel: tile.28
$region0: #{tile.28}
  %s0 = inlined_call_operand.vmem [shape: f32[8,4], index: 0, kind: input, shape index: {}]
  %s1 = inlined_call_operand.vmem [shape: f32[1,32], index: 1, kind: output, shape index: {}]
  $region1: #{tile.28} parent=0
    #allocation0 [shape = 'u8[4096]{0}', space=vmem, size = 0x1000, scoped, tag = 'scoped mem for output reshape']
    %v2 = vld [vmem:[%s0] sm:$0x1]
    %vm3 = vcmask 31744
    %4 = vst.msk [vmem:[#allocation0] sm:$0x1] %vm3, %v2
    %s5 = scalar_lea.vmem %s0, 7
    %v6 = vld [vmem:[%s5] sm:$0x1]
    %7 = vrot.lane.b32.xlu0 %v6, 28
    %v8 = vpop.permute.xlu0 %7
    %vm9 = vcmask 261344
    %10 = vst.msk [vmem:[#allocation0] sm:$0x1] %vm9, %v8
    %s11 = scalar_lea.vmem %s0, 6
    %v12 = vld [vmem:[%s11] sm:$0x1]
    %13 = vrot.lane.b32.xlu0 %v12, 24
    %v14 = vpop.permute.xlu0 %13
    %vm15 = vcmask 228544
    %16 = vst.msk [vmem:[#allocation0] sm:$0x1] %vm15, %v14
    %s17 = scalar_lea.vmem %s0, 5
    %v18 = vld [vmem:[%s17] sm:$0x1]
    %19 = vrot.lane.b32.xlu0 %v18, 20
    %v20 = vpop.permute.xlu0 %19
    %vm21 = vcmask 195744
    %22 = vst.msk [vmem:[#allocation0] sm:$0x1] %vm21, %v20
    %s23 = scalar_lea.vmem %s0, 4
    %v24 = vld [vmem:[%s23] sm:$0x1]
    %25 = vrot.lane.b32.xlu0 %v24, 16
    %v26 = vpop.permute.xlu0 %25
    %vm27 = vcmask 162944
    %28 = vst.msk [vmem:[#allocation0] sm:$0x1] %vm27, %v26
    %s29 = scalar_lea.vmem %s0, 3
    %v30 = vld [vmem:[%s29] sm:$0x1]
    %31 = vrot.lane.b32.xlu0 %v30, 12
    %v32 = vpop.permute.xlu0 %31
    %vm33 = vcmask 130144
    %34 = vst.msk [vmem:[#allocation0] sm:$0x1] %vm33, %v32
    %s35 = scalar_lea.vmem %s0, 2
    %v36 = vld [vmem:[%s35] sm:$0x1]
    %37 = vrot.lane.b32.xlu0 %v36, 8
    %v38 = vpop.permute.xlu0 %37
    %vm39 = vcmask 97344
    %40 = vst.msk [vmem:[#allocation0] sm:$0x1] %vm39, %v38
    %s41 = scalar_lea.vmem %s0, 1
    %v42 = vld [vmem:[%s41] sm:$0x1]
    %43 = vrot.lane.b32.xlu0 %v42, 4
    %v44 = vpop.permute.xlu0 %43
    %vm45 = vcmask 64544
    %46 = vst.msk [vmem:[#allocation0] sm:$0x1] %vm45, %v44
    %s48 = sshllo.u32 0, 1
    %v50 = vld [vmem:[#allocation0] sm:%s48]
    %s51 = sshllo.u32 0, 1
    %52 = vst [vmem:[%s1] sm:%s51] %v50

// kernel: residual_conv_mod.2
$region0: #{residual_conv_mod.2}
  #allocation0 [shape = 'u32[]', space=smem, size = 0x4, offset = 0x4, fixed_abs, tag = 'smem constant byte address 0x4 - core index']
  #allocation1 [shape = 'u32[144,128]{1,0:T(1,128)}', space=vmem, size = 0x12000, scoped, tag = 'internal scratch']
  #allocation2 [shape = 'f32[10,10,40]{2,1,0:T(8,128)}', space=vmem, size = 0x14000, scoped, tag = 'scratch operand']
  #allocation3 [shape = 'f32[64,32]{1,0:T(8,128)}', space=vmem, size = 0x8000, scoped, tag = 'scratch operand']
  %s0 = inlined_call_operand.vmem [shape: f32[2,8,8,32], index: 0, kind: input, shape index: {}]
  %s1 = inlined_call_operand.vmem [shape: f32[2,8,8,32], index: 1, kind: input, shape index: {}]
  %s2 = inlined_call_operand.vmem [shape: f32[9,40,32], index: 2, kind: input, shape index: {}]
  %s3 = inlined_call_operand.vmem [shape: f32[9,40,32], index: 3, kind: input, shape index: {}]
  %s4 = inlined_call_operand.vmem [shape: f32[2,2,8,8,32], index: 4, kind: output, shape index: {0}]
  %s5 = inlined_call_operand.vmem [shape: f32[2,4,32], index: 5, kind: output, shape index: {1}]
  %6 = xla_tuple %s4, %s5
  %s7 = sld [smem:[#allocation0]]
  $region57: #{residual_conv_mod.2} parent=0
    _
  %s9 = ssub.s32 1, %s7
  %s10 = scalar_select 0, %s9, %s7
  loop: start=0, step=1, limit=4
  $region2: #{residual_conv_mod.2} parent=0 // loop_pre_header
    _
  $region3: #{residual_conv_mod.2} parent=0 // loop_header
    %s12 = sphi 0, %s16
    %p13 = scmp.ge.s32.totalorder %s12, 4
    %s22 = sphi 0, %s24
    %s25 = sphi 0, %s22
    %s26 = sphi 0, %s25
    %s42 = sphi 0, %s26
    %s48 = sphi 0, %s50
    %s51 = sphi 0, %s48
    %s52 = sphi 0, %s51
    %s68 = sphi 0, %s52
    %s72 = sphi 0, %s72
    %s74 = sphi 0, %s72
    %s75 = sphi 0, %s74
    %s89 = sphi 0, %s75
    %s93 = sphi 0, %s93
    %s95 = sphi 0, %s93
    %s96 = sphi 0, %s95
    %s110 = sphi 0, %s96
    %s116 = sphi 0, %s118
    %s119 = sphi 0, %s116
    %s120 = sphi 0, %s119
    %s136 = sphi 0, %s120
    %s142 = sphi 0, %s144
    %s145 = sphi 0, %s142
    %s146 = sphi 0, %s145
    %s162 = sphi 0, %s146
  $region4: #{residual_conv_mod.2} parent=0 // loop_header_branch
    %15 = sbr.rel (%p13) target = $region8
  $region5: #{residual_conv_mod.2} parent=0 // loop_body
    %s17 = ssub.s32 %s12, 1
    %s18 = ssub.s32 %s12, 2
    %s19 = sadd.s32 %s12, 1
    %s20 = ssub.s32 %s12, %s19
    %p21 = scmp.eq.s32.totalorder %s20, 0
    %s23 = sadd.s32 %s22, 1
    %s24 = scalar_select %p21, %s22, %s23
    %p27 = pneg %p21
    %p28 = scmp.eq.s32.totalorder %s12, 1
    %p29 = por %p27, %p28
    %p30 = scmp.ne.s32.totalorder %s22, %s25
    %p31 = scmp.eq.s32.totalorder %s12, 0
    %p32 = por %p30, %p31
    %p33 = scmp.ne.s32.totalorder %s22, %s25
    %p34 = scmp.eq.s32.totalorder %s17, 1
    %p35 = por %p33, %p34
    %p36 = scmp.ne.s32.totalorder %s25, %s26
    %p37 = scmp.eq.s32.totalorder %s17, 0
    %p38 = por %p36, %p37
    %p39 = scmp.ne.s32.totalorder %s25, %s26
    %p40 = scmp.eq.s32.totalorder %s18, 1
    %p41 = por %p39, %p40
    %p43 = scmp.ne.s32.totalorder %s26, %s42
    %p44 = scmp.eq.s32.totalorder %s18, 0
    %p45 = por %p43, %p44
    %s46 = ssub.s32 %s12, %s19
    %p47 = scmp.eq.s32.totalorder %s46, 0
    %s49 = sadd.s32 %s48, 1
    %s50 = scalar_select %p47, %s48, %s49
    %p53 = pneg %p47
    %p54 = scmp.eq.s32.totalorder %s12, 1
    %p55 = por %p53, %p54
    %p56 = scmp.ne.s32.totalorder %s48, %s51
    %p57 = scmp.eq.s32.totalorder %s12, 0
    %p58 = por %p56, %p57
    %p59 = scmp.ne.s32.totalorder %s48, %s51
    %p60 = scmp.eq.s32.totalorder %s17, 1
    %p61 = por %p59, %p60
    %p62 = scmp.ne.s32.totalorder %s51, %s52
    %p63 = scmp.eq.s32.totalorder %s17, 0
    %p64 = por %p62, %p63
    %p65 = scmp.ne.s32.totalorder %s51, %s52
    %p66 = scmp.eq.s32.totalorder %s18, 1
    %p67 = por %p65, %p66
    %p69 = scmp.ne.s32.totalorder %s52, %s68
    %p70 = scmp.eq.s32.totalorder %s18, 0
    %p71 = por %p69, %p70
    %s73 = sadd.s32 %s72, 1
    %p76 = scmp.eq.s32.totalorder %s12, 1
    %p77 = scmp.ne.s32.totalorder %s72, %s74
    %p78 = scmp.eq.s32.totalorder %s12, 0
    %p79 = por %p77, %p78
    %p80 = scmp.ne.s32.totalorder %s72, %s74
    %p81 = scmp.eq.s32.totalorder %s17, 1
    %p82 = por %p80, %p81
    %p83 = scmp.ne.s32.totalorder %s74, %s75
    %p84 = scmp.eq.s32.totalorder %s17, 0
    %p85 = por %p83, %p84
    %p86 = scmp.ne.s32.totalorder %s74, %s75
    %p87 = scmp.eq.s32.totalorder %s18, 1
    %p88 = por %p86, %p87
    %p90 = scmp.ne.s32.totalorder %s75, %s89
    %p91 = scmp.eq.s32.totalorder %s18, 0
    %p92 = por %p90, %p91
    %s94 = sadd.s32 %s93, 1
    %p97 = scmp.eq.s32.totalorder %s12, 1
    %p98 = scmp.ne.s32.totalorder %s93, %s95
    %p99 = scmp.eq.s32.totalorder %s12, 0
    %p100 = por %p98, %p99
    %p101 = scmp.ne.s32.totalorder %s93, %s95
    %p102 = scmp.eq.s32.totalorder %s17, 1
    %p103 = por %p101, %p102
    %p104 = scmp.ne.s32.totalorder %s95, %s96
    %p105 = scmp.eq.s32.totalorder %s17, 0
    %p106 = por %p104, %p105
    %p107 = scmp.ne.s32.totalorder %s95, %s96
    %p108 = scmp.eq.s32.totalorder %s18, 1
    %p109 = por %p107, %p108
    %p111 = scmp.ne.s32.totalorder %s96, %s110
    %p112 = scmp.eq.s32.totalorder %s18, 0
    %p113 = por %p111, %p112
    %s114 = ssub.s32 %s12, %s19
    %p115 = scmp.eq.s32.totalorder %s114, 0
    %s117 = sadd.s32 %s116, 1
    %s118 = scalar_select %p115, %s116, %s117
    %p121 = pneg %p115
    %p122 = scmp.eq.s32.totalorder %s12, 1
    %p123 = por %p121, %p122
    %p124 = scmp.ne.s32.totalorder %s116, %s119
    %p125 = scmp.eq.s32.totalorder %s12, 0
    %p126 = por %p124, %p125
    %p127 = scmp.ne.s32.totalorder %s116, %s119
    %p128 = scmp.eq.s32.totalorder %s17, 1
    %p129 = por %p127, %p128
    %p130 = scmp.ne.s32.totalorder %s119, %s120
    %p131 = scmp.eq.s32.totalorder %s17, 0
    %p132 = por %p130, %p131
    %p133 = scmp.ne.s32.totalorder %s119, %s120
    %p134 = scmp.eq.s32.totalorder %s18, 1
    %p135 = por %p133, %p134
    %p137 = scmp.ne.s32.totalorder %s120, %s136
    %p138 = scmp.eq.s32.totalorder %s18, 0
    %p139 = por %p137, %p138
    %s140 = ssub.s32 %s12, %s19
    %p141 = scmp.eq.s32.totalorder %s140, 0
    %s143 = sadd.s32 %s142, 1
    %s144 = scalar_select %p141, %s142, %s143
    %p147 = pneg %p141
    %p148 = scmp.eq.s32.totalorder %s12, 1
    %p149 = por %p147, %p148
    %p150 = scmp.ne.s32.totalorder %s142, %s145
    %p151 = scmp.eq.s32.totalorder %s12, 0
    %p152 = por %p150, %p151
    %p153 = scmp.ne.s32.totalorder %s142, %s145
    %p154 = scmp.eq.s32.totalorder %s17, 1
    %p155 = por %p153, %p154
    %p156 = scmp.ne.s32.totalorder %s145, %s146
    %p157 = scmp.eq.s32.totalorder %s17, 0
    %p158 = por %p156, %p157
    %p159 = scmp.ne.s32.totalorder %s145, %s146
    %p160 = scmp.eq.s32.totalorder %s18, 1
    %p161 = por %p159, %p160
    %p163 = scmp.ne.s32.totalorder %s146, %s162
    %p164 = scmp.eq.s32.totalorder %s18, 0
    %p165 = por %p163, %p164
    %p166 = scmp.le.s32.totalorder 1, %s12
    %p167 = scmp.lt.s32.totalorder %s12, 3
    %p168 = pnand %p166, %p167
    %p169 = pneg %p168
    // Predicated region
    $region9: #{residual_conv_mod.2} parent=5 // pred_check
      _
    $region10: #{residual_conv_mod.2} parent=5 // pred_check_branch
      %171 = sbr.rel (%p168) target = $region12
    $region11: #{residual_conv_mod.2} parent=5 // pred_region
      %s172 = ssub.s32 %s12, 1
      // Predicated region
      $region13: #{residual_conv_mod.2} parent=11 // pred_check
        %p173 = pneg %p85
      $region14: #{residual_conv_mod.2} parent=11 // pred_check_branch
        %175 = sbr.rel (%p173) target = $region16
      $region15: #{residual_conv_mod.2} parent=11 // pred_region
        _
      $region16: #{residual_conv_mod.2} parent=11 // pred_fallthru
        _
      // Predicated region
      $region17: #{residual_conv_mod.2} parent=11 // pred_check
        %p176 = pneg %p106
      $region18: #{residual_conv_mod.2} parent=11 // pred_check_branch
        %178 = sbr.rel (%p176) target = $region20
      $region19: #{residual_conv_mod.2} parent=11 // pred_region
        _
      $region20: #{residual_conv_mod.2} parent=11 // pred_fallthru
        _
    $region12: #{residual_conv_mod.2} parent=5 // pred_fallthru
      _
    %p179 = scmp.lt.s32.totalorder %s12, 2
    // Predicated region
    $region21: #{residual_conv_mod.2} parent=5 // pred_check
      %p180 = pneg %p179
    $region22: #{residual_conv_mod.2} parent=5 // pred_check_branch
      %182 = sbr.rel (%p180) target = $region24
    $region23: #{residual_conv_mod.2} parent=5 // pred_region
      // Predicated region
      $region25: #{residual_conv_mod.2} parent=23 // pred_check
        %p183 = pneg %p32
      $region26: #{residual_conv_mod.2} parent=23 // pred_check_branch
        %185 = sbr.rel (%p183) target = $region28
      $region27: #{residual_conv_mod.2} parent=23 // pred_region
        %p186 = scmp.lt.s32.totalorder %s12, 1
        %s187 = scalar_select %p186, %s12, 1
        %s188 = smul.addr %s187, 8
        %s189 = smul.addr %s188, 8
        %s190 = scalar_lea.vmem %s0, %s189
      $region28: #{residual_conv_mod.2} parent=23 // pred_fallthru
        _
      // Predicated region
      $region29: #{residual_conv_mod.2} parent=23 // pred_check
        %p191 = pneg %p58
      $region30: #{residual_conv_mod.2} parent=23 // pred_check_branch
        %193 = sbr.rel (%p191) target = $region32
      $region31: #{residual_conv_mod.2} parent=23 // pred_region
        %p194 = scmp.lt.s32.totalorder %s12, 1
        %s195 = scalar_select %p194, %s12, 1
        %s196 = smul.addr %s195, 8
        %s197 = smul.addr %s196, 8
        %s198 = scalar_lea.vmem %s1, %s197
      $region32: #{residual_conv_mod.2} parent=23 // pred_fallthru
        _
    $region24: #{residual_conv_mod.2} parent=5 // pred_fallthru
      _
    %p199 = scmp.le.s32.totalorder 1, %s12
    %p200 = scmp.lt.s32.totalorder %s12, 3
    %p201 = pnand %p199, %p200
    %p202 = pneg %p201
    // Predicated region
    $region33: #{residual_conv_mod.2} parent=5 // pred_check
      _
    $region34: #{residual_conv_mod.2} parent=5 // pred_check_branch
      %204 = sbr.rel (%p201) target = $region36
    $region35: #{residual_conv_mod.2} parent=5 // pred_region
      %s205 = ssub.s32 %s12, 1
      %p206 = scmp.lt.s32.totalorder %s17, 1
      %s207 = scalar_select %p206, %s17, 1
      %s208 = smul.addr %s207, 8
      %s209 = smul.addr %s208, 8
      %s210 = scalar_lea.vmem %s0, %s209
      %p211 = pneg %p38
      %p212 = pneg %p35
      %p213 = scmp.lt.s32.totalorder %s17, 1
      %s214 = scalar_select %p213, %s17, 1
      %s215 = smul.addr %s214, 8
      %s216 = smul.addr %s215, 8
      %s217 = scalar_lea.vmem %s1, %s216
      %p218 = pneg %p64
      %p219 = pneg %p61
      %p220 = pneg %p85
      %p221 = pneg %p82
      %p222 = pneg %p106
      %p223 = pneg %p103
      %p224 = pneg %p132
      %p225 = pneg %p129
      %p226 = scmp.lt.s32.totalorder %s17, 1
      %s227 = scalar_select %p226, %s17, 1
      %s228 = smul.addr %s227, 16
      %s229 = smul.addr %s228, 8
      %s230 = scalar_lea.vmem %s4, %s229
      %p231 = pneg %p158
      %p232 = pneg %p155
      %p233 = scmp.lt.s32.totalorder %s17, 1
      %s234 = scalar_select %p233, %s17, 1
      %s235 = smul.addr %s234, 4
      %s236 = scalar_lea.vmem %s5, %s235
      %p237 = scmp.lt.s32.totalorder %s17, 1
      %s238 = scalar_select %p237, %s17, 1
      %s239 = smul.addr %s238, 8
      %s240 = smul.addr %s239, 8
      %s241 = scalar_lea.vmem %s0, %s240
      %p242 = scmp.lt.s32.totalorder %s17, 1
      %s243 = scalar_select %p242, %s17, 1
      %s244 = smul.addr %s243, 8
      %s245 = smul.addr %s244, 8
      %s246 = scalar_lea.vmem %s1, %s245
      %p247 = scmp.lt.s32.totalorder %s17, 1
      %s248 = scalar_select %p247, %s17, 1
      %s249 = smul.addr %s248, 16
      %s250 = smul.addr %s249, 8
      %s251 = scalar_lea.vmem %s4, %s250
      %p252 = scmp.lt.s32.totalorder %s17, 1
      %s253 = scalar_select %p252, %s17, 1
      %s254 = smul.addr %s253, 4
      %s255 = scalar_lea.vmem %s5, %s254
      %vm256 = vcmask 326656
      %257 = vst.msk [vmem:[#allocation2] sm:$0xff] %vm256, 0.0
      %vm258 = vcmask 320512
      %259 = vst.msk [vmem:[#allocation2 + $0x8] sm:$0x3] %vm258, 0.0
      %260 = vst.msk [vmem:[#allocation2 + $0x10] sm:$0xff] %vm256, 0.0
      %261 = vst.msk [vmem:[#allocation2 + $0x18] sm:$0x3] %vm258, 0.0
      %262 = vst.msk [vmem:[#allocation2 + $0x20] sm:$0xff] %vm256, 0.0
      %263 = vst.msk [vmem:[#allocation2 + $0x28] sm:$0x3] %vm258, 0.0
      %264 = vst.msk [vmem:[#allocation2 + $0x30] sm:$0xff] %vm256, 0.0
      %265 = vst.msk [vmem:[#allocation2 + $0x38] sm:$0x3] %vm258, 0.0
      %266 = vst.msk [vmem:[#allocation2 + $0x40] sm:$0xff] %vm256, 0.0
      %267 = vst.msk [vmem:[#allocation2 + $0x48] sm:$0x3] %vm258, 0.0
      %268 = vst.msk [vmem:[#allocation2 + $0x50] sm:$0xff] %vm256, 0.0
      %269 = vst.msk [vmem:[#allocation2 + $0x58] sm:$0x3] %vm258, 0.0
      %270 = vst.msk [vmem:[#allocation2 + $0x60] sm:$0xff] %vm256, 0.0
      %271 = vst.msk [vmem:[#allocation2 + $0x68] sm:$0x3] %vm258, 0.0
      %272 = vst.msk [vmem:[#allocation2 + $0x70] sm:$0xff] %vm256, 0.0
      %273 = vst.msk [vmem:[#allocation2 + $0x78] sm:$0x3] %vm258, 0.0
      %274 = vst.msk [vmem:[#allocation2 + $0x80] sm:$0xff] %vm256, 0.0
      %275 = vst.msk [vmem:[#allocation2 + $0x88] sm:$0x3] %vm258, 0.0
      %276 = vst.msk [vmem:[#allocation2 + $0x90] sm:$0xff] %vm256, 0.0
      %277 = vst.msk [vmem:[#allocation2 + $0x98] sm:$0x3] %vm258, 0.0
      %v278 = vld [vmem:[%s246] sm:$0xff]
      %v279 = vld [vmem:[%s246 + $0x8] sm:$0xff]
      %v280 = vld [vmem:[%s246 + $0x10] sm:$0xff]
      %v281 = vld [vmem:[%s246 + $0x18] sm:$0xff]
      %v282 = vld [vmem:[%s246 + $0x20] sm:$0xff]
      %v283 = vld [vmem:[%s246 + $0x28] sm:$0xff]
      %v284 = vld [vmem:[%s246 + $0x30] sm:$0xff]
      %v285 = vld [vmem:[%s246 + $0x38] sm:$0xff]
      %294 = vrot.lane.b32.xlu0 %v278, 4
      %v295 = vpop.permute.xlu0 %294
      %296 = vrot.lane.b32.xlu0 %v279, 4
      %v297 = vpop.permute.xlu0 %296
      %298 = vrot.lane.b32.xlu0 %v280, 4
      %v299 = vpop.permute.xlu0 %298
      %300 = vrot.lane.b32.xlu0 %v281, 4
      %v301 = vpop.permute.xlu0 %300
      %302 = vrot.lane.b32.xlu0 %v282, 4
      %v303 = vpop.permute.xlu0 %302
      %304 = vrot.lane.b32.xlu0 %v283, 4
      %v305 = vpop.permute.xlu0 %304
      %306 = vrot.lane.b32.xlu0 %v284, 4
      %v307 = vpop.permute.xlu0 %306
      %308 = vrot.lane.b32.xlu0 %v285, 4
      %v309 = vpop.permute.xlu0 %308
      %s318 = scalar_lea.vmem [#allocation2], 16
      %vm319 = vcmask 293920
      %320 = vst.msk [vmem:[%s318 + $0x1] sm:$0xff] %vm319, %v295
      %321 = vst.msk [vmem:[%s318 + $0x11] sm:$0xff] %vm319, %v297
      %322 = vst.msk [vmem:[%s318 + $0x21] sm:$0xff] %vm319, %v299
      %323 = vst.msk [vmem:[%s318 + $0x31] sm:$0xff] %vm319, %v301
      %324 = vst.msk [vmem:[%s318 + $0x41] sm:$0xff] %vm319, %v303
      %325 = vst.msk [vmem:[%s318 + $0x51] sm:$0xff] %vm319, %v305
      %326 = vst.msk [vmem:[%s318 + $0x61] sm:$0xff] %vm319, %v307
      %327 = vst.msk [vmem:[%s318 + $0x71] sm:$0xff] %vm319, %v309
      %v328 = vld [vmem:[%s241] sm:$0xff]
      %v329 = vld [vmem:[%s241 + $0x8] sm:$0xff]
      %v330 = vld [vmem:[%s241 + $0x10] sm:$0xff]
      %v331 = vld [vmem:[%s241 + $0x18] sm:$0xff]
      %v332 = vld [vmem:[%s241 + $0x20] sm:$0xff]
      %v333 = vld [vmem:[%s241 + $0x28] sm:$0xff]
      %v334 = vld [vmem:[%s241 + $0x30] sm:$0xff]
      %v335 = vld [vmem:[%s241 + $0x38] sm:$0xff]
      %vm336 = vcmask 261120
      %337 = vst.msk [vmem:[#allocation3] sm:$0xff] %vm336, %v328
      %338 = vst.msk [vmem:[#allocation3 + $0x8] sm:$0xff] %vm336, %v329
      %339 = vst.msk [vmem:[#allocation3 + $0x10] sm:$0xff] %vm336, %v330
      %340 = vst.msk [vmem:[#allocation3 + $0x18] sm:$0xff] %vm336, %v331
      %341 = vst.msk [vmem:[#allocation3 + $0x20] sm:$0xff] %vm336, %v332
      %342 = vst.msk [vmem:[#allocation3 + $0x28] sm:$0xff] %vm336, %v333
      %343 = vst.msk [vmem:[#allocation3 + $0x30] sm:$0xff] %vm336, %v334
      %344 = vst.msk [vmem:[#allocation3 + $0x38] sm:$0xff] %vm336, %v335
      %v345 = vld [vmem:[#allocation2] sm:$0xff]
      %v346 = vld [vmem:[#allocation2 + $0x10] sm:$0xff]
      %v347 = vld [vmem:[#allocation2 + $0x20] sm:$0xff]
      %v348 = vld [vmem:[#allocation2 + $0x30] sm:$0xff]
      %v349 = vld [vmem:[#allocation2 + $0x40] sm:$0xff]
      %v350 = vld [vmem:[#allocation2 + $0x50] sm:$0xff]
      %v351 = vld [vmem:[#allocation2 + $0x60] sm:$0xff]
      %v352 = vld [vmem:[#allocation2 + $0x70] sm:$0xff]
      %v353 = vld [vmem:[#allocation3] sm:$0xff]
      %v354 = vld [vmem:[#allocation3 + $0x8] sm:$0xff]
      %v355 = vld [vmem:[#allocation3 + $0x10] sm:$0xff]
      %v356 = vld [vmem:[#allocation3 + $0x18] sm:$0xff]
      %v357 = vld [vmem:[#allocation3 + $0x20] sm:$0xff]
      %v358 = vld [vmem:[#allocation3 + $0x28] sm:$0xff]
      %v359 = vld [vmem:[#allocation3 + $0x30] sm:$0xff]
      %v360 = vld [vmem:[#allocation3 + $0x38] sm:$0xff]
      %v361 = vld [vmem:[%s2] sm:$0xff]
      %v362 = vld [vmem:[%s2 + $0x8] sm:$0xff]
      %v363 = vld [vmem:[%s2 + $0x10] sm:$0xff]
      %v364 = vld [vmem:[%s2 + $0x18] sm:$0xff]
      %v365 = vld [vmem:[%s2 + $0x20] sm:$0xff]
      %v367 = vsel %vm256, %v345, 0
      %v370 = vsel %vm256, %v346, 0
      %v373 = vsel %vm256, %v347, 0
      %v376 = vsel %vm256, %v348, 0
      %v379 = vsel %vm256, %v349, 0
      %v382 = vsel %vm256, %v350, 0
      %v385 = vsel %vm256, %v351, 0
      %v388 = vsel %vm256, %v352, 0
      %390 = vmatprep.subr.mxu0 0.0
      %391 = vmatpush1.msra.mxu0 %v361
      %392 = vmatprep.subr.mxu0 0.0
      %393 = vmatpush1.msra.mxu0 %v362
      %394 = vmatprep.subr.mxu0 0.0
      %395 = vmatpush1.msra.mxu0 %v363
      %396 = vmatprep.subr.mxu0 0.0
      %397 = vmatpush1.msra.mxu0 %v364
      %398 = vmatprep.subr.mxu0 0.0
      %399 = vmatpush1.msra.mxu0 %v365
      %400 = vmatprep.subr.mxu0 0.0
      %401 = vmatpush1.msra.mxu0 0.0
      %402 = vmatprep.subr.mxu0 0.0
      %403 = vmatpush1.msra.mxu0 0.0
      %404 = vmatprep.subr.mxu0 0.0
      %405 = vmatpush1.msra.mxu0 0.0
      %406 = vmatprep.subr.mxu0 0.0
      %407 = vmatpush1.msra.mxu0 0.0
      %408 = vmatprep.subr.mxu0 0.0
      %409 = vmatpush1.msra.mxu0 0.0
      %410 = vmatprep.subr.mxu0 0.0
      %411 = vmatpush1.msra.mxu0 0.0
      %412 = vmatprep.subr.mxu0 0.0
      %413 = vmatpush1.msra.mxu0 0.0
      %414 = vmatprep.subr.mxu0 0.0
      %415 = vmatpush1.msra.mxu0 0.0
      %416 = vmatprep.subr.mxu0 0.0
      %417 = vmatpush1.msra.mxu0 0.0
      %418 = vmatprep.subr.mxu0 0.0
      %419 = vmatpush1.msra.mxu0 0.0
      %420 = vmatprep.subr.mxu0 0.0
      %421 = vmatpush1.msra.mxu0 0.0
      %422 = vmatprep.subr.mxu0 0.0
      %423 = vmatpush1.msra.mxu0 0.0
      %424 = vmatprep.subr.mxu0 0.0
      %425 = vmatpush1.msra.mxu0 0.0
      %426 = vmatprep.subr.mxu0 0.0
      %427 = vmatpush1.msra.mxu0 0.0
      %428 = vmatprep.subr.mxu0 0.0
      %429 = vmatpush1.msra.mxu0 0.0
      %430 = vmatprep.subr.mxu0 0.0
      %431 = vmatpush1.msra.mxu0 0.0
      %432 = vmatprep.subr.mxu0 0.0
      %433 = vmatpush1.msra.mxu0 0.0
      %434 = vmatprep.subr.mxu0 0.0
      %435 = vmatpush1.msra.mxu0 0.0
      %436 = vmatprep.subr.mxu0 0.0
      %437 = vmatpush1.msra.mxu0 0.0
      %438 = vmatprep.subr.mxu0 0.0
      %439 = vmatpush1.msra.mxu0 0.0
      %440 = vmatprep.subr.mxu0 0.0
      %441 = vmatpush1.msra.mxu0 0.0
      %442 = vmatprep.subr.mxu0 0.0
      %443 = vmatpush1.msra.mxu0 0.0
      %444 = vmatprep.subr.mxu0 0.0
      %445 = vmatpush1.msra.mxu0 0.0
      %446 = vmatprep.subr.mxu0 0.0
      %447 = vmatpush1.msra.mxu0 0.0
      %448 = vmatprep.subr.mxu0 0.0
      %449 = vmatpush1.msra.mxu0 0.0
      %450 = vmatprep.subr.mxu0 0.0
      %451 = vmatpush1.msra.mxu0 0.0
      %452 = vmatprep.subr.mxu0 0.0
      %453 = vmatpush1.msra.mxu0 0.0
      %454 = vmatprep.mubr.f32.mxu0 0.0
      %455 = vmatmul.mubr.f32.gmra.mrb[0].mxu0 %v367
      %v456 = vpop.f32.mrb[0].mxu0
      %v457 = vadd.f32 0.0, %v456
      %v458 = vpop.f32.mrb[0].mxu0
      %459 = vmatprep.mubr.f32.mxu0 0.0
      %460 = vmatmul.mubr.f32.gmra.mrb[0].mxu0 %v370
      %v461 = vpop.f32.mrb[0].mxu0
      %v462 = vadd.f32 0.0, %v461
      %v463 = vpop.f32.mrb[0].mxu0
      %464 = vmatprep.mubr.f32.mxu0 0.0
      %465 = vmatmul.mubr.f32.gmra.mrb[0].mxu0 %v373
      %v466 = vpop.f32.mrb[0].mxu0
      %v467 = vadd.f32 0.0, %v466
      %v468 = vpop.f32.mrb[0].mxu0
      %469 = vmatprep.mubr.f32.mxu0 0.0
      %470 = vmatmul.mubr.f32.gmra.mrb[0].mxu0 %v376
      %v471 = vpop.f32.mrb[0].mxu0
      %v472 = vadd.f32 0.0, %v471
      %v473 = vpop.f32.mrb[0].mxu0
      %474 = vmatprep.mubr.f32.mxu0 0.0
      %475 = vmatmul.mubr.f32.gmra.mrb[0].mxu0 %v379
      %v476 = vpop.f32.mrb[0].mxu0
      %v477 = vadd.f32 0.0, %v476
      %v478 = vpop.f32.mrb[0].mxu0
      %479 = vmatprep.mubr.f32.mxu0 0.0
      %480 = vmatmul.mubr.f32.gmra.mrb[0].mxu0 %v382
      %v481 = vpop.f32.mrb[0].mxu0
      %v482 = vadd.f32 0.0, %v481
      %v483 = vpop.f32.mrb[0].mxu0
      %484 = vmatprep.mubr.f32.mxu0 0.0
      %485 = vmatmul.mubr.f32.gmra.mrb[0].mxu0 %v385
      %v486 = vpop.f32.mrb[0].mxu0
      %v487 = vadd.f32 0.0, %v486
      %v488 = vpop.f32.mrb[0].mxu0
      %489 = vmatprep.mubr.f32.mxu0 0.0
      %490 = vmatmul.mubr.f32.gmra.mrb[0].mxu0 %v388
      %v491 = vpop.f32.mrb[0].mxu0
      %v492 = vadd.f32 0.0, %v491
      %v493 = vpop.f32.mrb[0].mxu0
      %494 = vdwg.mxu0
      %v495 = vadd.f32 %v353, %v457
      %v496 = vadd.f32 %v354, %v462
      %v497 = vadd.f32 %v355, %v467
      %v498 = vadd.f32 %v356, %v472
      %v499 = vadd.f32 %v357, %v477
      %v500 = vadd.f32 %v358, %v482
      %v501 = vadd.f32 %v359, %v487
      %v502 = vadd.f32 %v360, %v492
      %503 = vst.msk [vmem:[#allocation3] sm:$0xff] %vm336, %v495
      %504 = vst.msk [vmem:[#allocation3 + $0x8] sm:$0xff] %vm336, %v496
      %505 = vst.msk [vmem:[#allocation3 + $0x10] sm:$0xff] %vm336, %v497
      %506 = vst.msk [vmem:[#allocation3 + $0x18] sm:$0xff] %vm336, %v498
      %507 = vst.msk [vmem:[#allocation3 + $0x20] sm:$0xff] %vm336, %v499
      %508 = vst.msk [vmem:[#allocation3 + $0x28] sm:$0xff] %vm336, %v500
      %509 = vst.msk [vmem:[#allocation3 + $0x30] sm:$0xff] %vm336, %v501
      %510 = vst.msk [vmem:[#allocation3 + $0x38] sm:$0xff] %vm336, %v502
      %v511 = vld [vmem:[#allocation2 + $0x1] sm:$0xff]
      %v512 = vld [vmem:[#allocation2 + $0x11] sm:$0xff]
      %v513 = vld [vmem:[#allocation2 + $0x21] sm:$0xff]
      %v514 = vld [vmem:[#allocation2 + $0x31] sm:$0xff]
      %v515 = vld [vmem:[#allocation2 + $0x41] sm:$0xff]
      %v516 = vld [vmem:[#allocation2 + $0x51] sm:$0xff]
      %v517 = vld [vmem:[#allocation2 + $0x61] sm:$0xff]
      %v518 = vld [vmem:[#allocation2 + $0x71] sm:$0xff]
      %v519 = vld [vmem:[#allocation3] sm:$0xff]
      %v520 = vld [vmem:[#allocation3 + $0x8] sm:$0xff]
      %v521 = vld [vmem:[#allocation3 + $0x10] sm:$0xff]
      %v522 = vld [vmem:[#allocation3 + $0x18] sm:$0xff]
      %v523 = vld [vmem:[#allocation3 + $0x20] sm:$0xff]
      %v524 = vld [vmem:[#allocation3 + $0x28] sm:$0xff]
      %v525 = vld [vmem:[#allocation3 + $0x30] sm:$0xff]
      %v526 = vld [vmem:[#allocation3 + $0x38] sm:$0xff]
      %s527 = scalar_lea.vmem %s2, 40
      %v528 = vld [vmem:[%s527] sm:$0xff]
      %v529 = vld [vmem:[%s527 + $0x8] sm:$0xff]
      %v530 = vld [vmem:[%s527 + $0x10] sm:$0xff]
      %v531 = vld [vmem:[%s527 + $0x18] sm:$0xff]
      %v532 = vld [vmem:[%s527 + $0x20] sm:$0xff]
      %v534 = vsel %vm256, %v511, 0
      %v537 = vsel %vm256, %v512, 0
      %v540 = vsel %vm256, %v513, 0
      %v543 = vsel %vm256, %v514, 0
      %v546 = vsel %vm256, %v515, 0
      %v549 = vsel %vm256, %v516, 0
      %v552 = vsel %vm256, %v517, 0
      %v555 = vsel %vm256, %v518, 0
      %557 = vmatprep.subr.mxu0 0.0
      %558 = vmatpush1.msra.mxu0 %v528
      %559 = vmatprep.subr.mxu0 0.0
      %560 = vmatpush1.msra.mxu0 %v529
      %561 = vmatprep.subr.mxu0 0.0
      %562 = vmatpush1.msra.mxu0 %v530
      %563 = vmatprep.subr.mxu0 0.0
      %564 = vmatpush1.msra.mxu0 %v531
      %565 = vmatprep.subr.mxu0 0.0
      %566 = vmatpush1.msra.mxu0 %v532
      %567 = vmatprep.subr.mxu0 0.0
      %568 = vmatpush1.msra.mxu0 0.0
      %569 = vmatprep.subr.mxu0 0.0
      %570 = vmatpush1.msra.mxu0 0.0
      %571 = vmatprep.subr.mxu0 0.0
      %572 = vmatpush1.msra.mxu0 0.0
      %573 = vmatprep.subr.mxu0 0.0
      %574 = vmatpush1.msra.mxu0 0.0
      %575 = vmatprep.subr.mxu0 0.0
      %576 = vmatpush1.msra.mxu0 0.0
      %577 = vmatprep.subr.mxu0 0.0
      %578 = vmatpush1.msra.mxu0 0.0
      %579 = vmatprep.subr.mxu0 0.0
      %580 = vmatpush1.msra.mxu0 0.0
      %581 = vmatprep.subr.mxu0 0.0
      %582 = vmatpush1.msra.mxu0 0.0
      %583 = vmatprep.subr.mxu0 0.0
      %584 = vmatpush1.msra.mxu0 0.0
      %585 = vmatprep.subr.mxu0 0.0
      %586 = vmatpush1.msra.mxu0 0.0
      %587 = vmatprep.subr.mxu0 0.0
      %588 = vmatpush1.msra.mxu0 0.0
      %589 = vmatprep.subr.mxu0 0.0
      %590 = vmatpush1.msra.mxu0 0.0
      %591 = vmatprep.subr.mxu0 0.0
      %592 = vmatpush1.msra.mxu0 0.0
      %593 = vmatprep.subr.mxu0 0.0
      %594 = vmatpush1.msra.mxu0 0.0
      %595 = vmatprep.subr.mxu0 0.0
      %596 = vmatpush1.msra.mxu0 0.0
      %597 = vmatprep.subr.mxu0 0.0
      %598 = vmatpush1.msra.mxu0 0.0
      %599 = vmatprep.subr.mxu0 0.0
      %600 = vmatpush1.msra.mxu0 0.0
      %601 = vmatprep.subr.mxu0 0.0
      %602 = vmatpush1.msra.mxu0 0.0
      %603 = vmatprep.subr.mxu0 0.0
      %604 = vmatpush1.msra.mxu0 0.0
      %605 = vmatprep.subr.mxu0 0.0
      %606 = vmatpush1.msra.mxu0 0.0
      %607 = vmatprep.subr.mxu0 0.0
      %608 = vmatpush1.msra.mxu0 0.0
      %609 = vmatprep.subr.mxu0 0.0
      %610 = vmatpush1.msra.mxu0 0.0
      %611 = vmatprep.subr.mxu0 0.0
      %612 = vmatpush1.msra.mxu0 0.0
      %613 = vmatprep.subr.mxu0 0.0
      %614 = vmatpush1.msra.mxu0 0.0
      %615 = vmatprep.subr.mxu0 0.0
      %616 = vmatpush1.msra.mxu0 0.0
      %617 = vmatprep.subr.mxu0 0.0
      %618 = vmatpush1.msra.mxu0 0.0
      %619 = vmatprep.subr.mxu0 0.0
      %620 = vmatpush1.msra.mxu0 0.0
      %621 = vmatprep.mubr.f32.mxu0 0.0
      %622 = vmatmul.mubr.f32.gmra.mrb[0].mxu0 %v534
      %v623 = vpop.f32.mrb[0].mxu0
      %v624 = vadd.f32 0.0, %v623
      %v625 = vpop.f32.mrb[0].mxu0
      %626 = vmatprep.mubr.f32.mxu0 0.0
      %627 = vmatmul.mubr.f32.gmra.mrb[0].mxu0 %v537
      %v628 = vpop.f32.mrb[0].mxu0
      %v629 = vadd.f32 0.0, %v628
      %v630 = vpop.f32.mrb[0].mxu0
      %631 = vmatprep.mubr.f32.mxu0 0.0
      %632 = vmatmul.mubr.f32.gmra.mrb[0].mxu0 %v540
      %v633 = vpop.f32.mrb[0].mxu0
      %v634 = vadd.f32 0.0, %v633
      %v635 = vpop.f32.mrb[0].mxu0
      %636 = vmatprep.mubr.f32.mxu0 0.0
      %637 = vmatmul.mubr.f32.gmra.mrb[0].mxu0 %v543
      %v638 = vpop.f32.mrb[0].mxu0
      %v639 = vadd.f32 0.0, %v638
      %v640 = vpop.f32.mrb[0].mxu0
      %641 = vmatprep.mubr.f32.mxu0 0.0
      %642 = vmatmul.mubr.f32.gmra.mrb[0].mxu0 %v546
      %v643 = vpop.f32.mrb[0].mxu0
      %v644 = vadd.f32 0.0, %v643
      %v645 = vpop.f32.mrb[0].mxu0
      %646 = vmatprep.mubr.f32.mxu0 0.0
      %647 = vmatmul.mubr.f32.gmra.mrb[0].mxu0 %v549
      %v648 = vpop.f32.mrb[0].mxu0
      %v649 = vadd.f32 0.0, %v648
      %v650 = vpop.f32.mrb[0].mxu0
      %651 = vmatprep.mubr.f32.mxu0 0.0
      %652 = vmatmul.mubr.f32.gmra.mrb[0].mxu0 %v552
      %v653 = vpop.f32.mrb[0].mxu0
      %v654 = vadd.f32 0.0, %v653
      %v655 = vpop.f32.mrb[0].mxu0
      %656 = vmatprep.mubr.f32.mxu0 0.0
      %657 = vmatmul.mubr.f32.gmra.mrb[0].mxu0 %v555
      %v658 = vpop.f32.mrb[0].mxu0
      %v659 = vadd.f32 0.0, %v658
      %v660 = vpop.f32.mrb[0].mxu0
      %661 = vdwg.mxu0
      %v662 = vadd.f32 %v519, %v624
      %v663 = vadd.f32 %v520, %v629
      %v664 = vadd.f32 %v521, %v634
      %v665 = vadd.f32 %v522, %v639
      %v666 = vadd.f32 %v523, %v644
      %v667 = vadd.f32 %v524, %v649
      %v668 = vadd.f32 %v525, %v654
      %v669 = vadd.f32 %v526, %v659
      %670 = vst.msk [vmem:[#allocation3] sm:$0xff] %vm336, %v662
      %671 = vst.msk [vmem:[#allocation3 + $0x8] sm:$0xff] %vm336, %v663
      %672 = vst.msk [vmem:[#allocation3 + $0x10] sm:$0xff] %vm336, %v664
      %673 = vst.msk [vmem:[#allocation3 + $0x18] sm:$0xff] %vm336, %v665
      %674 = vst.msk [vmem:[#allocation3 + $0x20] sm:$0xff] %vm336, %v666
      %675 = vst.msk [vmem:[#allocation3 + $0x28] sm:$0xff] %vm336, %v667
      %676 = vst.msk [vmem:[#allocation3 + $0x30] sm:$0xff] %vm336, %v668
      %677 = vst.msk [vmem:[#allocation3 + $0x38] sm:$0xff] %vm336, %v669
      %v678 = vld [vmem:[#allocation2 + $0x2] sm:$0xff]
      %v679 = vld [vmem:[#allocation2 + $0x12] sm:$0xff]
      %v680 = vld [vmem:[#allocation2 + $0x22] sm:$0xff]
      %v681 = vld [vmem:[#allocation2 + $0x32] sm:$0xff]
      %v682 = vld [vmem:[#allocation2 + $0x42] sm:$0xff]
      %v683 = vld [vmem:[#allocation2 + $0x52] sm:$0xff]
      %v684 = vld [vmem:[#allocation2 + $0x62] sm:$0xff]
      %v685 = vld [vmem:[#allocation2 + $0x72] sm:$0xff]
      %v686 = vld [vmem:[#allocation3] sm:$0xff]
      %v687 = vld [vmem:[#allocation3 + $0x8] sm:$0xff]
      %v688 = vld [vmem:[#allocation3 + $0x10] sm:$0xff]
      %v689 = vld [vmem:[#allocation3 + $0x18] sm:$0xff]
      %v690 = vld [vmem:[#allocation3 + $0x20] sm:$0xff]
      %v691 = vld [vmem:[#allocation3 + $0x28] sm:$0xff]
      %v692 = vld [vmem:[#allocation3 + $0x30] sm:$0xff]
      %v693 = vld [vmem:[#allocation3 + $0x38] sm:$0xff]
      %s694 = scalar_lea.vmem %s2, 80
      %v695 = vld [vmem:[%s694] sm:$0xff]
      %v696 = vld [vmem:[%s694 + $0x8] sm:$0xff]
      %v697 = vld [vmem:[%s694 + $0x10] sm:$0xff]
      %v698 = vld [vmem:[%s694 + $0x18] sm:$0xff]
      %v699 = vld [vmem:[%s694 + $0x20] sm:$0xff]
      %v701 = vsel %vm256, %v678, 0
      %v704 = vsel %vm256, %v679, 0
      %v707 = vsel %vm256, %v680, 0
      %v710 = vsel %vm256, %v681, 0
      %v713 = vsel %vm256, %v682, 0
      %v716 = vsel %vm256, %v683, 0
      %v719 = vsel %vm256, %v684, 0
      %v722 = vsel %vm256, %v685, 0
      %724 = vmatprep.subr.mxu0 0.0
      %725 = vmatpush1.msra.mxu0 %v695
      %726 = vmatprep.subr.mxu0 0.0
      %727 = vmatpush1.msra.mxu0 %v696
      %728 = vmatprep.subr.mxu0 0.0
      %729 = vmatpush1.msra.mxu0 %v697
      %730 = vmatprep.subr.mxu0 0.0
      %731 = vmatpush1.msra.mxu0 %v698
      %732 = vmatprep.subr.mxu0 0.0
      %733 = vmatpush1.msra.mxu0 %v699
      %734 = vmatprep.subr.mxu0 0.0
      %735 = vmatpush1.msra.mxu0 0.0
      %736 = vmatprep.subr.mxu0 0.0
      %737 = vmatpush1.msra.mxu0 0.0
      %738 = vmatprep.subr.mxu0 0.0
      %739 = vmatpush1.msra.mxu0 0.0
      %740 = vmatprep.subr.mxu0 0.0
      %741 = vmatpush1.msra.mxu0 0.0
      %742 = vmatprep.subr.mxu0 0.0
      %743 = vmatpush1.msra.mxu0 0.0
      %744 = vmatprep.subr.mxu0 0.0
      %745 = vmatpush1.msra.mxu0 0.0
      %746 = vmatprep.subr.mxu0 0.0
      %747 = vmatpush1.msra.mxu0 0.0
      %748 = vmatprep.subr.mxu0 0.0
      %749 = vmatpush1.msra.mxu0 0.0
      %750 = vmatprep.subr.mxu0 0.0
      %751 = vmatpush1.msra.mxu0 0.0
      %752 = vmatprep.subr.mxu0 0.0
      %753 = vmatpush1.msra.mxu0 0.0
      %754 = vmatprep.subr.mxu0 0.0
      %755 = vmatpush1.msra.mxu0 0.0
      %756 = vmatprep.subr.mxu0 0.0
      %757 = vmatpush1.msra.mxu0 0.0
      %758 = vmatprep.subr.mxu0 0.0
      %759 = vmatpush1.msra.mxu0 0.0
      %760 = vmatprep.subr.mxu0 0.0
      %761 = vmatpush1.msra.mxu0 0.0
      %762 = vmatprep.subr.mxu0 0.0
      %763 = vmatpush1.msra.mxu0 0.0
      %764 = vmatprep.subr.mxu0 0.0
      %765 = vmatpush1.msra.mxu0 0.0
      %766 = vmatprep.subr.mxu0 0.0
      %767 = vmatpush1.msra.mxu0 0.0
      %768 = vmatprep.subr.mxu0 0.0
      %769 = vmatpush1.msra.mxu0 0.0
      %770 = vmatprep.subr.mxu0 0.0
      %771 = vmatpush1.msra.mxu0 0.0
      %772 = vmatprep.subr.mxu0 0.0
      %773 = vmatpush1.msra.mxu0 0.0
      %774 = vmatprep.subr.mxu0 0.0
      %775 = vmatpush1.msra.mxu0 0.0
      %776 = vmatprep.subr.mxu0 0.0
      %777 = vmatpush1.msra.mxu0 0.0
      %778 = vmatprep.subr.mxu0 0.0
      %779 = vmatpush1.msra.mxu0 0.0
      %780 = vmatprep.subr.mxu0 0.0
      %781 = vmatpush1.msra.mxu0 0.0
      %782 = vmatprep.subr.mxu0 0.0
      %783 = vmatpush1.msra.mxu0 0.0
      %784 = vmatprep.subr.mxu0 0.0
      %785 = vmatpush1.msra.mxu0 0.0
      %786 = vmatprep.subr.mxu0 0.0
      %787 = vmatpush1.msra.mxu0 0.0
      %788 = vmatprep.mubr.f32.mxu0 0.0
      %789 = vmatmul.mubr.f32.gmra.mrb[0].mxu0 %v701
      %v790 = vpop.f32.mrb[0].mxu0
      %v791 = vadd.f32 0.0, %v790
      %v792 = vpop.f32.mrb[0].mxu0
      %793 = vmatprep.mubr.f32.mxu0 0.0
      %794 = vmatmul.mubr.f32.gmra.mrb[0].mxu0 %v704
      %v795 = vpop.f32.mrb[0].mxu0
      %v796 = vadd.f32 0.0, %v795
      %v797 = vpop.f32.mrb[0].mxu0
      %798 = vmatprep.mubr.f32.mxu0 0.0
      %799 = vmatmul.mubr.f32.gmra.mrb[0].mxu0 %v707
      %v800 = vpop.f32.mrb[0].mxu0
      %v801 = vadd.f32 0.0, %v800
      %v802 = vpop.f32.mrb[0].mxu0
      %803 = vmatprep.mubr.f32.mxu0 0.0
      %804 = vmatmul.mubr.f32.gmra.mrb[0].mxu0 %v710
      %v805 = vpop.f32.mrb[0].mxu0
      %v806 = vadd.f32 0.0, %v805
      %v807 = vpop.f32.mrb[0].mxu0
      %808 = vmatprep.mubr.f32.mxu0 0.0
      %809 = vmatmul.mubr.f32.gmra.mrb[0].mxu0 %v713
      %v810 = vpop.f32.mrb[0].mxu0
      %v811 = vadd.f32 0.0, %v810
      %v812 = vpop.f32.mrb[0].mxu0
      %813 = vmatprep.mubr.f32.mxu0 0.0
      %814 = vmatmul.mubr.f32.gmra.mrb[0].mxu0 %v716
      %v815 = vpop.f32.mrb[0].mxu0
      %v816 = vadd.f32 0.0, %v815
      %v817 = vpop.f32.mrb[0].mxu0
      %818 = vmatprep.mubr.f32.mxu0 0.0
      %819 = vmatmul.mubr.f32.gmra.mrb[0].mxu0 %v719
      %v820 = vpop.f32.mrb[0].mxu0
      %v821 = vadd.f32 0.0, %v820
      %v822 = vpop.f32.mrb[0].mxu0
      %823 = vmatprep.mubr.f32.mxu0 0.0
      %824 = vmatmul.mubr.f32.gmra.mrb[0].mxu0 %v722
      %v825 = vpop.f32.mrb[0].mxu0
      %v826 = vadd.f32 0.0, %v825
      %v827 = vpop.f32.mrb[0].mxu0
      %828 = vdwg.mxu0
      %v829 = vadd.f32 %v686, %v791
      %v830 = vadd.f32 %v687, %v796
      %v831 = vadd.f32 %v688, %v801
      %v832 = vadd.f32 %v689, %v806
      %v833 = vadd.f32 %v690, %v811
      %v834 = vadd.f32 %v691, %v816
      %v835 = vadd.f32 %v692, %v821
      %v836 = vadd.f32 %v693, %v826
      %837 = vst.msk [vmem:[#allocation3] sm:$0xff] %vm336, %v829
      %838 = vst.msk [vmem:[#allocation3 + $0x8] sm:$0xff] %vm336, %v830
      %839 = vst.msk [vmem:[#allocation3 + $0x10] sm:$0xff] %vm336, %v831
      %840 = vst.msk [vmem:[#allocation3 + $0x18] sm:$0xff] %vm336, %v832
      %841 = vst.msk [vmem:[#allocation3 + $0x20] sm:$0xff] %vm336, %v833
      %842 = vst.msk [vmem:[#allocation3 + $0x28] sm:$0xff] %vm336, %v834
      %843 = vst.msk [vmem:[#allocation3 + $0x30] sm:$0xff] %vm336, %v835
      %844 = vst.msk [vmem:[#allocation3 + $0x38] sm:$0xff] %vm336, %v836
      %v845 = vld [vmem:[%s318] sm:$0xff]
      %v846 = vld [vmem:[%s318 + $0x10] sm:$0xff]
      %v847 = vld [vmem:[%s318 + $0x20] sm:$0xff]
      %v848 = vld [vmem:[%s318 + $0x30] sm:$0xff]
      %v849 = vld [vmem:[%s318 + $0x40] sm:$0xff]
      %v850 = vld [vmem:[%s318 + $0x50] sm:$0xff]
      %v851 = vld [vmem:[%s318 + $0x60] sm:$0xff]
      %v852 = vld [vmem:[%s318 + $0x70] sm:$0xff]
      %v853 = vld [vmem:[#allocation3] sm:$0xff]
      %v854 = vld [vmem:[#allocation3 + $0x8] sm:$0xff]
      %v855 = vld [vmem:[#allocation3 + $0x10] sm:$0xff]
      %v856 = vld [vmem:[#allocation3 + $0x18] sm:$0xff]
      %v857 = vld [vmem:[#allocation3 + $0x20] sm:$0xff]
      %v858 = vld [vmem:[#allocation3 + $0x28] sm:$0xff]
      %v859 = vld [vmem:[#allocation3 + $0x30] sm:$0xff]
      %v860 = vld [vmem:[#allocation3 + $0x38] sm:$0xff]
      %s861 = scalar_lea.vmem %s2, 120
      %v862 = vld [vmem:[%s861] sm:$0xff]
      %v863 = vld [vmem:[%s861 + $0x8] sm:$0xff]
      %v864 = vld [vmem:[%s861 + $0x10] sm:$0xff]
      %v865 = vld [vmem:[%s861 + $0x18] sm:$0xff]
      %v866 = vld [vmem:[%s861 + $0x20] sm:$0xff]
      %v868 = vsel %vm256, %v845, 0
      %v871 = vsel %vm256, %v846, 0
      %v874 = vsel %vm256, %v847, 0
      %v877 = vsel %vm256, %v848, 0
      %v880 = vsel %vm256, %v849, 0
      %v883 = vsel %vm256, %v850, 0
      %v886 = vsel %vm256, %v851, 0
      %v889 = vsel %vm256, %v852, 0
      %891 = vmatprep.subr.mxu0 0.0
      %892 = vmatpush1.msra.mxu0 %v862
      %893 = vmatprep.subr.mxu0 0.0
      %894 = vmatpush1.msra.mxu0 %v863
      %895 = vmatprep.subr.mxu0 0.0
      %896 = vmatpush1.msra.mxu0 %v864
      %897 = vmatprep.subr.mxu0 0.0
      %898 = vmatpush1.msra.mxu0 %v865
      %899 = vmatprep.subr.mxu0 0.0
      %900 = vmatpush1.msra.mxu0 %v866
      %901 = vmatprep.subr.mxu0 0.0
      %902 = vmatpush1.msra.mxu0 0.0
      %903 = vmatprep.subr.mxu0 0.0
      %904 = vmatpush1.msra.mxu0 0.0
      %905 = vmatprep.subr.mxu0 0.0
      %906 = vmatpush1.msra.mxu0 0.0
      %907 = vmatprep.subr.mxu0 0.0
      %908 = vmatpush1.msra.mxu0 0.0
      %909 = vmatprep.subr.mxu0 0.0
      %910 = vmatpush1.msra.mxu0 0.0
      %911 = vmatprep.subr.mxu0 0.0
      %912 = vmatpush1.msra.mxu0 0.0
      %913 = vmatprep.subr.mxu0 0.0
      %914 = vmatpush1.msra.mxu0 0.0
      %915 = vmatprep.subr.mxu0 0.0
      %916 = vmatpush1.msra.mxu0 0.0
      %917 = vmatprep.subr.mxu0 0.0
      %918 = vmatpush1.msra.mxu0 0.0
      %919 = vmatprep.subr.mxu0 0.0
      %920 = vmatpush1.msra.mxu0 0.0
      %921 = vmatprep.subr.mxu0 0.0
      %922 = vmatpush1.msra.mxu0 0.0
      %923 = vmatprep.subr.mxu0 0.0
      %924 = vmatpush1.msra.mxu0 0.0
      %925 = vmatprep.subr.mxu0 0.0
      %926 = vmatpush1.msra.mxu0 0.0
      %927 = vmatprep.subr.mxu0 0.0
      %928 = vmatpush1.msra.mxu0 0.0
      %929 = vmatprep.subr.mxu0 0.0
      %930 = vmatpush1.msra.mxu0 0.0
      %931 = vmatprep.subr.mxu0 0.0
      %932 = vmatpush1.msra.mxu0 0.0
      %933 = vmatprep.subr.mxu0 0.0
      %934 = vmatpush1.msra.mxu0 0.0
      %935 = vmatprep.subr.mxu0 0.0
      %936 = vmatpush1.msra.mxu0 0.0
      %937 = vmatprep.subr.mxu0 0.0
      %938 = vmatpush1.msra.mxu0 0.0
      %939 = vmatprep.subr.mxu0 0.0
      %940 = vmatpush1.msra.mxu0 0.0
      %941 = vmatprep.subr.mxu0 0.0
      %942 = vmatpush1.msra.mxu0 0.0
      %943 = vmatprep.subr.mxu0 0.0
      %944 = vmatpush1.msra.mxu0 0.0
      %945 = vmatprep.subr.mxu0 0.0
      %946 = vmatpush1.msra.mxu0 0.0
      %947 = vmatprep.subr.mxu0 0.0
      %948 = vmatpush1.msra.mxu0 0.0
      %949 = vmatprep.subr.mxu0 0.0
      %950 = vmatpush1.msra.mxu0 0.0
      %951 = vmatprep.subr.mxu0 0.0
      %952 = vmatpush1.msra.mxu0 0.0
      %953 = vmatprep.subr.mxu0 0.0
      %954 = vmatpush1.msra.mxu0 0.0
      %955 = vmatprep.mubr.f32.mxu0 0.0
      %956 = vmatmul.mubr.f32.gmra.mrb[0].mxu0 %v868
      %v957 = vpop.f32.mrb[0].mxu0
      %v958 = vadd.f32 0.0, %v957
      %v959 = vpop.f32.mrb[0].mxu0
      %960 = vmatprep.mubr.f32.mxu0 0.0
      %961 = vmatmul.mubr.f32.gmra.mrb[0].mxu0 %v871
      %v962 = vpop.f32.mrb[0].mxu0
      %v963 = vadd.f32 0.0, %v962
      %v964 = vpop.f32.mrb[0].mxu0
      %965 = vmatprep.mubr.f32.mxu0 0.0
      %966 = vmatmul.mubr.f32.gmra.mrb[0].mxu0 %v874
      %v967 = vpop.f32.mrb[0].mxu0
      %v968 = vadd.f32 0.0, %v967
      %v969 = vpop.f32.mrb[0].mxu0
      %970 = vmatprep.mubr.f32.mxu0 0.0
      %971 = vmatmul.mubr.f32.gmra.mrb[0].mxu0 %v877
      %v972 = vpop.f32.mrb[0].mxu0
      %v973 = vadd.f32 0.0, %v972
      %v974 = vpop.f32.mrb[0].mxu0
      %975 = vmatprep.mubr.f32.mxu0 0.0
      %976 = vmatmul.mubr.f32.gmra.mrb[0].mxu0 %v880
      %v977 = vpop.f32.mrb[0].mxu0
      %v978 = vadd.f32 0.0, %v977
      %v979 = vpop.f32.mrb[0].mxu0
      %980 = vmatprep.mubr.f32.mxu0 0.0
      %981 = vmatmul.mubr.f32.gmra.mrb[0].mxu0 %v883
      %v982 = vpop.f32.mrb[0].mxu0
      %v983 = vadd.f32 0.0, %v982
      %v984 = vpop.f32.mrb[0].mxu0
      %985 = vmatprep.mubr.f32.mxu0 0.0
      %986 = vmatmul.mubr.f32.gmra.mrb[0].mxu0 %v886
      %v987 = vpop.f32.mrb[0].mxu0
      %v988 = vadd.f32 0.0, %v987
      %v989 = vpop.f32.mrb[0].mxu0
      %990 = vmatprep.mubr.f32.mxu0 0.0
      %991 = vmatmul.mubr.f32.gmra.mrb[0].mxu0 %v889
      %v992 = vpop.f32.mrb[0].mxu0
      %v993 = vadd.f32 0.0, %v992
      %v994 = vpop.f32.mrb[0].mxu0
      %995 = vdwg.mxu0
      %v996 = vadd.f32 %v853, %v958
      %v997 = vadd.f32 %v854, %v963
      %v998 = vadd.f32 %v855, %v968
      %v999 = vadd.f32 %v856, %v973
      %v1000 = vadd.f32 %v857, %v978
      %v1001 = vadd.f32 %v858, %v983
      %v1002 = vadd.f32 %v859, %v988
      %v1003 = vadd.f32 %v860, %v993
      %1004 = vst.msk [vmem:[#allocation3] sm:$0xff] %vm336, %v996
      %1005 = vst.msk [vmem:[#allocation3 + $0x8] sm:$0xff] %vm336, %v997
      %1006 = vst.msk [vmem:[#allocation3 + $0x10] sm:$0xff] %vm336, %v998
      %1007 = vst.msk [vmem:[#allocation3 + $0x18] sm:$0xff] %vm336, %v999
      %1008 = vst.msk [vmem:[#allocation3 + $0x20] sm:$0xff] %vm336, %v1000
      %1009 = vst.msk [vmem:[#allocation3 + $0x28] sm:$0xff] %vm336, %v1001
      %1010 = vst.msk [vmem:[#allocation3 + $0x30] sm:$0xff] %vm336, %v1002
      %1011 = vst.msk [vmem:[#allocation3 + $0x38] sm:$0xff] %vm336, %v1003
      %v1012 = vld [vmem:[%s318 + $0x1] sm:$0xff]
      %v1013 = vld [vmem:[%s318 + $0x11] sm:$0xff]
      %v1014 = vld [vmem:[%s318 + $0x21] sm:$0xff]
      %v1015 = vld [vmem:[%s318 + $0x31] sm:$0xff]
      %v1016 = vld [vmem:[%s318 + $0x41] sm:$0xff]
      %v1017 = vld [vmem:[%s318 + $0x51] sm:$0xff]
      %v1018 = vld [vmem:[%s318 + $0x61] sm:$0xff]
      %v1019 = vld [vmem:[%s318 + $0x71] sm:$0xff]
      %v1020 = vld [vmem:[#allocation3] sm:$0xff]
      %v1021 = vld [vmem:[#allocation3 + $0x8] sm:$0xff]
      %v1022 = vld [vmem:[#allocation3 + $0x10] sm:$0xff]
      %v1023 = vld [vmem:[#allocation3 + $0x18] sm:$0xff]
      %v1024 = vld [vmem:[#allocation3 + $0x20] sm:$0xff]
      %v1025 = vld [vmem:[#allocation3 + $0x28] sm:$0xff]
      %v1026 = vld [vmem:[#allocation3 + $0x30] sm:$0xff]
      %v1027 = vld [vmem:[#allocation3 + $0x38] sm:$0xff]
      %s1028 = scalar_lea.vmem %s2, 160
      %v1029 = vld [vmem:[%s1028] sm:$0xff]
      %v1030 = vld [vmem:[%s1028 + $0x8] sm:$0xff]
      %v1031 = vld [vmem:[%s1028 + $0x10] sm:$0xff]
      %v1032 = vld [vmem:[%s1028 + $0x18] sm:$0xff]
      %v1033 = vld [vmem:[%s1028 + $0x20] sm:$0xff]
      %v1035 = vsel %vm256, %v1012, 0
      %v1038 = vsel %vm256, %v1013, 0
      %v1041 = vsel %vm256, %v1014, 0
      %v1044 = vsel %vm256, %v1015, 0
      %v1047 = vsel %vm256, %v1016, 0
      %v1050 = vsel %vm256, %v1017, 0
      %v1053 = vsel %vm256, %v1018, 0
      %v1056 = vsel %vm256, %v1019, 0
      %1058 = vmatprep.subr.mxu0 0.0
      %1059 = vmatpush1.msra.mxu0 %v1029
      %1060 = vmatprep.subr.mxu0 0.0
      %1061 = vmatpush1.msra.mxu0 %v1030
      %1062 = vmatprep.subr.mxu0 0.0
      %1063 = vmatpush1.msra.mxu0 %v1031
      %1064 = vmatprep.subr.mxu0 0.0
      %1065 = vmatpush1.msra.mxu0 %v1032
      %1066 = vmatprep.subr.mxu0 0.0
      %1067 = vmatpush1.msra.mxu0 %v1033
      %1068 = vmatprep.subr.mxu0 0.0
      %1069 = vmatpush1.msra.mxu0 0.0
      %1070 = vmatprep.subr.mxu0 0.0
      %1071 = vmatpush1.msra.mxu0 0.0
      %1072 = vmatprep.subr.mxu0 0.0
      %1073 = vmatpush1.msra.mxu0 0.0
      %1074 = vmatprep.subr.mxu0 0.0
      %1075 = vmatpush1.msra.mxu0 0.0
      %1076 = vmatprep.subr.mxu0 0.0
      %1077 = vmatpush1.msra.mxu0 0.0
      %1078 = vmatprep.subr.mxu0 0.0
      %1079 = vmatpush1.msra.mxu0 0.0
      %1080 = vmatprep.subr.mxu0 0.0
      %1081 = vmatpush1.msra.mxu0 0.0
      %1082 = vmatprep.subr.mxu0 0.0
      %1083 = vmatpush1.msra.mxu0 0.0
      %1084 = vmatprep.subr.mxu0 0.0
      %1085 = vmatpush1.msra.mxu0 0.0
      %1086 = vmatprep.subr.mxu0 0.0
      %1087 = vmatpush1.msra.mxu0 0.0
      %1088 = vmatprep.subr.mxu0 0.0
      %1089 = vmatpush1.msra.mxu0 0.0
      %1090 = vmatprep.subr.mxu0 0.0
      %1091 = vmatpush1.msra.mxu0 0.0
      %1092 = vmatprep.subr.mxu0 0.0
      %1093 = vmatpush1.msra.mxu0 0.0
      %1094 = vmatprep.subr.mxu0 0.0
      %1095 = vmatpush1.msra.mxu0 0.0
      %1096 = vmatprep.subr.mxu0 0.0
      %1097 = vmatpush1.msra.mxu0 0.0
      %1098 = vmatprep.subr.mxu0 0.0
      %1099 = vmatpush1.msra.mxu0 0.0
      %1100 = vmatprep.subr.mxu0 0.0
      %1101 = vmatpush1.msra.mxu0 0.0
      %1102 = vmatprep.subr.mxu0 0.0
      %1103 = vmatpush1.msra.mxu0 0.0
      %1104 = vmatprep.subr.mxu0 0.0
      %1105 = vmatpush1.msra.mxu0 0.0
      %1106 = vmatprep.subr.mxu0 0.0
      %1107 = vmatpush1.msra.mxu0 0.0
      %1108 = vmatprep.subr.mxu0 0.0
      %1109 = vmatpush1.msra.mxu0 0.0
      %1110 = vmatprep.subr.mxu0 0.0
      %1111 = vmatpush1.msra.mxu0 0.0
      %1112 = vmatprep.subr.mxu0 0.0
      %1113 = vmatpush1.msra.mxu0 0.0
      %1114 = vmatprep.subr.mxu0 0.0
      %1115 = vmatpush1.msra.mxu0 0.0
      %1116 = vmatprep.subr.mxu0 0.0
      %1117 = vmatpush1.msra.mxu0 0.0
      %1118 = vmatprep.subr.mxu0 0.0
      %1119 = vmatpush1.msra.mxu0 0.0
      %1120 = vmatprep.subr.mxu0 0.0
      %1121 = vmatpush1.msra.mxu0 0.0
      %1122 = vmatprep.mubr.f32.mxu0 0.0
      %1123 = vmatmul.mubr.f32.gmra.mrb[0].mxu0 %v1035
      %v1124 = vpop.f32.mrb[0].mxu0
      %v1125 = vadd.f32 0.0, %v1124
      %v1126 = vpop.f32.mrb[0].mxu0
      %1127 = vmatprep.mubr.f32.mxu0 0.0
      %1128 = vmatmul.mubr.f32.gmra.mrb[0].mxu0 %v1038
      %v1129 = vpop.f32.mrb[0].mxu0
      %v1130 = vadd.f32 0.0, %v1129
      %v1131 = vpop.f32.mrb[0].mxu0
      %1132 = vmatprep.mubr.f32.mxu0 0.0
      %1133 = vmatmul.mubr.f32.gmra.mrb[0].mxu0 %v1041
      %v1134 = vpop.f32.mrb[0].mxu0
      %v1135 = vadd.f32 0.0, %v1134
      %v1136 = vpop.f32.mrb[0].mxu0
      %1137 = vmatprep.mubr.f32.mxu0 0.0
      %1138 = vmatmul.mubr.f32.gmra.mrb[0].mxu0 %v1044
      %v1139 = vpop.f32.mrb[0].mxu0
      %v1140 = vadd.f32 0.0, %v1139
      %v1141 = vpop.f32.mrb[0].mxu0
      %1142 = vmatprep.mubr.f32.mxu0 0.0
      %1143 = vmatmul.mubr.f32.gmra.mrb[0].mxu0 %v1047
      %v1144 = vpop.f32.mrb[0].mxu0
      %v1145 = vadd.f32 0.0, %v1144
      %v1146 = vpop.f32.mrb[0].mxu0
      %1147 = vmatprep.mubr.f32.mxu0 0.0
      %1148 = vmatmul.mubr.f32.gmra.mrb[0].mxu0 %v1050
      %v1149 = vpop.f32.mrb[0].mxu0
      %v1150 = vadd.f32 0.0, %v1149
      %v1151 = vpop.f32.mrb[0].mxu0
      %1152 = vmatprep.mubr.f32.mxu0 0.0
      %1153 = vmatmul.mubr.f32.gmra.mrb[0].mxu0 %v1053
      %v1154 = vpop.f32.mrb[0].mxu0
      %v1155 = vadd.f32 0.0, %v1154
      %v1156 = vpop.f32.mrb[0].mxu0
      %1157 = vmatprep.mubr.f32.mxu0 0.0
      %1158 = vmatmul.mubr.f32.gmra.mrb[0].mxu0 %v1056
      %v1159 = vpop.f32.mrb[0].mxu0
      %v1160 = vadd.f32 0.0, %v1159
      %v1161 = vpop.f32.mrb[0].mxu0
      %1162 = vdwg.mxu0
      %v1163 = vadd.f32 %v1020, %v1125
      %v1164 = vadd.f32 %v1021, %v1130
      %v1165 = vadd.f32 %v1022, %v1135
      %v1166 = vadd.f32 %v1023, %v1140
      %v1167 = vadd.f32 %v1024, %v1145
      %v1168 = vadd.f32 %v1025, %v1150
      %v1169 = vadd.f32 %v1026, %v1155
      %v1170 = vadd.f32 %v1027, %v1160
      %1171 = vst.msk [vmem:[#allocation3] sm:$0xff] %vm336, %v1163
      %1172 = vst.msk [vmem:[#allocation3 + $0x8] sm:$0xff] %vm336, %v1164
      %1173 = vst.msk [vmem:[#allocation3 + $0x10] sm:$0xff] %vm336, %v1165
      %1174 = vst.msk [vmem:[#allocation3 + $0x18] sm:$0xff] %vm336, %v1166
      %1175 = vst.msk [vmem:[#allocation3 + $0x20] sm:$0xff] %vm336, %v1167
      %1176 = vst.msk [vmem:[#allocation3 + $0x28] sm:$0xff] %vm336, %v1168
      %1177 = vst.msk [vmem:[#allocation3 + $0x30] sm:$0xff] %vm336, %v1169
      %1178 = vst.msk [vmem:[#allocation3 + $0x38] sm:$0xff] %vm336, %v1170
      %v1179 = vld [vmem:[%s318 + $0x2] sm:$0xff]
      %v1180 = vld [vmem:[%s318 + $0x12] sm:$0xff]
      %v1181 = vld [vmem:[%s318 + $0x22] sm:$0xff]
      %v1182 = vld [vmem:[%s318 + $0x32] sm:$0xff]
      %v1183 = vld [vmem:[%s318 + $0x42] sm:$0xff]
      %v1184 = vld [vmem:[%s318 + $0x52] sm:$0xff]
      %v1185 = vld [vmem:[%s318 + $0x62] sm:$0xff]
      %v1186 = vld [vmem:[%s318 + $0x72] sm:$0xff]
      %v1187 = vld [vmem:[#allocation3] sm:$0xff]
      %v1188 = vld [vmem:[#allocation3 + $0x8] sm:$0xff]
      %v1189 = vld [vmem:[#allocation3 + $0x10] sm:$0xff]
      %v1190 = vld [vmem:[#allocation3 + $0x18] sm:$0xff]
      %v1191 = vld [vmem:[#allocation3 + $0x20] sm:$0xff]
      %v1192 = vld [vmem:[#allocation3 + $0x28] sm:$0xff]
      %v1193 = vld [vmem:[#allocation3 + $0x30] sm:$0xff]
      %v1194 = vld [vmem:[#allocation3 + $0x38] sm:$0xff]
      %s1195 = scalar_lea.vmem %s2, 200
      %v1196 = vld [vmem:[%s1195] sm:$0xff]
      %v1197 = vld [vmem:[%s1195 + $0x8] sm:$0xff]
      %v1198 = vld [vmem:[%s1195 + $0x10] sm:$0xff]
      %v1199 = vld [vmem:[%s1195 + $0x18] sm:$0xff]
      %v1200 = vld [vmem:[%s1195 + $0x20] sm:$0xff]
      %v1202 = vsel %vm256, %v1179, 0
      %v1205 = vsel %vm256, %v1180, 0
      %v1208 = vsel %vm256, %v1181, 0
      %v1211 = vsel %vm256, %v1182, 0
      %v1214 = vsel %vm256, %v1183, 0
      %v1217 = vsel %vm256, %v1184, 0
      %v1220 = vsel %vm256, %v1185, 0
      %v1223 = vsel %vm256, %v1186, 0
      %1225 = vmatprep.subr.mxu0 0.0
      %1226 = vmatpush1.msra.mxu0 %v1196
      %1227 = vmatprep.subr.mxu0 0.0
      %1228 = vmatpush1.msra.mxu0 %v1197
      %1229 = vmatprep.subr.mxu0 0.0
      %1230 = vmatpush1.msra.mxu0 %v1198
      %1231 = vmatprep.subr.mxu0 0.0
      %1232 = vmatpush1.msra.mxu0 %v1199
      %1233 = vmatprep.subr.mxu0 0.0
      %1234 = vmatpush1.msra.mxu0 %v1200
      %1235 = vmatprep.subr.mxu0 0.0
      %1236 = vmatpush1.msra.mxu0 0.0
      %1237 = vmatprep.subr.mxu0 0.0
      %1238 = vmatpush1.msra.mxu0 0.0
      %1239 = vmatprep.subr.mxu0 0.0
      %1240 = vmatpush1.msra.mxu0 0.0
      %1241 = vmatprep.subr.mxu0 0.0
      %1242 = vmatpush1.msra.mxu0 0.0
      %1243 = vmatprep.subr.mxu0 0.0
      %1244 = vmatpush1.msra.mxu0 0.0
      %1245 = vmatprep.subr.mxu0 0.0
      %1246 = vmatpush1.msra.mxu0 0.0
      %1247 = vmatprep.subr.mxu0 0.0
      %1248 = vmatpush1.msra.mxu0 0.0
      %1249 = vmatprep.subr.mxu0 0.0
      %1250 = vmatpush1.msra.mxu0 0.0
      %1251 = vmatprep.subr.mxu0 0.0
      %1252 = vmatpush1.msra.mxu0 0.0
      %1253 = vmatprep.subr.mxu0 0.0
      %1254 = vmatpush1.msra.mxu0 0.0
      %1255 = vmatprep.subr.mxu0 0.0
      %1256 = vmatpush1.msra.mxu0 0.0
      %1257 = vmatprep.subr.mxu0 0.0
      %1258 = vmatpush1.msra.mxu0 0.0
      %1259 = vmatprep.subr.mxu0 0.0
      %1260 = vmatpush1.msra.mxu0 0.0
      %1261 = vmatprep.subr.mxu0 0.0
      %1262 = vmatpush1.msra.mxu0 0.0
      %1263 = vmatprep.subr.mxu0 0.0
      %1264 = vmatpush1.msra.mxu0 0.0
      %1265 = vmatprep.subr.mxu0 0.0
      %1266 = vmatpush1.msra.mxu0 0.0
      %1267 = vmatprep.subr.mxu0 0.0
      %1268 = vmatpush1.msra.mxu0 0.0
      %1269 = vmatprep.subr.mxu0 0.0
      %1270 = vmatpush1.msra.mxu0 0.0
      %1271 = vmatprep.subr.mxu0 0.0
      %1272 = vmatpush1.msra.mxu0 0.0
      %1273 = vmatprep.subr.mxu0 0.0
      %1274 = vmatpush1.msra.mxu0 0.0
      %1275 = vmatprep.subr.mxu0 0.0
      %1276 = vmatpush1.msra.mxu0 0.0
      %1277 = vmatprep.subr.mxu0 0.0
      %1278 = vmatpush1.msra.mxu0 0.0
      %1279 = vmatprep.subr.mxu0 0.0
      %1280 = vmatpush1.msra.mxu0 0.0
      %1281 = vmatprep.subr.mxu0 0.0
      %1282 = vmatpush1.msra.mxu0 0.0
      %1283 = vmatprep.subr.mxu0 0.0
      %1284 = vmatpush1.msra.mxu0 0.0
      %1285 = vmatprep.subr.mxu0 0.0
      %1286 = vmatpush1.msra.mxu0 0.0
      %1287 = vmatprep.subr.mxu0 0.0
      %1288 = vmatpush1.msra.mxu0 0.0
      %1289 = vmatprep.mubr.f32.mxu0 0.0
      %1290 = vmatmul.mubr.f32.gmra.mrb[0].mxu0 %v1202
      %v1291 = vpop.f32.mrb[0].mxu0
      %v1292 = vadd.f32 0.0, %v1291
      %v1293 = vpop.f32.mrb[0].mxu0
      %1294 = vmatprep.mubr.f32.mxu0 0.0
      %1295 = vmatmul.mubr.f32.gmra.mrb[0].mxu0 %v1205
      %v1296 = vpop.f32.mrb[0].mxu0
      %v1297 = vadd.f32 0.0, %v1296
      %v1298 = vpop.f32.mrb[0].mxu0
      %1299 = vmatprep.mubr.f32.mxu0 0.0
      %1300 = vmatmul.mubr.f32.gmra.mrb[0].mxu0 %v1208
      %v1301 = vpop.f32.mrb[0].mxu0
      %v1302 = vadd.f32 0.0, %v1301
      %v1303 = vpop.f32.mrb[0].mxu0
      %1304 = vmatprep.mubr.f32.mxu0 0.0
      %1305 = vmatmul.mubr.f32.gmra.mrb[0].mxu0 %v1211
      %v1306 = vpop.f32.mrb[0].mxu0
      %v1307 = vadd.f32 0.0, %v1306
      %v1308 = vpop.f32.mrb[0].mxu0
      %1309 = vmatprep.mubr.f32.mxu0 0.0
      %1310 = vmatmul.mubr.f32.gmra.mrb[0].mxu0 %v1214
      %v1311 = vpop.f32.mrb[0].mxu0
      %v1312 = vadd.f32 0.0, %v1311
      %v1313 = vpop.f32.mrb[0].mxu0
      %1314 = vmatprep.mubr.f32.mxu0 0.0
      %1315 = vmatmul.mubr.f32.gmra.mrb[0].mxu0 %v1217
      %v1316 = vpop.f32.mrb[0].mxu0
      %v1317 = vadd.f32 0.0, %v1316
      %v1318 = vpop.f32.mrb[0].mxu0
      %1319 = vmatprep.mubr.f32.mxu0 0.0
      %1320 = vmatmul.mubr.f32.gmra.mrb[0].mxu0 %v1220
      %v1321 = vpop.f32.mrb[0].mxu0
      %v1322 = vadd.f32 0.0, %v1321
      %v1323 = vpop.f32.mrb[0].mxu0
      %1324 = vmatprep.mubr.f32.mxu0 0.0
      %1325 = vmatmul.mubr.f32.gmra.mrb[0].mxu0 %v1223
      %v1326 = vpop.f32.mrb[0].mxu0
      %v1327 = vadd.f32 0.0, %v1326
      %v1328 = vpop.f32.mrb[0].mxu0
      %1329 = vdwg.mxu0
      %v1330 = vadd.f32 %v1187, %v1292
      %v1331 = vadd.f32 %v1188, %v1297
      %v1332 = vadd.f32 %v1189, %v1302
      %v1333 = vadd.f32 %v1190, %v1307
      %v1334 = vadd.f32 %v1191, %v1312
      %v1335 = vadd.f32 %v1192, %v1317
      %v1336 = vadd.f32 %v1193, %v1322
      %v1337 = vadd.f32 %v1194, %v1327
      %1338 = vst.msk [vmem:[#allocation3] sm:$0xff] %vm336, %v1330
      %1339 = vst.msk [vmem:[#allocation3 + $0x8] sm:$0xff] %vm336, %v1331
      %1340 = vst.msk [vmem:[#allocation3 + $0x10] sm:$0xff] %vm336, %v1332
      %1341 = vst.msk [vmem:[#allocation3 + $0x18] sm:$0xff] %vm336, %v1333
      %1342 = vst.msk [vmem:[#allocation3 + $0x20] sm:$0xff] %vm336, %v1334
      %1343 = vst.msk [vmem:[#allocation3 + $0x28] sm:$0xff] %vm336, %v1335
      %1344 = vst.msk [vmem:[#allocation3 + $0x30] sm:$0xff] %vm336, %v1336
      %1345 = vst.msk [vmem:[#allocation3 + $0x38] sm:$0xff] %vm336, %v1337
      %s1346 = scalar_lea.vmem [#allocation2], 32
      %v1347 = vld [vmem:[%s1346] sm:$0xff]
      %v1348 = vld [vmem:[%s1346 + $0x10] sm:$0xff]
      %v1349 = vld [vmem:[%s1346 + $0x20] sm:$0xff]
      %v1350 = vld [vmem:[%s1346 + $0x30] sm:$0xff]
      %v1351 = vld [vmem:[%s1346 + $0x40] sm:$0xff]
      %v1352 = vld [vmem:[%s1346 + $0x50] sm:$0xff]
      %v1353 = vld [vmem:[%s1346 + $0x60] sm:$0xff]
      %v1354 = vld [vmem:[%s1346 + $0x70] sm:$0xff]
      %v1355 = vld [vmem:[#allocation3] sm:$0xff]
      %v1356 = vld [vmem:[#allocation3 + $0x8] sm:$0xff]
      %v1357 = vld [vmem:[#allocation3 + $0x10] sm:$0xff]
      %v1358 = vld [vmem:[#allocation3 + $0x18] sm:$0xff]
      %v1359 = vld [vmem:[#allocation3 + $0x20] sm:$0xff]
      %v1360 = vld [vmem:[#allocation3 + $0x28] sm:$0xff]
      %v1361 = vld [vmem:[#allocation3 + $0x30] sm:$0xff]
      %v1362 = vld [vmem:[#allocation3 + $0x38] sm:$0xff]
      %s1363 = scalar_lea.vmem %s2, 240
      %v1364 = vld [vmem:[%s1363] sm:$0xff]
      %v1365 = vld [vmem:[%s1363 + $0x8] sm:$0xff]
      %v1366 = vld [vmem:[%s1363 + $0x10] sm:$0xff]
      %v1367 = vld [vmem:[%s1363 + $0x18] sm:$0xff]
      %v1368 = vld [vmem:[%s1363 + $0x20] sm:$0xff]
      %v1370 = vsel %vm256, %v1347, 0
      %v1373 = vsel %vm256, %v1348, 0
      %v1376 = vsel %vm256, %v1349, 0
      %v1379 = vsel %vm256, %v1350, 0
      %v1382 = vsel %vm256, %v1351, 0
      %v1385 = vsel %vm256, %v1352, 0
      %v1388 = vsel %vm256, %v1353, 0
      %v1391 = vsel %vm256, %v1354, 0
      %1393 = vmatprep.subr.mxu0 0.0
      %1394 = vmatpush1.msra.mxu0 %v1364
      %1395 = vmatprep.subr.mxu0 0.0
      %1396 = vmatpush1.msra.mxu0 %v1365
      %1397 = vmatprep.subr.mxu0 0.0
      %1398 = vmatpush1.msra.mxu0 %v1366
      %1399 = vmatprep.subr.mxu0 0.0
      %1400 = vmatpush1.msra.mxu0 %v1367
      %1401 = vmatprep.subr.mxu0 0.0
      %1402 = vmatpush1.msra.mxu0 %v1368
      %1403 = vmatprep.subr.mxu0 0.0
      %1404 = vmatpush1.msra.mxu0 0.0
      %1405 = vmatprep.subr.mxu0 0.0
      %1406 = vmatpush1.msra.mxu0 0.0
      %1407 = vmatprep.subr.mxu0 0.0
      %1408 = vmatpush1.msra.mxu0 0.0
      %1409 = vmatprep.subr.mxu0 0.0
      %1410 = vmatpush1.msra.mxu0 0.0
      %1411 = vmatprep.subr.mxu0 0.0
      %1412 = vmatpush1.msra.mxu0 0.0
      %1413 = vmatprep.subr.mxu0 0.0
      %1414 = vmatpush1.msra.mxu0 0.0
      %1415 = vmatprep.subr.mxu0 0.0
      %1416 = vmatpush1.msra.mxu0 0.0
      %1417 = vmatprep.subr.mxu0 0.0
      %1418 = vmatpush1.msra.mxu0 0.0
      %1419 = vmatprep.subr.mxu0 0.0
      %1420 = vmatpush1.msra.mxu0 0.0
      %1421 = vmatprep.subr.mxu0 0.0
      %1422 = vmatpush1.msra.mxu0 0.0
      %1423 = vmatprep.subr.mxu0 0.0
      %1424 = vmatpush1.msra.mxu0 0.0
      %1425 = vmatprep.subr.mxu0 0.0
      %1426 = vmatpush1.msra.mxu0 0.0
      %1427 = vmatprep.subr.mxu0 0.0
      %1428 = vmatpush1.msra.mxu0 0.0
      %1429 = vmatprep.subr.mxu0 0.0
      %1430 = vmatpush1.msra.mxu0 0.0
      %1431 = vmatprep.subr.mxu0 0.0
      %1432 = vmatpush1.msra.mxu0 0.0
      %1433 = vmatprep.subr.mxu0 0.0
      %1434 = vmatpush1.msra.mxu0 0.0
      %1435 = vmatprep.subr.mxu0 0.0
      %1436 = vmatpush1.msra.mxu0 0.0
      %1437 = vmatprep.subr.mxu0 0.0
      %1438 = vmatpush1.msra.mxu0 0.0
      %1439 = vmatprep.subr.mxu0 0.0
      %1440 = vmatpush1.msra.mxu0 0.0
      %1441 = vmatprep.subr.mxu0 0.0
      %1442 = vmatpush1.msra.mxu0 0.0
      %1443 = vmatprep.subr.mxu0 0.0
      %1444 = vmatpush1.msra.mxu0 0.0
      %1445 = vmatprep.subr.mxu0 0.0
      %1446 = vmatpush1.msra.mxu0 0.0
      %1447 = vmatprep.subr.mxu0 0.0
      %1448 = vmatpush1.msra.mxu0 0.0
      %1449 = vmatprep.subr.mxu0 0.0
      %1450 = vmatpush1.msra.mxu0 0.0
      %1451 = vmatprep.subr.mxu0 0.0
      %1452 = vmatpush1.msra.mxu0 0.0
      %1453 = vmatprep.subr.mxu0 0.0
      %1454 = vmatpush1.msra.mxu0 0.0
      %1455 = vmatprep.subr.mxu0 0.0
      %1456 = vmatpush1.msra.mxu0 0.0
      %1457 = vmatprep.mubr.f32.mxu0 0.0
      %1458 = vmatmul.mubr.f32.gmra.mrb[0].mxu0 %v1370
      %v1459 = vpop.f32.mrb[0].mxu0
      %v1460 = vadd.f32 0.0, %v1459
      %v1461 = vpop.f32.mrb[0].mxu0
      %1462 = vmatprep.mubr.f32.mxu0 0.0
      %1463 = vmatmul.mubr.f32.gmra.mrb[0].mxu0 %v1373
      %v1464 = vpop.f32.mrb[0].mxu0
      %v1465 = vadd.f32 0.0, %v1464
      %v1466 = vpop.f32.mrb[0].mxu0
      %1467 = vmatprep.mubr.f32.mxu0 0.0
      %1468 = vmatmul.mubr.f32.gmra.mrb[0].mxu0 %v1376
      %v1469 = vpop.f32.mrb[0].mxu0
      %v1470 = vadd.f32 0.0, %v1469
      %v1471 = vpop.f32.mrb[0].mxu0
      %1472 = vmatprep.mubr.f32.mxu0 0.0
      %1473 = vmatmul.mubr.f32.gmra.mrb[0].mxu0 %v1379
      %v1474 = vpop.f32.mrb[0].mxu0
      %v1475 = vadd.f32 0.0, %v1474
      %v1476 = vpop.f32.mrb[0].mxu0
      %1477 = vmatprep.mubr.f32.mxu0 0.0
      %1478 = vmatmul.mubr.f32.gmra.mrb[0].mxu0 %v1382
      %v1479 = vpop.f32.mrb[0].mxu0
      %v1480 = vadd.f32 0.0, %v1479
      %v1481 = vpop.f32.mrb[0].mxu0
      %1482 = vmatprep.mubr.f32.mxu0 0.0
      %1483 = vmatmul.mubr.f32.gmra.mrb[0].mxu0 %v1385
      %v1484 = vpop.f32.mrb[0].mxu0
      %v1485 = vadd.f32 0.0, %v1484
      %v1486 = vpop.f32.mrb[0].mxu0
      %1487 = vmatprep.mubr.f32.mxu0 0.0
      %1488 = vmatmul.mubr.f32.gmra.mrb[0].mxu0 %v1388
      %v1489 = vpop.f32.mrb[0].mxu0
      %v1490 = vadd.f32 0.0, %v1489
      %v1491 = vpop.f32.mrb[0].mxu0
      %1492 = vmatprep.mubr.f32.mxu0 0.0
      %1493 = vmatmul.mubr.f32.gmra.mrb[0].mxu0 %v1391
      %v1494 = vpop.f32.mrb[0].mxu0
      %v1495 = vadd.f32 0.0, %v1494
      %v1496 = vpop.f32.mrb[0].mxu0
      %1497 = vdwg.mxu0
      %v1498 = vadd.f32 %v1355, %v1460
      %v1499 = vadd.f32 %v1356, %v1465
      %v1500 = vadd.f32 %v1357, %v1470
      %v1501 = vadd.f32 %v1358, %v1475
      %v1502 = vadd.f32 %v1359, %v1480
      %v1503 = vadd.f32 %v1360, %v1485
      %v1504 = vadd.f32 %v1361, %v1490
      %v1505 = vadd.f32 %v1362, %v1495
      %1506 = vst.msk [vmem:[#allocation3] sm:$0xff] %vm336, %v1498
      %1507 = vst.msk [vmem:[#allocation3 + $0x8] sm:$0xff] %vm336, %v1499
      %1508 = vst.msk [vmem:[#allocation3 + $0x10] sm:$0xff] %vm336, %v1500
      %1509 = vst.msk [vmem:[#allocation3 + $0x18] sm:$0xff] %vm336, %v1501
      %1510 = vst.msk [vmem:[#allocation3 + $0x20] sm:$0xff] %vm336, %v1502
      %1511 = vst.msk [vmem:[#allocation3 + $0x28] sm:$0xff] %vm336, %v1503
      %1512 = vst.msk [vmem:[#allocation3 + $0x30] sm:$0xff] %vm336, %v1504
      %1513 = vst.msk [vmem:[#allocation3 + $0x38] sm:$0xff] %vm336, %v1505
      %v1514 = vld [vmem:[%s1346 + $0x1] sm:$0xff]
      %v1515 = vld [vmem:[%s1346 + $0x11] sm:$0xff]
      %v1516 = vld [vmem:[%s1346 + $0x21] sm:$0xff]
      %v1517 = vld [vmem:[%s1346 + $0x31] sm:$0xff]
      %v1518 = vld [vmem:[%s1346 + $0x41] sm:$0xff]
      %v1519 = vld [vmem:[%s1346 + $0x51] sm:$0xff]
      %v1520 = vld [vmem:[%s1346 + $0x61] sm:$0xff]
      %v1521 = vld [vmem:[%s1346 + $0x71] sm:$0xff]
      %v1522 = vld [vmem:[#allocation3] sm:$0xff]
      %v1523 = vld [vmem:[#allocation3 + $0x8] sm:$0xff]
      %v1524 = vld [vmem:[#allocation3 + $0x10] sm:$0xff]
      %v1525 = vld [vmem:[#allocation3 + $0x18] sm:$0xff]
      %v1526 = vld [vmem:[#allocation3 + $0x20] sm:$0xff]
      %v1527 = vld [vmem:[#allocation3 + $0x28] sm:$0xff]
      %v1528 = vld [vmem:[#allocation3 + $0x30] sm:$0xff]
      %v1529 = vld [vmem:[#allocation3 + $0x38] sm:$0xff]
      %s1530 = scalar_lea.vmem %s2, 280
      %v1531 = vld [vmem:[%s1530] sm:$0xff]
      %v1532 = vld [vmem:[%s1530 + $0x8] sm:$0xff]
      %v1533 = vld [vmem:[%s1530 + $0x10] sm:$0xff]
      %v1534 = vld [vmem:[%s1530 + $0x18] sm:$0xff]
      %v1535 = vld [vmem:[%s1530 + $0x20] sm:$0xff]
      %v1537 = vsel %vm256, %v1514, 0
      %v1540 = vsel %vm256, %v1515, 0
      %v1543 = vsel %vm256, %v1516, 0
      %v1546 = vsel %vm256, %v1517, 0
      %v1549 = vsel %vm256, %v1518, 0
      %v1552 = vsel %vm256, %v1519, 0
      %v1555 = vsel %vm256, %v1520, 0
      %v1558 = vsel %vm256, %v1521, 0
      %1560 = vmatprep.subr.mxu0 0.0
      %1561 = vmatpush1.msra.mxu0 %v1531
      %1562 = vmatprep.subr.mxu0 0.0
      %1563 = vmatpush1.msra.mxu0 %v1532
      %1564 = vmatprep.subr.mxu0 0.0
      %1565 = vmatpush1.msra.mxu0 %v1533
      %1566 = vmatprep.subr.mxu0 0.0
      %1567 = vmatpush1.msra.mxu0 %v1534
      %1568 = vmatprep.subr.mxu0 0.0
      %1569 = vmatpush1.msra.mxu0 %v1535
      %1570 = vmatprep.subr.mxu0 0.0
      %1571 = vmatpush1.msra.mxu0 0.0
      %1572 = vmatprep.subr.mxu0 0.0
      %1573 = vmatpush1.msra.mxu0 0.0
      %1574 = vmatprep.subr.mxu0 0.0
      %1575 = vmatpush1.msra.mxu0 0.0
      %1576 = vmatprep.subr.mxu0 0.0
      %1577 = vmatpush1.msra.mxu0 0.0
      %1578 = vmatprep.subr.mxu0 0.0
      %1579 = vmatpush1.msra.mxu0 0.0
      %1580 = vmatprep.subr.mxu0 0.0
      %1581 = vmatpush1.msra.mxu0 0.0
      %1582 = vmatprep.subr.mxu0 0.0
      %1583 = vmatpush1.msra.mxu0 0.0
      %1584 = vmatprep.subr.mxu0 0.0
      %1585 = vmatpush1.msra.mxu0 0.0
      %1586 = vmatprep.subr.mxu0 0.0
      %1587 = vmatpush1.msra.mxu0 0.0
      %1588 = vmatprep.subr.mxu0 0.0
      %1589 = vmatpush1.msra.mxu0 0.0
      %1590 = vmatprep.subr.mxu0 0.0
      %1591 = vmatpush1.msra.mxu0 0.0
      %1592 = vmatprep.subr.mxu0 0.0
      %1593 = vmatpush1.msra.mxu0 0.0
      %1594 = vmatprep.subr.mxu0 0.0
      %1595 = vmatpush1.msra.mxu0 0.0
      %1596 = vmatprep.subr.mxu0 0.0
      %1597 = vmatpush1.msra.mxu0 0.0
      %1598 = vmatprep.subr.mxu0 0.0
      %1599 = vmatpush1.msra.mxu0 0.0
      %1600 = vmatprep.subr.mxu0 0.0
      %1601 = vmatpush1.msra.mxu0 0.0
      %1602 = vmatprep.subr.mxu0 0.0
      %1603 = vmatpush1.msra.mxu0 0.0
      %1604 = vmatprep.subr.mxu0 0.0
      %1605 = vmatpush1.msra.mxu0 0.0
      %1606 = vmatprep.subr.mxu0 0.0
      %1607 = vmatpush1.msra.mxu0 0.0
      %1608 = vmatprep.subr.mxu0 0.0
      %1609 = vmatpush1.msra.mxu0 0.0
      %1610 = vmatprep.subr.mxu0 0.0
      %1611 = vmatpush1.msra.mxu0 0.0
      %1612 = vmatprep.subr.mxu0 0.0
      %1613 = vmatpush1.msra.mxu0 0.0
      %1614 = vmatprep.subr.mxu0 0.0
      %1615 = vmatpush1.msra.mxu0 0.0
      %1616 = vmatprep.subr.mxu0 0.0
      %1617 = vmatpush1.msra.mxu0 0.0
      %1618 = vmatprep.subr.mxu0 0.0
      %1619 = vmatpush1.msra.mxu0 0.0
      %1620 = vmatprep.subr.mxu0 0.0
      %1621 = vmatpush1.msra.mxu0 0.0
      %1622 = vmatprep.subr.mxu0 0.0
      %1623 = vmatpush1.msra.mxu0 0.0
      %1624 = vmatprep.mubr.f32.mxu0 0.0
      %1625 = vmatmul.mubr.f32.gmra.mrb[0].mxu0 %v1537
      %v1626 = vpop.f32.mrb[0].mxu0
      %v1627 = vadd.f32 0.0, %v1626
      %v1628 = vpop.f32.mrb[0].mxu0
      %1629 = vmatprep.mubr.f32.mxu0 0.0
      %1630 = vmatmul.mubr.f32.gmra.mrb[0].mxu0 %v1540
      %v1631 = vpop.f32.mrb[0].mxu0
      %v1632 = vadd.f32 0.0, %v1631
      %v1633 = vpop.f32.mrb[0].mxu0
      %1634 = vmatprep.mubr.f32.mxu0 0.0
      %1635 = vmatmul.mubr.f32.gmra.mrb[0].mxu0 %v1543
      %v1636 = vpop.f32.mrb[0].mxu0
      %v1637 = vadd.f32 0.0, %v1636
      %v1638 = vpop.f32.mrb[0].mxu0
      %1639 = vmatprep.mubr.f32.mxu0 0.0
      %1640 = vmatmul.mubr.f32.gmra.mrb[0].mxu0 %v1546
      %v1641 = vpop.f32.mrb[0].mxu0
      %v1642 = vadd.f32 0.0, %v1641
      %v1643 = vpop.f32.mrb[0].mxu0
      %1644 = vmatprep.mubr.f32.mxu0 0.0
      %1645 = vmatmul.mubr.f32.gmra.mrb[0].mxu0 %v1549
      %v1646 = vpop.f32.mrb[0].mxu0
      %v1647 = vadd.f32 0.0, %v1646
      %v1648 = vpop.f32.mrb[0].mxu0
      %1649 = vmatprep.mubr.f32.mxu0 0.0
      %1650 = vmatmul.mubr.f32.gmra.mrb[0].mxu0 %v1552
      %v1651 = vpop.f32.mrb[0].mxu0
      %v1652 = vadd.f32 0.0, %v1651
      %v1653 = vpop.f32.mrb[0].mxu0
      %1654 = vmatprep.mubr.f32.mxu0 0.0
      %1655 = vmatmul.mubr.f32.gmra.mrb[0].mxu0 %v1555
      %v1656 = vpop.f32.mrb[0].mxu0
      %v1657 = vadd.f32 0.0, %v1656
      %v1658 = vpop.f32.mrb[0].mxu0
      %1659 = vmatprep.mubr.f32.mxu0 0.0
      %1660 = vmatmul.mubr.f32.gmra.mrb[0].mxu0 %v1558
      %v1661 = vpop.f32.mrb[0].mxu0
      %v1662 = vadd.f32 0.0, %v1661
      %v1663 = vpop.f32.mrb[0].mxu0
      %1664 = vdwg.mxu0
      %v1665 = vadd.f32 %v1522, %v1627
      %v1666 = vadd.f32 %v1523, %v1632
      %v1667 = vadd.f32 %v1524, %v1637
      %v1668 = vadd.f32 %v1525, %v1642
      %v1669 = vadd.f32 %v1526, %v1647
      %v1670 = vadd.f32 %v1527, %v1652
      %v1671 = vadd.f32 %v1528, %v1657
      %v1672 = vadd.f32 %v1529, %v1662
      %1673 = vst.msk [vmem:[#allocation3] sm:$0xff] %vm336, %v1665
      %1674 = vst.msk [vmem:[#allocation3 + $0x8] sm:$0xff] %vm336, %v1666
      %1675 = vst.msk [vmem:[#allocation3 + $0x10] sm:$0xff] %vm336, %v1667
      %1676 = vst.msk [vmem:[#allocation3 + $0x18] sm:$0xff] %vm336, %v1668
      %1677 = vst.msk [vmem:[#allocation3 + $0x20] sm:$0xff] %vm336, %v1669
      %1678 = vst.msk [vmem:[#allocation3 + $0x28] sm:$0xff] %vm336, %v1670
      %1679 = vst.msk [vmem:[#allocation3 + $0x30] sm:$0xff] %vm336, %v1671
      %1680 = vst.msk [vmem:[#allocation3 + $0x38] sm:$0xff] %vm336, %v1672
      %v1681 = vld [vmem:[%s1346 + $0x2] sm:$0xff]
      %v1682 = vld [vmem:[%s1346 + $0x12] sm:$0xff]
      %v1683 = vld [vmem:[%s1346 + $0x22] sm:$0xff]
      %v1684 = vld [vmem:[%s1346 + $0x32] sm:$0xff]
      %v1685 = vld [vmem:[%s1346 + $0x42] sm:$0xff]
      %v1686 = vld [vmem:[%s1346 + $0x52] sm:$0xff]
      %v1687 = vld [vmem:[%s1346 + $0x62] sm:$0xff]
      %v1688 = vld [vmem:[%s1346 + $0x72] sm:$0xff]
      %v1689 = vld [vmem:[#allocation3] sm:$0xff]
      %v1690 = vld [vmem:[#allocation3 + $0x8] sm:$0xff]
      %v1691 = vld [vmem:[#allocation3 + $0x10] sm:$0xff]
      %v1692 = vld [vmem:[#allocation3 + $0x18] sm:$0xff]
      %v1693 = vld [vmem:[#allocation3 + $0x20] sm:$0xff]
      %v1694 = vld [vmem:[#allocation3 + $0x28] sm:$0xff]
      %v1695 = vld [vmem:[#allocation3 + $0x30] sm:$0xff]
      %v1696 = vld [vmem:[#allocation3 + $0x38] sm:$0xff]
      %s1697 = scalar_lea.vmem %s2, 320
      %v1698 = vld [vmem:[%s1697] sm:$0xff]
      %v1699 = vld [vmem:[%s1697 + $0x8] sm:$0xff]
      %v1700 = vld [vmem:[%s1697 + $0x10] sm:$0xff]
      %v1701 = vld [vmem:[%s1697 + $0x18] sm:$0xff]
      %v1702 = vld [vmem:[%s1697 + $0x20] sm:$0xff]
      %v1704 = vsel %vm256, %v1681, 0
      %v1707 = vsel %vm256, %v1682, 0
      %v1710 = vsel %vm256, %v1683, 0
      %v1713 = vsel %vm256, %v1684, 0
      %v1716 = vsel %vm256, %v1685, 0
      %v1719 = vsel %vm256, %v1686, 0
      %v1722 = vsel %vm256, %v1687, 0
      %v1725 = vsel %vm256, %v1688, 0
      %1727 = vmatprep.subr.mxu0 0.0
      %1728 = vmatpush1.msra.mxu0 %v1698
      %1729 = vmatprep.subr.mxu0 0.0
      %1730 = vmatpush1.msra.mxu0 %v1699
      %1731 = vmatprep.subr.mxu0 0.0
      %1732 = vmatpush1.msra.mxu0 %v1700
      %1733 = vmatprep.subr.mxu0 0.0
      %1734 = vmatpush1.msra.mxu0 %v1701
      %1735 = vmatprep.subr.mxu0 0.0
      %1736 = vmatpush1.msra.mxu0 %v1702
      %1737 = vmatprep.subr.mxu0 0.0
      %1738 = vmatpush1.msra.mxu0 0.0
      %1739 = vmatprep.subr.mxu0 0.0
      %1740 = vmatpush1.msra.mxu0 0.0
      %1741 = vmatprep.subr.mxu0 0.0
      %1742 = vmatpush1.msra.mxu0 0.0
      %1743 = vmatprep.subr.mxu0 0.0
      %1744 = vmatpush1.msra.mxu0 0.0
      %1745 = vmatprep.subr.mxu0 0.0
      %1746 = vmatpush1.msra.mxu0 0.0
      %1747 = vmatprep.subr.mxu0 0.0
      %1748 = vmatpush1.msra.mxu0 0.0
      %1749 = vmatprep.subr.mxu0 0.0
      %1750 = vmatpush1.msra.mxu0 0.0
      %1751 = vmatprep.subr.mxu0 0.0
      %1752 = vmatpush1.msra.mxu0 0.0
      %1753 = vmatprep.subr.mxu0 0.0
      %1754 = vmatpush1.msra.mxu0 0.0
      %1755 = vmatprep.subr.mxu0 0.0
      %1756 = vmatpush1.msra.mxu0 0.0
      %1757 = vmatprep.subr.mxu0 0.0
      %1758 = vmatpush1.msra.mxu0 0.0
      %1759 = vmatprep.subr.mxu0 0.0
      %1760 = vmatpush1.msra.mxu0 0.0
      %1761 = vmatprep.subr.mxu0 0.0
      %1762 = vmatpush1.msra.mxu0 0.0
      %1763 = vmatprep.subr.mxu0 0.0
      %1764 = vmatpush1.msra.mxu0 0.0
      %1765 = vmatprep.subr.mxu0 0.0
      %1766 = vmatpush1.msra.mxu0 0.0
      %1767 = vmatprep.subr.mxu0 0.0
      %1768 = vmatpush1.msra.mxu0 0.0
      %1769 = vmatprep.subr.mxu0 0.0
      %1770 = vmatpush1.msra.mxu0 0.0
      %1771 = vmatprep.subr.mxu0 0.0
      %1772 = vmatpush1.msra.mxu0 0.0
      %1773 = vmatprep.subr.mxu0 0.0
      %1774 = vmatpush1.msra.mxu0 0.0
      %1775 = vmatprep.subr.mxu0 0.0
      %1776 = vmatpush1.msra.mxu0 0.0
      %1777 = vmatprep.subr.mxu0 0.0
      %1778 = vmatpush1.msra.mxu0 0.0
      %1779 = vmatprep.subr.mxu0 0.0
      %1780 = vmatpush1.msra.mxu0 0.0
      %1781 = vmatprep.subr.mxu0 0.0
      %1782 = vmatpush1.msra.mxu0 0.0
      %1783 = vmatprep.subr.mxu0 0.0
      %1784 = vmatpush1.msra.mxu0 0.0
      %1785 = vmatprep.subr.mxu0 0.0
      %1786 = vmatpush1.msra.mxu0 0.0
      %1787 = vmatprep.subr.mxu0 0.0
      %1788 = vmatpush1.msra.mxu0 0.0
      %1789 = vmatprep.subr.mxu0 0.0
      %1790 = vmatpush1.msra.mxu0 0.0
      %1791 = vmatprep.mubr.f32.mxu0 0.0
      %1792 = vmatmul.mubr.f32.gmra.mrb[0].mxu0 %v1704
      %v1793 = vpop.f32.mrb[0].mxu0
      %v1794 = vadd.f32 0.0, %v1793
      %v1795 = vpop.f32.mrb[0].mxu0
      %1796 = vmatprep.mubr.f32.mxu0 0.0
      %1797 = vmatmul.mubr.f32.gmra.mrb[0].mxu0 %v1707
      %v1798 = vpop.f32.mrb[0].mxu0
      %v1799 = vadd.f32 0.0, %v1798
      %v1800 = vpop.f32.mrb[0].mxu0
      %1801 = vmatprep.mubr.f32.mxu0 0.0
      %1802 = vmatmul.mubr.f32.gmra.mrb[0].mxu0 %v1710
      %v1803 = vpop.f32.mrb[0].mxu0
      %v1804 = vadd.f32 0.0, %v1803
      %v1805 = vpop.f32.mrb[0].mxu0
      %1806 = vmatprep.mubr.f32.mxu0 0.0
      %1807 = vmatmul.mubr.f32.gmra.mrb[0].mxu0 %v1713
      %v1808 = vpop.f32.mrb[0].mxu0
      %v1809 = vadd.f32 0.0, %v1808
      %v1810 = vpop.f32.mrb[0].mxu0
      %1811 = vmatprep.mubr.f32.mxu0 0.0
      %1812 = vmatmul.mubr.f32.gmra.mrb[0].mxu0 %v1716
      %v1813 = vpop.f32.mrb[0].mxu0
      %v1814 = vadd.f32 0.0, %v1813
      %v1815 = vpop.f32.mrb[0].mxu0
      %1816 = vmatprep.mubr.f32.mxu0 0.0
      %1817 = vmatmul.mubr.f32.gmra.mrb[0].mxu0 %v1719
      %v1818 = vpop.f32.mrb[0].mxu0
      %v1819 = vadd.f32 0.0, %v1818
      %v1820 = vpop.f32.mrb[0].mxu0
      %1821 = vmatprep.mubr.f32.mxu0 0.0
      %1822 = vmatmul.mubr.f32.gmra.mrb[0].mxu0 %v1722
      %v1823 = vpop.f32.mrb[0].mxu0
      %v1824 = vadd.f32 0.0, %v1823
      %v1825 = vpop.f32.mrb[0].mxu0
      %1826 = vmatprep.mubr.f32.mxu0 0.0
      %1827 = vmatmul.mubr.f32.gmra.mrb[0].mxu0 %v1725
      %v1828 = vpop.f32.mrb[0].mxu0
      %v1829 = vadd.f32 0.0, %v1828
      %v1830 = vpop.f32.mrb[0].mxu0
      %1831 = vdwg.mxu0
      %v1832 = vadd.f32 %v1689, %v1794
      %v1833 = vadd.f32 %v1690, %v1799
      %v1834 = vadd.f32 %v1691, %v1804
      %v1835 = vadd.f32 %v1692, %v1809
      %v1836 = vadd.f32 %v1693, %v1814
      %v1837 = vadd.f32 %v1694, %v1819
      %v1838 = vadd.f32 %v1695, %v1824
      %v1839 = vadd.f32 %v1696, %v1829
      %1840 = vst.msk [vmem:[#allocation3] sm:$0xff] %vm336, %v1832
      %1841 = vst.msk [vmem:[#allocation3 + $0x8] sm:$0xff] %vm336, %v1833
      %1842 = vst.msk [vmem:[#allocation3 + $0x10] sm:$0xff] %vm336, %v1834
      %1843 = vst.msk [vmem:[#allocation3 + $0x18] sm:$0xff] %vm336, %v1835
      %1844 = vst.msk [vmem:[#allocation3 + $0x20] sm:$0xff] %vm336, %v1836
      %1845 = vst.msk [vmem:[#allocation3 + $0x28] sm:$0xff] %vm336, %v1837
      %1846 = vst.msk [vmem:[#allocation3 + $0x30] sm:$0xff] %vm336, %v1838
      %1847 = vst.msk [vmem:[#allocation3 + $0x38] sm:$0xff] %vm336, %v1839
      %v1848 = vld [vmem:[#allocation3] sm:$0xff]
      %v1849 = vld [vmem:[#allocation3 + $0x8] sm:$0xff]
      %v1850 = vld [vmem:[#allocation3 + $0x10] sm:$0xff]
      %v1851 = vld [vmem:[#allocation3 + $0x18] sm:$0xff]
      %v1852 = vld [vmem:[#allocation3 + $0x20] sm:$0xff]
      %v1853 = vld [vmem:[#allocation3 + $0x28] sm:$0xff]
      %v1854 = vld [vmem:[#allocation3 + $0x30] sm:$0xff]
      %v1855 = vld [vmem:[#allocation3 + $0x38] sm:$0xff]
      %1856 = vst.msk [vmem:[%s251] sm:$0xff] %vm336, %v1848
      %1857 = vst.msk [vmem:[%s251 + $0x8] sm:$0xff] %vm336, %v1849
      %1858 = vst.msk [vmem:[%s251 + $0x10] sm:$0xff] %vm336, %v1850
      %1859 = vst.msk [vmem:[%s251 + $0x18] sm:$0xff] %vm336, %v1851
      %1860 = vst.msk [vmem:[%s251 + $0x20] sm:$0xff] %vm336, %v1852
      %1861 = vst.msk [vmem:[%s251 + $0x28] sm:$0xff] %vm336, %v1853
      %1862 = vst.msk [vmem:[%s251 + $0x30] sm:$0xff] %vm336, %v1854
      %1863 = vst.msk [vmem:[%s251 + $0x38] sm:$0xff] %vm336, %v1855
      %1872 = vrot.lane.b32.xlu0 %v1848, 4
      %v1873 = vpop.permute.xlu0 %1872
      %1874 = vrot.lane.b32.xlu0 %v1849, 4
      %v1875 = vpop.permute.xlu0 %1874
      %1876 = vrot.lane.b32.xlu0 %v1850, 4
      %v1877 = vpop.permute.xlu0 %1876
      %1878 = vrot.lane.b32.xlu0 %v1851, 4
      %v1879 = vpop.permute.xlu0 %1878
      %1880 = vrot.lane.b32.xlu0 %v1852, 4
      %v1881 = vpop.permute.xlu0 %1880
      %1882 = vrot.lane.b32.xlu0 %v1853, 4
      %v1883 = vpop.permute.xlu0 %1882
      %1884 = vrot.lane.b32.xlu0 %v1854, 4
      %v1885 = vpop.permute.xlu0 %1884
      %1886 = vrot.lane.b32.xlu0 %v1855, 4
      %v1887 = vpop.permute.xlu0 %1886
      %1896 = vst.msk [vmem:[%s318 + $0x1] sm:$0xff] %vm319, %v1873
      %1897 = vst.msk [vmem:[%s318 + $0x11] sm:$0xff] %vm319, %v1875
      %1898 = vst.msk [vmem:[%s318 + $0x21] sm:$0xff] %vm319, %v1877
      %1899 = vst.msk [vmem:[%s318 + $0x31] sm:$0xff] %vm319, %v1879
      %1900 = vst.msk [vmem:[%s318 + $0x41] sm:$0xff] %vm319, %v1881
      %1901 = vst.msk [vmem:[%s318 + $0x51] sm:$0xff] %vm319, %v1883
      %1902 = vst.msk [vmem:[%s318 + $0x61] sm:$0xff] %vm319, %v1885
      %1903 = vst.msk [vmem:[%s318 + $0x71] sm:$0xff] %vm319, %v1887
      %v1904 = vld [vmem:[%s246] sm:$0xff]
      %v1905 = vld [vmem:[%s246 + $0x8] sm:$0xff]
      %v1906 = vld [vmem:[%s246 + $0x10] sm:$0xff]
      %v1907 = vld [vmem:[%s246 + $0x18] sm:$0xff]
      %v1908 = vld [vmem:[%s246 + $0x20] sm:$0xff]
      %v1909 = vld [vmem:[%s246 + $0x28] sm:$0xff]
      %v1910 = vld [vmem:[%s246 + $0x30] sm:$0xff]
      %v1911 = vld [vmem:[%s246 + $0x38] sm:$0xff]
      %1912 = vst.msk [vmem:[#allocation3] sm:$0xff] %vm336, %v1904
      %1913 = vst.msk [vmem:[#allocation3 + $0x8] sm:$0xff] %vm336, %v1905
      %1914 = vst.msk [vmem:[#allocation3 + $0x10] sm:$0xff] %vm336, %v1906
      %1915 = vst.msk [vmem:[#allocation3 + $0x18] sm:$0xff] %vm336, %v1907
      %1916 = vst.msk [vmem:[#allocation3 + $0x20] sm:$0xff] %vm336, %v1908
      %1917 = vst.msk [vmem:[#allocation3 + $0x28] sm:$0xff] %vm336, %v1909
      %1918 = vst.msk [vmem:[#allocation3 + $0x30] sm:$0xff] %vm336, %v1910
      %1919 = vst.msk [vmem:[#allocation3 + $0x38] sm:$0xff] %vm336, %v1911
      %v1920 = vld [vmem:[#allocation2] sm:$0xff]
      %v1921 = vld [vmem:[#allocation2 + $0x10] sm:$0xff]
      %v1922 = vld [vmem:[#allocation2 + $0x20] sm:$0xff]
      %v1923 = vld [vmem:[#allocation2 + $0x30] sm:$0xff]
      %v1924 = vld [vmem:[#allocation2 + $0x40] sm:$0xff]
      %v1925 = vld [vmem:[#allocation2 + $0x50] sm:$0xff]
      %v1926 = vld [vmem:[#allocation2 + $0x60] sm:$0xff]
      %v1927 = vld [vmem:[#allocation2 + $0x70] sm:$0xff]
      %v1928 = vld [vmem:[#allocation3] sm:$0xff]
      %v1929 = vld [vmem:[#allocation3 + $0x8] sm:$0xff]
      %v1930 = vld [vmem:[#allocation3 + $0x10] sm:$0xff]
      %v1931 = vld [vmem:[#allocation3 + $0x18] sm:$0xff]
      %v1932 = vld [vmem:[#allocation3 + $0x20] sm:$0xff]
      %v1933 = vld [vmem:[#allocation3 + $0x28] sm:$0xff]
      %v1934 = vld [vmem:[#allocation3 + $0x30] sm:$0xff]
      %v1935 = vld [vmem:[#allocation3 + $0x38] sm:$0xff]
      %v1936 = vld [vmem:[%s3] sm:$0xff]
      %v1937 = vld [vmem:[%s3 + $0x8] sm:$0xff]
      %v1938 = vld [vmem:[%s3 + $0x10] sm:$0xff]
      %v1939 = vld [vmem:[%s3 + $0x18] sm:$0xff]
      %v1940 = vld [vmem:[%s3 + $0x20] sm:$0xff]
      %v1942 = vsel %vm256, %v1920, 0
      %v1945 = vsel %vm256, %v1921, 0
      %v1948 = vsel %vm256, %v1922, 0
      %v1951 = vsel %vm256, %v1923, 0
      %v1954 = vsel %vm256, %v1924, 0
      %v1957 = vsel %vm256, %v1925, 0
      %v1960 = vsel %vm256, %v1926, 0
      %v1963 = vsel %vm256, %v1927, 0
      %1965 = vmatprep.subr.mxu0 0.0
      %1966 = vmatpush1.msra.mxu0 %v1936
      %1967 = vmatprep.subr.mxu0 0.0
      %1968 = vmatpush1.msra.mxu0 %v1937
      %1969 = vmatprep.subr.mxu0 0.0
      %1970 = vmatpush1.msra.mxu0 %v1938
      %1971 = vmatprep.subr.mxu0 0.0
      %1972 = vmatpush1.msra.mxu0 %v1939
      %1973 = vmatprep.subr.mxu0 0.0
      %1974 = vmatpush1.msra.mxu0 %v1940
      %1975 = vmatprep.subr.mxu0 0.0
      %1976 = vmatpush1.msra.mxu0 0.0
      %1977 = vmatprep.subr.mxu0 0.0
      %1978 = vmatpush1.msra.mxu0 0.0
      %1979 = vmatprep.subr.mxu0 0.0
      %1980 = vmatpush1.msra.mxu0 0.0
      %1981 = vmatprep.subr.mxu0 0.0
      %1982 = vmatpush1.msra.mxu0 0.0
      %1983 = vmatprep.subr.mxu0 0.0
      %1984 = vmatpush1.msra.mxu0 0.0
      %1985 = vmatprep.subr.mxu0 0.0
      %1986 = vmatpush1.msra.mxu0 0.0
      %1987 = vmatprep.subr.mxu0 0.0
      %1988 = vmatpush1.msra.mxu0 0.0
      %1989 = vmatprep.subr.mxu0 0.0
      %1990 = vmatpush1.msra.mxu0 0.0
      %1991 = vmatprep.subr.mxu0 0.0
      %1992 = vmatpush1.msra.mxu0 0.0
      %1993 = vmatprep.subr.mxu0 0.0
      %1994 = vmatpush1.msra.mxu0 0.0
      %1995 = vmatprep.subr.mxu0 0.0
      %1996 = vmatpush1.msra.mxu0 0.0
      %1997 = vmatprep.subr.mxu0 0.0
      %1998 = vmatpush1.msra.mxu0 0.0
      %1999 = vmatprep.subr.mxu0 0.0
      %2000 = vmatpush1.msra.mxu0 0.0
      %2001 = vmatprep.subr.mxu0 0.0
      %2002 = vmatpush1.msra.mxu0 0.0
      %2003 = vmatprep.subr.mxu0 0.0
      %2004 = vmatpush1.msra.mxu0 0.0
      %2005 = vmatprep.subr.mxu0 0.0
      %2006 = vmatpush1.msra.mxu0 0.0
      %2007 = vmatprep.subr.mxu0 0.0
      %2008 = vmatpush1.msra.mxu0 0.0
      %2009 = vmatprep.subr.mxu0 0.0
      %2010 = vmatpush1.msra.mxu0 0.0
      %2011 = vmatprep.subr.mxu0 0.0
      %2012 = vmatpush1.msra.mxu0 0.0
      %2013 = vmatprep.subr.mxu0 0.0
      %2014 = vmatpush1.msra.mxu0 0.0
      %2015 = vmatprep.subr.mxu0 0.0
      %2016 = vmatpush1.msra.mxu0 0.0
      %2017 = vmatprep.subr.mxu0 0.0
      %2018 = vmatpush1.msra.mxu0 0.0
      %2019 = vmatprep.subr.mxu0 0.0
      %2020 = vmatpush1.msra.mxu0 0.0
      %2021 = vmatprep.subr.mxu0 0.0
      %2022 = vmatpush1.msra.mxu0 0.0
      %2023 = vmatprep.subr.mxu0 0.0
      %2024 = vmatpush1.msra.mxu0 0.0
      %2025 = vmatprep.subr.mxu0 0.0
      %2026 = vmatpush1.msra.mxu0 0.0
      %2027 = vmatprep.subr.mxu0 0.0
      %2028 = vmatpush1.msra.mxu0 0.0
      %2029 = vmatprep.mubr.f32.mxu0 0.0
      %2030 = vmatmul.mubr.f32.gmra.mrb[0].mxu0 %v1942
      %v2031 = vpop.f32.mrb[0].mxu0
      %v2032 = vadd.f32 0.0, %v2031
      %v2033 = vpop.f32.mrb[0].mxu0
      %2034 = vmatprep.mubr.f32.mxu0 0.0
      %2035 = vmatmul.mubr.f32.gmra.mrb[0].mxu0 %v1945
      %v2036 = vpop.f32.mrb[0].mxu0
      %v2037 = vadd.f32 0.0, %v2036
      %v2038 = vpop.f32.mrb[0].mxu0
      %2039 = vmatprep.mubr.f32.mxu0 0.0
      %2040 = vmatmul.mubr.f32.gmra.mrb[0].mxu0 %v1948
      %v2041 = vpop.f32.mrb[0].mxu0
      %v2042 = vadd.f32 0.0, %v2041
      %v2043 = vpop.f32.mrb[0].mxu0
      %2044 = vmatprep.mubr.f32.mxu0 0.0
      %2045 = vmatmul.mubr.f32.gmra.mrb[0].mxu0 %v1951
      %v2046 = vpop.f32.mrb[0].mxu0
      %v2047 = vadd.f32 0.0, %v2046
      %v2048 = vpop.f32.mrb[0].mxu0
      %2049 = vmatprep.mubr.f32.mxu0 0.0
      %2050 = vmatmul.mubr.f32.gmra.mrb[0].mxu0 %v1954
      %v2051 = vpop.f32.mrb[0].mxu0
      %v2052 = vadd.f32 0.0, %v2051
      %v2053 = vpop.f32.mrb[0].mxu0
      %2054 = vmatprep.mubr.f32.mxu0 0.0
      %2055 = vmatmul.mubr.f32.gmra.mrb[0].mxu0 %v1957
      %v2056 = vpop.f32.mrb[0].mxu0
      %v2057 = vadd.f32 0.0, %v2056
      %v2058 = vpop.f32.mrb[0].mxu0
      %2059 = vmatprep.mubr.f32.mxu0 0.0
      %2060 = vmatmul.mubr.f32.gmra.mrb[0].mxu0 %v1960
      %v2061 = vpop.f32.mrb[0].mxu0
      %v2062 = vadd.f32 0.0, %v2061
      %v2063 = vpop.f32.mrb[0].mxu0
      %2064 = vmatprep.mubr.f32.mxu0 0.0
      %2065 = vmatmul.mubr.f32.gmra.mrb[0].mxu0 %v1963
      %v2066 = vpop.f32.mrb[0].mxu0
      %v2067 = vadd.f32 0.0, %v2066
      %v2068 = vpop.f32.mrb[0].mxu0
      %2069 = vdwg.mxu0
      %v2070 = vadd.f32 %v1928, %v2032
      %v2071 = vadd.f32 %v1929, %v2037
      %v2072 = vadd.f32 %v1930, %v2042
      %v2073 = vadd.f32 %v1931, %v2047
      %v2074 = vadd.f32 %v1932, %v2052
      %v2075 = vadd.f32 %v1933, %v2057
      %v2076 = vadd.f32 %v1934, %v2062
      %v2077 = vadd.f32 %v1935, %v2067
      %2078 = vst.msk [vmem:[#allocation3] sm:$0xff] %vm336, %v2070
      %2079 = vst.msk [vmem:[#allocation3 + $0x8] sm:$0xff] %vm336, %v2071
      %2080 = vst.msk [vmem:[#allocation3 + $0x10] sm:$0xff] %vm336, %v2072
      %2081 = vst.msk [vmem:[#allocation3 + $0x18] sm:$0xff] %vm336, %v2073
      %2082 = vst.msk [vmem:[#allocation3 + $0x20] sm:$0xff] %vm336, %v2074
      %2083 = vst.msk [vmem:[#allocation3 + $0x28] sm:$0xff] %vm336, %v2075
      %2084 = vst.msk [vmem:[#allocation3 + $0x30] sm:$0xff] %vm336, %v2076
      %2085 = vst.msk [vmem:[#allocation3 + $0x38] sm:$0xff] %vm336, %v2077
      %v2086 = vld [vmem:[#allocation2 + $0x1] sm:$0xff]
      %v2087 = vld [vmem:[#allocation2 + $0x11] sm:$0xff]
      %v2088 = vld [vmem:[#allocation2 + $0x21] sm:$0xff]
      %v2089 = vld [vmem:[#allocation2 + $0x31] sm:$0xff]
      %v2090 = vld [vmem:[#allocation2 + $0x41] sm:$0xff]
      %v2091 = vld [vmem:[#allocation2 + $0x51] sm:$0xff]
      %v2092 = vld [vmem:[#allocation2 + $0x61] sm:$0xff]
      %v2093 = vld [vmem:[#allocation2 + $0x71] sm:$0xff]
      %v2094 = vld [vmem:[#allocation3] sm:$0xff]
      %v2095 = vld [vmem:[#allocation3 + $0x8] sm:$0xff]
      %v2096 = vld [vmem:[#allocation3 + $0x10] sm:$0xff]
      %v2097 = vld [vmem:[#allocation3 + $0x18] sm:$0xff]
      %v2098 = vld [vmem:[#allocation3 + $0x20] sm:$0xff]
      %v2099 = vld [vmem:[#allocation3 + $0x28] sm:$0xff]
      %v2100 = vld [vmem:[#allocation3 + $0x30] sm:$0xff]
      %v2101 = vld [vmem:[#allocation3 + $0x38] sm:$0xff]
      %s2102 = scalar_lea.vmem %s3, 40
      %v2103 = vld [vmem:[%s2102] sm:$0xff]
      %v2104 = vld [vmem:[%s2102 + $0x8] sm:$0xff]
      %v2105 = vld [vmem:[%s2102 + $0x10] sm:$0xff]
      %v2106 = vld [vmem:[%s2102 + $0x18] sm:$0xff]
      %v2107 = vld [vmem:[%s2102 + $0x20] sm:$0xff]
      %v2109 = vsel %vm256, %v2086, 0
      %v2112 = vsel %vm256, %v2087, 0
      %v2115 = vsel %vm256, %v2088, 0
      %v2118 = vsel %vm256, %v2089, 0
      %v2121 = vsel %vm256, %v2090, 0
      %v2124 = vsel %vm256, %v2091, 0
      %v2127 = vsel %vm256, %v2092, 0
      %v2130 = vsel %vm256, %v2093, 0
      %2132 = vmatprep.subr.mxu0 0.0
      %2133 = vmatpush1.msra.mxu0 %v2103
      %2134 = vmatprep.subr.mxu0 0.0
      %2135 = vmatpush1.msra.mxu0 %v2104
      %2136 = vmatprep.subr.mxu0 0.0
      %2137 = vmatpush1.msra.mxu0 %v2105
      %2138 = vmatprep.subr.mxu0 0.0
      %2139 = vmatpush1.msra.mxu0 %v2106
      %2140 = vmatprep.subr.mxu0 0.0
      %2141 = vmatpush1.msra.mxu0 %v2107
      %2142 = vmatprep.subr.mxu0 0.0
      %2143 = vmatpush1.msra.mxu0 0.0
      %2144 = vmatprep.subr.mxu0 0.0
      %2145 = vmatpush1.msra.mxu0 0.0
      %2146 = vmatprep.subr.mxu0 0.0
      %2147 = vmatpush1.msra.mxu0 0.0
      %2148 = vmatprep.subr.mxu0 0.0
      %2149 = vmatpush1.msra.mxu0 0.0
      %2150 = vmatprep.subr.mxu0 0.0
      %2151 = vmatpush1.msra.mxu0 0.0
      %2152 = vmatprep.subr.mxu0 0.0
      %2153 = vmatpush1.msra.mxu0 0.0
      %2154 = vmatprep.subr.mxu0 0.0
      %2155 = vmatpush1.msra.mxu0 0.0
      %2156 = vmatprep.subr.mxu0 0.0
      %2157 = vmatpush1.msra.mxu0 0.0
      %2158 = vmatprep.subr.mxu0 0.0
      %2159 = vmatpush1.msra.mxu0 0.0
      %2160 = vmatprep.subr.mxu0 0.0
      %2161 = vmatpush1.msra.mxu0 0.0
      %2162 = vmatprep.subr.mxu0 0.0
      %2163 = vmatpush1.msra.mxu0 0.0
      %2164 = vmatprep.subr.mxu0 0.0
      %2165 = vmatpush1.msra.mxu0 0.0
      %2166 = vmatprep.subr.mxu0 0.0
      %2167 = vmatpush1.msra.mxu0 0.0
      %2168 = vmatprep.subr.mxu0 0.0
      %2169 = vmatpush1.msra.mxu0 0.0
      %2170 = vmatprep.subr.mxu0 0.0
      %2171 = vmatpush1.msra.mxu0 0.0
      %2172 = vmatprep.subr.mxu0 0.0
      %2173 = vmatpush1.msra.mxu0 0.0
      %2174 = vmatprep.subr.mxu0 0.0
      %2175 = vmatpush1.msra.mxu0 0.0
      %2176 = vmatprep.subr.mxu0 0.0
      %2177 = vmatpush1.msra.mxu0 0.0
      %2178 = vmatprep.subr.mxu0 0.0
      %2179 = vmatpush1.msra.mxu0 0.0
      %2180 = vmatprep.subr.mxu0 0.0
      %2181 = vmatpush1.msra.mxu0 0.0
      %2182 = vmatprep.subr.mxu0 0.0
      %2183 = vmatpush1.msra.mxu0 0.0
      %2184 = vmatprep.subr.mxu0 0.0
      %2185 = vmatpush1.msra.mxu0 0.0
      %2186 = vmatprep.subr.mxu0 0.0
      %2187 = vmatpush1.msra.mxu0 0.0
      %2188 = vmatprep.subr.mxu0 0.0
      %2189 = vmatpush1.msra.mxu0 0.0
      %2190 = vmatprep.subr.mxu0 0.0
      %2191 = vmatpush1.msra.mxu0 0.0
      %2192 = vmatprep.subr.mxu0 0.0
      %2193 = vmatpush1.msra.mxu0 0.0
      %2194 = vmatprep.subr.mxu0 0.0
      %2195 = vmatpush1.msra.mxu0 0.0
      %2196 = vmatprep.mubr.f32.mxu0 0.0
      %2197 = vmatmul.mubr.f32.gmra.mrb[0].mxu0 %v2109
      %v2198 = vpop.f32.mrb[0].mxu0
      %v2199 = vadd.f32 0.0, %v2198
      %v2200 = vpop.f32.mrb[0].mxu0
      %2201 = vmatprep.mubr.f32.mxu0 0.0
      %2202 = vmatmul.mubr.f32.gmra.mrb[0].mxu0 %v2112
      %v2203 = vpop.f32.mrb[0].mxu0
      %v2204 = vadd.f32 0.0, %v2203
      %v2205 = vpop.f32.mrb[0].mxu0
      %2206 = vmatprep.mubr.f32.mxu0 0.0
      %2207 = vmatmul.mubr.f32.gmra.mrb[0].mxu0 %v2115
      %v2208 = vpop.f32.mrb[0].mxu0
      %v2209 = vadd.f32 0.0, %v2208
      %v2210 = vpop.f32.mrb[0].mxu0
      %2211 = vmatprep.mubr.f32.mxu0 0.0
      %2212 = vmatmul.mubr.f32.gmra.mrb[0].mxu0 %v2118
      %v2213 = vpop.f32.mrb[0].mxu0
      %v2214 = vadd.f32 0.0, %v2213
      %v2215 = vpop.f32.mrb[0].mxu0
      %2216 = vmatprep.mubr.f32.mxu0 0.0
      %2217 = vmatmul.mubr.f32.gmra.mrb[0].mxu0 %v2121
      %v2218 = vpop.f32.mrb[0].mxu0
      %v2219 = vadd.f32 0.0, %v2218
      %v2220 = vpop.f32.mrb[0].mxu0
      %2221 = vmatprep.mubr.f32.mxu0 0.0
      %2222 = vmatmul.mubr.f32.gmra.mrb[0].mxu0 %v2124
      %v2223 = vpop.f32.mrb[0].mxu0
      %v2224 = vadd.f32 0.0, %v2223
      %v2225 = vpop.f32.mrb[0].mxu0
      %2226 = vmatprep.mubr.f32.mxu0 0.0
      %2227 = vmatmul.mubr.f32.gmra.mrb[0].mxu0 %v2127
      %v2228 = vpop.f32.mrb[0].mxu0
      %v2229 = vadd.f32 0.0, %v2228
      %v2230 = vpop.f32.mrb[0].mxu0
      %2231 = vmatprep.mubr.f32.mxu0 0.0
      %2232 = vmatmul.mubr.f32.gmra.mrb[0].mxu0 %v2130
      %v2233 = vpop.f32.mrb[0].mxu0
      %v2234 = vadd.f32 0.0, %v2233
      %v2235 = vpop.f32.mrb[0].mxu0
      %2236 = vdwg.mxu0
      %v2237 = vadd.f32 %v2094, %v2199
      %v2238 = vadd.f32 %v2095, %v2204
      %v2239 = vadd.f32 %v2096, %v2209
      %v2240 = vadd.f32 %v2097, %v2214
      %v2241 = vadd.f32 %v2098, %v2219
      %v2242 = vadd.f32 %v2099, %v2224
      %v2243 = vadd.f32 %v2100, %v2229
      %v2244 = vadd.f32 %v2101, %v2234
      %2245 = vst.msk [vmem:[#allocation3] sm:$0xff] %vm336, %v2237
      %2246 = vst.msk [vmem:[#allocation3 + $0x8] sm:$0xff] %vm336, %v2238
      %2247 = vst.msk [vmem:[#allocation3 + $0x10] sm:$0xff] %vm336, %v2239
      %2248 = vst.msk [vmem:[#allocation3 + $0x18] sm:$0xff] %vm336, %v2240
      %2249 = vst.msk [vmem:[#allocation3 + $0x20] sm:$0xff] %vm336, %v2241
      %2250 = vst.msk [vmem:[#allocation3 + $0x28] sm:$0xff] %vm336, %v2242
      %2251 = vst.msk [vmem:[#allocation3 + $0x30] sm:$0xff] %vm336, %v2243
      %2252 = vst.msk [vmem:[#allocation3 + $0x38] sm:$0xff] %vm336, %v2244
      %v2253 = vld [vmem:[#allocation2 + $0x2] sm:$0xff]
      %v2254 = vld [vmem:[#allocation2 + $0x12] sm:$0xff]
      %v2255 = vld [vmem:[#allocation2 + $0x22] sm:$0xff]
      %v2256 = vld [vmem:[#allocation2 + $0x32] sm:$0xff]
      %v2257 = vld [vmem:[#allocation2 + $0x42] sm:$0xff]
      %v2258 = vld [vmem:[#allocation2 + $0x52] sm:$0xff]
      %v2259 = vld [vmem:[#allocation2 + $0x62] sm:$0xff]
      %v2260 = vld [vmem:[#allocation2 + $0x72] sm:$0xff]
      %v2261 = vld [vmem:[#allocation3] sm:$0xff]
      %v2262 = vld [vmem:[#allocation3 + $0x8] sm:$0xff]
      %v2263 = vld [vmem:[#allocation3 + $0x10] sm:$0xff]
      %v2264 = vld [vmem:[#allocation3 + $0x18] sm:$0xff]
      %v2265 = vld [vmem:[#allocation3 + $0x20] sm:$0xff]
      %v2266 = vld [vmem:[#allocation3 + $0x28] sm:$0xff]
      %v2267 = vld [vmem:[#allocation3 + $0x30] sm:$0xff]
      %v2268 = vld [vmem:[#allocation3 + $0x38] sm:$0xff]
      %s2269 = scalar_lea.vmem %s3, 80
      %v2270 = vld [vmem:[%s2269] sm:$0xff]
      %v2271 = vld [vmem:[%s2269 + $0x8] sm:$0xff]
      %v2272 = vld [vmem:[%s2269 + $0x10] sm:$0xff]
      %v2273 = vld [vmem:[%s2269 + $0x18] sm:$0xff]
      %v2274 = vld [vmem:[%s2269 + $0x20] sm:$0xff]
      %v2276 = vsel %vm256, %v2253, 0
      %v2279 = vsel %vm256, %v2254, 0
      %v2282 = vsel %vm256, %v2255, 0
      %v2285 = vsel %vm256, %v2256, 0
      %v2288 = vsel %vm256, %v2257, 0
      %v2291 = vsel %vm256, %v2258, 0
      %v2294 = vsel %vm256, %v2259, 0
      %v2297 = vsel %vm256, %v2260, 0
      %2299 = vmatprep.subr.mxu0 0.0
      %2300 = vmatpush1.msra.mxu0 %v2270
      %2301 = vmatprep.subr.mxu0 0.0
      %2302 = vmatpush1.msra.mxu0 %v2271
      %2303 = vmatprep.subr.mxu0 0.0
      %2304 = vmatpush1.msra.mxu0 %v2272
      %2305 = vmatprep.subr.mxu0 0.0
      %2306 = vmatpush1.msra.mxu0 %v2273
      %2307 = vmatprep.subr.mxu0 0.0
      %2308 = vmatpush1.msra.mxu0 %v2274
      %2309 = vmatprep.subr.mxu0 0.0
      %2310 = vmatpush1.msra.mxu0 0.0
      %2311 = vmatprep.subr.mxu0 0.0
      %2312 = vmatpush1.msra.mxu0 0.0
      %2313 = vmatprep.subr.mxu0 0.0
      %2314 = vmatpush1.msra.mxu0 0.0
      %2315 = vmatprep.subr.mxu0 0.0
      %2316 = vmatpush1.msra.mxu0 0.0
      %2317 = vmatprep.subr.mxu0 0.0
      %2318 = vmatpush1.msra.mxu0 0.0
      %2319 = vmatprep.subr.mxu0 0.0
      %2320 = vmatpush1.msra.mxu0 0.0
      %2321 = vmatprep.subr.mxu0 0.0
      %2322 = vmatpush1.msra.mxu0 0.0
      %2323 = vmatprep.subr.mxu0 0.0
      %2324 = vmatpush1.msra.mxu0 0.0
      %2325 = vmatprep.subr.mxu0 0.0
      %2326 = vmatpush1.msra.mxu0 0.0
      %2327 = vmatprep.subr.mxu0 0.0
      %2328 = vmatpush1.msra.mxu0 0.0
      %2329 = vmatprep.subr.mxu0 0.0
      %2330 = vmatpush1.msra.mxu0 0.0
      %2331 = vmatprep.subr.mxu0 0.0
      %2332 = vmatpush1.msra.mxu0 0.0
      %2333 = vmatprep.subr.mxu0 0.0
      %2334 = vmatpush1.msra.mxu0 0.0
      %2335 = vmatprep.subr.mxu0 0.0
      %2336 = vmatpush1.msra.mxu0 0.0
      %2337 = vmatprep.subr.mxu0 0.0
      %2338 = vmatpush1.msra.mxu0 0.0
      %2339 = vmatprep.subr.mxu0 0.0
      %2340 = vmatpush1.msra.mxu0 0.0
      %2341 = vmatprep.subr.mxu0 0.0
      %2342 = vmatpush1.msra.mxu0 0.0
      %2343 = vmatprep.subr.mxu0 0.0
      %2344 = vmatpush1.msra.mxu0 0.0
      %2345 = vmatprep.subr.mxu0 0.0
      %2346 = vmatpush1.msra.mxu0 0.0
      %2347 = vmatprep.subr.mxu0 0.0
      %2348 = vmatpush1.msra.mxu0 0.0
      %2349 = vmatprep.subr.mxu0 0.0
      %2350 = vmatpush1.msra.mxu0 0.0
      %2351 = vmatprep.subr.mxu0 0.0
      %2352 = vmatpush1.msra.mxu0 0.0
      %2353 = vmatprep.subr.mxu0 0.0
      %2354 = vmatpush1.msra.mxu0 0.0
      %2355 = vmatprep.subr.mxu0 0.0
      %2356 = vmatpush1.msra.mxu0 0.0
      %2357 = vmatprep.subr.mxu0 0.0
      %2358 = vmatpush1.msra.mxu0 0.0
      %2359 = vmatprep.subr.mxu0 0.0
      %2360 = vmatpush1.msra.mxu0 0.0
      %2361 = vmatprep.subr.mxu0 0.0
      %2362 = vmatpush1.msra.mxu0 0.0
      %2363 = vmatprep.mubr.f32.mxu0 0.0
      %2364 = vmatmul.mubr.f32.gmra.mrb[0].mxu0 %v2276
      %v2365 = vpop.f32.mrb[0].mxu0
      %v2366 = vadd.f32 0.0, %v2365
      %v2367 = vpop.f32.mrb[0].mxu0
      %2368 = vmatprep.mubr.f32.mxu0 0.0
      %2369 = vmatmul.mubr.f32.gmra.mrb[0].mxu0 %v2279
      %v2370 = vpop.f32.mrb[0].mxu0
      %v2371 = vadd.f32 0.0, %v2370
      %v2372 = vpop.f32.mrb[0].mxu0
      %2373 = vmatprep.mubr.f32.mxu0 0.0
      %2374 = vmatmul.mubr.f32.gmra.mrb[0].mxu0 %v2282
      %v2375 = vpop.f32.mrb[0].mxu0
      %v2376 = vadd.f32 0.0, %v2375
      %v2377 = vpop.f32.mrb[0].mxu0
      %2378 = vmatprep.mubr.f32.mxu0 0.0
      %2379 = vmatmul.mubr.f32.gmra.mrb[0].mxu0 %v2285
      %v2380 = vpop.f32.mrb[0].mxu0
      %v2381 = vadd.f32 0.0, %v2380
      %v2382 = vpop.f32.mrb[0].mxu0
      %2383 = vmatprep.mubr.f32.mxu0 0.0
      %2384 = vmatmul.mubr.f32.gmra.mrb[0].mxu0 %v2288
      %v2385 = vpop.f32.mrb[0].mxu0
      %v2386 = vadd.f32 0.0, %v2385
      %v2387 = vpop.f32.mrb[0].mxu0
      %2388 = vmatprep.mubr.f32.mxu0 0.0
      %2389 = vmatmul.mubr.f32.gmra.mrb[0].mxu0 %v2291
      %v2390 = vpop.f32.mrb[0].mxu0
      %v2391 = vadd.f32 0.0, %v2390
      %v2392 = vpop.f32.mrb[0].mxu0
      %2393 = vmatprep.mubr.f32.mxu0 0.0
      %2394 = vmatmul.mubr.f32.gmra.mrb[0].mxu0 %v2294
      %v2395 = vpop.f32.mrb[0].mxu0
      %v2396 = vadd.f32 0.0, %v2395
      %v2397 = vpop.f32.mrb[0].mxu0
      %2398 = vmatprep.mubr.f32.mxu0 0.0
      %2399 = vmatmul.mubr.f32.gmra.mrb[0].mxu0 %v2297
      %v2400 = vpop.f32.mrb[0].mxu0
      %v2401 = vadd.f32 0.0, %v2400
      %v2402 = vpop.f32.mrb[0].mxu0
      %2403 = vdwg.mxu0
      %v2404 = vadd.f32 %v2261, %v2366
      %v2405 = vadd.f32 %v2262, %v2371
      %v2406 = vadd.f32 %v2263, %v2376
      %v2407 = vadd.f32 %v2264, %v2381
      %v2408 = vadd.f32 %v2265, %v2386
      %v2409 = vadd.f32 %v2266, %v2391
      %v2410 = vadd.f32 %v2267, %v2396
      %v2411 = vadd.f32 %v2268, %v2401
      %2412 = vst.msk [vmem:[#allocation3] sm:$0xff] %vm336, %v2404
      %2413 = vst.msk [vmem:[#allocation3 + $0x8] sm:$0xff] %vm336, %v2405
      %2414 = vst.msk [vmem:[#allocation3 + $0x10] sm:$0xff] %vm336, %v2406
      %2415 = vst.msk [vmem:[#allocation3 + $0x18] sm:$0xff] %vm336, %v2407
      %2416 = vst.msk [vmem:[#allocation3 + $0x20] sm:$0xff] %vm336, %v2408
      %2417 = vst.msk [vmem:[#allocation3 + $0x28] sm:$0xff] %vm336, %v2409
      %2418 = vst.msk [vmem:[#allocation3 + $0x30] sm:$0xff] %vm336, %v2410
      %2419 = vst.msk [vmem:[#allocation3 + $0x38] sm:$0xff] %vm336, %v2411
      %v2420 = vld [vmem:[%s318] sm:$0xff]
      %v2421 = vld [vmem:[%s318 + $0x10] sm:$0xff]
      %v2422 = vld [vmem:[%s318 + $0x20] sm:$0xff]
      %v2423 = vld [vmem:[%s318 + $0x30] sm:$0xff]
      %v2424 = vld [vmem:[%s318 + $0x40] sm:$0xff]
      %v2425 = vld [vmem:[%s318 + $0x50] sm:$0xff]
      %v2426 = vld [vmem:[%s318 + $0x60] sm:$0xff]
      %v2427 = vld [vmem:[%s318 + $0x70] sm:$0xff]
      %v2428 = vld [vmem:[#allocation3] sm:$0xff]
      %v2429 = vld [vmem:[#allocation3 + $0x8] sm:$0xff]
      %v2430 = vld [vmem:[#allocation3 + $0x10] sm:$0xff]
      %v2431 = vld [vmem:[#allocation3 + $0x18] sm:$0xff]
      %v2432 = vld [vmem:[#allocation3 + $0x20] sm:$0xff]
      %v2433 = vld [vmem:[#allocation3 + $0x28] sm:$0xff]
      %v2434 = vld [vmem:[#allocation3 + $0x30] sm:$0xff]
      %v2435 = vld [vmem:[#allocation3 + $0x38] sm:$0xff]
      %s2436 = scalar_lea.vmem %s3, 120
      %v2437 = vld [vmem:[%s2436] sm:$0xff]
      %v2438 = vld [vmem:[%s2436 + $0x8] sm:$0xff]
      %v2439 = vld [vmem:[%s2436 + $0x10] sm:$0xff]
      %v2440 = vld [vmem:[%s2436 + $0x18] sm:$0xff]
      %v2441 = vld [vmem:[%s2436 + $0x20] sm:$0xff]
      %v2443 = vsel %vm256, %v2420, 0
      %v2446 = vsel %vm256, %v2421, 0
      %v2449 = vsel %vm256, %v2422, 0
      %v2452 = vsel %vm256, %v2423, 0
      %v2455 = vsel %vm256, %v2424, 0
      %v2458 = vsel %vm256, %v2425, 0
      %v2461 = vsel %vm256, %v2426, 0
      %v2464 = vsel %vm256, %v2427, 0
      %2466 = vmatprep.subr.mxu0 0.0
      %2467 = vmatpush1.msra.mxu0 %v2437
      %2468 = vmatprep.subr.mxu0 0.0
      %2469 = vmatpush1.msra.mxu0 %v2438
      %2470 = vmatprep.subr.mxu0 0.0
      %2471 = vmatpush1.msra.mxu0 %v2439
      %2472 = vmatprep.subr.mxu0 0.0
      %2473 = vmatpush1.msra.mxu0 %v2440
      %2474 = vmatprep.subr.mxu0 0.0
      %2475 = vmatpush1.msra.mxu0 %v2441
      %2476 = vmatprep.subr.mxu0 0.0
      %2477 = vmatpush1.msra.mxu0 0.0
      %2478 = vmatprep.subr.mxu0 0.0
      %2479 = vmatpush1.msra.mxu0 0.0
      %2480 = vmatprep.subr.mxu0 0.0
      %2481 = vmatpush1.msra.mxu0 0.0
      %2482 = vmatprep.subr.mxu0 0.0
      %2483 = vmatpush1.msra.mxu0 0.0
      %2484 = vmatprep.subr.mxu0 0.0
      %2485 = vmatpush1.msra.mxu0 0.0
      %2486 = vmatprep.subr.mxu0 0.0
      %2487 = vmatpush1.msra.mxu0 0.0
      %2488 = vmatprep.subr.mxu0 0.0
      %2489 = vmatpush1.msra.mxu0 0.0
      %2490 = vmatprep.subr.mxu0 0.0
      %2491 = vmatpush1.msra.mxu0 0.0
      %2492 = vmatprep.subr.mxu0 0.0
      %2493 = vmatpush1.msra.mxu0 0.0
      %2494 = vmatprep.subr.mxu0 0.0
      %2495 = vmatpush1.msra.mxu0 0.0
      %2496 = vmatprep.subr.mxu0 0.0
      %2497 = vmatpush1.msra.mxu0 0.0
      %2498 = vmatprep.subr.mxu0 0.0
      %2499 = vmatpush1.msra.mxu0 0.0
      %2500 = vmatprep.subr.mxu0 0.0
      %2501 = vmatpush1.msra.mxu0 0.0
      %2502 = vmatprep.subr.mxu0 0.0
      %2503 = vmatpush1.msra.mxu0 0.0
      %2504 = vmatprep.subr.mxu0 0.0
      %2505 = vmatpush1.msra.mxu0 0.0
      %2506 = vmatprep.subr.mxu0 0.0
      %2507 = vmatpush1.msra.mxu0 0.0
      %2508 = vmatprep.subr.mxu0 0.0
      %2509 = vmatpush1.msra.mxu0 0.0
      %2510 = vmatprep.subr.mxu0 0.0
      %2511 = vmatpush1.msra.mxu0 0.0
      %2512 = vmatprep.subr.mxu0 0.0
      %2513 = vmatpush1.msra.mxu0 0.0
      %2514 = vmatprep.subr.mxu0 0.0
      %2515 = vmatpush1.msra.mxu0 0.0
      %2516 = vmatprep.subr.mxu0 0.0
      %2517 = vmatpush1.msra.mxu0 0.0
      %2518 = vmatprep.subr.mxu0 0.0
      %2519 = vmatpush1.msra.mxu0 0.0
      %2520 = vmatprep.subr.mxu0 0.0
      %2521 = vmatpush1.msra.mxu0 0.0
      %2522 = vmatprep.subr.mxu0 0.0
      %2523 = vmatpush1.msra.mxu0 0.0
      %2524 = vmatprep.subr.mxu0 0.0
      %2525 = vmatpush1.msra.mxu0 0.0
      %2526 = vmatprep.subr.mxu0 0.0
      %2527 = vmatpush1.msra.mxu0 0.0
      %2528 = vmatprep.subr.mxu0 0.0
      %2529 = vmatpush1.msra.mxu0 0.0
      %2530 = vmatprep.mubr.f32.mxu0 0.0
      %2531 = vmatmul.mubr.f32.gmra.mrb[0].mxu0 %v2443
      %v2532 = vpop.f32.mrb[0].mxu0
      %v2533 = vadd.f32 0.0, %v2532
      %v2534 = vpop.f32.mrb[0].mxu0
      %2535 = vmatprep.mubr.f32.mxu0 0.0
      %2536 = vmatmul.mubr.f32.gmra.mrb[0].mxu0 %v2446
      %v2537 = vpop.f32.mrb[0].mxu0
      %v2538 = vadd.f32 0.0, %v2537
      %v2539 = vpop.f32.mrb[0].mxu0
      %2540 = vmatprep.mubr.f32.mxu0 0.0
      %2541 = vmatmul.mubr.f32.gmra.mrb[0].mxu0 %v2449
      %v2542 = vpop.f32.mrb[0].mxu0
      %v2543 = vadd.f32 0.0, %v2542
      %v2544 = vpop.f32.mrb[0].mxu0
      %2545 = vmatprep.mubr.f32.mxu0 0.0
      %2546 = vmatmul.mubr.f32.gmra.mrb[0].mxu0 %v2452
      %v2547 = vpop.f32.mrb[0].mxu0
      %v2548 = vadd.f32 0.0, %v2547
      %v2549 = vpop.f32.mrb[0].mxu0
      %2550 = vmatprep.mubr.f32.mxu0 0.0
      %2551 = vmatmul.mubr.f32.gmra.mrb[0].mxu0 %v2455
      %v2552 = vpop.f32.mrb[0].mxu0
      %v2553 = vadd.f32 0.0, %v2552
      %v2554 = vpop.f32.mrb[0].mxu0
      %2555 = vmatprep.mubr.f32.mxu0 0.0
      %2556 = vmatmul.mubr.f32.gmra.mrb[0].mxu0 %v2458
      %v2557 = vpop.f32.mrb[0].mxu0
      %v2558 = vadd.f32 0.0, %v2557
      %v2559 = vpop.f32.mrb[0].mxu0
      %2560 = vmatprep.mubr.f32.mxu0 0.0
      %2561 = vmatmul.mubr.f32.gmra.mrb[0].mxu0 %v2461
      %v2562 = vpop.f32.mrb[0].mxu0
      %v2563 = vadd.f32 0.0, %v2562
      %v2564 = vpop.f32.mrb[0].mxu0
      %2565 = vmatprep.mubr.f32.mxu0 0.0
      %2566 = vmatmul.mubr.f32.gmra.mrb[0].mxu0 %v2464
      %v2567 = vpop.f32.mrb[0].mxu0
      %v2568 = vadd.f32 0.0, %v2567
      %v2569 = vpop.f32.mrb[0].mxu0
      %2570 = vdwg.mxu0
      %v2571 = vadd.f32 %v2428, %v2533
      %v2572 = vadd.f32 %v2429, %v2538
      %v2573 = vadd.f32 %v2430, %v2543
      %v2574 = vadd.f32 %v2431, %v2548
      %v2575 = vadd.f32 %v2432, %v2553
      %v2576 = vadd.f32 %v2433, %v2558
      %v2577 = vadd.f32 %v2434, %v2563
      %v2578 = vadd.f32 %v2435, %v2568
      %2579 = vst.msk [vmem:[#allocation3] sm:$0xff] %vm336, %v2571
      %2580 = vst.msk [vmem:[#allocation3 + $0x8] sm:$0xff] %vm336, %v2572
      %2581 = vst.msk [vmem:[#allocation3 + $0x10] sm:$0xff] %vm336, %v2573
      %2582 = vst.msk [vmem:[#allocation3 + $0x18] sm:$0xff] %vm336, %v2574
      %2583 = vst.msk [vmem:[#allocation3 + $0x20] sm:$0xff] %vm336, %v2575
      %2584 = vst.msk [vmem:[#allocation3 + $0x28] sm:$0xff] %vm336, %v2576
      %2585 = vst.msk [vmem:[#allocation3 + $0x30] sm:$0xff] %vm336, %v2577
      %2586 = vst.msk [vmem:[#allocation3 + $0x38] sm:$0xff] %vm336, %v2578
      %v2587 = vld [vmem:[%s318 + $0x1] sm:$0xff]
      %v2588 = vld [vmem:[%s318 + $0x11] sm:$0xff]
      %v2589 = vld [vmem:[%s318 + $0x21] sm:$0xff]
      %v2590 = vld [vmem:[%s318 + $0x31] sm:$0xff]
      %v2591 = vld [vmem:[%s318 + $0x41] sm:$0xff]
      %v2592 = vld [vmem:[%s318 + $0x51] sm:$0xff]
      %v2593 = vld [vmem:[%s318 + $0x61] sm:$0xff]
      %v2594 = vld [vmem:[%s318 + $0x71] sm:$0xff]
      %v2595 = vld [vmem:[#allocation3] sm:$0xff]
      %v2596 = vld [vmem:[#allocation3 + $0x8] sm:$0xff]
      %v2597 = vld [vmem:[#allocation3 + $0x10] sm:$0xff]
      %v2598 = vld [vmem:[#allocation3 + $0x18] sm:$0xff]
      %v2599 = vld [vmem:[#allocation3 + $0x20] sm:$0xff]
      %v2600 = vld [vmem:[#allocation3 + $0x28] sm:$0xff]
      %v2601 = vld [vmem:[#allocation3 + $0x30] sm:$0xff]
      %v2602 = vld [vmem:[#allocation3 + $0x38] sm:$0xff]
      %s2603 = scalar_lea.vmem %s3, 160
      %v2604 = vld [vmem:[%s2603] sm:$0xff]
      %v2605 = vld [vmem:[%s2603 + $0x8] sm:$0xff]
      %v2606 = vld [vmem:[%s2603 + $0x10] sm:$0xff]
      %v2607 = vld [vmem:[%s2603 + $0x18] sm:$0xff]
      %v2608 = vld [vmem:[%s2603 + $0x20] sm:$0xff]
      %v2610 = vsel %vm256, %v2587, 0
      %v2613 = vsel %vm256, %v2588, 0
      %v2616 = vsel %vm256, %v2589, 0
      %v2619 = vsel %vm256, %v2590, 0
      %v2622 = vsel %vm256, %v2591, 0
      %v2625 = vsel %vm256, %v2592, 0
      %v2628 = vsel %vm256, %v2593, 0
      %v2631 = vsel %vm256, %v2594, 0
      %2633 = vmatprep.subr.mxu0 0.0
      %2634 = vmatpush1.msra.mxu0 %v2604
      %2635 = vmatprep.subr.mxu0 0.0
      %2636 = vmatpush1.msra.mxu0 %v2605
      %2637 = vmatprep.subr.mxu0 0.0
      %2638 = vmatpush1.msra.mxu0 %v2606
      %2639 = vmatprep.subr.mxu0 0.0
      %2640 = vmatpush1.msra.mxu0 %v2607
      %2641 = vmatprep.subr.mxu0 0.0
      %2642 = vmatpush1.msra.mxu0 %v2608
      %2643 = vmatprep.subr.mxu0 0.0
      %2644 = vmatpush1.msra.mxu0 0.0
      %2645 = vmatprep.subr.mxu0 0.0
      %2646 = vmatpush1.msra.mxu0 0.0
      %2647 = vmatprep.subr.mxu0 0.0
      %2648 = vmatpush1.msra.mxu0 0.0
      %2649 = vmatprep.subr.mxu0 0.0
      %2650 = vmatpush1.msra.mxu0 0.0
      %2651 = vmatprep.subr.mxu0 0.0
      %2652 = vmatpush1.msra.mxu0 0.0
      %2653 = vmatprep.subr.mxu0 0.0
      %2654 = vmatpush1.msra.mxu0 0.0
      %2655 = vmatprep.subr.mxu0 0.0
      %2656 = vmatpush1.msra.mxu0 0.0
      %2657 = vmatprep.subr.mxu0 0.0
      %2658 = vmatpush1.msra.mxu0 0.0
      %2659 = vmatprep.subr.mxu0 0.0
      %2660 = vmatpush1.msra.mxu0 0.0
      %2661 = vmatprep.subr.mxu0 0.0
      %2662 = vmatpush1.msra.mxu0 0.0
      %2663 = vmatprep.subr.mxu0 0.0
      %2664 = vmatpush1.msra.mxu0 0.0
      %2665 = vmatprep.subr.mxu0 0.0
      %2666 = vmatpush1.msra.mxu0 0.0
      %2667 = vmatprep.subr.mxu0 0.0
      %2668 = vmatpush1.msra.mxu0 0.0
      %2669 = vmatprep.subr.mxu0 0.0
      %2670 = vmatpush1.msra.mxu0 0.0
      %2671 = vmatprep.subr.mxu0 0.0
      %2672 = vmatpush1.msra.mxu0 0.0
      %2673 = vmatprep.subr.mxu0 0.0
      %2674 = vmatpush1.msra.mxu0 0.0
      %2675 = vmatprep.subr.mxu0 0.0
      %2676 = vmatpush1.msra.mxu0 0.0
      %2677 = vmatprep.subr.mxu0 0.0
      %2678 = vmatpush1.msra.mxu0 0.0
      %2679 = vmatprep.subr.mxu0 0.0
      %2680 = vmatpush1.msra.mxu0 0.0
      %2681 = vmatprep.subr.mxu0 0.0
      %2682 = vmatpush1.msra.mxu0 0.0
      %2683 = vmatprep.subr.mxu0 0.0
      %2684 = vmatpush1.msra.mxu0 0.0
      %2685 = vmatprep.subr.mxu0 0.0
      %2686 = vmatpush1.msra.mxu0 0.0
      %2687 = vmatprep.subr.mxu0 0.0
      %2688 = vmatpush1.msra.mxu0 0.0
      %2689 = vmatprep.subr.mxu0 0.0
      %2690 = vmatpush1.msra.mxu0 0.0
      %2691 = vmatprep.subr.mxu0 0.0
      %2692 = vmatpush1.msra.mxu0 0.0
      %2693 = vmatprep.subr.mxu0 0.0
      %2694 = vmatpush1.msra.mxu0 0.0
      %2695 = vmatprep.subr.mxu0 0.0
      %2696 = vmatpush1.msra.mxu0 0.0
      %2697 = vmatprep.mubr.f32.mxu0 0.0
      %2698 = vmatmul.mubr.f32.gmra.mrb[0].mxu0 %v2610
      %v2699 = vpop.f32.mrb[0].mxu0
      %v2700 = vadd.f32 0.0, %v2699
      %v2701 = vpop.f32.mrb[0].mxu0
      %2702 = vmatprep.mubr.f32.mxu0 0.0
      %2703 = vmatmul.mubr.f32.gmra.mrb[0].mxu0 %v2613
      %v2704 = vpop.f32.mrb[0].mxu0
      %v2705 = vadd.f32 0.0, %v2704
      %v2706 = vpop.f32.mrb[0].mxu0
      %2707 = vmatprep.mubr.f32.mxu0 0.0
      %2708 = vmatmul.mubr.f32.gmra.mrb[0].mxu0 %v2616
      %v2709 = vpop.f32.mrb[0].mxu0
      %v2710 = vadd.f32 0.0, %v2709
      %v2711 = vpop.f32.mrb[0].mxu0
      %2712 = vmatprep.mubr.f32.mxu0 0.0
      %2713 = vmatmul.mubr.f32.gmra.mrb[0].mxu0 %v2619
      %v2714 = vpop.f32.mrb[0].mxu0
      %v2715 = vadd.f32 0.0, %v2714
      %v2716 = vpop.f32.mrb[0].mxu0
      %2717 = vmatprep.mubr.f32.mxu0 0.0
      %2718 = vmatmul.mubr.f32.gmra.mrb[0].mxu0 %v2622
      %v2719 = vpop.f32.mrb[0].mxu0
      %v2720 = vadd.f32 0.0, %v2719
      %v2721 = vpop.f32.mrb[0].mxu0
      %2722 = vmatprep.mubr.f32.mxu0 0.0
      %2723 = vmatmul.mubr.f32.gmra.mrb[0].mxu0 %v2625
      %v2724 = vpop.f32.mrb[0].mxu0
      %v2725 = vadd.f32 0.0, %v2724
      %v2726 = vpop.f32.mrb[0].mxu0
      %2727 = vmatprep.mubr.f32.mxu0 0.0
      %2728 = vmatmul.mubr.f32.gmra.mrb[0].mxu0 %v2628
      %v2729 = vpop.f32.mrb[0].mxu0
      %v2730 = vadd.f32 0.0, %v2729
      %v2731 = vpop.f32.mrb[0].mxu0
      %2732 = vmatprep.mubr.f32.mxu0 0.0
      %2733 = vmatmul.mubr.f32.gmra.mrb[0].mxu0 %v2631
      %v2734 = vpop.f32.mrb[0].mxu0
      %v2735 = vadd.f32 0.0, %v2734
      %v2736 = vpop.f32.mrb[0].mxu0
      %2737 = vdwg.mxu0
      %v2738 = vadd.f32 %v2595, %v2700
      %v2739 = vadd.f32 %v2596, %v2705
      %v2740 = vadd.f32 %v2597, %v2710
      %v2741 = vadd.f32 %v2598, %v2715
      %v2742 = vadd.f32 %v2599, %v2720
      %v2743 = vadd.f32 %v2600, %v2725
      %v2744 = vadd.f32 %v2601, %v2730
      %v2745 = vadd.f32 %v2602, %v2735
      %2746 = vst.msk [vmem:[#allocation3] sm:$0xff] %vm336, %v2738
      %2747 = vst.msk [vmem:[#allocation3 + $0x8] sm:$0xff] %vm336, %v2739
      %2748 = vst.msk [vmem:[#allocation3 + $0x10] sm:$0xff] %vm336, %v2740
      %2749 = vst.msk [vmem:[#allocation3 + $0x18] sm:$0xff] %vm336, %v2741
      %2750 = vst.msk [vmem:[#allocation3 + $0x20] sm:$0xff] %vm336, %v2742
      %2751 = vst.msk [vmem:[#allocation3 + $0x28] sm:$0xff] %vm336, %v2743
      %2752 = vst.msk [vmem:[#allocation3 + $0x30] sm:$0xff] %vm336, %v2744
      %2753 = vst.msk [vmem:[#allocation3 + $0x38] sm:$0xff] %vm336, %v2745
      %v2754 = vld [vmem:[%s318 + $0x2] sm:$0xff]
      %v2755 = vld [vmem:[%s318 + $0x12] sm:$0xff]
      %v2756 = vld [vmem:[%s318 + $0x22] sm:$0xff]
      %v2757 = vld [vmem:[%s318 + $0x32] sm:$0xff]
      %v2758 = vld [vmem:[%s318 + $0x42] sm:$0xff]
      %v2759 = vld [vmem:[%s318 + $0x52] sm:$0xff]
      %v2760 = vld [vmem:[%s318 + $0x62] sm:$0xff]
      %v2761 = vld [vmem:[%s318 + $0x72] sm:$0xff]
      %v2762 = vld [vmem:[#allocation3] sm:$0xff]
      %v2763 = vld [vmem:[#allocation3 + $0x8] sm:$0xff]
      %v2764 = vld [vmem:[#allocation3 + $0x10] sm:$0xff]
      %v2765 = vld [vmem:[#allocation3 + $0x18] sm:$0xff]
      %v2766 = vld [vmem:[#allocation3 + $0x20] sm:$0xff]
      %v2767 = vld [vmem:[#allocation3 + $0x28] sm:$0xff]
      %v2768 = vld [vmem:[#allocation3 + $0x30] sm:$0xff]
      %v2769 = vld [vmem:[#allocation3 + $0x38] sm:$0xff]
      %s2770 = scalar_lea.vmem %s3, 200
      %v2771 = vld [vmem:[%s2770] sm:$0xff]
      %v2772 = vld [vmem:[%s2770 + $0x8] sm:$0xff]
      %v2773 = vld [vmem:[%s2770 + $0x10] sm:$0xff]
      %v2774 = vld [vmem:[%s2770 + $0x18] sm:$0xff]
      %v2775 = vld [vmem:[%s2770 + $0x20] sm:$0xff]
      %v2777 = vsel %vm256, %v2754, 0
      %v2780 = vsel %vm256, %v2755, 0
      %v2783 = vsel %vm256, %v2756, 0
      %v2786 = vsel %vm256, %v2757, 0
      %v2789 = vsel %vm256, %v2758, 0
      %v2792 = vsel %vm256, %v2759, 0
      %v2795 = vsel %vm256, %v2760, 0
      %v2798 = vsel %vm256, %v2761, 0
      %2800 = vmatprep.subr.mxu0 0.0
      %2801 = vmatpush1.msra.mxu0 %v2771
      %2802 = vmatprep.subr.mxu0 0.0
      %2803 = vmatpush1.msra.mxu0 %v2772
      %2804 = vmatprep.subr.mxu0 0.0
      %2805 = vmatpush1.msra.mxu0 %v2773
      %2806 = vmatprep.subr.mxu0 0.0
      %2807 = vmatpush1.msra.mxu0 %v2774
      %2808 = vmatprep.subr.mxu0 0.0
      %2809 = vmatpush1.msra.mxu0 %v2775
      %2810 = vmatprep.subr.mxu0 0.0
      %2811 = vmatpush1.msra.mxu0 0.0
      %2812 = vmatprep.subr.mxu0 0.0
      %2813 = vmatpush1.msra.mxu0 0.0
      %2814 = vmatprep.subr.mxu0 0.0
      %2815 = vmatpush1.msra.mxu0 0.0
      %2816 = vmatprep.subr.mxu0 0.0
      %2817 = vmatpush1.msra.mxu0 0.0
      %2818 = vmatprep.subr.mxu0 0.0
      %2819 = vmatpush1.msra.mxu0 0.0
      %2820 = vmatprep.subr.mxu0 0.0
      %2821 = vmatpush1.msra.mxu0 0.0
      %2822 = vmatprep.subr.mxu0 0.0
      %2823 = vmatpush1.msra.mxu0 0.0
      %2824 = vmatprep.subr.mxu0 0.0
      %2825 = vmatpush1.msra.mxu0 0.0
      %2826 = vmatprep.subr.mxu0 0.0
      %2827 = vmatpush1.msra.mxu0 0.0
      %2828 = vmatprep.subr.mxu0 0.0
      %2829 = vmatpush1.msra.mxu0 0.0
      %2830 = vmatprep.subr.mxu0 0.0
      %2831 = vmatpush1.msra.mxu0 0.0
      %2832 = vmatprep.subr.mxu0 0.0
      %2833 = vmatpush1.msra.mxu0 0.0
      %2834 = vmatprep.subr.mxu0 0.0
      %2835 = vmatpush1.msra.mxu0 0.0
      %2836 = vmatprep.subr.mxu0 0.0
      %2837 = vmatpush1.msra.mxu0 0.0
      %2838 = vmatprep.subr.mxu0 0.0
      %2839 = vmatpush1.msra.mxu0 0.0
      %2840 = vmatprep.subr.mxu0 0.0
      %2841 = vmatpush1.msra.mxu0 0.0
      %2842 = vmatprep.subr.mxu0 0.0
      %2843 = vmatpush1.msra.mxu0 0.0
      %2844 = vmatprep.subr.mxu0 0.0
      %2845 = vmatpush1.msra.mxu0 0.0
      %2846 = vmatprep.subr.mxu0 0.0
      %2847 = vmatpush1.msra.mxu0 0.0
      %2848 = vmatprep.subr.mxu0 0.0
      %2849 = vmatpush1.msra.mxu0 0.0
      %2850 = vmatprep.subr.mxu0 0.0
      %2851 = vmatpush1.msra.mxu0 0.0
      %2852 = vmatprep.subr.mxu0 0.0
      %2853 = vmatpush1.msra.mxu0 0.0
      %2854 = vmatprep.subr.mxu0 0.0
      %2855 = vmatpush1.msra.mxu0 0.0
      %2856 = vmatprep.subr.mxu0 0.0
      %2857 = vmatpush1.msra.mxu0 0.0
      %2858 = vmatprep.subr.mxu0 0.0
      %2859 = vmatpush1.msra.mxu0 0.0
      %2860 = vmatprep.subr.mxu0 0.0
      %2861 = vmatpush1.msra.mxu0 0.0
      %2862 = vmatprep.subr.mxu0 0.0
      %2863 = vmatpush1.msra.mxu0 0.0
      %2864 = vmatprep.mubr.f32.mxu0 0.0
      %2865 = vmatmul.mubr.f32.gmra.mrb[0].mxu0 %v2777
      %v2866 = vpop.f32.mrb[0].mxu0
      %v2867 = vadd.f32 0.0, %v2866
      %v2868 = vpop.f32.mrb[0].mxu0
      %2869 = vmatprep.mubr.f32.mxu0 0.0
      %2870 = vmatmul.mubr.f32.gmra.mrb[0].mxu0 %v2780
      %v2871 = vpop.f32.mrb[0].mxu0
      %v2872 = vadd.f32 0.0, %v2871
      %v2873 = vpop.f32.mrb[0].mxu0
      %2874 = vmatprep.mubr.f32.mxu0 0.0
      %2875 = vmatmul.mubr.f32.gmra.mrb[0].mxu0 %v2783
      %v2876 = vpop.f32.mrb[0].mxu0
      %v2877 = vadd.f32 0.0, %v2876
      %v2878 = vpop.f32.mrb[0].mxu0
      %2879 = vmatprep.mubr.f32.mxu0 0.0
      %2880 = vmatmul.mubr.f32.gmra.mrb[0].mxu0 %v2786
      %v2881 = vpop.f32.mrb[0].mxu0
      %v2882 = vadd.f32 0.0, %v2881
      %v2883 = vpop.f32.mrb[0].mxu0
      %2884 = vmatprep.mubr.f32.mxu0 0.0
      %2885 = vmatmul.mubr.f32.gmra.mrb[0].mxu0 %v2789
      %v2886 = vpop.f32.mrb[0].mxu0
      %v2887 = vadd.f32 0.0, %v2886
      %v2888 = vpop.f32.mrb[0].mxu0
      %2889 = vmatprep.mubr.f32.mxu0 0.0
      %2890 = vmatmul.mubr.f32.gmra.mrb[0].mxu0 %v2792
      %v2891 = vpop.f32.mrb[0].mxu0
      %v2892 = vadd.f32 0.0, %v2891
      %v2893 = vpop.f32.mrb[0].mxu0
      %2894 = vmatprep.mubr.f32.mxu0 0.0
      %2895 = vmatmul.mubr.f32.gmra.mrb[0].mxu0 %v2795
      %v2896 = vpop.f32.mrb[0].mxu0
      %v2897 = vadd.f32 0.0, %v2896
      %v2898 = vpop.f32.mrb[0].mxu0
      %2899 = vmatprep.mubr.f32.mxu0 0.0
      %2900 = vmatmul.mubr.f32.gmra.mrb[0].mxu0 %v2798
      %v2901 = vpop.f32.mrb[0].mxu0
      %v2902 = vadd.f32 0.0, %v2901
      %v2903 = vpop.f32.mrb[0].mxu0
      %2904 = vdwg.mxu0
      %v2905 = vadd.f32 %v2762, %v2867
      %v2906 = vadd.f32 %v2763, %v2872
      %v2907 = vadd.f32 %v2764, %v2877
      %v2908 = vadd.f32 %v2765, %v2882
      %v2909 = vadd.f32 %v2766, %v2887
      %v2910 = vadd.f32 %v2767, %v2892
      %v2911 = vadd.f32 %v2768, %v2897
      %v2912 = vadd.f32 %v2769, %v2902
      %2913 = vst.msk [vmem:[#allocation3] sm:$0xff] %vm336, %v2905
      %2914 = vst.msk [vmem:[#allocation3 + $0x8] sm:$0xff] %vm336, %v2906
      %2915 = vst.msk [vmem:[#allocation3 + $0x10] sm:$0xff] %vm336, %v2907
      %2916 = vst.msk [vmem:[#allocation3 + $0x18] sm:$0xff] %vm336, %v2908
      %2917 = vst.msk [vmem:[#allocation3 + $0x20] sm:$0xff] %vm336, %v2909
      %2918 = vst.msk [vmem:[#allocation3 + $0x28] sm:$0xff] %vm336, %v2910
      %2919 = vst.msk [vmem:[#allocation3 + $0x30] sm:$0xff] %vm336, %v2911
      %2920 = vst.msk [vmem:[#allocation3 + $0x38] sm:$0xff] %vm336, %v2912
      %v2921 = vld [vmem:[%s1346] sm:$0xff]
      %v2922 = vld [vmem:[%s1346 + $0x10] sm:$0xff]
      %v2923 = vld [vmem:[%s1346 + $0x20] sm:$0xff]
      %v2924 = vld [vmem:[%s1346 + $0x30] sm:$0xff]
      %v2925 = vld [vmem:[%s1346 + $0x40] sm:$0xff]
      %v2926 = vld [vmem:[%s1346 + $0x50] sm:$0xff]
      %v2927 = vld [vmem:[%s1346 + $0x60] sm:$0xff]
      %v2928 = vld [vmem:[%s1346 + $0x70] sm:$0xff]
      %v2929 = vld [vmem:[#allocation3] sm:$0xff]
      %v2930 = vld [vmem:[#allocation3 + $0x8] sm:$0xff]
      %v2931 = vld [vmem:[#allocation3 + $0x10] sm:$0xff]
      %v2932 = vld [vmem:[#allocation3 + $0x18] sm:$0xff]
      %v2933 = vld [vmem:[#allocation3 + $0x20] sm:$0xff]
      %v2934 = vld [vmem:[#allocation3 + $0x28] sm:$0xff]
      %v2935 = vld [vmem:[#allocation3 + $0x30] sm:$0xff]
      %v2936 = vld [vmem:[#allocation3 + $0x38] sm:$0xff]
      %s2937 = scalar_lea.vmem %s3, 240
      %v2938 = vld [vmem:[%s2937] sm:$0xff]
      %v2939 = vld [vmem:[%s2937 + $0x8] sm:$0xff]
      %v2940 = vld [vmem:[%s2937 + $0x10] sm:$0xff]
      %v2941 = vld [vmem:[%s2937 + $0x18] sm:$0xff]
      %v2942 = vld [vmem:[%s2937 + $0x20] sm:$0xff]
      %v2944 = vsel %vm256, %v2921, 0
      %v2947 = vsel %vm256, %v2922, 0
      %v2950 = vsel %vm256, %v2923, 0
      %v2953 = vsel %vm256, %v2924, 0
      %v2956 = vsel %vm256, %v2925, 0
      %v2959 = vsel %vm256, %v2926, 0
      %v2962 = vsel %vm256, %v2927, 0
      %v2965 = vsel %vm256, %v2928, 0
      %2967 = vmatprep.subr.mxu0 0.0
      %2968 = vmatpush1.msra.mxu0 %v2938
      %2969 = vmatprep.subr.mxu0 0.0
      %2970 = vmatpush1.msra.mxu0 %v2939
      %2971 = vmatprep.subr.mxu0 0.0
      %2972 = vmatpush1.msra.mxu0 %v2940
      %2973 = vmatprep.subr.mxu0 0.0
      %2974 = vmatpush1.msra.mxu0 %v2941
      %2975 = vmatprep.subr.mxu0 0.0
      %2976 = vmatpush1.msra.mxu0 %v2942
      %2977 = vmatprep.subr.mxu0 0.0
      %2978 = vmatpush1.msra.mxu0 0.0
      %2979 = vmatprep.subr.mxu0 0.0
      %2980 = vmatpush1.msra.mxu0 0.0
      %2981 = vmatprep.subr.mxu0 0.0
      %2982 = vmatpush1.msra.mxu0 0.0
      %2983 = vmatprep.subr.mxu0 0.0
      %2984 = vmatpush1.msra.mxu0 0.0
      %2985 = vmatprep.subr.mxu0 0.0
      %2986 = vmatpush1.msra.mxu0 0.0
      %2987 = vmatprep.subr.mxu0 0.0
      %2988 = vmatpush1.msra.mxu0 0.0
      %2989 = vmatprep.subr.mxu0 0.0
      %2990 = vmatpush1.msra.mxu0 0.0
      %2991 = vmatprep.subr.mxu0 0.0
      %2992 = vmatpush1.msra.mxu0 0.0
      %2993 = vmatprep.subr.mxu0 0.0
      %2994 = vmatpush1.msra.mxu0 0.0
      %2995 = vmatprep.subr.mxu0 0.0
      %2996 = vmatpush1.msra.mxu0 0.0
      %2997 = vmatprep.subr.mxu0 0.0
      %2998 = vmatpush1.msra.mxu0 0.0
      %2999 = vmatprep.subr.mxu0 0.0
      %3000 = vmatpush1.msra.mxu0 0.0
      %3001 = vmatprep.subr.mxu0 0.0
      %3002 = vmatpush1.msra.mxu0 0.0
      %3003 = vmatprep.subr.mxu0 0.0
      %3004 = vmatpush1.msra.mxu0 0.0
      %3005 = vmatprep.subr.mxu0 0.0
      %3006 = vmatpush1.msra.mxu0 0.0
      %3007 = vmatprep.subr.mxu0 0.0
      %3008 = vmatpush1.msra.mxu0 0.0
      %3009 = vmatprep.subr.mxu0 0.0
      %3010 = vmatpush1.msra.mxu0 0.0
      %3011 = vmatprep.subr.mxu0 0.0
      %3012 = vmatpush1.msra.mxu0 0.0
      %3013 = vmatprep.subr.mxu0 0.0
      %3014 = vmatpush1.msra.mxu0 0.0
      %3015 = vmatprep.subr.mxu0 0.0
      %3016 = vmatpush1.msra.mxu0 0.0
      %3017 = vmatprep.subr.mxu0 0.0
      %3018 = vmatpush1.msra.mxu0 0.0
      %3019 = vmatprep.subr.mxu0 0.0
      %3020 = vmatpush1.msra.mxu0 0.0
      %3021 = vmatprep.subr.mxu0 0.0
      %3022 = vmatpush1.msra.mxu0 0.0
      %3023 = vmatprep.subr.mxu0 0.0
      %3024 = vmatpush1.msra.mxu0 0.0
      %3025 = vmatprep.subr.mxu0 0.0
      %3026 = vmatpush1.msra.mxu0 0.0
      %3027 = vmatprep.subr.mxu0 0.0
      %3028 = vmatpush1.msra.mxu0 0.0
      %3029 = vmatprep.subr.mxu0 0.0
      %3030 = vmatpush1.msra.mxu0 0.0
      %3031 = vmatprep.mubr.f32.mxu0 0.0
      %3032 = vmatmul.mubr.f32.gmra.mrb[0].mxu0 %v2944
      %v3033 = vpop.f32.mrb[0].mxu0
      %v3034 = vadd.f32 0.0, %v3033
      %v3035 = vpop.f32.mrb[0].mxu0
      %3036 = vmatprep.mubr.f32.mxu0 0.0
      %3037 = vmatmul.mubr.f32.gmra.mrb[0].mxu0 %v2947
      %v3038 = vpop.f32.mrb[0].mxu0
      %v3039 = vadd.f32 0.0, %v3038
      %v3040 = vpop.f32.mrb[0].mxu0
      %3041 = vmatprep.mubr.f32.mxu0 0.0
      %3042 = vmatmul.mubr.f32.gmra.mrb[0].mxu0 %v2950
      %v3043 = vpop.f32.mrb[0].mxu0
      %v3044 = vadd.f32 0.0, %v3043
      %v3045 = vpop.f32.mrb[0].mxu0
      %3046 = vmatprep.mubr.f32.mxu0 0.0
      %3047 = vmatmul.mubr.f32.gmra.mrb[0].mxu0 %v2953
      %v3048 = vpop.f32.mrb[0].mxu0
      %v3049 = vadd.f32 0.0, %v3048
      %v3050 = vpop.f32.mrb[0].mxu0
      %3051 = vmatprep.mubr.f32.mxu0 0.0
      %3052 = vmatmul.mubr.f32.gmra.mrb[0].mxu0 %v2956
      %v3053 = vpop.f32.mrb[0].mxu0
      %v3054 = vadd.f32 0.0, %v3053
      %v3055 = vpop.f32.mrb[0].mxu0
      %3056 = vmatprep.mubr.f32.mxu0 0.0
      %3057 = vmatmul.mubr.f32.gmra.mrb[0].mxu0 %v2959
      %v3058 = vpop.f32.mrb[0].mxu0
      %v3059 = vadd.f32 0.0, %v3058
      %v3060 = vpop.f32.mrb[0].mxu0
      %3061 = vmatprep.mubr.f32.mxu0 0.0
      %3062 = vmatmul.mubr.f32.gmra.mrb[0].mxu0 %v2962
      %v3063 = vpop.f32.mrb[0].mxu0
      %v3064 = vadd.f32 0.0, %v3063
      %v3065 = vpop.f32.mrb[0].mxu0
      %3066 = vmatprep.mubr.f32.mxu0 0.0
      %3067 = vmatmul.mubr.f32.gmra.mrb[0].mxu0 %v2965
      %v3068 = vpop.f32.mrb[0].mxu0
      %v3069 = vadd.f32 0.0, %v3068
      %v3070 = vpop.f32.mrb[0].mxu0
      %3071 = vdwg.mxu0
      %v3072 = vadd.f32 %v2929, %v3034
      %v3073 = vadd.f32 %v2930, %v3039
      %v3074 = vadd.f32 %v2931, %v3044
      %v3075 = vadd.f32 %v2932, %v3049
      %v3076 = vadd.f32 %v2933, %v3054
      %v3077 = vadd.f32 %v2934, %v3059
      %v3078 = vadd.f32 %v2935, %v3064
      %v3079 = vadd.f32 %v2936, %v3069
      %3080 = vst.msk [vmem:[#allocation3] sm:$0xff] %vm336, %v3072
      %3081 = vst.msk [vmem:[#allocation3 + $0x8] sm:$0xff] %vm336, %v3073
      %3082 = vst.msk [vmem:[#allocation3 + $0x10] sm:$0xff] %vm336, %v3074
      %3083 = vst.msk [vmem:[#allocation3 + $0x18] sm:$0xff] %vm336, %v3075
      %3084 = vst.msk [vmem:[#allocation3 + $0x20] sm:$0xff] %vm336, %v3076
      %3085 = vst.msk [vmem:[#allocation3 + $0x28] sm:$0xff] %vm336, %v3077
      %3086 = vst.msk [vmem:[#allocation3 + $0x30] sm:$0xff] %vm336, %v3078
      %3087 = vst.msk [vmem:[#allocation3 + $0x38] sm:$0xff] %vm336, %v3079
      %v3088 = vld [vmem:[%s1346 + $0x1] sm:$0xff]
      %v3089 = vld [vmem:[%s1346 + $0x11] sm:$0xff]
      %v3090 = vld [vmem:[%s1346 + $0x21] sm:$0xff]
      %v3091 = vld [vmem:[%s1346 + $0x31] sm:$0xff]
      %v3092 = vld [vmem:[%s1346 + $0x41] sm:$0xff]
      %v3093 = vld [vmem:[%s1346 + $0x51] sm:$0xff]
      %v3094 = vld [vmem:[%s1346 + $0x61] sm:$0xff]
      %v3095 = vld [vmem:[%s1346 + $0x71] sm:$0xff]
      %v3096 = vld [vmem:[#allocation3] sm:$0xff]
      %v3097 = vld [vmem:[#allocation3 + $0x8] sm:$0xff]
      %v3098 = vld [vmem:[#allocation3 + $0x10] sm:$0xff]
      %v3099 = vld [vmem:[#allocation3 + $0x18] sm:$0xff]
      %v3100 = vld [vmem:[#allocation3 + $0x20] sm:$0xff]
      %v3101 = vld [vmem:[#allocation3 + $0x28] sm:$0xff]
      %v3102 = vld [vmem:[#allocation3 + $0x30] sm:$0xff]
      %v3103 = vld [vmem:[#allocation3 + $0x38] sm:$0xff]
      %s3104 = scalar_lea.vmem %s3, 280
      %v3105 = vld [vmem:[%s3104] sm:$0xff]
      %v3106 = vld [vmem:[%s3104 + $0x8] sm:$0xff]
      %v3107 = vld [vmem:[%s3104 + $0x10] sm:$0xff]
      %v3108 = vld [vmem:[%s3104 + $0x18] sm:$0xff]
      %v3109 = vld [vmem:[%s3104 + $0x20] sm:$0xff]
      %v3111 = vsel %vm256, %v3088, 0
      %v3114 = vsel %vm256, %v3089, 0
      %v3117 = vsel %vm256, %v3090, 0
      %v3120 = vsel %vm256, %v3091, 0
      %v3123 = vsel %vm256, %v3092, 0
      %v3126 = vsel %vm256, %v3093, 0
      %v3129 = vsel %vm256, %v3094, 0
      %v3132 = vsel %vm256, %v3095, 0
      %3134 = vmatprep.subr.mxu0 0.0
      %3135 = vmatpush1.msra.mxu0 %v3105
      %3136 = vmatprep.subr.mxu0 0.0
      %3137 = vmatpush1.msra.mxu0 %v3106
      %3138 = vmatprep.subr.mxu0 0.0
      %3139 = vmatpush1.msra.mxu0 %v3107
      %3140 = vmatprep.subr.mxu0 0.0
      %3141 = vmatpush1.msra.mxu0 %v3108
      %3142 = vmatprep.subr.mxu0 0.0
      %3143 = vmatpush1.msra.mxu0 %v3109
      %3144 = vmatprep.subr.mxu0 0.0
      %3145 = vmatpush1.msra.mxu0 0.0
      %3146 = vmatprep.subr.mxu0 0.0
      %3147 = vmatpush1.msra.mxu0 0.0
      %3148 = vmatprep.subr.mxu0 0.0
      %3149 = vmatpush1.msra.mxu0 0.0
      %3150 = vmatprep.subr.mxu0 0.0
      %3151 = vmatpush1.msra.mxu0 0.0
      %3152 = vmatprep.subr.mxu0 0.0
      %3153 = vmatpush1.msra.mxu0 0.0
      %3154 = vmatprep.subr.mxu0 0.0
      %3155 = vmatpush1.msra.mxu0 0.0
      %3156 = vmatprep.subr.mxu0 0.0
      %3157 = vmatpush1.msra.mxu0 0.0
      %3158 = vmatprep.subr.mxu0 0.0
      %3159 = vmatpush1.msra.mxu0 0.0
      %3160 = vmatprep.subr.mxu0 0.0
      %3161 = vmatpush1.msra.mxu0 0.0
      %3162 = vmatprep.subr.mxu0 0.0
      %3163 = vmatpush1.msra.mxu0 0.0
      %3164 = vmatprep.subr.mxu0 0.0
      %3165 = vmatpush1.msra.mxu0 0.0
      %3166 = vmatprep.subr.mxu0 0.0
      %3167 = vmatpush1.msra.mxu0 0.0
      %3168 = vmatprep.subr.mxu0 0.0
      %3169 = vmatpush1.msra.mxu0 0.0
      %3170 = vmatprep.subr.mxu0 0.0
      %3171 = vmatpush1.msra.mxu0 0.0
      %3172 = vmatprep.subr.mxu0 0.0
      %3173 = vmatpush1.msra.mxu0 0.0
      %3174 = vmatprep.subr.mxu0 0.0
      %3175 = vmatpush1.msra.mxu0 0.0
      %3176 = vmatprep.subr.mxu0 0.0
      %3177 = vmatpush1.msra.mxu0 0.0
      %3178 = vmatprep.subr.mxu0 0.0
      %3179 = vmatpush1.msra.mxu0 0.0
      %3180 = vmatprep.subr.mxu0 0.0
      %3181 = vmatpush1.msra.mxu0 0.0
      %3182 = vmatprep.subr.mxu0 0.0
      %3183 = vmatpush1.msra.mxu0 0.0
      %3184 = vmatprep.subr.mxu0 0.0
      %3185 = vmatpush1.msra.mxu0 0.0
      %3186 = vmatprep.subr.mxu0 0.0
      %3187 = vmatpush1.msra.mxu0 0.0
      %3188 = vmatprep.subr.mxu0 0.0
      %3189 = vmatpush1.msra.mxu0 0.0
      %3190 = vmatprep.subr.mxu0 0.0
      %3191 = vmatpush1.msra.mxu0 0.0
      %3192 = vmatprep.subr.mxu0 0.0
      %3193 = vmatpush1.msra.mxu0 0.0
      %3194 = vmatprep.subr.mxu0 0.0
      %3195 = vmatpush1.msra.mxu0 0.0
      %3196 = vmatprep.subr.mxu0 0.0
      %3197 = vmatpush1.msra.mxu0 0.0
      %3198 = vmatprep.mubr.f32.mxu0 0.0
      %3199 = vmatmul.mubr.f32.gmra.mrb[0].mxu0 %v3111
      %v3200 = vpop.f32.mrb[0].mxu0
      %v3201 = vadd.f32 0.0, %v3200
      %v3202 = vpop.f32.mrb[0].mxu0
      %3203 = vmatprep.mubr.f32.mxu0 0.0
      %3204 = vmatmul.mubr.f32.gmra.mrb[0].mxu0 %v3114
      %v3205 = vpop.f32.mrb[0].mxu0
      %v3206 = vadd.f32 0.0, %v3205
      %v3207 = vpop.f32.mrb[0].mxu0
      %3208 = vmatprep.mubr.f32.mxu0 0.0
      %3209 = vmatmul.mubr.f32.gmra.mrb[0].mxu0 %v3117
      %v3210 = vpop.f32.mrb[0].mxu0
      %v3211 = vadd.f32 0.0, %v3210
      %v3212 = vpop.f32.mrb[0].mxu0
      %3213 = vmatprep.mubr.f32.mxu0 0.0
      %3214 = vmatmul.mubr.f32.gmra.mrb[0].mxu0 %v3120
      %v3215 = vpop.f32.mrb[0].mxu0
      %v3216 = vadd.f32 0.0, %v3215
      %v3217 = vpop.f32.mrb[0].mxu0
      %3218 = vmatprep.mubr.f32.mxu0 0.0
      %3219 = vmatmul.mubr.f32.gmra.mrb[0].mxu0 %v3123
      %v3220 = vpop.f32.mrb[0].mxu0
      %v3221 = vadd.f32 0.0, %v3220
      %v3222 = vpop.f32.mrb[0].mxu0
      %3223 = vmatprep.mubr.f32.mxu0 0.0
      %3224 = vmatmul.mubr.f32.gmra.mrb[0].mxu0 %v3126
      %v3225 = vpop.f32.mrb[0].mxu0
      %v3226 = vadd.f32 0.0, %v3225
      %v3227 = vpop.f32.mrb[0].mxu0
      %3228 = vmatprep.mubr.f32.mxu0 0.0
      %3229 = vmatmul.mubr.f32.gmra.mrb[0].mxu0 %v3129
      %v3230 = vpop.f32.mrb[0].mxu0
      %v3231 = vadd.f32 0.0, %v3230
      %v3232 = vpop.f32.mrb[0].mxu0
      %3233 = vmatprep.mubr.f32.mxu0 0.0
      %3234 = vmatmul.mubr.f32.gmra.mrb[0].mxu0 %v3132
      %v3235 = vpop.f32.mrb[0].mxu0
      %v3236 = vadd.f32 0.0, %v3235
      %v3237 = vpop.f32.mrb[0].mxu0
      %3238 = vdwg.mxu0
      %v3239 = vadd.f32 %v3096, %v3201
      %v3240 = vadd.f32 %v3097, %v3206
      %v3241 = vadd.f32 %v3098, %v3211
      %v3242 = vadd.f32 %v3099, %v3216
      %v3243 = vadd.f32 %v3100, %v3221
      %v3244 = vadd.f32 %v3101, %v3226
      %v3245 = vadd.f32 %v3102, %v3231
      %v3246 = vadd.f32 %v3103, %v3236
      %3247 = vst.msk [vmem:[#allocation3] sm:$0xff] %vm336, %v3239
      %3248 = vst.msk [vmem:[#allocation3 + $0x8] sm:$0xff] %vm336, %v3240
      %3249 = vst.msk [vmem:[#allocation3 + $0x10] sm:$0xff] %vm336, %v3241
      %3250 = vst.msk [vmem:[#allocation3 + $0x18] sm:$0xff] %vm336, %v3242
      %3251 = vst.msk [vmem:[#allocation3 + $0x20] sm:$0xff] %vm336, %v3243
      %3252 = vst.msk [vmem:[#allocation3 + $0x28] sm:$0xff] %vm336, %v3244
      %3253 = vst.msk [vmem:[#allocation3 + $0x30] sm:$0xff] %vm336, %v3245
      %3254 = vst.msk [vmem:[#allocation3 + $0x38] sm:$0xff] %vm336, %v3246
      %v3255 = vld [vmem:[%s1346 + $0x2] sm:$0xff]
      %v3256 = vld [vmem:[%s1346 + $0x12] sm:$0xff]
      %v3257 = vld [vmem:[%s1346 + $0x22] sm:$0xff]
      %v3258 = vld [vmem:[%s1346 + $0x32] sm:$0xff]
      %v3259 = vld [vmem:[%s1346 + $0x42] sm:$0xff]
      %v3260 = vld [vmem:[%s1346 + $0x52] sm:$0xff]
      %v3261 = vld [vmem:[%s1346 + $0x62] sm:$0xff]
      %v3262 = vld [vmem:[%s1346 + $0x72] sm:$0xff]
      %v3263 = vld [vmem:[#allocation3] sm:$0xff]
      %v3264 = vld [vmem:[#allocation3 + $0x8] sm:$0xff]
      %v3265 = vld [vmem:[#allocation3 + $0x10] sm:$0xff]
      %v3266 = vld [vmem:[#allocation3 + $0x18] sm:$0xff]
      %v3267 = vld [vmem:[#allocation3 + $0x20] sm:$0xff]
      %v3268 = vld [vmem:[#allocation3 + $0x28] sm:$0xff]
      %v3269 = vld [vmem:[#allocation3 + $0x30] sm:$0xff]
      %v3270 = vld [vmem:[#allocation3 + $0x38] sm:$0xff]
      %s3271 = scalar_lea.vmem %s3, 320
      %v3272 = vld [vmem:[%s3271] sm:$0xff]
      %v3273 = vld [vmem:[%s3271 + $0x8] sm:$0xff]
      %v3274 = vld [vmem:[%s3271 + $0x10] sm:$0xff]
      %v3275 = vld [vmem:[%s3271 + $0x18] sm:$0xff]
      %v3276 = vld [vmem:[%s3271 + $0x20] sm:$0xff]
      %v3278 = vsel %vm256, %v3255, 0
      %v3281 = vsel %vm256, %v3256, 0
      %v3284 = vsel %vm256, %v3257, 0
      %v3287 = vsel %vm256, %v3258, 0
      %v3290 = vsel %vm256, %v3259, 0
      %v3293 = vsel %vm256, %v3260, 0
      %v3296 = vsel %vm256, %v3261, 0
      %v3299 = vsel %vm256, %v3262, 0
      %3301 = vmatprep.subr.mxu0 0.0
      %3302 = vmatpush1.msra.mxu0 %v3272
      %3303 = vmatprep.subr.mxu0 0.0
      %3304 = vmatpush1.msra.mxu0 %v3273
      %3305 = vmatprep.subr.mxu0 0.0
      %3306 = vmatpush1.msra.mxu0 %v3274
      %3307 = vmatprep.subr.mxu0 0.0
      %3308 = vmatpush1.msra.mxu0 %v3275
      %3309 = vmatprep.subr.mxu0 0.0
      %3310 = vmatpush1.msra.mxu0 %v3276
      %3311 = vmatprep.subr.mxu0 0.0
      %3312 = vmatpush1.msra.mxu0 0.0
      %3313 = vmatprep.subr.mxu0 0.0
      %3314 = vmatpush1.msra.mxu0 0.0
      %3315 = vmatprep.subr.mxu0 0.0
      %3316 = vmatpush1.msra.mxu0 0.0
      %3317 = vmatprep.subr.mxu0 0.0
      %3318 = vmatpush1.msra.mxu0 0.0
      %3319 = vmatprep.subr.mxu0 0.0
      %3320 = vmatpush1.msra.mxu0 0.0
      %3321 = vmatprep.subr.mxu0 0.0
      %3322 = vmatpush1.msra.mxu0 0.0
      %3323 = vmatprep.subr.mxu0 0.0
      %3324 = vmatpush1.msra.mxu0 0.0
      %3325 = vmatprep.subr.mxu0 0.0
      %3326 = vmatpush1.msra.mxu0 0.0
      %3327 = vmatprep.subr.mxu0 0.0
      %3328 = vmatpush1.msra.mxu0 0.0
      %3329 = vmatprep.subr.mxu0 0.0
      %3330 = vmatpush1.msra.mxu0 0.0
      %3331 = vmatprep.subr.mxu0 0.0
      %3332 = vmatpush1.msra.mxu0 0.0
      %3333 = vmatprep.subr.mxu0 0.0
      %3334 = vmatpush1.msra.mxu0 0.0
      %3335 = vmatprep.subr.mxu0 0.0
      %3336 = vmatpush1.msra.mxu0 0.0
      %3337 = vmatprep.subr.mxu0 0.0
      %3338 = vmatpush1.msra.mxu0 0.0
      %3339 = vmatprep.subr.mxu0 0.0
      %3340 = vmatpush1.msra.mxu0 0.0
      %3341 = vmatprep.subr.mxu0 0.0
      %3342 = vmatpush1.msra.mxu0 0.0
      %3343 = vmatprep.subr.mxu0 0.0
      %3344 = vmatpush1.msra.mxu0 0.0
      %3345 = vmatprep.subr.mxu0 0.0
      %3346 = vmatpush1.msra.mxu0 0.0
      %3347 = vmatprep.subr.mxu0 0.0
      %3348 = vmatpush1.msra.mxu0 0.0
      %3349 = vmatprep.subr.mxu0 0.0
      %3350 = vmatpush1.msra.mxu0 0.0
      %3351 = vmatprep.subr.mxu0 0.0
      %3352 = vmatpush1.msra.mxu0 0.0
      %3353 = vmatprep.subr.mxu0 0.0
      %3354 = vmatpush1.msra.mxu0 0.0
      %3355 = vmatprep.subr.mxu0 0.0
      %3356 = vmatpush1.msra.mxu0 0.0
      %3357 = vmatprep.subr.mxu0 0.0
      %3358 = vmatpush1.msra.mxu0 0.0
      %3359 = vmatprep.subr.mxu0 0.0
      %3360 = vmatpush1.msra.mxu0 0.0
      %3361 = vmatprep.subr.mxu0 0.0
      %3362 = vmatpush1.msra.mxu0 0.0
      %3363 = vmatprep.subr.mxu0 0.0
      %3364 = vmatpush1.msra.mxu0 0.0
      %3365 = vmatprep.mubr.f32.mxu0 0.0
      %3366 = vmatmul.mubr.f32.gmra.mrb[0].mxu0 %v3278
      %v3367 = vpop.f32.mrb[0].mxu0
      %v3368 = vadd.f32 0.0, %v3367
      %v3369 = vpop.f32.mrb[0].mxu0
      %3370 = vmatprep.mubr.f32.mxu0 0.0
      %3371 = vmatmul.mubr.f32.gmra.mrb[0].mxu0 %v3281
      %v3372 = vpop.f32.mrb[0].mxu0
      %v3373 = vadd.f32 0.0, %v3372
      %v3374 = vpop.f32.mrb[0].mxu0
      %3375 = vmatprep.mubr.f32.mxu0 0.0
      %3376 = vmatmul.mubr.f32.gmra.mrb[0].mxu0 %v3284
      %v3377 = vpop.f32.mrb[0].mxu0
      %v3378 = vadd.f32 0.0, %v3377
      %v3379 = vpop.f32.mrb[0].mxu0
      %3380 = vmatprep.mubr.f32.mxu0 0.0
      %3381 = vmatmul.mubr.f32.gmra.mrb[0].mxu0 %v3287
      %v3382 = vpop.f32.mrb[0].mxu0
      %v3383 = vadd.f32 0.0, %v3382
      %v3384 = vpop.f32.mrb[0].mxu0
      %3385 = vmatprep.mubr.f32.mxu0 0.0
      %3386 = vmatmul.mubr.f32.gmra.mrb[0].mxu0 %v3290
      %v3387 = vpop.f32.mrb[0].mxu0
      %v3388 = vadd.f32 0.0, %v3387
      %v3389 = vpop.f32.mrb[0].mxu0
      %3390 = vmatprep.mubr.f32.mxu0 0.0
      %3391 = vmatmul.mubr.f32.gmra.mrb[0].mxu0 %v3293
      %v3392 = vpop.f32.mrb[0].mxu0
      %v3393 = vadd.f32 0.0, %v3392
      %v3394 = vpop.f32.mrb[0].mxu0
      %3395 = vmatprep.mubr.f32.mxu0 0.0
      %3396 = vmatmul.mubr.f32.gmra.mrb[0].mxu0 %v3296
      %v3397 = vpop.f32.mrb[0].mxu0
      %v3398 = vadd.f32 0.0, %v3397
      %v3399 = vpop.f32.mrb[0].mxu0
      %3400 = vmatprep.mubr.f32.mxu0 0.0
      %3401 = vmatmul.mubr.f32.gmra.mrb[0].mxu0 %v3299
      %v3402 = vpop.f32.mrb[0].mxu0
      %v3403 = vadd.f32 0.0, %v3402
      %v3404 = vpop.f32.mrb[0].mxu0
      %3405 = vdwg.mxu0
      %v3406 = vadd.f32 %v3263, %v3368
      %v3407 = vadd.f32 %v3264, %v3373
      %v3408 = vadd.f32 %v3265, %v3378
      %v3409 = vadd.f32 %v3266, %v3383
      %v3410 = vadd.f32 %v3267, %v3388
      %v3411 = vadd.f32 %v3268, %v3393
      %v3412 = vadd.f32 %v3269, %v3398
      %v3413 = vadd.f32 %v3270, %v3403
      %3414 = vst.msk [vmem:[#allocation3] sm:$0xff] %vm336, %v3406
      %3415 = vst.msk [vmem:[#allocation3 + $0x8] sm:$0xff] %vm336, %v3407
      %3416 = vst.msk [vmem:[#allocation3 + $0x10] sm:$0xff] %vm336, %v3408
      %3417 = vst.msk [vmem:[#allocation3 + $0x18] sm:$0xff] %vm336, %v3409
      %3418 = vst.msk [vmem:[#allocation3 + $0x20] sm:$0xff] %vm336, %v3410
      %3419 = vst.msk [vmem:[#allocation3 + $0x28] sm:$0xff] %vm336, %v3411
      %3420 = vst.msk [vmem:[#allocation3 + $0x30] sm:$0xff] %vm336, %v3412
      %3421 = vst.msk [vmem:[#allocation3 + $0x38] sm:$0xff] %vm336, %v3413
      %v3422 = vld [vmem:[#allocation3] sm:$0xff]
      %v3423 = vld [vmem:[#allocation3 + $0x8] sm:$0xff]
      %v3424 = vld [vmem:[#allocation3 + $0x10] sm:$0xff]
      %v3425 = vld [vmem:[#allocation3 + $0x18] sm:$0xff]
      %v3426 = vld [vmem:[#allocation3 + $0x20] sm:$0xff]
      %v3427 = vld [vmem:[#allocation3 + $0x28] sm:$0xff]
      %v3428 = vld [vmem:[#allocation3 + $0x30] sm:$0xff]
      %v3429 = vld [vmem:[#allocation3 + $0x38] sm:$0xff]
      %s3430 = scalar_lea.vmem %s251, 64
      %3431 = vst.msk [vmem:[%s3430] sm:$0xff] %vm336, %v3422
      %3432 = vst.msk [vmem:[%s3430 + $0x8] sm:$0xff] %vm336, %v3423
      %3433 = vst.msk [vmem:[%s3430 + $0x10] sm:$0xff] %vm336, %v3424
      %3434 = vst.msk [vmem:[%s3430 + $0x18] sm:$0xff] %vm336, %v3425
      %3435 = vst.msk [vmem:[%s3430 + $0x20] sm:$0xff] %vm336, %v3426
      %3436 = vst.msk [vmem:[%s3430 + $0x28] sm:$0xff] %vm336, %v3427
      %3437 = vst.msk [vmem:[%s3430 + $0x30] sm:$0xff] %vm336, %v3428
      %3438 = vst.msk [vmem:[%s3430 + $0x38] sm:$0xff] %vm336, %v3429
      %v3439 = vsel %vm336, %v1848, 0.0
      %v3440 = vsel %vm336, %v1849, 0.0
      %v3441 = vadd.f32 %v3439, %v3440
      %v3442 = vsel %vm336, %v1850, 0.0
      %v3443 = vadd.f32 %v3441, %v3442
      %v3444 = vsel %vm336, %v1851, 0.0
      %v3445 = vadd.f32 %v3443, %v3444
      %v3446 = vsel %vm336, %v1852, 0.0
      %v3447 = vadd.f32 %v3445, %v3446
      %v3448 = vsel %vm336, %v1853, 0.0
      %v3449 = vadd.f32 %v3447, %v3448
      %v3450 = vsel %vm336, %v1854, 0.0
      %v3451 = vadd.f32 %v3449, %v3450
      %v3452 = vsel %vm336, %v1855, 0.0
      %v3453 = vadd.f32 %v3451, %v3452
      %v3454 = vrot.slane %v3453, 4
      %v3455 = vadd.f32 %v3453, %v3454
      %v3456 = vrot.slane %v3455, 2
      %v3457 = vadd.f32 %v3455, %v3456
      %v3458 = vrot.slane %v3457, 1
      %v3459 = vadd.f32 %v3457, %v3458
      %v3460 = vsel %vm336, %v3422, 0.0
      %v3461 = vsel %vm336, %v3423, 0.0
      %v3462 = vadd.f32 %v3460, %v3461
      %v3463 = vsel %vm336, %v3424, 0.0
      %v3464 = vadd.f32 %v3462, %v3463
      %v3465 = vsel %vm336, %v3425, 0.0
      %v3466 = vadd.f32 %v3464, %v3465
      %v3467 = vsel %vm336, %v3426, 0.0
      %v3468 = vadd.f32 %v3466, %v3467
      %v3469 = vsel %vm336, %v3427, 0.0
      %v3470 = vadd.f32 %v3468, %v3469
      %v3471 = vsel %vm336, %v3428, 0.0
      %v3472 = vadd.f32 %v3470, %v3471
      %v3473 = vsel %vm336, %v3429, 0.0
      %v3474 = vadd.f32 %v3472, %v3473
      %v3475 = vrot.slane %v3474, 4
      %v3476 = vadd.f32 %v3474, %v3475
      %v3477 = vrot.slane %v3476, 2
      %v3478 = vadd.f32 %v3476, %v3477
      %v3479 = vrot.slane %v3478, 1
      %v3480 = vadd.f32 %v3478, %v3479
      %v3481 = vmul.f32 %v1848, %v1848
      %v3482 = vmul.f32 %v1849, %v1849
      %v3483 = vmul.f32 %v1850, %v1850
      %v3484 = vmul.f32 %v1851, %v1851
      %v3485 = vmul.f32 %v1852, %v1852
      %v3486 = vmul.f32 %v1853, %v1853
      %v3487 = vmul.f32 %v1854, %v1854
      %v3488 = vmul.f32 %v1855, %v1855
      %v3489 = vsel %vm336, %v3481, 0.0
      %v3490 = vsel %vm336, %v3482, 0.0
      %v3491 = vadd.f32 %v3489, %v3490
      %v3492 = vsel %vm336, %v3483, 0.0
      %v3493 = vadd.f32 %v3491, %v3492
      %v3494 = vsel %vm336, %v3484, 0.0
      %v3495 = vadd.f32 %v3493, %v3494
      %v3496 = vsel %vm336, %v3485, 0.0
      %v3497 = vadd.f32 %v3495, %v3496
      %v3498 = vsel %vm336, %v3486, 0.0
      %v3499 = vadd.f32 %v3497, %v3498
      %v3500 = vsel %vm336, %v3487, 0.0
      %v3501 = vadd.f32 %v3499, %v3500
      %v3502 = vsel %vm336, %v3488, 0.0
      %v3503 = vadd.f32 %v3501, %v3502
      %v3504 = vrot.slane %v3503, 4
      %v3505 = vadd.f32 %v3503, %v3504
      %v3506 = vrot.slane %v3505, 2
      %v3507 = vadd.f32 %v3505, %v3506
      %v3508 = vrot.slane %v3507, 1
      %v3509 = vadd.f32 %v3507, %v3508
      %v3510 = vmul.f32 %v3422, %v3422
      %v3511 = vmul.f32 %v3423, %v3423
      %v3512 = vmul.f32 %v3424, %v3424
      %v3513 = vmul.f32 %v3425, %v3425
      %v3514 = vmul.f32 %v3426, %v3426
      %v3515 = vmul.f32 %v3427, %v3427
      %v3516 = vmul.f32 %v3428, %v3428
      %v3517 = vmul.f32 %v3429, %v3429
      %v3518 = vsel %vm336, %v3510, 0.0
      %v3519 = vsel %vm336, %v3511, 0.0
      %v3520 = vadd.f32 %v3518, %v3519
      %v3521 = vsel %vm336, %v3512, 0.0
      %v3522 = vadd.f32 %v3520, %v3521
      %v3523 = vsel %vm336, %v3513, 0.0
      %v3524 = vadd.f32 %v3522, %v3523
      %v3525 = vsel %vm336, %v3514, 0.0
      %v3526 = vadd.f32 %v3524, %v3525
      %v3527 = vsel %vm336, %v3515, 0.0
      %v3528 = vadd.f32 %v3526, %v3527
      %v3529 = vsel %vm336, %v3516, 0.0
      %v3530 = vadd.f32 %v3528, %v3529
      %v3531 = vsel %vm336, %v3517, 0.0
      %v3532 = vadd.f32 %v3530, %v3531
      %v3533 = vrot.slane %v3532, 4
      %v3534 = vadd.f32 %v3532, %v3533
      %v3535 = vrot.slane %v3534, 2
      %v3536 = vadd.f32 %v3534, %v3535
      %v3537 = vrot.slane %v3536, 1
      %v3538 = vadd.f32 %v3536, %v3537
      %vm3539 = vcmask 1040384
      %v3540 = vsel %vm3539, %v3459, %v3480
      %vm3541 = vcmask 1041408
      %v3542 = vsel %vm3541, %v3540, %v3509
      %vm3543 = vcmask 1042432
      %v3544 = vsel %vm3543, %v3542, %v3538
      %vm3545 = vcmask 257024
      %3546 = vst.msk [vmem:[%s255] sm:$0xf] %vm3545, %v3544
      %p3547 = scmp.lt.s32.totalorder %s17, 1
      %s3548 = scalar_select %p3547, %s17, 1
      %s3549 = smul.addr %s3548, 16
      %s3550 = smul.addr %s3549, 8
      %s3551 = scalar_lea.vmem %s4, %s3550
      %p3552 = scmp.lt.s32.totalorder %s17, 1
      %s3553 = scalar_select %p3552, %s17, 1
      %s3554 = smul.addr %s3553, 4
      %s3555 = scalar_lea.vmem %s5, %s3554
      // Predicated region
      $region37: #{residual_conv_mod.2} parent=35 // pred_check
        %p3556 = pneg %p129
      $region38: #{residual_conv_mod.2} parent=35 // pred_check_branch
        %3558 = sbr.rel (%p3556) target = $region40
      $region39: #{residual_conv_mod.2} parent=35 // pred_region
        _
      $region40: #{residual_conv_mod.2} parent=35 // pred_fallthru
        _
      // Predicated region
      $region41: #{residual_conv_mod.2} parent=35 // pred_check
        %p3559 = pneg %p155
      $region42: #{residual_conv_mod.2} parent=35 // pred_check_branch
        %3561 = sbr.rel (%p3559) target = $region44
      $region43: #{residual_conv_mod.2} parent=35 // pred_region
        _
      $region44: #{residual_conv_mod.2} parent=35 // pred_fallthru
        _
    $region36: #{residual_conv_mod.2} parent=5 // pred_fallthru
      _
    %p3562 = scmp.le.s32.totalorder 2, %s12
    // Predicated region
    $region45: #{residual_conv_mod.2} parent=5 // pred_check
      %p3563 = pneg %p3562
    $region46: #{residual_conv_mod.2} parent=5 // pred_check_branch
      %3565 = sbr.rel (%p3563) target = $region48
    $region47: #{residual_conv_mod.2} parent=5 // pred_region
      %s3566 = ssub.s32 %s12, 2
      // Predicated region
      $region49: #{residual_conv_mod.2} parent=47 // pred_check
        %p3567 = pneg %p135
      $region50: #{residual_conv_mod.2} parent=47 // pred_check_branch
        %3569 = sbr.rel (%p3567) target = $region52
      $region51: #{residual_conv_mod.2} parent=47 // pred_region
        %p3570 = scmp.lt.s32.totalorder %s18, 1
        %s3571 = scalar_select %p3570, %s18, 1
        %s3572 = smul.addr %s3571, 16
        %s3573 = smul.addr %s3572, 8
        %s3574 = scalar_lea.vmem %s4, %s3573
      $region52: #{residual_conv_mod.2} parent=47 // pred_fallthru
        _
      // Predicated region
      $region53: #{residual_conv_mod.2} parent=47 // pred_check
        %p3575 = pneg %p161
      $region54: #{residual_conv_mod.2} parent=47 // pred_check_branch
        %3577 = sbr.rel (%p3575) target = $region56
      $region55: #{residual_conv_mod.2} parent=47 // pred_region
        %p3578 = scmp.lt.s32.totalorder %s18, 1
        %s3579 = scalar_select %p3578, %s18, 1
        %s3580 = smul.addr %s3579, 4
        %s3581 = scalar_lea.vmem %s5, %s3580
      $region56: #{residual_conv_mod.2} parent=47 // pred_fallthru
        _
    $region48: #{residual_conv_mod.2} parent=5 // pred_fallthru
      _
  $region6: #{residual_conv_mod.2} parent=0 // loop_footer
    %s16 = sadd.s32 1, %s12
  $region7: #{residual_conv_mod.2} parent=0 // loop_footer_branch
    %11 = sbr.rel target = $region3
  $region8: #{residual_conv_mod.2} parent=0 // loop_exit
    _

// kernel: residual_conv_mod.3
$region0: #{residual_conv_mod.3}
  #allocation0 [shape = 'u32[]', space=smem, size = 0x4, offset = 0x4, fixed_abs, tag = 'smem constant byte address 0x4 - core index']
  #allocation1 [shape = 'u32[144,128]{1,0:T(1,128)}', space=vmem, size = 0x12000, scoped, tag = 'internal scratch']
  #allocation2 [shape = 'f32[10,10,40]{2,1,0:T(8,128)}', space=vmem, size = 0x14000, scoped, tag = 'scratch operand']
  #allocation3 [shape = 'f32[64,32]{1,0:T(8,128)}', space=vmem, size = 0x8000, scoped, tag = 'scratch operand']
  %s0 = inlined_call_operand.vmem [shape: f32[2,2,8,8,32], index: 0, kind: input, shape index: {}]
  %s1 = inlined_call_operand.vmem [shape: f32[2,32], index: 1, kind: input, shape index: {}]
  %s2 = inlined_call_operand.vmem [shape: f32[2,32], index: 2, kind: input, shape index: {}]
  %s3 = inlined_call_operand.vmem [shape: f32[9,40,32], index: 3, kind: input, shape index: {}]
  %s4 = inlined_call_operand.vmem [shape: f32[9,40,32], index: 4, kind: input, shape index: {}]
  %s5 = inlined_call_operand.vmem [shape: f32[2,2,8,8,32], index: 5, kind: output, shape index: {}]
  %s6 = sld [smem:[#allocation0]]
  $region53: #{residual_conv_mod.3} parent=0
    _
  %s8 = ssub.s32 1, %s6
  %s9 = scalar_select 0, %s8, %s6
  loop: start=0, step=1, limit=4
  $region2: #{residual_conv_mod.3} parent=0 // loop_pre_header
    _
  $region3: #{residual_conv_mod.3} parent=0 // loop_header
    %s11 = sphi 0, %s15
    %p12 = scmp.ge.s32.totalorder %s11, 4
    %s21 = sphi 0, %s23
    %s24 = sphi 0, %s21
    %s25 = sphi 0, %s24
    %s41 = sphi 0, %s25
    %s45 = sphi 0, %s45
    %s47 = sphi 0, %s45
    %s48 = sphi 0, %s47
    %s62 = sphi 0, %s48
    %s66 = sphi 0, %s66
    %s68 = sphi 0, %s66
    %s69 = sphi 0, %s68
    %s83 = sphi 0, %s69
    %s87 = sphi 0, %s87
    %s89 = sphi 0, %s87
    %s90 = sphi 0, %s89
    %s104 = sphi 0, %s90
    %s108 = sphi 0, %s108
    %s110 = sphi 0, %s108
    %s111 = sphi 0, %s110
    %s125 = sphi 0, %s111
    %s131 = sphi 0, %s133
    %s134 = sphi 0, %s131
    %s135 = sphi 0, %s134
    %s151 = sphi 0, %s135
  $region4: #{residual_conv_mod.3} parent=0 // loop_header_branch
    %14 = sbr.rel (%p12) target = $region8
  $region5: #{residual_conv_mod.3} parent=0 // loop_body
    %s16 = ssub.s32 %s11, 1
    %s17 = ssub.s32 %s11, 2
    %s18 = sadd.s32 %s11, 1
    %s19 = ssub.s32 %s11, %s18
    %p20 = scmp.eq.s32.totalorder %s19, 0
    %s22 = sadd.s32 %s21, 1
    %s23 = scalar_select %p20, %s21, %s22
    %p26 = pneg %p20
    %p27 = scmp.eq.s32.totalorder %s11, 1
    %p28 = por %p26, %p27
    %p29 = scmp.ne.s32.totalorder %s21, %s24
    %p30 = scmp.eq.s32.totalorder %s11, 0
    %p31 = por %p29, %p30
    %p32 = scmp.ne.s32.totalorder %s21, %s24
    %p33 = scmp.eq.s32.totalorder %s16, 1
    %p34 = por %p32, %p33
    %p35 = scmp.ne.s32.totalorder %s24, %s25
    %p36 = scmp.eq.s32.totalorder %s16, 0
    %p37 = por %p35, %p36
    %p38 = scmp.ne.s32.totalorder %s24, %s25
    %p39 = scmp.eq.s32.totalorder %s17, 1
    %p40 = por %p38, %p39
    %p42 = scmp.ne.s32.totalorder %s25, %s41
    %p43 = scmp.eq.s32.totalorder %s17, 0
    %p44 = por %p42, %p43
    %s46 = sadd.s32 %s45, 1
    %p49 = scmp.eq.s32.totalorder %s11, 1
    %p50 = scmp.ne.s32.totalorder %s45, %s47
    %p51 = scmp.eq.s32.totalorder %s11, 0
    %p52 = por %p50, %p51
    %p53 = scmp.ne.s32.totalorder %s45, %s47
    %p54 = scmp.eq.s32.totalorder %s16, 1
    %p55 = por %p53, %p54
    %p56 = scmp.ne.s32.totalorder %s47, %s48
    %p57 = scmp.eq.s32.totalorder %s16, 0
    %p58 = por %p56, %p57
    %p59 = scmp.ne.s32.totalorder %s47, %s48
    %p60 = scmp.eq.s32.totalorder %s17, 1
    %p61 = por %p59, %p60
    %p63 = scmp.ne.s32.totalorder %s48, %s62
    %p64 = scmp.eq.s32.totalorder %s17, 0
    %p65 = por %p63, %p64
    %s67 = sadd.s32 %s66, 1
    %p70 = scmp.eq.s32.totalorder %s11, 1
    %p71 = scmp.ne.s32.totalorder %s66, %s68
    %p72 = scmp.eq.s32.totalorder %s11, 0
    %p73 = por %p71, %p72
    %p74 = scmp.ne.s32.totalorder %s66, %s68
    %p75 = scmp.eq.s32.totalorder %s16, 1
    %p76 = por %p74, %p75
    %p77 = scmp.ne.s32.totalorder %s68, %s69
    %p78 = scmp.eq.s32.totalorder %s16, 0
    %p79 = por %p77, %p78
    %p80 = scmp.ne.s32.totalorder %s68, %s69
    %p81 = scmp.eq.s32.totalorder %s17, 1
    %p82 = por %p80, %p81
    %p84 = scmp.ne.s32.totalorder %s69, %s83
    %p85 = scmp.eq.s32.totalorder %s17, 0
    %p86 = por %p84, %p85
    %s88 = sadd.s32 %s87, 1
    %p91 = scmp.eq.s32.totalorder %s11, 1
    %p92 = scmp.ne.s32.totalorder %s87, %s89
    %p93 = scmp.eq.s32.totalorder %s11, 0
    %p94 = por %p92, %p93
    %p95 = scmp.ne.s32.totalorder %s87, %s89
    %p96 = scmp.eq.s32.totalorder %s16, 1
    %p97 = por %p95, %p96
    %p98 = scmp.ne.s32.totalorder %s89, %s90
    %p99 = scmp.eq.s32.totalorder %s16, 0
    %p100 = por %p98, %p99
    %p101 = scmp.ne.s32.totalorder %s89, %s90
    %p102 = scmp.eq.s32.totalorder %s17, 1
    %p103 = por %p101, %p102
    %p105 = scmp.ne.s32.totalorder %s90, %s104
    %p106 = scmp.eq.s32.totalorder %s17, 0
    %p107 = por %p105, %p106
    %s109 = sadd.s32 %s108, 1
    %p112 = scmp.eq.s32.totalorder %s11, 1
    %p113 = scmp.ne.s32.totalorder %s108, %s110
    %p114 = scmp.eq.s32.totalorder %s11, 0
    %p115 = por %p113, %p114
    %p116 = scmp.ne.s32.totalorder %s108, %s110
    %p117 = scmp.eq.s32.totalorder %s16, 1
    %p118 = por %p116, %p117
    %p119 = scmp.ne.s32.totalorder %s110, %s111
    %p120 = scmp.eq.s32.totalorder %s16, 0
    %p121 = por %p119, %p120
    %p122 = scmp.ne.s32.totalorder %s110, %s111
    %p123 = scmp.eq.s32.totalorder %s17, 1
    %p124 = por %p122, %p123
    %p126 = scmp.ne.s32.totalorder %s111, %s125
    %p127 = scmp.eq.s32.totalorder %s17, 0
    %p128 = por %p126, %p127
    %s129 = ssub.s32 %s11, %s18
    %p130 = scmp.eq.s32.totalorder %s129, 0
    %s132 = sadd.s32 %s131, 1
    %s133 = scalar_select %p130, %s131, %s132
    %p136 = pneg %p130
    %p137 = scmp.eq.s32.totalorder %s11, 1
    %p138 = por %p136, %p137
    %p139 = scmp.ne.s32.totalorder %s131, %s134
    %p140 = scmp.eq.s32.totalorder %s11, 0
    %p141 = por %p139, %p140
    %p142 = scmp.ne.s32.totalorder %s131, %s134
    %p143 = scmp.eq.s32.totalorder %s16, 1
    %p144 = por %p142, %p143
    %p145 = scmp.ne.s32.totalorder %s134, %s135
    %p146 = scmp.eq.s32.totalorder %s16, 0
    %p147 = por %p145, %p146
    %p148 = scmp.ne.s32.totalorder %s134, %s135
    %p149 = scmp.eq.s32.totalorder %s17, 1
    %p150 = por %p148, %p149
    %p152 = scmp.ne.s32.totalorder %s135, %s151
    %p153 = scmp.eq.s32.totalorder %s17, 0
    %p154 = por %p152, %p153
    %p155 = scmp.le.s32.totalorder 1, %s11
    %p156 = scmp.lt.s32.totalorder %s11, 3
    %p157 = pnand %p155, %p156
    %p158 = pneg %p157
    // Predicated region
    $region9: #{residual_conv_mod.3} parent=5 // pred_check
      _
    $region10: #{residual_conv_mod.3} parent=5 // pred_check_branch
      %160 = sbr.rel (%p157) target = $region12
    $region11: #{residual_conv_mod.3} parent=5 // pred_region
      %s161 = ssub.s32 %s11, 1
      // Predicated region
      $region13: #{residual_conv_mod.3} parent=11 // pred_check
        %p162 = pneg %p58
      $region14: #{residual_conv_mod.3} parent=11 // pred_check_branch
        %164 = sbr.rel (%p162) target = $region16
      $region15: #{residual_conv_mod.3} parent=11 // pred_region
        _
      $region16: #{residual_conv_mod.3} parent=11 // pred_fallthru
        _
      // Predicated region
      $region17: #{residual_conv_mod.3} parent=11 // pred_check
        %p165 = pneg %p79
      $region18: #{residual_conv_mod.3} parent=11 // pred_check_branch
        %167 = sbr.rel (%p165) target = $region20
      $region19: #{residual_conv_mod.3} parent=11 // pred_region
        _
      $region20: #{residual_conv_mod.3} parent=11 // pred_fallthru
        _
      // Predicated region
      $region21: #{residual_conv_mod.3} parent=11 // pred_check
        %p168 = pneg %p100
      $region22: #{residual_conv_mod.3} parent=11 // pred_check_branch
        %170 = sbr.rel (%p168) target = $region24
      $region23: #{residual_conv_mod.3} parent=11 // pred_region
        _
      $region24: #{residual_conv_mod.3} parent=11 // pred_fallthru
        _
      // Predicated region
      $region25: #{residual_conv_mod.3} parent=11 // pred_check
        %p171 = pneg %p121
      $region26: #{residual_conv_mod.3} parent=11 // pred_check_branch
        %173 = sbr.rel (%p171) target = $region28
      $region27: #{residual_conv_mod.3} parent=11 // pred_region
        _
      $region28: #{residual_conv_mod.3} parent=11 // pred_fallthru
        _
    $region12: #{residual_conv_mod.3} parent=5 // pred_fallthru
      _
    %p174 = scmp.lt.s32.totalorder %s11, 2
    // Predicated region
    $region29: #{residual_conv_mod.3} parent=5 // pred_check
      %p175 = pneg %p174
    $region30: #{residual_conv_mod.3} parent=5 // pred_check_branch
      %177 = sbr.rel (%p175) target = $region32
    $region31: #{residual_conv_mod.3} parent=5 // pred_region
      // Predicated region
      $region33: #{residual_conv_mod.3} parent=31 // pred_check
        %p178 = pneg %p31
      $region34: #{residual_conv_mod.3} parent=31 // pred_check_branch
        %180 = sbr.rel (%p178) target = $region36
      $region35: #{residual_conv_mod.3} parent=31 // pred_region
        %p181 = scmp.lt.s32.totalorder %s11, 1
        %s182 = scalar_select %p181, %s11, 1
        %s183 = smul.addr %s182, 16
        %s184 = smul.addr %s183, 8
        %s185 = scalar_lea.vmem %s0, %s184
      $region36: #{residual_conv_mod.3} parent=31 // pred_fallthru
        _
    $region32: #{residual_conv_mod.3} parent=5 // pred_fallthru
      _
    %p186 = scmp.le.s32.totalorder 1, %s11
    %p187 = scmp.lt.s32.totalorder %s11, 3
    %p188 = pnand %p186, %p187
    %p189 = pneg %p188
    // Predicated region
    $region37: #{residual_conv_mod.3} parent=5 // pred_check
      _
    $region38: #{residual_conv_mod.3} parent=5 // pred_check_branch
      %191 = sbr.rel (%p188) target = $region40
    $region39: #{residual_conv_mod.3} parent=5 // pred_region
      %s192 = ssub.s32 %s11, 1
      %p193 = scmp.lt.s32.totalorder %s16, 1
      %s194 = scalar_select %p193, %s16, 1
      %s195 = smul.addr %s194, 16
      %s196 = smul.addr %s195, 8
      %s197 = scalar_lea.vmem %s0, %s196
      %p198 = pneg %p37
      %p199 = pneg %p34
      %p200 = pneg %p58
      %p201 = pneg %p55
      %p202 = pneg %p79
      %p203 = pneg %p76
      %p204 = pneg %p100
      %p205 = pneg %p97
      %p206 = pneg %p121
      %p207 = pneg %p118
      %p208 = pneg %p147
      %p209 = pneg %p144
      %p210 = scmp.lt.s32.totalorder %s16, 1
      %s211 = scalar_select %p210, %s16, 1
      %s212 = smul.addr %s211, 16
      %s213 = smul.addr %s212, 8
      %s214 = scalar_lea.vmem %s5, %s213
      %p215 = scmp.lt.s32.totalorder %s16, 1
      %s216 = scalar_select %p215, %s16, 1
      %s217 = smul.addr %s216, 16
      %s218 = smul.addr %s217, 8
      %s219 = scalar_lea.vmem %s0, %s218
      %p220 = scmp.lt.s32.totalorder %s16, 1
      %s221 = scalar_select %p220, %s16, 1
      %s222 = smul.addr %s221, 16
      %s223 = smul.addr %s222, 8
      %s224 = scalar_lea.vmem %s5, %s223
      %vm225 = vcmask 326656
      %226 = vst.msk [vmem:[#allocation2] sm:$0xff] %vm225, 0.0
      %vm227 = vcmask 320512
      %228 = vst.msk [vmem:[#allocation2 + $0x8] sm:$0x3] %vm227, 0.0
      %229 = vst.msk [vmem:[#allocation2 + $0x10] sm:$0xff] %vm225, 0.0
      %230 = vst.msk [vmem:[#allocation2 + $0x18] sm:$0x3] %vm227, 0.0
      %231 = vst.msk [vmem:[#allocation2 + $0x20] sm:$0xff] %vm225, 0.0
      %232 = vst.msk [vmem:[#allocation2 + $0x28] sm:$0x3] %vm227, 0.0
      %233 = vst.msk [vmem:[#allocation2 + $0x30] sm:$0xff] %vm225, 0.0
      %234 = vst.msk [vmem:[#allocation2 + $0x38] sm:$0x3] %vm227, 0.0
      %235 = vst.msk [vmem:[#allocation2 + $0x40] sm:$0xff] %vm225, 0.0
      %236 = vst.msk [vmem:[#allocation2 + $0x48] sm:$0x3] %vm227, 0.0
      %237 = vst.msk [vmem:[#allocation2 + $0x50] sm:$0xff] %vm225, 0.0
      %238 = vst.msk [vmem:[#allocation2 + $0x58] sm:$0x3] %vm227, 0.0
      %239 = vst.msk [vmem:[#allocation2 + $0x60] sm:$0xff] %vm225, 0.0
      %240 = vst.msk [vmem:[#allocation2 + $0x68] sm:$0x3] %vm227, 0.0
      %241 = vst.msk [vmem:[#allocation2 + $0x70] sm:$0xff] %vm225, 0.0
      %242 = vst.msk [vmem:[#allocation2 + $0x78] sm:$0x3] %vm227, 0.0
      %243 = vst.msk [vmem:[#allocation2 + $0x80] sm:$0xff] %vm225, 0.0
      %244 = vst.msk [vmem:[#allocation2 + $0x88] sm:$0x3] %vm227, 0.0
      %245 = vst.msk [vmem:[#allocation2 + $0x90] sm:$0xff] %vm225, 0.0
      %246 = vst.msk [vmem:[#allocation2 + $0x98] sm:$0x3] %vm227, 0.0
      %s247 = scalar_lea.vmem %s219, 64
      %v248 = vld [vmem:[%s247] sm:$0xff]
      %v249 = vld [vmem:[%s247 + $0x8] sm:$0xff]
      %v250 = vld [vmem:[%s247 + $0x10] sm:$0xff]
      %v251 = vld [vmem:[%s247 + $0x18] sm:$0xff]
      %v252 = vld [vmem:[%s247 + $0x20] sm:$0xff]
      %v253 = vld [vmem:[%s247 + $0x28] sm:$0xff]
      %v254 = vld [vmem:[%s247 + $0x30] sm:$0xff]
      %v255 = vld [vmem:[%s247 + $0x38] sm:$0xff]
      %v256 = vld [vmem:[%s1 + $0x1] sm:$0x1]
      %v257 = vlaneseq
      %v258 = vshrl.u32 %v257, 7
      %v259 = vsub.s32 0, %v258
      %v260 = vrot.slane %v256, %v259
      %v261 = vmul.f32 %v248, %v260
      %v262 = vmul.f32 %v249, %v260
      %v263 = vmul.f32 %v250, %v260
      %v264 = vmul.f32 %v251, %v260
      %v265 = vmul.f32 %v252, %v260
      %v266 = vmul.f32 %v253, %v260
      %v267 = vmul.f32 %v254, %v260
      %v268 = vmul.f32 %v255, %v260
      %v269 = vld [vmem:[%s2 + $0x1] sm:$0x1]
      %v270 = vlaneseq
      %v271 = vshrl.u32 %v270, 7
      %v272 = vsub.s32 0, %v271
      %v273 = vrot.slane %v269, %v272
      %v274 = vadd.f32 %v261, %v273
      %v275 = vadd.f32 %v262, %v273
      %v276 = vadd.f32 %v263, %v273
      %v277 = vadd.f32 %v264, %v273
      %v278 = vadd.f32 %v265, %v273
      %v279 = vadd.f32 %v266, %v273
      %v280 = vadd.f32 %v267, %v273
      %v281 = vadd.f32 %v268, %v273
      %290 = vrot.lane.b32.xlu0 %v274, 4
      %v291 = vpop.permute.xlu0 %290
      %292 = vrot.lane.b32.xlu0 %v275, 4
      %v293 = vpop.permute.xlu0 %292
      %294 = vrot.lane.b32.xlu0 %v276, 4
      %v295 = vpop.permute.xlu0 %294
      %296 = vrot.lane.b32.xlu0 %v277, 4
      %v297 = vpop.permute.xlu0 %296
      %298 = vrot.lane.b32.xlu0 %v278, 4
      %v299 = vpop.permute.xlu0 %298
      %300 = vrot.lane.b32.xlu0 %v279, 4
      %v301 = vpop.permute.xlu0 %300
      %302 = vrot.lane.b32.xlu0 %v280, 4
      %v303 = vpop.permute.xlu0 %302
      %304 = vrot.lane.b32.xlu0 %v281, 4
      %v305 = vpop.permute.xlu0 %304
      %s314 = scalar_lea.vmem [#allocation2], 16
      %vm315 = vcmask 293920
      %316 = vst.msk [vmem:[%s314 + $0x1] sm:$0xff] %vm315, %v291
      %317 = vst.msk [vmem:[%s314 + $0x11] sm:$0xff] %vm315, %v293
      %318 = vst.msk [vmem:[%s314 + $0x21] sm:$0xff] %vm315, %v295
      %319 = vst.msk [vmem:[%s314 + $0x31] sm:$0xff] %vm315, %v297
      %320 = vst.msk [vmem:[%s314 + $0x41] sm:$0xff] %vm315, %v299
      %321 = vst.msk [vmem:[%s314 + $0x51] sm:$0xff] %vm315, %v301
      %322 = vst.msk [vmem:[%s314 + $0x61] sm:$0xff] %vm315, %v303
      %323 = vst.msk [vmem:[%s314 + $0x71] sm:$0xff] %vm315, %v305
      %v324 = vld [vmem:[%s219] sm:$0xff]
      %v325 = vld [vmem:[%s219 + $0x8] sm:$0xff]
      %v326 = vld [vmem:[%s219 + $0x10] sm:$0xff]
      %v327 = vld [vmem:[%s219 + $0x18] sm:$0xff]
      %v328 = vld [vmem:[%s219 + $0x20] sm:$0xff]
      %v329 = vld [vmem:[%s219 + $0x28] sm:$0xff]
      %v330 = vld [vmem:[%s219 + $0x30] sm:$0xff]
      %v331 = vld [vmem:[%s219 + $0x38] sm:$0xff]
      %v332 = vld [vmem:[%s1] sm:$0x1]
      %v333 = vlaneseq
      %v334 = vshrl.u32 %v333, 7
      %v335 = vsub.s32 0, %v334
      %v336 = vrot.slane %v332, %v335
      %v337 = vmul.f32 %v324, %v336
      %v338 = vmul.f32 %v325, %v336
      %v339 = vmul.f32 %v326, %v336
      %v340 = vmul.f32 %v327, %v336
      %v341 = vmul.f32 %v328, %v336
      %v342 = vmul.f32 %v329, %v336
      %v343 = vmul.f32 %v330, %v336
      %v344 = vmul.f32 %v331, %v336
      %v345 = vld [vmem:[%s2] sm:$0x1]
      %v346 = vlaneseq
      %v347 = vshrl.u32 %v346, 7
      %v348 = vsub.s32 0, %v347
      %v349 = vrot.slane %v345, %v348
      %v350 = vadd.f32 %v337, %v349
      %v351 = vadd.f32 %v338, %v349
      %v352 = vadd.f32 %v339, %v349
      %v353 = vadd.f32 %v340, %v349
      %v354 = vadd.f32 %v341, %v349
      %v355 = vadd.f32 %v342, %v349
      %v356 = vadd.f32 %v343, %v349
      %v357 = vadd.f32 %v344, %v349
      %vm358 = vcmask 261120
      %359 = vst.msk [vmem:[#allocation3] sm:$0xff] %vm358, %v350
      %360 = vst.msk [vmem:[#allocation3 + $0x8] sm:$0xff] %vm358, %v351
      %361 = vst.msk [vmem:[#allocation3 + $0x10] sm:$0xff] %vm358, %v352
      %362 = vst.msk [vmem:[#allocation3 + $0x18] sm:$0xff] %vm358, %v353
      %363 = vst.msk [vmem:[#allocation3 + $0x20] sm:$0xff] %vm358, %v354
      %364 = vst.msk [vmem:[#allocation3 + $0x28] sm:$0xff] %vm358, %v355
      %365 = vst.msk [vmem:[#allocation3 + $0x30] sm:$0xff] %vm358, %v356
      %366 = vst.msk [vmem:[#allocation3 + $0x38] sm:$0xff] %vm358, %v357
      %v367 = vld [vmem:[#allocation2] sm:$0xff]
      %v368 = vld [vmem:[#allocation2 + $0x10] sm:$0xff]
      %v369 = vld [vmem:[#allocation2 + $0x20] sm:$0xff]
      %v370 = vld [vmem:[#allocation2 + $0x30] sm:$0xff]
      %v371 = vld [vmem:[#allocation2 + $0x40] sm:$0xff]
      %v372 = vld [vmem:[#allocation2 + $0x50] sm:$0xff]
      %v373 = vld [vmem:[#allocation2 + $0x60] sm:$0xff]
      %v374 = vld [vmem:[#allocation2 + $0x70] sm:$0xff]
      %v375 = vld [vmem:[#allocation3] sm:$0xff]
      %v376 = vld [vmem:[#allocation3 + $0x8] sm:$0xff]
      %v377 = vld [vmem:[#allocation3 + $0x10] sm:$0xff]
      %v378 = vld [vmem:[#allocation3 + $0x18] sm:$0xff]
      %v379 = vld [vmem:[#allocation3 + $0x20] sm:$0xff]
      %v380 = vld [vmem:[#allocation3 + $0x28] sm:$0xff]
      %v381 = vld [vmem:[#allocation3 + $0x30] sm:$0xff]
      %v382 = vld [vmem:[#allocation3 + $0x38] sm:$0xff]
      %v383 = vld [vmem:[%s3] sm:$0xff]
      %v384 = vld [vmem:[%s3 + $0x8] sm:$0xff]
      %v385 = vld [vmem:[%s3 + $0x10] sm:$0xff]
      %v386 = vld [vmem:[%s3 + $0x18] sm:$0xff]
      %v387 = vld [vmem:[%s3 + $0x20] sm:$0xff]
      %v389 = vsel %vm225, %v367, 0
      %v392 = vsel %vm225, %v368, 0
      %v395 = vsel %vm225, %v369, 0
      %v398 = vsel %vm225, %v370, 0
      %v401 = vsel %vm225, %v371, 0
      %v404 = vsel %vm225, %v372, 0
      %v407 = vsel %vm225, %v373, 0
      %v410 = vsel %vm225, %v374, 0
      %412 = vmatprep.subr.mxu0 0.0
      %413 = vmatpush1.msra.mxu0 %v383
      %414 = vmatprep.subr.mxu0 0.0
      %415 = vmatpush1.msra.mxu0 %v384
      %416 = vmatprep.subr.mxu0 0.0
      %417 = vmatpush1.msra.mxu0 %v385
      %418 = vmatprep.subr.mxu0 0.0
      %419 = vmatpush1.msra.mxu0 %v386
      %420 = vmatprep.subr.mxu0 0.0
      %421 = vmatpush1.msra.mxu0 %v387
      %422 = vmatprep.subr.mxu0 0.0
      %423 = vmatpush1.msra.mxu0 0.0
      %424 = vmatprep.subr.mxu0 0.0
      %425 = vmatpush1.msra.mxu0 0.0
      %426 = vmatprep.subr.mxu0 0.0
      %427 = vmatpush1.msra.mxu0 0.0
      %428 = vmatprep.subr.mxu0 0.0
      %429 = vmatpush1.msra.mxu0 0.0
      %430 = vmatprep.subr.mxu0 0.0
      %431 = vmatpush1.msra.mxu0 0.0
      %432 = vmatprep.subr.mxu0 0.0
      %433 = vmatpush1.msra.mxu0 0.0
      %434 = vmatprep.subr.mxu0 0.0
      %435 = vmatpush1.msra.mxu0 0.0
      %436 = vmatprep.subr.mxu0 0.0
      %437 = vmatpush1.msra.mxu0 0.0
      %438 = vmatprep.subr.mxu0 0.0
      %439 = vmatpush1.msra.mxu0 0.0
      %440 = vmatprep.subr.mxu0 0.0
      %441 = vmatpush1.msra.mxu0 0.0
      %442 = vmatprep.subr.mxu0 0.0
      %443 = vmatpush1.msra.mxu0 0.0
      %444 = vmatprep.subr.mxu0 0.0
      %445 = vmatpush1.msra.mxu0 0.0
      %446 = vmatprep.subr.mxu0 0.0
      %447 = vmatpush1.msra.mxu0 0.0
      %448 = vmatprep.subr.mxu0 0.0
      %449 = vmatpush1.msra.mxu0 0.0
      %450 = vmatprep.subr.mxu0 0.0
      %451 = vmatpush1.msra.mxu0 0.0
      %452 = vmatprep.subr.mxu0 0.0
      %453 = vmatpush1.msra.mxu0 0.0
      %454 = vmatprep.subr.mxu0 0.0
      %455 = vmatpush1.msra.mxu0 0.0
      %456 = vmatprep.subr.mxu0 0.0
      %457 = vmatpush1.msra.mxu0 0.0
      %458 = vmatprep.subr.mxu0 0.0
      %459 = vmatpush1.msra.mxu0 0.0
      %460 = vmatprep.subr.mxu0 0.0
      %461 = vmatpush1.msra.mxu0 0.0
      %462 = vmatprep.subr.mxu0 0.0
      %463 = vmatpush1.msra.mxu0 0.0
      %464 = vmatprep.subr.mxu0 0.0
      %465 = vmatpush1.msra.mxu0 0.0
      %466 = vmatprep.subr.mxu0 0.0
      %467 = vmatpush1.msra.mxu0 0.0
      %468 = vmatprep.subr.mxu0 0.0
      %469 = vmatpush1.msra.mxu0 0.0
      %470 = vmatprep.subr.mxu0 0.0
      %471 = vmatpush1.msra.mxu0 0.0
      %472 = vmatprep.subr.mxu0 0.0
      %473 = vmatpush1.msra.mxu0 0.0
      %474 = vmatprep.subr.mxu0 0.0
      %475 = vmatpush1.msra.mxu0 0.0
      %476 = vmatprep.mubr.f32.mxu0 0.0
      %477 = vmatmul.mubr.f32.gmra.mrb[0].mxu0 %v389
      %v478 = vpop.f32.mrb[0].mxu0
      %v479 = vadd.f32 0.0, %v478
      %v480 = vpop.f32.mrb[0].mxu0
      %481 = vmatprep.mubr.f32.mxu0 0.0
      %482 = vmatmul.mubr.f32.gmra.mrb[0].mxu0 %v392
      %v483 = vpop.f32.mrb[0].mxu0
      %v484 = vadd.f32 0.0, %v483
      %v485 = vpop.f32.mrb[0].mxu0
      %486 = vmatprep.mubr.f32.mxu0 0.0
      %487 = vmatmul.mubr.f32.gmra.mrb[0].mxu0 %v395
      %v488 = vpop.f32.mrb[0].mxu0
      %v489 = vadd.f32 0.0, %v488
      %v490 = vpop.f32.mrb[0].mxu0
      %491 = vmatprep.mubr.f32.mxu0 0.0
      %492 = vmatmul.mubr.f32.gmra.mrb[0].mxu0 %v398
      %v493 = vpop.f32.mrb[0].mxu0
      %v494 = vadd.f32 0.0, %v493
      %v495 = vpop.f32.mrb[0].mxu0
      %496 = vmatprep.mubr.f32.mxu0 0.0
      %497 = vmatmul.mubr.f32.gmra.mrb[0].mxu0 %v401
      %v498 = vpop.f32.mrb[0].mxu0
      %v499 = vadd.f32 0.0, %v498
      %v500 = vpop.f32.mrb[0].mxu0
      %501 = vmatprep.mubr.f32.mxu0 0.0
      %502 = vmatmul.mubr.f32.gmra.mrb[0].mxu0 %v404
      %v503 = vpop.f32.mrb[0].mxu0
      %v504 = vadd.f32 0.0, %v503
      %v505 = vpop.f32.mrb[0].mxu0
      %506 = vmatprep.mubr.f32.mxu0 0.0
      %507 = vmatmul.mubr.f32.gmra.mrb[0].mxu0 %v407
      %v508 = vpop.f32.mrb[0].mxu0
      %v509 = vadd.f32 0.0, %v508
      %v510 = vpop.f32.mrb[0].mxu0
      %511 = vmatprep.mubr.f32.mxu0 0.0
      %512 = vmatmul.mubr.f32.gmra.mrb[0].mxu0 %v410
      %v513 = vpop.f32.mrb[0].mxu0
      %v514 = vadd.f32 0.0, %v513
      %v515 = vpop.f32.mrb[0].mxu0
      %516 = vdwg.mxu0
      %v517 = vadd.f32 %v375, %v479
      %v518 = vadd.f32 %v376, %v484
      %v519 = vadd.f32 %v377, %v489
      %v520 = vadd.f32 %v378, %v494
      %v521 = vadd.f32 %v379, %v499
      %v522 = vadd.f32 %v380, %v504
      %v523 = vadd.f32 %v381, %v509
      %v524 = vadd.f32 %v382, %v514
      %525 = vst.msk [vmem:[#allocation3] sm:$0xff] %vm358, %v517
      %526 = vst.msk [vmem:[#allocation3 + $0x8] sm:$0xff] %vm358, %v518
      %527 = vst.msk [vmem:[#allocation3 + $0x10] sm:$0xff] %vm358, %v519
      %528 = vst.msk [vmem:[#allocation3 + $0x18] sm:$0xff] %vm358, %v520
      %529 = vst.msk [vmem:[#allocation3 + $0x20] sm:$0xff] %vm358, %v521
      %530 = vst.msk [vmem:[#allocation3 + $0x28] sm:$0xff] %vm358, %v522
      %531 = vst.msk [vmem:[#allocation3 + $0x30] sm:$0xff] %vm358, %v523
      %532 = vst.msk [vmem:[#allocation3 + $0x38] sm:$0xff] %vm358, %v524
      %v533 = vld [vmem:[#allocation2 + $0x1] sm:$0xff]
      %v534 = vld [vmem:[#allocation2 + $0x11] sm:$0xff]
      %v535 = vld [vmem:[#allocation2 + $0x21] sm:$0xff]
      %v536 = vld [vmem:[#allocation2 + $0x31] sm:$0xff]
      %v537 = vld [vmem:[#allocation2 + $0x41] sm:$0xff]
      %v538 = vld [vmem:[#allocation2 + $0x51] sm:$0xff]
      %v539 = vld [vmem:[#allocation2 + $0x61] sm:$0xff]
      %v540 = vld [vmem:[#allocation2 + $0x71] sm:$0xff]
      %v541 = vld [vmem:[#allocation3] sm:$0xff]
      %v542 = vld [vmem:[#allocation3 + $0x8] sm:$0xff]
      %v543 = vld [vmem:[#allocation3 + $0x10] sm:$0xff]
      %v544 = vld [vmem:[#allocation3 + $0x18] sm:$0xff]
      %v545 = vld [vmem:[#allocation3 + $0x20] sm:$0xff]
      %v546 = vld [vmem:[#allocation3 + $0x28] sm:$0xff]
      %v547 = vld [vmem:[#allocation3 + $0x30] sm:$0xff]
      %v548 = vld [vmem:[#allocation3 + $0x38] sm:$0xff]
      %s549 = scalar_lea.vmem %s3, 40
      %v550 = vld [vmem:[%s549] sm:$0xff]
      %v551 = vld [vmem:[%s549 + $0x8] sm:$0xff]
      %v552 = vld [vmem:[%s549 + $0x10] sm:$0xff]
      %v553 = vld [vmem:[%s549 + $0x18] sm:$0xff]
      %v554 = vld [vmem:[%s549 + $0x20] sm:$0xff]
      %v556 = vsel %vm225, %v533, 0
      %v559 = vsel %vm225, %v534, 0
      %v562 = vsel %vm225, %v535, 0
      %v565 = vsel %vm225, %v536, 0
      %v568 = vsel %vm225, %v537, 0
      %v571 = vsel %vm225, %v538, 0
      %v574 = vsel %vm225, %v539, 0
      %v577 = vsel %vm225, %v540, 0
      %579 = vmatprep.subr.mxu0 0.0
      %580 = vmatpush1.msra.mxu0 %v550
      %581 = vmatprep.subr.mxu0 0.0
      %582 = vmatpush1.msra.mxu0 %v551
      %583 = vmatprep.subr.mxu0 0.0
      %584 = vmatpush1.msra.mxu0 %v552
      %585 = vmatprep.subr.mxu0 0.0
      %586 = vmatpush1.msra.mxu0 %v553
      %587 = vmatprep.subr.mxu0 0.0
      %588 = vmatpush1.msra.mxu0 %v554
      %589 = vmatprep.subr.mxu0 0.0
      %590 = vmatpush1.msra.mxu0 0.0
      %591 = vmatprep.subr.mxu0 0.0
      %592 = vmatpush1.msra.mxu0 0.0
      %593 = vmatprep.subr.mxu0 0.0
      %594 = vmatpush1.msra.mxu0 0.0
      %595 = vmatprep.subr.mxu0 0.0
      %596 = vmatpush1.msra.mxu0 0.0
      %597 = vmatprep.subr.mxu0 0.0
      %598 = vmatpush1.msra.mxu0 0.0
      %599 = vmatprep.subr.mxu0 0.0
      %600 = vmatpush1.msra.mxu0 0.0
      %601 = vmatprep.subr.mxu0 0.0
      %602 = vmatpush1.msra.mxu0 0.0
      %603 = vmatprep.subr.mxu0 0.0
      %604 = vmatpush1.msra.mxu0 0.0
      %605 = vmatprep.subr.mxu0 0.0
      %606 = vmatpush1.msra.mxu0 0.0
      %607 = vmatprep.subr.mxu0 0.0
      %608 = vmatpush1.msra.mxu0 0.0
      %609 = vmatprep.subr.mxu0 0.0
      %610 = vmatpush1.msra.mxu0 0.0
      %611 = vmatprep.subr.mxu0 0.0
      %612 = vmatpush1.msra.mxu0 0.0
      %613 = vmatprep.subr.mxu0 0.0
      %614 = vmatpush1.msra.mxu0 0.0
      %615 = vmatprep.subr.mxu0 0.0
      %616 = vmatpush1.msra.mxu0 0.0
      %617 = vmatprep.subr.mxu0 0.0
      %618 = vmatpush1.msra.mxu0 0.0
      %619 = vmatprep.subr.mxu0 0.0
      %620 = vmatpush1.msra.mxu0 0.0
      %621 = vmatprep.subr.mxu0 0.0
      %622 = vmatpush1.msra.mxu0 0.0
      %623 = vmatprep.subr.mxu0 0.0
      %624 = vmatpush1.msra.mxu0 0.0
      %625 = vmatprep.subr.mxu0 0.0
      %626 = vmatpush1.msra.mxu0 0.0
      %627 = vmatprep.subr.mxu0 0.0
      %628 = vmatpush1.msra.mxu0 0.0
      %629 = vmatprep.subr.mxu0 0.0
      %630 = vmatpush1.msra.mxu0 0.0
      %631 = vmatprep.subr.mxu0 0.0
      %632 = vmatpush1.msra.mxu0 0.0
      %633 = vmatprep.subr.mxu0 0.0
      %634 = vmatpush1.msra.mxu0 0.0
      %635 = vmatprep.subr.mxu0 0.0
      %636 = vmatpush1.msra.mxu0 0.0
      %637 = vmatprep.subr.mxu0 0.0
      %638 = vmatpush1.msra.mxu0 0.0
      %639 = vmatprep.subr.mxu0 0.0
      %640 = vmatpush1.msra.mxu0 0.0
      %641 = vmatprep.subr.mxu0 0.0
      %642 = vmatpush1.msra.mxu0 0.0
      %643 = vmatprep.mubr.f32.mxu0 0.0
      %644 = vmatmul.mubr.f32.gmra.mrb[0].mxu0 %v556
      %v645 = vpop.f32.mrb[0].mxu0
      %v646 = vadd.f32 0.0, %v645
      %v647 = vpop.f32.mrb[0].mxu0
      %648 = vmatprep.mubr.f32.mxu0 0.0
      %649 = vmatmul.mubr.f32.gmra.mrb[0].mxu0 %v559
      %v650 = vpop.f32.mrb[0].mxu0
      %v651 = vadd.f32 0.0, %v650
      %v652 = vpop.f32.mrb[0].mxu0
      %653 = vmatprep.mubr.f32.mxu0 0.0
      %654 = vmatmul.mubr.f32.gmra.mrb[0].mxu0 %v562
      %v655 = vpop.f32.mrb[0].mxu0
      %v656 = vadd.f32 0.0, %v655
      %v657 = vpop.f32.mrb[0].mxu0
      %658 = vmatprep.mubr.f32.mxu0 0.0
      %659 = vmatmul.mubr.f32.gmra.mrb[0].mxu0 %v565
      %v660 = vpop.f32.mrb[0].mxu0
      %v661 = vadd.f32 0.0, %v660
      %v662 = vpop.f32.mrb[0].mxu0
      %663 = vmatprep.mubr.f32.mxu0 0.0
      %664 = vmatmul.mubr.f32.gmra.mrb[0].mxu0 %v568
      %v665 = vpop.f32.mrb[0].mxu0
      %v666 = vadd.f32 0.0, %v665
      %v667 = vpop.f32.mrb[0].mxu0
      %668 = vmatprep.mubr.f32.mxu0 0.0
      %669 = vmatmul.mubr.f32.gmra.mrb[0].mxu0 %v571
      %v670 = vpop.f32.mrb[0].mxu0
      %v671 = vadd.f32 0.0, %v670
      %v672 = vpop.f32.mrb[0].mxu0
      %673 = vmatprep.mubr.f32.mxu0 0.0
      %674 = vmatmul.mubr.f32.gmra.mrb[0].mxu0 %v574
      %v675 = vpop.f32.mrb[0].mxu0
      %v676 = vadd.f32 0.0, %v675
      %v677 = vpop.f32.mrb[0].mxu0
      %678 = vmatprep.mubr.f32.mxu0 0.0
      %679 = vmatmul.mubr.f32.gmra.mrb[0].mxu0 %v577
      %v680 = vpop.f32.mrb[0].mxu0
      %v681 = vadd.f32 0.0, %v680
      %v682 = vpop.f32.mrb[0].mxu0
      %683 = vdwg.mxu0
      %v684 = vadd.f32 %v541, %v646
      %v685 = vadd.f32 %v542, %v651
      %v686 = vadd.f32 %v543, %v656
      %v687 = vadd.f32 %v544, %v661
      %v688 = vadd.f32 %v545, %v666
      %v689 = vadd.f32 %v546, %v671
      %v690 = vadd.f32 %v547, %v676
      %v691 = vadd.f32 %v548, %v681
      %692 = vst.msk [vmem:[#allocation3] sm:$0xff] %vm358, %v684
      %693 = vst.msk [vmem:[#allocation3 + $0x8] sm:$0xff] %vm358, %v685
      %694 = vst.msk [vmem:[#allocation3 + $0x10] sm:$0xff] %vm358, %v686
      %695 = vst.msk [vmem:[#allocation3 + $0x18] sm:$0xff] %vm358, %v687
      %696 = vst.msk [vmem:[#allocation3 + $0x20] sm:$0xff] %vm358, %v688
      %697 = vst.msk [vmem:[#allocation3 + $0x28] sm:$0xff] %vm358, %v689
      %698 = vst.msk [vmem:[#allocation3 + $0x30] sm:$0xff] %vm358, %v690
      %699 = vst.msk [vmem:[#allocation3 + $0x38] sm:$0xff] %vm358, %v691
      %v700 = vld [vmem:[#allocation2 + $0x2] sm:$0xff]
      %v701 = vld [vmem:[#allocation2 + $0x12] sm:$0xff]
      %v702 = vld [vmem:[#allocation2 + $0x22] sm:$0xff]
      %v703 = vld [vmem:[#allocation2 + $0x32] sm:$0xff]
      %v704 = vld [vmem:[#allocation2 + $0x42] sm:$0xff]
      %v705 = vld [vmem:[#allocation2 + $0x52] sm:$0xff]
      %v706 = vld [vmem:[#allocation2 + $0x62] sm:$0xff]
      %v707 = vld [vmem:[#allocation2 + $0x72] sm:$0xff]
      %v708 = vld [vmem:[#allocation3] sm:$0xff]
      %v709 = vld [vmem:[#allocation3 + $0x8] sm:$0xff]
      %v710 = vld [vmem:[#allocation3 + $0x10] sm:$0xff]
      %v711 = vld [vmem:[#allocation3 + $0x18] sm:$0xff]
      %v712 = vld [vmem:[#allocation3 + $0x20] sm:$0xff]
      %v713 = vld [vmem:[#allocation3 + $0x28] sm:$0xff]
      %v714 = vld [vmem:[#allocation3 + $0x30] sm:$0xff]
      %v715 = vld [vmem:[#allocation3 + $0x38] sm:$0xff]
      %s716 = scalar_lea.vmem %s3, 80
      %v717 = vld [vmem:[%s716] sm:$0xff]
      %v718 = vld [vmem:[%s716 + $0x8] sm:$0xff]
      %v719 = vld [vmem:[%s716 + $0x10] sm:$0xff]
      %v720 = vld [vmem:[%s716 + $0x18] sm:$0xff]
      %v721 = vld [vmem:[%s716 + $0x20] sm:$0xff]
      %v723 = vsel %vm225, %v700, 0
      %v726 = vsel %vm225, %v701, 0
      %v729 = vsel %vm225, %v702, 0
      %v732 = vsel %vm225, %v703, 0
      %v735 = vsel %vm225, %v704, 0
      %v738 = vsel %vm225, %v705, 0
      %v741 = vsel %vm225, %v706, 0
      %v744 = vsel %vm225, %v707, 0
      %746 = vmatprep.subr.mxu0 0.0
      %747 = vmatpush1.msra.mxu0 %v717
      %748 = vmatprep.subr.mxu0 0.0
      %749 = vmatpush1.msra.mxu0 %v718
      %750 = vmatprep.subr.mxu0 0.0
      %751 = vmatpush1.msra.mxu0 %v719
      %752 = vmatprep.subr.mxu0 0.0
      %753 = vmatpush1.msra.mxu0 %v720
      %754 = vmatprep.subr.mxu0 0.0
      %755 = vmatpush1.msra.mxu0 %v721
      %756 = vmatprep.subr.mxu0 0.0
      %757 = vmatpush1.msra.mxu0 0.0
      %758 = vmatprep.subr.mxu0 0.0
      %759 = vmatpush1.msra.mxu0 0.0
      %760 = vmatprep.subr.mxu0 0.0
      %761 = vmatpush1.msra.mxu0 0.0
      %762 = vmatprep.subr.mxu0 0.0
      %763 = vmatpush1.msra.mxu0 0.0
      %764 = vmatprep.subr.mxu0 0.0
      %765 = vmatpush1.msra.mxu0 0.0
      %766 = vmatprep.subr.mxu0 0.0
      %767 = vmatpush1.msra.mxu0 0.0
      %768 = vmatprep.subr.mxu0 0.0
      %769 = vmatpush1.msra.mxu0 0.0
      %770 = vmatprep.subr.mxu0 0.0
      %771 = vmatpush1.msra.mxu0 0.0
      %772 = vmatprep.subr.mxu0 0.0
      %773 = vmatpush1.msra.mxu0 0.0
      %774 = vmatprep.subr.mxu0 0.0
      %775 = vmatpush1.msra.mxu0 0.0
      %776 = vmatprep.subr.mxu0 0.0
      %777 = vmatpush1.msra.mxu0 0.0
      %778 = vmatprep.subr.mxu0 0.0
      %779 = vmatpush1.msra.mxu0 0.0
      %780 = vmatprep.subr.mxu0 0.0
      %781 = vmatpush1.msra.mxu0 0.0
      %782 = vmatprep.subr.mxu0 0.0
      %783 = vmatpush1.msra.mxu0 0.0
      %784 = vmatprep.subr.mxu0 0.0
      %785 = vmatpush1.msra.mxu0 0.0
      %786 = vmatprep.subr.mxu0 0.0
      %787 = vmatpush1.msra.mxu0 0.0
      %788 = vmatprep.subr.mxu0 0.0
      %789 = vmatpush1.msra.mxu0 0.0
      %790 = vmatprep.subr.mxu0 0.0
      %791 = vmatpush1.msra.mxu0 0.0
      %792 = vmatprep.subr.mxu0 0.0
      %793 = vmatpush1.msra.mxu0 0.0
      %794 = vmatprep.subr.mxu0 0.0
      %795 = vmatpush1.msra.mxu0 0.0
      %796 = vmatprep.subr.mxu0 0.0
      %797 = vmatpush1.msra.mxu0 0.0
      %798 = vmatprep.subr.mxu0 0.0
      %799 = vmatpush1.msra.mxu0 0.0
      %800 = vmatprep.subr.mxu0 0.0
      %801 = vmatpush1.msra.mxu0 0.0
      %802 = vmatprep.subr.mxu0 0.0
      %803 = vmatpush1.msra.mxu0 0.0
      %804 = vmatprep.subr.mxu0 0.0
      %805 = vmatpush1.msra.mxu0 0.0
      %806 = vmatprep.subr.mxu0 0.0
      %807 = vmatpush1.msra.mxu0 0.0
      %808 = vmatprep.subr.mxu0 0.0
      %809 = vmatpush1.msra.mxu0 0.0
      %810 = vmatprep.mubr.f32.mxu0 0.0
      %811 = vmatmul.mubr.f32.gmra.mrb[0].mxu0 %v723
      %v812 = vpop.f32.mrb[0].mxu0
      %v813 = vadd.f32 0.0, %v812
      %v814 = vpop.f32.mrb[0].mxu0
      %815 = vmatprep.mubr.f32.mxu0 0.0
      %816 = vmatmul.mubr.f32.gmra.mrb[0].mxu0 %v726
      %v817 = vpop.f32.mrb[0].mxu0
      %v818 = vadd.f32 0.0, %v817
      %v819 = vpop.f32.mrb[0].mxu0
      %820 = vmatprep.mubr.f32.mxu0 0.0
      %821 = vmatmul.mubr.f32.gmra.mrb[0].mxu0 %v729
      %v822 = vpop.f32.mrb[0].mxu0
      %v823 = vadd.f32 0.0, %v822
      %v824 = vpop.f32.mrb[0].mxu0
      %825 = vmatprep.mubr.f32.mxu0 0.0
      %826 = vmatmul.mubr.f32.gmra.mrb[0].mxu0 %v732
      %v827 = vpop.f32.mrb[0].mxu0
      %v828 = vadd.f32 0.0, %v827
      %v829 = vpop.f32.mrb[0].mxu0
      %830 = vmatprep.mubr.f32.mxu0 0.0
      %831 = vmatmul.mubr.f32.gmra.mrb[0].mxu0 %v735
      %v832 = vpop.f32.mrb[0].mxu0
      %v833 = vadd.f32 0.0, %v832
      %v834 = vpop.f32.mrb[0].mxu0
      %835 = vmatprep.mubr.f32.mxu0 0.0
      %836 = vmatmul.mubr.f32.gmra.mrb[0].mxu0 %v738
      %v837 = vpop.f32.mrb[0].mxu0
      %v838 = vadd.f32 0.0, %v837
      %v839 = vpop.f32.mrb[0].mxu0
      %840 = vmatprep.mubr.f32.mxu0 0.0
      %841 = vmatmul.mubr.f32.gmra.mrb[0].mxu0 %v741
      %v842 = vpop.f32.mrb[0].mxu0
      %v843 = vadd.f32 0.0, %v842
      %v844 = vpop.f32.mrb[0].mxu0
      %845 = vmatprep.mubr.f32.mxu0 0.0
      %846 = vmatmul.mubr.f32.gmra.mrb[0].mxu0 %v744
      %v847 = vpop.f32.mrb[0].mxu0
      %v848 = vadd.f32 0.0, %v847
      %v849 = vpop.f32.mrb[0].mxu0
      %850 = vdwg.mxu0
      %v851 = vadd.f32 %v708, %v813
      %v852 = vadd.f32 %v709, %v818
      %v853 = vadd.f32 %v710, %v823
      %v854 = vadd.f32 %v711, %v828
      %v855 = vadd.f32 %v712, %v833
      %v856 = vadd.f32 %v713, %v838
      %v857 = vadd.f32 %v714, %v843
      %v858 = vadd.f32 %v715, %v848
      %859 = vst.msk [vmem:[#allocation3] sm:$0xff] %vm358, %v851
      %860 = vst.msk [vmem:[#allocation3 + $0x8] sm:$0xff] %vm358, %v852
      %861 = vst.msk [vmem:[#allocation3 + $0x10] sm:$0xff] %vm358, %v853
      %862 = vst.msk [vmem:[#allocation3 + $0x18] sm:$0xff] %vm358, %v854
      %863 = vst.msk [vmem:[#allocation3 + $0x20] sm:$0xff] %vm358, %v855
      %864 = vst.msk [vmem:[#allocation3 + $0x28] sm:$0xff] %vm358, %v856
      %865 = vst.msk [vmem:[#allocation3 + $0x30] sm:$0xff] %vm358, %v857
      %866 = vst.msk [vmem:[#allocation3 + $0x38] sm:$0xff] %vm358, %v858
      %v867 = vld [vmem:[%s314] sm:$0xff]
      %v868 = vld [vmem:[%s314 + $0x10] sm:$0xff]
      %v869 = vld [vmem:[%s314 + $0x20] sm:$0xff]
      %v870 = vld [vmem:[%s314 + $0x30] sm:$0xff]
      %v871 = vld [vmem:[%s314 + $0x40] sm:$0xff]
      %v872 = vld [vmem:[%s314 + $0x50] sm:$0xff]
      %v873 = vld [vmem:[%s314 + $0x60] sm:$0xff]
      %v874 = vld [vmem:[%s314 + $0x70] sm:$0xff]
      %v875 = vld [vmem:[#allocation3] sm:$0xff]
      %v876 = vld [vmem:[#allocation3 + $0x8] sm:$0xff]
      %v877 = vld [vmem:[#allocation3 + $0x10] sm:$0xff]
      %v878 = vld [vmem:[#allocation3 + $0x18] sm:$0xff]
      %v879 = vld [vmem:[#allocation3 + $0x20] sm:$0xff]
      %v880 = vld [vmem:[#allocation3 + $0x28] sm:$0xff]
      %v881 = vld [vmem:[#allocation3 + $0x30] sm:$0xff]
      %v882 = vld [vmem:[#allocation3 + $0x38] sm:$0xff]
      %s883 = scalar_lea.vmem %s3, 120
      %v884 = vld [vmem:[%s883] sm:$0xff]
      %v885 = vld [vmem:[%s883 + $0x8] sm:$0xff]
      %v886 = vld [vmem:[%s883 + $0x10] sm:$0xff]
      %v887 = vld [vmem:[%s883 + $0x18] sm:$0xff]
      %v888 = vld [vmem:[%s883 + $0x20] sm:$0xff]
      %v890 = vsel %vm225, %v867, 0
      %v893 = vsel %vm225, %v868, 0
      %v896 = vsel %vm225, %v869, 0
      %v899 = vsel %vm225, %v870, 0
      %v902 = vsel %vm225, %v871, 0
      %v905 = vsel %vm225, %v872, 0
      %v908 = vsel %vm225, %v873, 0
      %v911 = vsel %vm225, %v874, 0
      %913 = vmatprep.subr.mxu0 0.0
      %914 = vmatpush1.msra.mxu0 %v884
      %915 = vmatprep.subr.mxu0 0.0
      %916 = vmatpush1.msra.mxu0 %v885
      %917 = vmatprep.subr.mxu0 0.0
      %918 = vmatpush1.msra.mxu0 %v886
      %919 = vmatprep.subr.mxu0 0.0
      %920 = vmatpush1.msra.mxu0 %v887
      %921 = vmatprep.subr.mxu0 0.0
      %922 = vmatpush1.msra.mxu0 %v888
      %923 = vmatprep.subr.mxu0 0.0
      %924 = vmatpush1.msra.mxu0 0.0
      %925 = vmatprep.subr.mxu0 0.0
      %926 = vmatpush1.msra.mxu0 0.0
      %927 = vmatprep.subr.mxu0 0.0
      %928 = vmatpush1.msra.mxu0 0.0
      %929 = vmatprep.subr.mxu0 0.0
      %930 = vmatpush1.msra.mxu0 0.0
      %931 = vmatprep.subr.mxu0 0.0
      %932 = vmatpush1.msra.mxu0 0.0
      %933 = vmatprep.subr.mxu0 0.0
      %934 = vmatpush1.msra.mxu0 0.0
      %935 = vmatprep.subr.mxu0 0.0
      %936 = vmatpush1.msra.mxu0 0.0
      %937 = vmatprep.subr.mxu0 0.0
      %938 = vmatpush1.msra.mxu0 0.0
      %939 = vmatprep.subr.mxu0 0.0
      %940 = vmatpush1.msra.mxu0 0.0
      %941 = vmatprep.subr.mxu0 0.0
      %942 = vmatpush1.msra.mxu0 0.0
      %943 = vmatprep.subr.mxu0 0.0
      %944 = vmatpush1.msra.mxu0 0.0
      %945 = vmatprep.subr.mxu0 0.0
      %946 = vmatpush1.msra.mxu0 0.0
      %947 = vmatprep.subr.mxu0 0.0
      %948 = vmatpush1.msra.mxu0 0.0
      %949 = vmatprep.subr.mxu0 0.0
      %950 = vmatpush1.msra.mxu0 0.0
      %951 = vmatprep.subr.mxu0 0.0
      %952 = vmatpush1.msra.mxu0 0.0
      %953 = vmatprep.subr.mxu0 0.0
      %954 = vmatpush1.msra.mxu0 0.0
      %955 = vmatprep.subr.mxu0 0.0
      %956 = vmatpush1.msra.mxu0 0.0
      %957 = vmatprep.subr.mxu0 0.0
      %958 = vmatpush1.msra.mxu0 0.0
      %959 = vmatprep.subr.mxu0 0.0
      %960 = vmatpush1.msra.mxu0 0.0
      %961 = vmatprep.subr.mxu0 0.0
      %962 = vmatpush1.msra.mxu0 0.0
      %963 = vmatprep.subr.mxu0 0.0
      %964 = vmatpush1.msra.mxu0 0.0
      %965 = vmatprep.subr.mxu0 0.0
      %966 = vmatpush1.msra.mxu0 0.0
      %967 = vmatprep.subr.mxu0 0.0
      %968 = vmatpush1.msra.mxu0 0.0
      %969 = vmatprep.subr.mxu0 0.0
      %970 = vmatpush1.msra.mxu0 0.0
      %971 = vmatprep.subr.mxu0 0.0
      %972 = vmatpush1.msra.mxu0 0.0
      %973 = vmatprep.subr.mxu0 0.0
      %974 = vmatpush1.msra.mxu0 0.0
      %975 = vmatprep.subr.mxu0 0.0
      %976 = vmatpush1.msra.mxu0 0.0
      %977 = vmatprep.mubr.f32.mxu0 0.0
      %978 = vmatmul.mubr.f32.gmra.mrb[0].mxu0 %v890
      %v979 = vpop.f32.mrb[0].mxu0
      %v980 = vadd.f32 0.0, %v979
      %v981 = vpop.f32.mrb[0].mxu0
      %982 = vmatprep.mubr.f32.mxu0 0.0
      %983 = vmatmul.mubr.f32.gmra.mrb[0].mxu0 %v893
      %v984 = vpop.f32.mrb[0].mxu0
      %v985 = vadd.f32 0.0, %v984
      %v986 = vpop.f32.mrb[0].mxu0
      %987 = vmatprep.mubr.f32.mxu0 0.0
      %988 = vmatmul.mubr.f32.gmra.mrb[0].mxu0 %v896
      %v989 = vpop.f32.mrb[0].mxu0
      %v990 = vadd.f32 0.0, %v989
      %v991 = vpop.f32.mrb[0].mxu0
      %992 = vmatprep.mubr.f32.mxu0 0.0
      %993 = vmatmul.mubr.f32.gmra.mrb[0].mxu0 %v899
      %v994 = vpop.f32.mrb[0].mxu0
      %v995 = vadd.f32 0.0, %v994
      %v996 = vpop.f32.mrb[0].mxu0
      %997 = vmatprep.mubr.f32.mxu0 0.0
      %998 = vmatmul.mubr.f32.gmra.mrb[0].mxu0 %v902
      %v999 = vpop.f32.mrb[0].mxu0
      %v1000 = vadd.f32 0.0, %v999
      %v1001 = vpop.f32.mrb[0].mxu0
      %1002 = vmatprep.mubr.f32.mxu0 0.0
      %1003 = vmatmul.mubr.f32.gmra.mrb[0].mxu0 %v905
      %v1004 = vpop.f32.mrb[0].mxu0
      %v1005 = vadd.f32 0.0, %v1004
      %v1006 = vpop.f32.mrb[0].mxu0
      %1007 = vmatprep.mubr.f32.mxu0 0.0
      %1008 = vmatmul.mubr.f32.gmra.mrb[0].mxu0 %v908
      %v1009 = vpop.f32.mrb[0].mxu0
      %v1010 = vadd.f32 0.0, %v1009
      %v1011 = vpop.f32.mrb[0].mxu0
      %1012 = vmatprep.mubr.f32.mxu0 0.0
      %1013 = vmatmul.mubr.f32.gmra.mrb[0].mxu0 %v911
      %v1014 = vpop.f32.mrb[0].mxu0
      %v1015 = vadd.f32 0.0, %v1014
      %v1016 = vpop.f32.mrb[0].mxu0
      %1017 = vdwg.mxu0
      %v1018 = vadd.f32 %v875, %v980
      %v1019 = vadd.f32 %v876, %v985
      %v1020 = vadd.f32 %v877, %v990
      %v1021 = vadd.f32 %v878, %v995
      %v1022 = vadd.f32 %v879, %v1000
      %v1023 = vadd.f32 %v880, %v1005
      %v1024 = vadd.f32 %v881, %v1010
      %v1025 = vadd.f32 %v882, %v1015
      %1026 = vst.msk [vmem:[#allocation3] sm:$0xff] %vm358, %v1018
      %1027 = vst.msk [vmem:[#allocation3 + $0x8] sm:$0xff] %vm358, %v1019
      %1028 = vst.msk [vmem:[#allocation3 + $0x10] sm:$0xff] %vm358, %v1020
      %1029 = vst.msk [vmem:[#allocation3 + $0x18] sm:$0xff] %vm358, %v1021
      %1030 = vst.msk [vmem:[#allocation3 + $0x20] sm:$0xff] %vm358, %v1022
      %1031 = vst.msk [vmem:[#allocation3 + $0x28] sm:$0xff] %vm358, %v1023
      %1032 = vst.msk [vmem:[#allocation3 + $0x30] sm:$0xff] %vm358, %v1024
      %1033 = vst.msk [vmem:[#allocation3 + $0x38] sm:$0xff] %vm358, %v1025
      %v1034 = vld [vmem:[%s314 + $0x1] sm:$0xff]
      %v1035 = vld [vmem:[%s314 + $0x11] sm:$0xff]
      %v1036 = vld [vmem:[%s314 + $0x21] sm:$0xff]
      %v1037 = vld [vmem:[%s314 + $0x31] sm:$0xff]
      %v1038 = vld [vmem:[%s314 + $0x41] sm:$0xff]
      %v1039 = vld [vmem:[%s314 + $0x51] sm:$0xff]
      %v1040 = vld [vmem:[%s314 + $0x61] sm:$0xff]
      %v1041 = vld [vmem:[%s314 + $0x71] sm:$0xff]
      %v1042 = vld [vmem:[#allocation3] sm:$0xff]
      %v1043 = vld [vmem:[#allocation3 + $0x8] sm:$0xff]
      %v1044 = vld [vmem:[#allocation3 + $0x10] sm:$0xff]
      %v1045 = vld [vmem:[#allocation3 + $0x18] sm:$0xff]
      %v1046 = vld [vmem:[#allocation3 + $0x20] sm:$0xff]
      %v1047 = vld [vmem:[#allocation3 + $0x28] sm:$0xff]
      %v1048 = vld [vmem:[#allocation3 + $0x30] sm:$0xff]
      %v1049 = vld [vmem:[#allocation3 + $0x38] sm:$0xff]
      %s1050 = scalar_lea.vmem %s3, 160
      %v1051 = vld [vmem:[%s1050] sm:$0xff]
      %v1052 = vld [vmem:[%s1050 + $0x8] sm:$0xff]
      %v1053 = vld [vmem:[%s1050 + $0x10] sm:$0xff]
      %v1054 = vld [vmem:[%s1050 + $0x18] sm:$0xff]
      %v1055 = vld [vmem:[%s1050 + $0x20] sm:$0xff]
      %v1057 = vsel %vm225, %v1034, 0
      %v1060 = vsel %vm225, %v1035, 0
      %v1063 = vsel %vm225, %v1036, 0
      %v1066 = vsel %vm225, %v1037, 0
      %v1069 = vsel %vm225, %v1038, 0
      %v1072 = vsel %vm225, %v1039, 0
      %v1075 = vsel %vm225, %v1040, 0
      %v1078 = vsel %vm225, %v1041, 0
      %1080 = vmatprep.subr.mxu0 0.0
      %1081 = vmatpush1.msra.mxu0 %v1051
      %1082 = vmatprep.subr.mxu0 0.0
      %1083 = vmatpush1.msra.mxu0 %v1052
      %1084 = vmatprep.subr.mxu0 0.0
      %1085 = vmatpush1.msra.mxu0 %v1053
      %1086 = vmatprep.subr.mxu0 0.0
      %1087 = vmatpush1.msra.mxu0 %v1054
      %1088 = vmatprep.subr.mxu0 0.0
      %1089 = vmatpush1.msra.mxu0 %v1055
      %1090 = vmatprep.subr.mxu0 0.0
      %1091 = vmatpush1.msra.mxu0 0.0
      %1092 = vmatprep.subr.mxu0 0.0
      %1093 = vmatpush1.msra.mxu0 0.0
      %1094 = vmatprep.subr.mxu0 0.0
      %1095 = vmatpush1.msra.mxu0 0.0
      %1096 = vmatprep.subr.mxu0 0.0
      %1097 = vmatpush1.msra.mxu0 0.0
      %1098 = vmatprep.subr.mxu0 0.0
      %1099 = vmatpush1.msra.mxu0 0.0
      %1100 = vmatprep.subr.mxu0 0.0
      %1101 = vmatpush1.msra.mxu0 0.0
      %1102 = vmatprep.subr.mxu0 0.0
      %1103 = vmatpush1.msra.mxu0 0.0
      %1104 = vmatprep.subr.mxu0 0.0
      %1105 = vmatpush1.msra.mxu0 0.0
      %1106 = vmatprep.subr.mxu0 0.0
      %1107 = vmatpush1.msra.mxu0 0.0
      %1108 = vmatprep.subr.mxu0 0.0
      %1109 = vmatpush1.msra.mxu0 0.0
      %1110 = vmatprep.subr.mxu0 0.0
      %1111 = vmatpush1.msra.mxu0 0.0
      %1112 = vmatprep.subr.mxu0 0.0
      %1113 = vmatpush1.msra.mxu0 0.0
      %1114 = vmatprep.subr.mxu0 0.0
      %1115 = vmatpush1.msra.mxu0 0.0
      %1116 = vmatprep.subr.mxu0 0.0
      %1117 = vmatpush1.msra.mxu0 0.0
      %1118 = vmatprep.subr.mxu0 0.0
      %1119 = vmatpush1.msra.mxu0 0.0
      %1120 = vmatprep.subr.mxu0 0.0
      %1121 = vmatpush1.msra.mxu0 0.0
      %1122 = vmatprep.subr.mxu0 0.0
      %1123 = vmatpush1.msra.mxu0 0.0
      %1124 = vmatprep.subr.mxu0 0.0
      %1125 = vmatpush1.msra.mxu0 0.0
      %1126 = vmatprep.subr.mxu0 0.0
      %1127 = vmatpush1.msra.mxu0 0.0
      %1128 = vmatprep.subr.mxu0 0.0
      %1129 = vmatpush1.msra.mxu0 0.0
      %1130 = vmatprep.subr.mxu0 0.0
      %1131 = vmatpush1.msra.mxu0 0.0
      %1132 = vmatprep.subr.mxu0 0.0
      %1133 = vmatpush1.msra.mxu0 0.0
      %1134 = vmatprep.subr.mxu0 0.0
      %1135 = vmatpush1.msra.mxu0 0.0
      %1136 = vmatprep.subr.mxu0 0.0
      %1137 = vmatpush1.msra.mxu0 0.0
      %1138 = vmatprep.subr.mxu0 0.0
      %1139 = vmatpush1.msra.mxu0 0.0
      %1140 = vmatprep.subr.mxu0 0.0
      %1141 = vmatpush1.msra.mxu0 0.0
      %1142 = vmatprep.subr.mxu0 0.0
      %1143 = vmatpush1.msra.mxu0 0.0
      %1144 = vmatprep.mubr.f32.mxu0 0.0
      %1145 = vmatmul.mubr.f32.gmra.mrb[0].mxu0 %v1057
      %v1146 = vpop.f32.mrb[0].mxu0
      %v1147 = vadd.f32 0.0, %v1146
      %v1148 = vpop.f32.mrb[0].mxu0
      %1149 = vmatprep.mubr.f32.mxu0 0.0
      %1150 = vmatmul.mubr.f32.gmra.mrb[0].mxu0 %v1060
      %v1151 = vpop.f32.mrb[0].mxu0
      %v1152 = vadd.f32 0.0, %v1151
      %v1153 = vpop.f32.mrb[0].mxu0
      %1154 = vmatprep.mubr.f32.mxu0 0.0
      %1155 = vmatmul.mubr.f32.gmra.mrb[0].mxu0 %v1063
      %v1156 = vpop.f32.mrb[0].mxu0
      %v1157 = vadd.f32 0.0, %v1156
      %v1158 = vpop.f32.mrb[0].mxu0
      %1159 = vmatprep.mubr.f32.mxu0 0.0
      %1160 = vmatmul.mubr.f32.gmra.mrb[0].mxu0 %v1066
      %v1161 = vpop.f32.mrb[0].mxu0
      %v1162 = vadd.f32 0.0, %v1161
      %v1163 = vpop.f32.mrb[0].mxu0
      %1164 = vmatprep.mubr.f32.mxu0 0.0
      %1165 = vmatmul.mubr.f32.gmra.mrb[0].mxu0 %v1069
      %v1166 = vpop.f32.mrb[0].mxu0
      %v1167 = vadd.f32 0.0, %v1166
      %v1168 = vpop.f32.mrb[0].mxu0
      %1169 = vmatprep.mubr.f32.mxu0 0.0
      %1170 = vmatmul.mubr.f32.gmra.mrb[0].mxu0 %v1072
      %v1171 = vpop.f32.mrb[0].mxu0
      %v1172 = vadd.f32 0.0, %v1171
      %v1173 = vpop.f32.mrb[0].mxu0
      %1174 = vmatprep.mubr.f32.mxu0 0.0
      %1175 = vmatmul.mubr.f32.gmra.mrb[0].mxu0 %v1075
      %v1176 = vpop.f32.mrb[0].mxu0
      %v1177 = vadd.f32 0.0, %v1176
      %v1178 = vpop.f32.mrb[0].mxu0
      %1179 = vmatprep.mubr.f32.mxu0 0.0
      %1180 = vmatmul.mubr.f32.gmra.mrb[0].mxu0 %v1078
      %v1181 = vpop.f32.mrb[0].mxu0
      %v1182 = vadd.f32 0.0, %v1181
      %v1183 = vpop.f32.mrb[0].mxu0
      %1184 = vdwg.mxu0
      %v1185 = vadd.f32 %v1042, %v1147
      %v1186 = vadd.f32 %v1043, %v1152
      %v1187 = vadd.f32 %v1044, %v1157
      %v1188 = vadd.f32 %v1045, %v1162
      %v1189 = vadd.f32 %v1046, %v1167
      %v1190 = vadd.f32 %v1047, %v1172
      %v1191 = vadd.f32 %v1048, %v1177
      %v1192 = vadd.f32 %v1049, %v1182
      %1193 = vst.msk [vmem:[#allocation3] sm:$0xff] %vm358, %v1185
      %1194 = vst.msk [vmem:[#allocation3 + $0x8] sm:$0xff] %vm358, %v1186
      %1195 = vst.msk [vmem:[#allocation3 + $0x10] sm:$0xff] %vm358, %v1187
      %1196 = vst.msk [vmem:[#allocation3 + $0x18] sm:$0xff] %vm358, %v1188
      %1197 = vst.msk [vmem:[#allocation3 + $0x20] sm:$0xff] %vm358, %v1189
      %1198 = vst.msk [vmem:[#allocation3 + $0x28] sm:$0xff] %vm358, %v1190
      %1199 = vst.msk [vmem:[#allocation3 + $0x30] sm:$0xff] %vm358, %v1191
      %1200 = vst.msk [vmem:[#allocation3 + $0x38] sm:$0xff] %vm358, %v1192
      %v1201 = vld [vmem:[%s314 + $0x2] sm:$0xff]
      %v1202 = vld [vmem:[%s314 + $0x12] sm:$0xff]
      %v1203 = vld [vmem:[%s314 + $0x22] sm:$0xff]
      %v1204 = vld [vmem:[%s314 + $0x32] sm:$0xff]
      %v1205 = vld [vmem:[%s314 + $0x42] sm:$0xff]
      %v1206 = vld [vmem:[%s314 + $0x52] sm:$0xff]
      %v1207 = vld [vmem:[%s314 + $0x62] sm:$0xff]
      %v1208 = vld [vmem:[%s314 + $0x72] sm:$0xff]
      %v1209 = vld [vmem:[#allocation3] sm:$0xff]
      %v1210 = vld [vmem:[#allocation3 + $0x8] sm:$0xff]
      %v1211 = vld [vmem:[#allocation3 + $0x10] sm:$0xff]
      %v1212 = vld [vmem:[#allocation3 + $0x18] sm:$0xff]
      %v1213 = vld [vmem:[#allocation3 + $0x20] sm:$0xff]
      %v1214 = vld [vmem:[#allocation3 + $0x28] sm:$0xff]
      %v1215 = vld [vmem:[#allocation3 + $0x30] sm:$0xff]
      %v1216 = vld [vmem:[#allocation3 + $0x38] sm:$0xff]
      %s1217 = scalar_lea.vmem %s3, 200
      %v1218 = vld [vmem:[%s1217] sm:$0xff]
      %v1219 = vld [vmem:[%s1217 + $0x8] sm:$0xff]
      %v1220 = vld [vmem:[%s1217 + $0x10] sm:$0xff]
      %v1221 = vld [vmem:[%s1217 + $0x18] sm:$0xff]
      %v1222 = vld [vmem:[%s1217 + $0x20] sm:$0xff]
      %v1224 = vsel %vm225, %v1201, 0
      %v1227 = vsel %vm225, %v1202, 0
      %v1230 = vsel %vm225, %v1203, 0
      %v1233 = vsel %vm225, %v1204, 0
      %v1236 = vsel %vm225, %v1205, 0
      %v1239 = vsel %vm225, %v1206, 0
      %v1242 = vsel %vm225, %v1207, 0
      %v1245 = vsel %vm225, %v1208, 0
      %1247 = vmatprep.subr.mxu0 0.0
      %1248 = vmatpush1.msra.mxu0 %v1218
      %1249 = vmatprep.subr.mxu0 0.0
      %1250 = vmatpush1.msra.mxu0 %v1219
      %1251 = vmatprep.subr.mxu0 0.0
      %1252 = vmatpush1.msra.mxu0 %v1220
      %1253 = vmatprep.subr.mxu0 0.0
      %1254 = vmatpush1.msra.mxu0 %v1221
      %1255 = vmatprep.subr.mxu0 0.0
      %1256 = vmatpush1.msra.mxu0 %v1222
      %1257 = vmatprep.subr.mxu0 0.0
      %1258 = vmatpush1.msra.mxu0 0.0
      %1259 = vmatprep.subr.mxu0 0.0
      %1260 = vmatpush1.msra.mxu0 0.0
      %1261 = vmatprep.subr.mxu0 0.0
      %1262 = vmatpush1.msra.mxu0 0.0
      %1263 = vmatprep.subr.mxu0 0.0
      %1264 = vmatpush1.msra.mxu0 0.0
      %1265 = vmatprep.subr.mxu0 0.0
      %1266 = vmatpush1.msra.mxu0 0.0
      %1267 = vmatprep.subr.mxu0 0.0
      %1268 = vmatpush1.msra.mxu0 0.0
      %1269 = vmatprep.subr.mxu0 0.0
      %1270 = vmatpush1.msra.mxu0 0.0
      %1271 = vmatprep.subr.mxu0 0.0
      %1272 = vmatpush1.msra.mxu0 0.0
      %1273 = vmatprep.subr.mxu0 0.0
      %1274 = vmatpush1.msra.mxu0 0.0
      %1275 = vmatprep.subr.mxu0 0.0
      %1276 = vmatpush1.msra.mxu0 0.0
      %1277 = vmatprep.subr.mxu0 0.0
      %1278 = vmatpush1.msra.mxu0 0.0
      %1279 = vmatprep.subr.mxu0 0.0
      %1280 = vmatpush1.msra.mxu0 0.0
      %1281 = vmatprep.subr.mxu0 0.0
      %1282 = vmatpush1.msra.mxu0 0.0
      %1283 = vmatprep.subr.mxu0 0.0
      %1284 = vmatpush1.msra.mxu0 0.0
      %1285 = vmatprep.subr.mxu0 0.0
      %1286 = vmatpush1.msra.mxu0 0.0
      %1287 = vmatprep.subr.mxu0 0.0
      %1288 = vmatpush1.msra.mxu0 0.0
      %1289 = vmatprep.subr.mxu0 0.0
      %1290 = vmatpush1.msra.mxu0 0.0
      %1291 = vmatprep.subr.mxu0 0.0
      %1292 = vmatpush1.msra.mxu0 0.0
      %1293 = vmatprep.subr.mxu0 0.0
      %1294 = vmatpush1.msra.mxu0 0.0
      %1295 = vmatprep.subr.mxu0 0.0
      %1296 = vmatpush1.msra.mxu0 0.0
      %1297 = vmatprep.subr.mxu0 0.0
      %1298 = vmatpush1.msra.mxu0 0.0
      %1299 = vmatprep.subr.mxu0 0.0
      %1300 = vmatpush1.msra.mxu0 0.0
      %1301 = vmatprep.subr.mxu0 0.0
      %1302 = vmatpush1.msra.mxu0 0.0
      %1303 = vmatprep.subr.mxu0 0.0
      %1304 = vmatpush1.msra.mxu0 0.0
      %1305 = vmatprep.subr.mxu0 0.0
      %1306 = vmatpush1.msra.mxu0 0.0
      %1307 = vmatprep.subr.mxu0 0.0
      %1308 = vmatpush1.msra.mxu0 0.0
      %1309 = vmatprep.subr.mxu0 0.0
      %1310 = vmatpush1.msra.mxu0 0.0
      %1311 = vmatprep.mubr.f32.mxu0 0.0
      %1312 = vmatmul.mubr.f32.gmra.mrb[0].mxu0 %v1224
      %v1313 = vpop.f32.mrb[0].mxu0
      %v1314 = vadd.f32 0.0, %v1313
      %v1315 = vpop.f32.mrb[0].mxu0
      %1316 = vmatprep.mubr.f32.mxu0 0.0
      %1317 = vmatmul.mubr.f32.gmra.mrb[0].mxu0 %v1227
      %v1318 = vpop.f32.mrb[0].mxu0
      %v1319 = vadd.f32 0.0, %v1318
      %v1320 = vpop.f32.mrb[0].mxu0
      %1321 = vmatprep.mubr.f32.mxu0 0.0
      %1322 = vmatmul.mubr.f32.gmra.mrb[0].mxu0 %v1230
      %v1323 = vpop.f32.mrb[0].mxu0
      %v1324 = vadd.f32 0.0, %v1323
      %v1325 = vpop.f32.mrb[0].mxu0
      %1326 = vmatprep.mubr.f32.mxu0 0.0
      %1327 = vmatmul.mubr.f32.gmra.mrb[0].mxu0 %v1233
      %v1328 = vpop.f32.mrb[0].mxu0
      %v1329 = vadd.f32 0.0, %v1328
      %v1330 = vpop.f32.mrb[0].mxu0
      %1331 = vmatprep.mubr.f32.mxu0 0.0
      %1332 = vmatmul.mubr.f32.gmra.mrb[0].mxu0 %v1236
      %v1333 = vpop.f32.mrb[0].mxu0
      %v1334 = vadd.f32 0.0, %v1333
      %v1335 = vpop.f32.mrb[0].mxu0
      %1336 = vmatprep.mubr.f32.mxu0 0.0
      %1337 = vmatmul.mubr.f32.gmra.mrb[0].mxu0 %v1239
      %v1338 = vpop.f32.mrb[0].mxu0
      %v1339 = vadd.f32 0.0, %v1338
      %v1340 = vpop.f32.mrb[0].mxu0
      %1341 = vmatprep.mubr.f32.mxu0 0.0
      %1342 = vmatmul.mubr.f32.gmra.mrb[0].mxu0 %v1242
      %v1343 = vpop.f32.mrb[0].mxu0
      %v1344 = vadd.f32 0.0, %v1343
      %v1345 = vpop.f32.mrb[0].mxu0
      %1346 = vmatprep.mubr.f32.mxu0 0.0
      %1347 = vmatmul.mubr.f32.gmra.mrb[0].mxu0 %v1245
      %v1348 = vpop.f32.mrb[0].mxu0
      %v1349 = vadd.f32 0.0, %v1348
      %v1350 = vpop.f32.mrb[0].mxu0
      %1351 = vdwg.mxu0
      %v1352 = vadd.f32 %v1209, %v1314
      %v1353 = vadd.f32 %v1210, %v1319
      %v1354 = vadd.f32 %v1211, %v1324
      %v1355 = vadd.f32 %v1212, %v1329
      %v1356 = vadd.f32 %v1213, %v1334
      %v1357 = vadd.f32 %v1214, %v1339
      %v1358 = vadd.f32 %v1215, %v1344
      %v1359 = vadd.f32 %v1216, %v1349
      %1360 = vst.msk [vmem:[#allocation3] sm:$0xff] %vm358, %v1352
      %1361 = vst.msk [vmem:[#allocation3 + $0x8] sm:$0xff] %vm358, %v1353
      %1362 = vst.msk [vmem:[#allocation3 + $0x10] sm:$0xff] %vm358, %v1354
      %1363 = vst.msk [vmem:[#allocation3 + $0x18] sm:$0xff] %vm358, %v1355
      %1364 = vst.msk [vmem:[#allocation3 + $0x20] sm:$0xff] %vm358, %v1356
      %1365 = vst.msk [vmem:[#allocation3 + $0x28] sm:$0xff] %vm358, %v1357
      %1366 = vst.msk [vmem:[#allocation3 + $0x30] sm:$0xff] %vm358, %v1358
      %1367 = vst.msk [vmem:[#allocation3 + $0x38] sm:$0xff] %vm358, %v1359
      %s1368 = scalar_lea.vmem [#allocation2], 32
      %v1369 = vld [vmem:[%s1368] sm:$0xff]
      %v1370 = vld [vmem:[%s1368 + $0x10] sm:$0xff]
      %v1371 = vld [vmem:[%s1368 + $0x20] sm:$0xff]
      %v1372 = vld [vmem:[%s1368 + $0x30] sm:$0xff]
      %v1373 = vld [vmem:[%s1368 + $0x40] sm:$0xff]
      %v1374 = vld [vmem:[%s1368 + $0x50] sm:$0xff]
      %v1375 = vld [vmem:[%s1368 + $0x60] sm:$0xff]
      %v1376 = vld [vmem:[%s1368 + $0x70] sm:$0xff]
      %v1377 = vld [vmem:[#allocation3] sm:$0xff]
      %v1378 = vld [vmem:[#allocation3 + $0x8] sm:$0xff]
      %v1379 = vld [vmem:[#allocation3 + $0x10] sm:$0xff]
      %v1380 = vld [vmem:[#allocation3 + $0x18] sm:$0xff]
      %v1381 = vld [vmem:[#allocation3 + $0x20] sm:$0xff]
      %v1382 = vld [vmem:[#allocation3 + $0x28] sm:$0xff]
      %v1383 = vld [vmem:[#allocation3 + $0x30] sm:$0xff]
      %v1384 = vld [vmem:[#allocation3 + $0x38] sm:$0xff]
      %s1385 = scalar_lea.vmem %s3, 240
      %v1386 = vld [vmem:[%s1385] sm:$0xff]
      %v1387 = vld [vmem:[%s1385 + $0x8] sm:$0xff]
      %v1388 = vld [vmem:[%s1385 + $0x10] sm:$0xff]
      %v1389 = vld [vmem:[%s1385 + $0x18] sm:$0xff]
      %v1390 = vld [vmem:[%s1385 + $0x20] sm:$0xff]
      %v1392 = vsel %vm225, %v1369, 0
      %v1395 = vsel %vm225, %v1370, 0
      %v1398 = vsel %vm225, %v1371, 0
      %v1401 = vsel %vm225, %v1372, 0
      %v1404 = vsel %vm225, %v1373, 0
      %v1407 = vsel %vm225, %v1374, 0
      %v1410 = vsel %vm225, %v1375, 0
      %v1413 = vsel %vm225, %v1376, 0
      %1415 = vmatprep.subr.mxu0 0.0
      %1416 = vmatpush1.msra.mxu0 %v1386
      %1417 = vmatprep.subr.mxu0 0.0
      %1418 = vmatpush1.msra.mxu0 %v1387
      %1419 = vmatprep.subr.mxu0 0.0
      %1420 = vmatpush1.msra.mxu0 %v1388
      %1421 = vmatprep.subr.mxu0 0.0
      %1422 = vmatpush1.msra.mxu0 %v1389
      %1423 = vmatprep.subr.mxu0 0.0
      %1424 = vmatpush1.msra.mxu0 %v1390
      %1425 = vmatprep.subr.mxu0 0.0
      %1426 = vmatpush1.msra.mxu0 0.0
      %1427 = vmatprep.subr.mxu0 0.0
      %1428 = vmatpush1.msra.mxu0 0.0
      %1429 = vmatprep.subr.mxu0 0.0
      %1430 = vmatpush1.msra.mxu0 0.0
      %1431 = vmatprep.subr.mxu0 0.0
      %1432 = vmatpush1.msra.mxu0 0.0
      %1433 = vmatprep.subr.mxu0 0.0
      %1434 = vmatpush1.msra.mxu0 0.0
      %1435 = vmatprep.subr.mxu0 0.0
      %1436 = vmatpush1.msra.mxu0 0.0
      %1437 = vmatprep.subr.mxu0 0.0
      %1438 = vmatpush1.msra.mxu0 0.0
      %1439 = vmatprep.subr.mxu0 0.0
      %1440 = vmatpush1.msra.mxu0 0.0
      %1441 = vmatprep.subr.mxu0 0.0
      %1442 = vmatpush1.msra.mxu0 0.0
      %1443 = vmatprep.subr.mxu0 0.0
      %1444 = vmatpush1.msra.mxu0 0.0
      %1445 = vmatprep.subr.mxu0 0.0
      %1446 = vmatpush1.msra.mxu0 0.0
      %1447 = vmatprep.subr.mxu0 0.0
      %1448 = vmatpush1.msra.mxu0 0.0
      %1449 = vmatprep.subr.mxu0 0.0
      %1450 = vmatpush1.msra.mxu0 0.0
      %1451 = vmatprep.subr.mxu0 0.0
      %1452 = vmatpush1.msra.mxu0 0.0
      %1453 = vmatprep.subr.mxu0 0.0
      %1454 = vmatpush1.msra.mxu0 0.0
      %1455 = vmatprep.subr.mxu0 0.0
      %1456 = vmatpush1.msra.mxu0 0.0
      %1457 = vmatprep.subr.mxu0 0.0
      %1458 = vmatpush1.msra.mxu0 0.0
      %1459 = vmatprep.subr.mxu0 0.0
      %1460 = vmatpush1.msra.mxu0 0.0
      %1461 = vmatprep.subr.mxu0 0.0
      %1462 = vmatpush1.msra.mxu0 0.0
      %1463 = vmatprep.subr.mxu0 0.0
      %1464 = vmatpush1.msra.mxu0 0.0
      %1465 = vmatprep.subr.mxu0 0.0
      %1466 = vmatpush1.msra.mxu0 0.0
      %1467 = vmatprep.subr.mxu0 0.0
      %1468 = vmatpush1.msra.mxu0 0.0
      %1469 = vmatprep.subr.mxu0 0.0
      %1470 = vmatpush1.msra.mxu0 0.0
      %1471 = vmatprep.subr.mxu0 0.0
      %1472 = vmatpush1.msra.mxu0 0.0
      %1473 = vmatprep.subr.mxu0 0.0
      %1474 = vmatpush1.msra.mxu0 0.0
      %1475 = vmatprep.subr.mxu0 0.0
      %1476 = vmatpush1.msra.mxu0 0.0
      %1477 = vmatprep.subr.mxu0 0.0
      %1478 = vmatpush1.msra.mxu0 0.0
      %1479 = vmatprep.mubr.f32.mxu0 0.0
      %1480 = vmatmul.mubr.f32.gmra.mrb[0].mxu0 %v1392
      %v1481 = vpop.f32.mrb[0].mxu0
      %v1482 = vadd.f32 0.0, %v1481
      %v1483 = vpop.f32.mrb[0].mxu0
      %1484 = vmatprep.mubr.f32.mxu0 0.0
      %1485 = vmatmul.mubr.f32.gmra.mrb[0].mxu0 %v1395
      %v1486 = vpop.f32.mrb[0].mxu0
      %v1487 = vadd.f32 0.0, %v1486
      %v1488 = vpop.f32.mrb[0].mxu0
      %1489 = vmatprep.mubr.f32.mxu0 0.0
      %1490 = vmatmul.mubr.f32.gmra.mrb[0].mxu0 %v1398
      %v1491 = vpop.f32.mrb[0].mxu0
      %v1492 = vadd.f32 0.0, %v1491
      %v1493 = vpop.f32.mrb[0].mxu0
      %1494 = vmatprep.mubr.f32.mxu0 0.0
      %1495 = vmatmul.mubr.f32.gmra.mrb[0].mxu0 %v1401
      %v1496 = vpop.f32.mrb[0].mxu0
      %v1497 = vadd.f32 0.0, %v1496
      %v1498 = vpop.f32.mrb[0].mxu0
      %1499 = vmatprep.mubr.f32.mxu0 0.0
      %1500 = vmatmul.mubr.f32.gmra.mrb[0].mxu0 %v1404
      %v1501 = vpop.f32.mrb[0].mxu0
      %v1502 = vadd.f32 0.0, %v1501
      %v1503 = vpop.f32.mrb[0].mxu0
      %1504 = vmatprep.mubr.f32.mxu0 0.0
      %1505 = vmatmul.mubr.f32.gmra.mrb[0].mxu0 %v1407
      %v1506 = vpop.f32.mrb[0].mxu0
      %v1507 = vadd.f32 0.0, %v1506
      %v1508 = vpop.f32.mrb[0].mxu0
      %1509 = vmatprep.mubr.f32.mxu0 0.0
      %1510 = vmatmul.mubr.f32.gmra.mrb[0].mxu0 %v1410
      %v1511 = vpop.f32.mrb[0].mxu0
      %v1512 = vadd.f32 0.0, %v1511
      %v1513 = vpop.f32.mrb[0].mxu0
      %1514 = vmatprep.mubr.f32.mxu0 0.0
      %1515 = vmatmul.mubr.f32.gmra.mrb[0].mxu0 %v1413
      %v1516 = vpop.f32.mrb[0].mxu0
      %v1517 = vadd.f32 0.0, %v1516
      %v1518 = vpop.f32.mrb[0].mxu0
      %1519 = vdwg.mxu0
      %v1520 = vadd.f32 %v1377, %v1482
      %v1521 = vadd.f32 %v1378, %v1487
      %v1522 = vadd.f32 %v1379, %v1492
      %v1523 = vadd.f32 %v1380, %v1497
      %v1524 = vadd.f32 %v1381, %v1502
      %v1525 = vadd.f32 %v1382, %v1507
      %v1526 = vadd.f32 %v1383, %v1512
      %v1527 = vadd.f32 %v1384, %v1517
      %1528 = vst.msk [vmem:[#allocation3] sm:$0xff] %vm358, %v1520
      %1529 = vst.msk [vmem:[#allocation3 + $0x8] sm:$0xff] %vm358, %v1521
      %1530 = vst.msk [vmem:[#allocation3 + $0x10] sm:$0xff] %vm358, %v1522
      %1531 = vst.msk [vmem:[#allocation3 + $0x18] sm:$0xff] %vm358, %v1523
      %1532 = vst.msk [vmem:[#allocation3 + $0x20] sm:$0xff] %vm358, %v1524
      %1533 = vst.msk [vmem:[#allocation3 + $0x28] sm:$0xff] %vm358, %v1525
      %1534 = vst.msk [vmem:[#allocation3 + $0x30] sm:$0xff] %vm358, %v1526
      %1535 = vst.msk [vmem:[#allocation3 + $0x38] sm:$0xff] %vm358, %v1527
      %v1536 = vld [vmem:[%s1368 + $0x1] sm:$0xff]
      %v1537 = vld [vmem:[%s1368 + $0x11] sm:$0xff]
      %v1538 = vld [vmem:[%s1368 + $0x21] sm:$0xff]
      %v1539 = vld [vmem:[%s1368 + $0x31] sm:$0xff]
      %v1540 = vld [vmem:[%s1368 + $0x41] sm:$0xff]
      %v1541 = vld [vmem:[%s1368 + $0x51] sm:$0xff]
      %v1542 = vld [vmem:[%s1368 + $0x61] sm:$0xff]
      %v1543 = vld [vmem:[%s1368 + $0x71] sm:$0xff]
      %v1544 = vld [vmem:[#allocation3] sm:$0xff]
      %v1545 = vld [vmem:[#allocation3 + $0x8] sm:$0xff]
      %v1546 = vld [vmem:[#allocation3 + $0x10] sm:$0xff]
      %v1547 = vld [vmem:[#allocation3 + $0x18] sm:$0xff]
      %v1548 = vld [vmem:[#allocation3 + $0x20] sm:$0xff]
      %v1549 = vld [vmem:[#allocation3 + $0x28] sm:$0xff]
      %v1550 = vld [vmem:[#allocation3 + $0x30] sm:$0xff]
      %v1551 = vld [vmem:[#allocation3 + $0x38] sm:$0xff]
      %s1552 = scalar_lea.vmem %s3, 280
      %v1553 = vld [vmem:[%s1552] sm:$0xff]
      %v1554 = vld [vmem:[%s1552 + $0x8] sm:$0xff]
      %v1555 = vld [vmem:[%s1552 + $0x10] sm:$0xff]
      %v1556 = vld [vmem:[%s1552 + $0x18] sm:$0xff]
      %v1557 = vld [vmem:[%s1552 + $0x20] sm:$0xff]
      %v1559 = vsel %vm225, %v1536, 0
      %v1562 = vsel %vm225, %v1537, 0
      %v1565 = vsel %vm225, %v1538, 0
      %v1568 = vsel %vm225, %v1539, 0
      %v1571 = vsel %vm225, %v1540, 0
      %v1574 = vsel %vm225, %v1541, 0
      %v1577 = vsel %vm225, %v1542, 0
      %v1580 = vsel %vm225, %v1543, 0
      %1582 = vmatprep.subr.mxu0 0.0
      %1583 = vmatpush1.msra.mxu0 %v1553
      %1584 = vmatprep.subr.mxu0 0.0
      %1585 = vmatpush1.msra.mxu0 %v1554
      %1586 = vmatprep.subr.mxu0 0.0
      %1587 = vmatpush1.msra.mxu0 %v1555
      %1588 = vmatprep.subr.mxu0 0.0
      %1589 = vmatpush1.msra.mxu0 %v1556
      %1590 = vmatprep.subr.mxu0 0.0
      %1591 = vmatpush1.msra.mxu0 %v1557
      %1592 = vmatprep.subr.mxu0 0.0
      %1593 = vmatpush1.msra.mxu0 0.0
      %1594 = vmatprep.subr.mxu0 0.0
      %1595 = vmatpush1.msra.mxu0 0.0
      %1596 = vmatprep.subr.mxu0 0.0
      %1597 = vmatpush1.msra.mxu0 0.0
      %1598 = vmatprep.subr.mxu0 0.0
      %1599 = vmatpush1.msra.mxu0 0.0
      %1600 = vmatprep.subr.mxu0 0.0
      %1601 = vmatpush1.msra.mxu0 0.0
      %1602 = vmatprep.subr.mxu0 0.0
      %1603 = vmatpush1.msra.mxu0 0.0
      %1604 = vmatprep.subr.mxu0 0.0
      %1605 = vmatpush1.msra.mxu0 0.0
      %1606 = vmatprep.subr.mxu0 0.0
      %1607 = vmatpush1.msra.mxu0 0.0
      %1608 = vmatprep.subr.mxu0 0.0
      %1609 = vmatpush1.msra.mxu0 0.0
      %1610 = vmatprep.subr.mxu0 0.0
      %1611 = vmatpush1.msra.mxu0 0.0
      %1612 = vmatprep.subr.mxu0 0.0
      %1613 = vmatpush1.msra.mxu0 0.0
      %1614 = vmatprep.subr.mxu0 0.0
      %1615 = vmatpush1.msra.mxu0 0.0
      %1616 = vmatprep.subr.mxu0 0.0
      %1617 = vmatpush1.msra.mxu0 0.0
      %1618 = vmatprep.subr.mxu0 0.0
      %1619 = vmatpush1.msra.mxu0 0.0
      %1620 = vmatprep.subr.mxu0 0.0
      %1621 = vmatpush1.msra.mxu0 0.0
      %1622 = vmatprep.subr.mxu0 0.0
      %1623 = vmatpush1.msra.mxu0 0.0
      %1624 = vmatprep.subr.mxu0 0.0
      %1625 = vmatpush1.msra.mxu0 0.0
      %1626 = vmatprep.subr.mxu0 0.0
      %1627 = vmatpush1.msra.mxu0 0.0
      %1628 = vmatprep.subr.mxu0 0.0
      %1629 = vmatpush1.msra.mxu0 0.0
      %1630 = vmatprep.subr.mxu0 0.0
      %1631 = vmatpush1.msra.mxu0 0.0
      %1632 = vmatprep.subr.mxu0 0.0
      %1633 = vmatpush1.msra.mxu0 0.0
      %1634 = vmatprep.subr.mxu0 0.0
      %1635 = vmatpush1.msra.mxu0 0.0
      %1636 = vmatprep.subr.mxu0 0.0
      %1637 = vmatpush1.msra.mxu0 0.0
      %1638 = vmatprep.subr.mxu0 0.0
      %1639 = vmatpush1.msra.mxu0 0.0
      %1640 = vmatprep.subr.mxu0 0.0
      %1641 = vmatpush1.msra.mxu0 0.0
      %1642 = vmatprep.subr.mxu0 0.0
      %1643 = vmatpush1.msra.mxu0 0.0
      %1644 = vmatprep.subr.mxu0 0.0
      %1645 = vmatpush1.msra.mxu0 0.0
      %1646 = vmatprep.mubr.f32.mxu0 0.0
      %1647 = vmatmul.mubr.f32.gmra.mrb[0].mxu0 %v1559
      %v1648 = vpop.f32.mrb[0].mxu0
      %v1649 = vadd.f32 0.0, %v1648
      %v1650 = vpop.f32.mrb[0].mxu0
      %1651 = vmatprep.mubr.f32.mxu0 0.0
      %1652 = vmatmul.mubr.f32.gmra.mrb[0].mxu0 %v1562
      %v1653 = vpop.f32.mrb[0].mxu0
      %v1654 = vadd.f32 0.0, %v1653
      %v1655 = vpop.f32.mrb[0].mxu0
      %1656 = vmatprep.mubr.f32.mxu0 0.0
      %1657 = vmatmul.mubr.f32.gmra.mrb[0].mxu0 %v1565
      %v1658 = vpop.f32.mrb[0].mxu0
      %v1659 = vadd.f32 0.0, %v1658
      %v1660 = vpop.f32.mrb[0].mxu0
      %1661 = vmatprep.mubr.f32.mxu0 0.0
      %1662 = vmatmul.mubr.f32.gmra.mrb[0].mxu0 %v1568
      %v1663 = vpop.f32.mrb[0].mxu0
      %v1664 = vadd.f32 0.0, %v1663
      %v1665 = vpop.f32.mrb[0].mxu0
      %1666 = vmatprep.mubr.f32.mxu0 0.0
      %1667 = vmatmul.mubr.f32.gmra.mrb[0].mxu0 %v1571
      %v1668 = vpop.f32.mrb[0].mxu0
      %v1669 = vadd.f32 0.0, %v1668
      %v1670 = vpop.f32.mrb[0].mxu0
      %1671 = vmatprep.mubr.f32.mxu0 0.0
      %1672 = vmatmul.mubr.f32.gmra.mrb[0].mxu0 %v1574
      %v1673 = vpop.f32.mrb[0].mxu0
      %v1674 = vadd.f32 0.0, %v1673
      %v1675 = vpop.f32.mrb[0].mxu0
      %1676 = vmatprep.mubr.f32.mxu0 0.0
      %1677 = vmatmul.mubr.f32.gmra.mrb[0].mxu0 %v1577
      %v1678 = vpop.f32.mrb[0].mxu0
      %v1679 = vadd.f32 0.0, %v1678
      %v1680 = vpop.f32.mrb[0].mxu0
      %1681 = vmatprep.mubr.f32.mxu0 0.0
      %1682 = vmatmul.mubr.f32.gmra.mrb[0].mxu0 %v1580
      %v1683 = vpop.f32.mrb[0].mxu0
      %v1684 = vadd.f32 0.0, %v1683
      %v1685 = vpop.f32.mrb[0].mxu0
      %1686 = vdwg.mxu0
      %v1687 = vadd.f32 %v1544, %v1649
      %v1688 = vadd.f32 %v1545, %v1654
      %v1689 = vadd.f32 %v1546, %v1659
      %v1690 = vadd.f32 %v1547, %v1664
      %v1691 = vadd.f32 %v1548, %v1669
      %v1692 = vadd.f32 %v1549, %v1674
      %v1693 = vadd.f32 %v1550, %v1679
      %v1694 = vadd.f32 %v1551, %v1684
      %1695 = vst.msk [vmem:[#allocation3] sm:$0xff] %vm358, %v1687
      %1696 = vst.msk [vmem:[#allocation3 + $0x8] sm:$0xff] %vm358, %v1688
      %1697 = vst.msk [vmem:[#allocation3 + $0x10] sm:$0xff] %vm358, %v1689
      %1698 = vst.msk [vmem:[#allocation3 + $0x18] sm:$0xff] %vm358, %v1690
      %1699 = vst.msk [vmem:[#allocation3 + $0x20] sm:$0xff] %vm358, %v1691
      %1700 = vst.msk [vmem:[#allocation3 + $0x28] sm:$0xff] %vm358, %v1692
      %1701 = vst.msk [vmem:[#allocation3 + $0x30] sm:$0xff] %vm358, %v1693
      %1702 = vst.msk [vmem:[#allocation3 + $0x38] sm:$0xff] %vm358, %v1694
      %v1703 = vld [vmem:[%s1368 + $0x2] sm:$0xff]
      %v1704 = vld [vmem:[%s1368 + $0x12] sm:$0xff]
      %v1705 = vld [vmem:[%s1368 + $0x22] sm:$0xff]
      %v1706 = vld [vmem:[%s1368 + $0x32] sm:$0xff]
      %v1707 = vld [vmem:[%s1368 + $0x42] sm:$0xff]
      %v1708 = vld [vmem:[%s1368 + $0x52] sm:$0xff]
      %v1709 = vld [vmem:[%s1368 + $0x62] sm:$0xff]
      %v1710 = vld [vmem:[%s1368 + $0x72] sm:$0xff]
      %v1711 = vld [vmem:[#allocation3] sm:$0xff]
      %v1712 = vld [vmem:[#allocation3 + $0x8] sm:$0xff]
      %v1713 = vld [vmem:[#allocation3 + $0x10] sm:$0xff]
      %v1714 = vld [vmem:[#allocation3 + $0x18] sm:$0xff]
      %v1715 = vld [vmem:[#allocation3 + $0x20] sm:$0xff]
      %v1716 = vld [vmem:[#allocation3 + $0x28] sm:$0xff]
      %v1717 = vld [vmem:[#allocation3 + $0x30] sm:$0xff]
      %v1718 = vld [vmem:[#allocation3 + $0x38] sm:$0xff]
      %s1719 = scalar_lea.vmem %s3, 320
      %v1720 = vld [vmem:[%s1719] sm:$0xff]
      %v1721 = vld [vmem:[%s1719 + $0x8] sm:$0xff]
      %v1722 = vld [vmem:[%s1719 + $0x10] sm:$0xff]
      %v1723 = vld [vmem:[%s1719 + $0x18] sm:$0xff]
      %v1724 = vld [vmem:[%s1719 + $0x20] sm:$0xff]
      %v1726 = vsel %vm225, %v1703, 0
      %v1729 = vsel %vm225, %v1704, 0
      %v1732 = vsel %vm225, %v1705, 0
      %v1735 = vsel %vm225, %v1706, 0
      %v1738 = vsel %vm225, %v1707, 0
      %v1741 = vsel %vm225, %v1708, 0
      %v1744 = vsel %vm225, %v1709, 0
      %v1747 = vsel %vm225, %v1710, 0
      %1749 = vmatprep.subr.mxu0 0.0
      %1750 = vmatpush1.msra.mxu0 %v1720
      %1751 = vmatprep.subr.mxu0 0.0
      %1752 = vmatpush1.msra.mxu0 %v1721
      %1753 = vmatprep.subr.mxu0 0.0
      %1754 = vmatpush1.msra.mxu0 %v1722
      %1755 = vmatprep.subr.mxu0 0.0
      %1756 = vmatpush1.msra.mxu0 %v1723
      %1757 = vmatprep.subr.mxu0 0.0
      %1758 = vmatpush1.msra.mxu0 %v1724
      %1759 = vmatprep.subr.mxu0 0.0
      %1760 = vmatpush1.msra.mxu0 0.0
      %1761 = vmatprep.subr.mxu0 0.0
      %1762 = vmatpush1.msra.mxu0 0.0
      %1763 = vmatprep.subr.mxu0 0.0
      %1764 = vmatpush1.msra.mxu0 0.0
      %1765 = vmatprep.subr.mxu0 0.0
      %1766 = vmatpush1.msra.mxu0 0.0
      %1767 = vmatprep.subr.mxu0 0.0
      %1768 = vmatpush1.msra.mxu0 0.0
      %1769 = vmatprep.subr.mxu0 0.0
      %1770 = vmatpush1.msra.mxu0 0.0
      %1771 = vmatprep.subr.mxu0 0.0
      %1772 = vmatpush1.msra.mxu0 0.0
      %1773 = vmatprep.subr.mxu0 0.0
      %1774 = vmatpush1.msra.mxu0 0.0
      %1775 = vmatprep.subr.mxu0 0.0
      %1776 = vmatpush1.msra.mxu0 0.0
      %1777 = vmatprep.subr.mxu0 0.0
      %1778 = vmatpush1.msra.mxu0 0.0
      %1779 = vmatprep.subr.mxu0 0.0
      %1780 = vmatpush1.msra.mxu0 0.0
      %1781 = vmatprep.subr.mxu0 0.0
      %1782 = vmatpush1.msra.mxu0 0.0
      %1783 = vmatprep.subr.mxu0 0.0
      %1784 = vmatpush1.msra.mxu0 0.0
      %1785 = vmatprep.subr.mxu0 0.0
      %1786 = vmatpush1.msra.mxu0 0.0
      %1787 = vmatprep.subr.mxu0 0.0
      %1788 = vmatpush1.msra.mxu0 0.0
      %1789 = vmatprep.subr.mxu0 0.0
      %1790 = vmatpush1.msra.mxu0 0.0
      %1791 = vmatprep.subr.mxu0 0.0
      %1792 = vmatpush1.msra.mxu0 0.0
      %1793 = vmatprep.subr.mxu0 0.0
      %1794 = vmatpush1.msra.mxu0 0.0
      %1795 = vmatprep.subr.mxu0 0.0
      %1796 = vmatpush1.msra.mxu0 0.0
      %1797 = vmatprep.subr.mxu0 0.0
      %1798 = vmatpush1.msra.mxu0 0.0
      %1799 = vmatprep.subr.mxu0 0.0
      %1800 = vmatpush1.msra.mxu0 0.0
      %1801 = vmatprep.subr.mxu0 0.0
      %1802 = vmatpush1.msra.mxu0 0.0
      %1803 = vmatprep.subr.mxu0 0.0
      %1804 = vmatpush1.msra.mxu0 0.0
      %1805 = vmatprep.subr.mxu0 0.0
      %1806 = vmatpush1.msra.mxu0 0.0
      %1807 = vmatprep.subr.mxu0 0.0
      %1808 = vmatpush1.msra.mxu0 0.0
      %1809 = vmatprep.subr.mxu0 0.0
      %1810 = vmatpush1.msra.mxu0 0.0
      %1811 = vmatprep.subr.mxu0 0.0
      %1812 = vmatpush1.msra.mxu0 0.0
      %1813 = vmatprep.mubr.f32.mxu0 0.0
      %1814 = vmatmul.mubr.f32.gmra.mrb[0].mxu0 %v1726
      %v1815 = vpop.f32.mrb[0].mxu0
      %v1816 = vadd.f32 0.0, %v1815
      %v1817 = vpop.f32.mrb[0].mxu0
      %1818 = vmatprep.mubr.f32.mxu0 0.0
      %1819 = vmatmul.mubr.f32.gmra.mrb[0].mxu0 %v1729
      %v1820 = vpop.f32.mrb[0].mxu0
      %v1821 = vadd.f32 0.0, %v1820
      %v1822 = vpop.f32.mrb[0].mxu0
      %1823 = vmatprep.mubr.f32.mxu0 0.0
      %1824 = vmatmul.mubr.f32.gmra.mrb[0].mxu0 %v1732
      %v1825 = vpop.f32.mrb[0].mxu0
      %v1826 = vadd.f32 0.0, %v1825
      %v1827 = vpop.f32.mrb[0].mxu0
      %1828 = vmatprep.mubr.f32.mxu0 0.0
      %1829 = vmatmul.mubr.f32.gmra.mrb[0].mxu0 %v1735
      %v1830 = vpop.f32.mrb[0].mxu0
      %v1831 = vadd.f32 0.0, %v1830
      %v1832 = vpop.f32.mrb[0].mxu0
      %1833 = vmatprep.mubr.f32.mxu0 0.0
      %1834 = vmatmul.mubr.f32.gmra.mrb[0].mxu0 %v1738
      %v1835 = vpop.f32.mrb[0].mxu0
      %v1836 = vadd.f32 0.0, %v1835
      %v1837 = vpop.f32.mrb[0].mxu0
      %1838 = vmatprep.mubr.f32.mxu0 0.0
      %1839 = vmatmul.mubr.f32.gmra.mrb[0].mxu0 %v1741
      %v1840 = vpop.f32.mrb[0].mxu0
      %v1841 = vadd.f32 0.0, %v1840
      %v1842 = vpop.f32.mrb[0].mxu0
      %1843 = vmatprep.mubr.f32.mxu0 0.0
      %1844 = vmatmul.mubr.f32.gmra.mrb[0].mxu0 %v1744
      %v1845 = vpop.f32.mrb[0].mxu0
      %v1846 = vadd.f32 0.0, %v1845
      %v1847 = vpop.f32.mrb[0].mxu0
      %1848 = vmatprep.mubr.f32.mxu0 0.0
      %1849 = vmatmul.mubr.f32.gmra.mrb[0].mxu0 %v1747
      %v1850 = vpop.f32.mrb[0].mxu0
      %v1851 = vadd.f32 0.0, %v1850
      %v1852 = vpop.f32.mrb[0].mxu0
      %1853 = vdwg.mxu0
      %v1854 = vadd.f32 %v1711, %v1816
      %v1855 = vadd.f32 %v1712, %v1821
      %v1856 = vadd.f32 %v1713, %v1826
      %v1857 = vadd.f32 %v1714, %v1831
      %v1858 = vadd.f32 %v1715, %v1836
      %v1859 = vadd.f32 %v1716, %v1841
      %v1860 = vadd.f32 %v1717, %v1846
      %v1861 = vadd.f32 %v1718, %v1851
      %1862 = vst.msk [vmem:[#allocation3] sm:$0xff] %vm358, %v1854
      %1863 = vst.msk [vmem:[#allocation3 + $0x8] sm:$0xff] %vm358, %v1855
      %1864 = vst.msk [vmem:[#allocation3 + $0x10] sm:$0xff] %vm358, %v1856
      %1865 = vst.msk [vmem:[#allocation3 + $0x18] sm:$0xff] %vm358, %v1857
      %1866 = vst.msk [vmem:[#allocation3 + $0x20] sm:$0xff] %vm358, %v1858
      %1867 = vst.msk [vmem:[#allocation3 + $0x28] sm:$0xff] %vm358, %v1859
      %1868 = vst.msk [vmem:[#allocation3 + $0x30] sm:$0xff] %vm358, %v1860
      %1869 = vst.msk [vmem:[#allocation3 + $0x38] sm:$0xff] %vm358, %v1861
      %v1870 = vld [vmem:[#allocation3] sm:$0xff]
      %v1871 = vld [vmem:[#allocation3 + $0x8] sm:$0xff]
      %v1872 = vld [vmem:[#allocation3 + $0x10] sm:$0xff]
      %v1873 = vld [vmem:[#allocation3 + $0x18] sm:$0xff]
      %v1874 = vld [vmem:[#allocation3 + $0x20] sm:$0xff]
      %v1875 = vld [vmem:[#allocation3 + $0x28] sm:$0xff]
      %v1876 = vld [vmem:[#allocation3 + $0x30] sm:$0xff]
      %v1877 = vld [vmem:[#allocation3 + $0x38] sm:$0xff]
      %1878 = vst.msk [vmem:[%s224] sm:$0xff] %vm358, %v1870
      %1879 = vst.msk [vmem:[%s224 + $0x8] sm:$0xff] %vm358, %v1871
      %1880 = vst.msk [vmem:[%s224 + $0x10] sm:$0xff] %vm358, %v1872
      %1881 = vst.msk [vmem:[%s224 + $0x18] sm:$0xff] %vm358, %v1873
      %1882 = vst.msk [vmem:[%s224 + $0x20] sm:$0xff] %vm358, %v1874
      %1883 = vst.msk [vmem:[%s224 + $0x28] sm:$0xff] %vm358, %v1875
      %1884 = vst.msk [vmem:[%s224 + $0x30] sm:$0xff] %vm358, %v1876
      %1885 = vst.msk [vmem:[%s224 + $0x38] sm:$0xff] %vm358, %v1877
      %1894 = vrot.lane.b32.xlu0 %v1870, 4
      %v1895 = vpop.permute.xlu0 %1894
      %1896 = vrot.lane.b32.xlu0 %v1871, 4
      %v1897 = vpop.permute.xlu0 %1896
      %1898 = vrot.lane.b32.xlu0 %v1872, 4
      %v1899 = vpop.permute.xlu0 %1898
      %1900 = vrot.lane.b32.xlu0 %v1873, 4
      %v1901 = vpop.permute.xlu0 %1900
      %1902 = vrot.lane.b32.xlu0 %v1874, 4
      %v1903 = vpop.permute.xlu0 %1902
      %1904 = vrot.lane.b32.xlu0 %v1875, 4
      %v1905 = vpop.permute.xlu0 %1904
      %1906 = vrot.lane.b32.xlu0 %v1876, 4
      %v1907 = vpop.permute.xlu0 %1906
      %1908 = vrot.lane.b32.xlu0 %v1877, 4
      %v1909 = vpop.permute.xlu0 %1908
      %1918 = vst.msk [vmem:[%s314 + $0x1] sm:$0xff] %vm315, %v1895
      %1919 = vst.msk [vmem:[%s314 + $0x11] sm:$0xff] %vm315, %v1897
      %1920 = vst.msk [vmem:[%s314 + $0x21] sm:$0xff] %vm315, %v1899
      %1921 = vst.msk [vmem:[%s314 + $0x31] sm:$0xff] %vm315, %v1901
      %1922 = vst.msk [vmem:[%s314 + $0x41] sm:$0xff] %vm315, %v1903
      %1923 = vst.msk [vmem:[%s314 + $0x51] sm:$0xff] %vm315, %v1905
      %1924 = vst.msk [vmem:[%s314 + $0x61] sm:$0xff] %vm315, %v1907
      %1925 = vst.msk [vmem:[%s314 + $0x71] sm:$0xff] %vm315, %v1909
      %v1926 = vld [vmem:[%s247] sm:$0xff]
      %v1927 = vld [vmem:[%s247 + $0x8] sm:$0xff]
      %v1928 = vld [vmem:[%s247 + $0x10] sm:$0xff]
      %v1929 = vld [vmem:[%s247 + $0x18] sm:$0xff]
      %v1930 = vld [vmem:[%s247 + $0x20] sm:$0xff]
      %v1931 = vld [vmem:[%s247 + $0x28] sm:$0xff]
      %v1932 = vld [vmem:[%s247 + $0x30] sm:$0xff]
      %v1933 = vld [vmem:[%s247 + $0x38] sm:$0xff]
      %v1934 = vld [vmem:[%s1 + $0x1] sm:$0x1]
      %v1935 = vlaneseq
      %v1936 = vshrl.u32 %v1935, 7
      %v1937 = vsub.s32 0, %v1936
      %v1938 = vrot.slane %v1934, %v1937
      %v1939 = vmul.f32 %v1926, %v1938
      %v1940 = vmul.f32 %v1927, %v1938
      %v1941 = vmul.f32 %v1928, %v1938
      %v1942 = vmul.f32 %v1929, %v1938
      %v1943 = vmul.f32 %v1930, %v1938
      %v1944 = vmul.f32 %v1931, %v1938
      %v1945 = vmul.f32 %v1932, %v1938
      %v1946 = vmul.f32 %v1933, %v1938
      %v1947 = vld [vmem:[%s2 + $0x1] sm:$0x1]
      %v1948 = vlaneseq
      %v1949 = vshrl.u32 %v1948, 7
      %v1950 = vsub.s32 0, %v1949
      %v1951 = vrot.slane %v1947, %v1950
      %v1952 = vadd.f32 %v1939, %v1951
      %v1953 = vadd.f32 %v1940, %v1951
      %v1954 = vadd.f32 %v1941, %v1951
      %v1955 = vadd.f32 %v1942, %v1951
      %v1956 = vadd.f32 %v1943, %v1951
      %v1957 = vadd.f32 %v1944, %v1951
      %v1958 = vadd.f32 %v1945, %v1951
      %v1959 = vadd.f32 %v1946, %v1951
      %1960 = vst.msk [vmem:[#allocation3] sm:$0xff] %vm358, %v1952
      %1961 = vst.msk [vmem:[#allocation3 + $0x8] sm:$0xff] %vm358, %v1953
      %1962 = vst.msk [vmem:[#allocation3 + $0x10] sm:$0xff] %vm358, %v1954
      %1963 = vst.msk [vmem:[#allocation3 + $0x18] sm:$0xff] %vm358, %v1955
      %1964 = vst.msk [vmem:[#allocation3 + $0x20] sm:$0xff] %vm358, %v1956
      %1965 = vst.msk [vmem:[#allocation3 + $0x28] sm:$0xff] %vm358, %v1957
      %1966 = vst.msk [vmem:[#allocation3 + $0x30] sm:$0xff] %vm358, %v1958
      %1967 = vst.msk [vmem:[#allocation3 + $0x38] sm:$0xff] %vm358, %v1959
      %v1968 = vld [vmem:[#allocation2] sm:$0xff]
      %v1969 = vld [vmem:[#allocation2 + $0x10] sm:$0xff]
      %v1970 = vld [vmem:[#allocation2 + $0x20] sm:$0xff]
      %v1971 = vld [vmem:[#allocation2 + $0x30] sm:$0xff]
      %v1972 = vld [vmem:[#allocation2 + $0x40] sm:$0xff]
      %v1973 = vld [vmem:[#allocation2 + $0x50] sm:$0xff]
      %v1974 = vld [vmem:[#allocation2 + $0x60] sm:$0xff]
      %v1975 = vld [vmem:[#allocation2 + $0x70] sm:$0xff]
      %v1976 = vld [vmem:[#allocation3] sm:$0xff]
      %v1977 = vld [vmem:[#allocation3 + $0x8] sm:$0xff]
      %v1978 = vld [vmem:[#allocation3 + $0x10] sm:$0xff]
      %v1979 = vld [vmem:[#allocation3 + $0x18] sm:$0xff]
      %v1980 = vld [vmem:[#allocation3 + $0x20] sm:$0xff]
      %v1981 = vld [vmem:[#allocation3 + $0x28] sm:$0xff]
      %v1982 = vld [vmem:[#allocation3 + $0x30] sm:$0xff]
      %v1983 = vld [vmem:[#allocation3 + $0x38] sm:$0xff]
      %v1984 = vld [vmem:[%s4] sm:$0xff]
      %v1985 = vld [vmem:[%s4 + $0x8] sm:$0xff]
      %v1986 = vld [vmem:[%s4 + $0x10] sm:$0xff]
      %v1987 = vld [vmem:[%s4 + $0x18] sm:$0xff]
      %v1988 = vld [vmem:[%s4 + $0x20] sm:$0xff]
      %v1990 = vsel %vm225, %v1968, 0
      %v1993 = vsel %vm225, %v1969, 0
      %v1996 = vsel %vm225, %v1970, 0
      %v1999 = vsel %vm225, %v1971, 0
      %v2002 = vsel %vm225, %v1972, 0
      %v2005 = vsel %vm225, %v1973, 0
      %v2008 = vsel %vm225, %v1974, 0
      %v2011 = vsel %vm225, %v1975, 0
      %2013 = vmatprep.subr.mxu0 0.0
      %2014 = vmatpush1.msra.mxu0 %v1984
      %2015 = vmatprep.subr.mxu0 0.0
      %2016 = vmatpush1.msra.mxu0 %v1985
      %2017 = vmatprep.subr.mxu0 0.0
      %2018 = vmatpush1.msra.mxu0 %v1986
      %2019 = vmatprep.subr.mxu0 0.0
      %2020 = vmatpush1.msra.mxu0 %v1987
      %2021 = vmatprep.subr.mxu0 0.0
      %2022 = vmatpush1.msra.mxu0 %v1988
      %2023 = vmatprep.subr.mxu0 0.0
      %2024 = vmatpush1.msra.mxu0 0.0
      %2025 = vmatprep.subr.mxu0 0.0
      %2026 = vmatpush1.msra.mxu0 0.0
      %2027 = vmatprep.subr.mxu0 0.0
      %2028 = vmatpush1.msra.mxu0 0.0
      %2029 = vmatprep.subr.mxu0 0.0
      %2030 = vmatpush1.msra.mxu0 0.0
      %2031 = vmatprep.subr.mxu0 0.0
      %2032 = vmatpush1.msra.mxu0 0.0
      %2033 = vmatprep.subr.mxu0 0.0
      %2034 = vmatpush1.msra.mxu0 0.0
      %2035 = vmatprep.subr.mxu0 0.0
      %2036 = vmatpush1.msra.mxu0 0.0
      %2037 = vmatprep.subr.mxu0 0.0
      %2038 = vmatpush1.msra.mxu0 0.0
      %2039 = vmatprep.subr.mxu0 0.0
      %2040 = vmatpush1.msra.mxu0 0.0
      %2041 = vmatprep.subr.mxu0 0.0
      %2042 = vmatpush1.msra.mxu0 0.0
      %2043 = vmatprep.subr.mxu0 0.0
      %2044 = vmatpush1.msra.mxu0 0.0
      %2045 = vmatprep.subr.mxu0 0.0
      %2046 = vmatpush1.msra.mxu0 0.0
      %2047 = vmatprep.subr.mxu0 0.0
      %2048 = vmatpush1.msra.mxu0 0.0
      %2049 = vmatprep.subr.mxu0 0.0
      %2050 = vmatpush1.msra.mxu0 0.0
      %2051 = vmatprep.subr.mxu0 0.0
      %2052 = vmatpush1.msra.mxu0 0.0
      %2053 = vmatprep.subr.mxu0 0.0
      %2054 = vmatpush1.msra.mxu0 0.0
      %2055 = vmatprep.subr.mxu0 0.0
      %2056 = vmatpush1.msra.mxu0 0.0
      %2057 = vmatprep.subr.mxu0 0.0
      %2058 = vmatpush1.msra.mxu0 0.0
      %2059 = vmatprep.subr.mxu0 0.0
      %2060 = vmatpush1.msra.mxu0 0.0
      %2061 = vmatprep.subr.mxu0 0.0
      %2062 = vmatpush1.msra.mxu0 0.0
      %2063 = vmatprep.subr.mxu0 0.0
      %2064 = vmatpush1.msra.mxu0 0.0
      %2065 = vmatprep.subr.mxu0 0.0
      %2066 = vmatpush1.msra.mxu0 0.0
      %2067 = vmatprep.subr.mxu0 0.0
      %2068 = vmatpush1.msra.mxu0 0.0
      %2069 = vmatprep.subr.mxu0 0.0
      %2070 = vmatpush1.msra.mxu0 0.0
      %2071 = vmatprep.subr.mxu0 0.0
      %2072 = vmatpush1.msra.mxu0 0.0
      %2073 = vmatprep.subr.mxu0 0.0
      %2074 = vmatpush1.msra.mxu0 0.0
      %2075 = vmatprep.subr.mxu0 0.0
      %2076 = vmatpush1.msra.mxu0 0.0
      %2077 = vmatprep.mubr.f32.mxu0 0.0
      %2078 = vmatmul.mubr.f32.gmra.mrb[0].mxu0 %v1990
      %v2079 = vpop.f32.mrb[0].mxu0
      %v2080 = vadd.f32 0.0, %v2079
      %v2081 = vpop.f32.mrb[0].mxu0
      %2082 = vmatprep.mubr.f32.mxu0 0.0
      %2083 = vmatmul.mubr.f32.gmra.mrb[0].mxu0 %v1993
      %v2084 = vpop.f32.mrb[0].mxu0
      %v2085 = vadd.f32 0.0, %v2084
      %v2086 = vpop.f32.mrb[0].mxu0
      %2087 = vmatprep.mubr.f32.mxu0 0.0
      %2088 = vmatmul.mubr.f32.gmra.mrb[0].mxu0 %v1996
      %v2089 = vpop.f32.mrb[0].mxu0
      %v2090 = vadd.f32 0.0, %v2089
      %v2091 = vpop.f32.mrb[0].mxu0
      %2092 = vmatprep.mubr.f32.mxu0 0.0
      %2093 = vmatmul.mubr.f32.gmra.mrb[0].mxu0 %v1999
      %v2094 = vpop.f32.mrb[0].mxu0
      %v2095 = vadd.f32 0.0, %v2094
      %v2096 = vpop.f32.mrb[0].mxu0
      %2097 = vmatprep.mubr.f32.mxu0 0.0
      %2098 = vmatmul.mubr.f32.gmra.mrb[0].mxu0 %v2002
      %v2099 = vpop.f32.mrb[0].mxu0
      %v2100 = vadd.f32 0.0, %v2099
      %v2101 = vpop.f32.mrb[0].mxu0
      %2102 = vmatprep.mubr.f32.mxu0 0.0
      %2103 = vmatmul.mubr.f32.gmra.mrb[0].mxu0 %v2005
      %v2104 = vpop.f32.mrb[0].mxu0
      %v2105 = vadd.f32 0.0, %v2104
      %v2106 = vpop.f32.mrb[0].mxu0
      %2107 = vmatprep.mubr.f32.mxu0 0.0
      %2108 = vmatmul.mubr.f32.gmra.mrb[0].mxu0 %v2008
      %v2109 = vpop.f32.mrb[0].mxu0
      %v2110 = vadd.f32 0.0, %v2109
      %v2111 = vpop.f32.mrb[0].mxu0
      %2112 = vmatprep.mubr.f32.mxu0 0.0
      %2113 = vmatmul.mubr.f32.gmra.mrb[0].mxu0 %v2011
      %v2114 = vpop.f32.mrb[0].mxu0
      %v2115 = vadd.f32 0.0, %v2114
      %v2116 = vpop.f32.mrb[0].mxu0
      %2117 = vdwg.mxu0
      %v2118 = vadd.f32 %v1976, %v2080
      %v2119 = vadd.f32 %v1977, %v2085
      %v2120 = vadd.f32 %v1978, %v2090
      %v2121 = vadd.f32 %v1979, %v2095
      %v2122 = vadd.f32 %v1980, %v2100
      %v2123 = vadd.f32 %v1981, %v2105
      %v2124 = vadd.f32 %v1982, %v2110
      %v2125 = vadd.f32 %v1983, %v2115
      %2126 = vst.msk [vmem:[#allocation3] sm:$0xff] %vm358, %v2118
      %2127 = vst.msk [vmem:[#allocation3 + $0x8] sm:$0xff] %vm358, %v2119
      %2128 = vst.msk [vmem:[#allocation3 + $0x10] sm:$0xff] %vm358, %v2120
      %2129 = vst.msk [vmem:[#allocation3 + $0x18] sm:$0xff] %vm358, %v2121
      %2130 = vst.msk [vmem:[#allocation3 + $0x20] sm:$0xff] %vm358, %v2122
      %2131 = vst.msk [vmem:[#allocation3 + $0x28] sm:$0xff] %vm358, %v2123
      %2132 = vst.msk [vmem:[#allocation3 + $0x30] sm:$0xff] %vm358, %v2124
      %2133 = vst.msk [vmem:[#allocation3 + $0x38] sm:$0xff] %vm358, %v2125
      %v2134 = vld [vmem:[#allocation2 + $0x1] sm:$0xff]
      %v2135 = vld [vmem:[#allocation2 + $0x11] sm:$0xff]
      %v2136 = vld [vmem:[#allocation2 + $0x21] sm:$0xff]
      %v2137 = vld [vmem:[#allocation2 + $0x31] sm:$0xff]
      %v2138 = vld [vmem:[#allocation2 + $0x41] sm:$0xff]
      %v2139 = vld [vmem:[#allocation2 + $0x51] sm:$0xff]
      %v2140 = vld [vmem:[#allocation2 + $0x61] sm:$0xff]
      %v2141 = vld [vmem:[#allocation2 + $0x71] sm:$0xff]
      %v2142 = vld [vmem:[#allocation3] sm:$0xff]
      %v2143 = vld [vmem:[#allocation3 + $0x8] sm:$0xff]
      %v2144 = vld [vmem:[#allocation3 + $0x10] sm:$0xff]
      %v2145 = vld [vmem:[#allocation3 + $0x18] sm:$0xff]
      %v2146 = vld [vmem:[#allocation3 + $0x20] sm:$0xff]
      %v2147 = vld [vmem:[#allocation3 + $0x28] sm:$0xff]
      %v2148 = vld [vmem:[#allocation3 + $0x30] sm:$0xff]
      %v2149 = vld [vmem:[#allocation3 + $0x38] sm:$0xff]
      %s2150 = scalar_lea.vmem %s4, 40
      %v2151 = vld [vmem:[%s2150] sm:$0xff]
      %v2152 = vld [vmem:[%s2150 + $0x8] sm:$0xff]
      %v2153 = vld [vmem:[%s2150 + $0x10] sm:$0xff]
      %v2154 = vld [vmem:[%s2150 + $0x18] sm:$0xff]
      %v2155 = vld [vmem:[%s2150 + $0x20] sm:$0xff]
      %v2157 = vsel %vm225, %v2134, 0
      %v2160 = vsel %vm225, %v2135, 0
      %v2163 = vsel %vm225, %v2136, 0
      %v2166 = vsel %vm225, %v2137, 0
      %v2169 = vsel %vm225, %v2138, 0
      %v2172 = vsel %vm225, %v2139, 0
      %v2175 = vsel %vm225, %v2140, 0
      %v2178 = vsel %vm225, %v2141, 0
      %2180 = vmatprep.subr.mxu0 0.0
      %2181 = vmatpush1.msra.mxu0 %v2151
      %2182 = vmatprep.subr.mxu0 0.0
      %2183 = vmatpush1.msra.mxu0 %v2152
      %2184 = vmatprep.subr.mxu0 0.0
      %2185 = vmatpush1.msra.mxu0 %v2153
      %2186 = vmatprep.subr.mxu0 0.0
      %2187 = vmatpush1.msra.mxu0 %v2154
      %2188 = vmatprep.subr.mxu0 0.0
      %2189 = vmatpush1.msra.mxu0 %v2155
      %2190 = vmatprep.subr.mxu0 0.0
      %2191 = vmatpush1.msra.mxu0 0.0
      %2192 = vmatprep.subr.mxu0 0.0
      %2193 = vmatpush1.msra.mxu0 0.0
      %2194 = vmatprep.subr.mxu0 0.0
      %2195 = vmatpush1.msra.mxu0 0.0
      %2196 = vmatprep.subr.mxu0 0.0
      %2197 = vmatpush1.msra.mxu0 0.0
      %2198 = vmatprep.subr.mxu0 0.0
      %2199 = vmatpush1.msra.mxu0 0.0
      %2200 = vmatprep.subr.mxu0 0.0
      %2201 = vmatpush1.msra.mxu0 0.0
      %2202 = vmatprep.subr.mxu0 0.0
      %2203 = vmatpush1.msra.mxu0 0.0
      %2204 = vmatprep.subr.mxu0 0.0
      %2205 = vmatpush1.msra.mxu0 0.0
      %2206 = vmatprep.subr.mxu0 0.0
      %2207 = vmatpush1.msra.mxu0 0.0
      %2208 = vmatprep.subr.mxu0 0.0
      %2209 = vmatpush1.msra.mxu0 0.0
      %2210 = vmatprep.subr.mxu0 0.0
      %2211 = vmatpush1.msra.mxu0 0.0
      %2212 = vmatprep.subr.mxu0 0.0
      %2213 = vmatpush1.msra.mxu0 0.0
      %2214 = vmatprep.subr.mxu0 0.0
      %2215 = vmatpush1.msra.mxu0 0.0
      %2216 = vmatprep.subr.mxu0 0.0
      %2217 = vmatpush1.msra.mxu0 0.0
      %2218 = vmatprep.subr.mxu0 0.0
      %2219 = vmatpush1.msra.mxu0 0.0
      %2220 = vmatprep.subr.mxu0 0.0
      %2221 = vmatpush1.msra.mxu0 0.0
      %2222 = vmatprep.subr.mxu0 0.0
      %2223 = vmatpush1.msra.mxu0 0.0
      %2224 = vmatprep.subr.mxu0 0.0
      %2225 = vmatpush1.msra.mxu0 0.0
      %2226 = vmatprep.subr.mxu0 0.0
      %2227 = vmatpush1.msra.mxu0 0.0
      %2228 = vmatprep.subr.mxu0 0.0
      %2229 = vmatpush1.msra.mxu0 0.0
      %2230 = vmatprep.subr.mxu0 0.0
      %2231 = vmatpush1.msra.mxu0 0.0
      %2232 = vmatprep.subr.mxu0 0.0
      %2233 = vmatpush1.msra.mxu0 0.0
      %2234 = vmatprep.subr.mxu0 0.0
      %2235 = vmatpush1.msra.mxu0 0.0
      %2236 = vmatprep.subr.mxu0 0.0
      %2237 = vmatpush1.msra.mxu0 0.0
      %2238 = vmatprep.subr.mxu0 0.0
      %2239 = vmatpush1.msra.mxu0 0.0
      %2240 = vmatprep.subr.mxu0 0.0
      %2241 = vmatpush1.msra.mxu0 0.0
      %2242 = vmatprep.subr.mxu0 0.0
      %2243 = vmatpush1.msra.mxu0 0.0
      %2244 = vmatprep.mubr.f32.mxu0 0.0
      %2245 = vmatmul.mubr.f32.gmra.mrb[0].mxu0 %v2157
      %v2246 = vpop.f32.mrb[0].mxu0
      %v2247 = vadd.f32 0.0, %v2246
      %v2248 = vpop.f32.mrb[0].mxu0
      %2249 = vmatprep.mubr.f32.mxu0 0.0
      %2250 = vmatmul.mubr.f32.gmra.mrb[0].mxu0 %v2160
      %v2251 = vpop.f32.mrb[0].mxu0
      %v2252 = vadd.f32 0.0, %v2251
      %v2253 = vpop.f32.mrb[0].mxu0
      %2254 = vmatprep.mubr.f32.mxu0 0.0
      %2255 = vmatmul.mubr.f32.gmra.mrb[0].mxu0 %v2163
      %v2256 = vpop.f32.mrb[0].mxu0
      %v2257 = vadd.f32 0.0, %v2256
      %v2258 = vpop.f32.mrb[0].mxu0
      %2259 = vmatprep.mubr.f32.mxu0 0.0
      %2260 = vmatmul.mubr.f32.gmra.mrb[0].mxu0 %v2166
      %v2261 = vpop.f32.mrb[0].mxu0
      %v2262 = vadd.f32 0.0, %v2261
      %v2263 = vpop.f32.mrb[0].mxu0
      %2264 = vmatprep.mubr.f32.mxu0 0.0
      %2265 = vmatmul.mubr.f32.gmra.mrb[0].mxu0 %v2169
      %v2266 = vpop.f32.mrb[0].mxu0
      %v2267 = vadd.f32 0.0, %v2266
      %v2268 = vpop.f32.mrb[0].mxu0
      %2269 = vmatprep.mubr.f32.mxu0 0.0
      %2270 = vmatmul.mubr.f32.gmra.mrb[0].mxu0 %v2172
      %v2271 = vpop.f32.mrb[0].mxu0
      %v2272 = vadd.f32 0.0, %v2271
      %v2273 = vpop.f32.mrb[0].mxu0
      %2274 = vmatprep.mubr.f32.mxu0 0.0
      %2275 = vmatmul.mubr.f32.gmra.mrb[0].mxu0 %v2175
      %v2276 = vpop.f32.mrb[0].mxu0
      %v2277 = vadd.f32 0.0, %v2276
      %v2278 = vpop.f32.mrb[0].mxu0
      %2279 = vmatprep.mubr.f32.mxu0 0.0
      %2280 = vmatmul.mubr.f32.gmra.mrb[0].mxu0 %v2178
      %v2281 = vpop.f32.mrb[0].mxu0
      %v2282 = vadd.f32 0.0, %v2281
      %v2283 = vpop.f32.mrb[0].mxu0
      %2284 = vdwg.mxu0
      %v2285 = vadd.f32 %v2142, %v2247
      %v2286 = vadd.f32 %v2143, %v2252
      %v2287 = vadd.f32 %v2144, %v2257
      %v2288 = vadd.f32 %v2145, %v2262
      %v2289 = vadd.f32 %v2146, %v2267
      %v2290 = vadd.f32 %v2147, %v2272
      %v2291 = vadd.f32 %v2148, %v2277
      %v2292 = vadd.f32 %v2149, %v2282
      %2293 = vst.msk [vmem:[#allocation3] sm:$0xff] %vm358, %v2285
      %2294 = vst.msk [vmem:[#allocation3 + $0x8] sm:$0xff] %vm358, %v2286
      %2295 = vst.msk [vmem:[#allocation3 + $0x10] sm:$0xff] %vm358, %v2287
      %2296 = vst.msk [vmem:[#allocation3 + $0x18] sm:$0xff] %vm358, %v2288
      %2297 = vst.msk [vmem:[#allocation3 + $0x20] sm:$0xff] %vm358, %v2289
      %2298 = vst.msk [vmem:[#allocation3 + $0x28] sm:$0xff] %vm358, %v2290
      %2299 = vst.msk [vmem:[#allocation3 + $0x30] sm:$0xff] %vm358, %v2291
      %2300 = vst.msk [vmem:[#allocation3 + $0x38] sm:$0xff] %vm358, %v2292
      %v2301 = vld [vmem:[#allocation2 + $0x2] sm:$0xff]
      %v2302 = vld [vmem:[#allocation2 + $0x12] sm:$0xff]
      %v2303 = vld [vmem:[#allocation2 + $0x22] sm:$0xff]
      %v2304 = vld [vmem:[#allocation2 + $0x32] sm:$0xff]
      %v2305 = vld [vmem:[#allocation2 + $0x42] sm:$0xff]
      %v2306 = vld [vmem:[#allocation2 + $0x52] sm:$0xff]
      %v2307 = vld [vmem:[#allocation2 + $0x62] sm:$0xff]
      %v2308 = vld [vmem:[#allocation2 + $0x72] sm:$0xff]
      %v2309 = vld [vmem:[#allocation3] sm:$0xff]
      %v2310 = vld [vmem:[#allocation3 + $0x8] sm:$0xff]
      %v2311 = vld [vmem:[#allocation3 + $0x10] sm:$0xff]
      %v2312 = vld [vmem:[#allocation3 + $0x18] sm:$0xff]
      %v2313 = vld [vmem:[#allocation3 + $0x20] sm:$0xff]
      %v2314 = vld [vmem:[#allocation3 + $0x28] sm:$0xff]
      %v2315 = vld [vmem:[#allocation3 + $0x30] sm:$0xff]
      %v2316 = vld [vmem:[#allocation3 + $0x38] sm:$0xff]
      %s2317 = scalar_lea.vmem %s4, 80
      %v2318 = vld [vmem:[%s2317] sm:$0xff]
      %v2319 = vld [vmem:[%s2317 + $0x8] sm:$0xff]
      %v2320 = vld [vmem:[%s2317 + $0x10] sm:$0xff]
      %v2321 = vld [vmem:[%s2317 + $0x18] sm:$0xff]
      %v2322 = vld [vmem:[%s2317 + $0x20] sm:$0xff]
      %v2324 = vsel %vm225, %v2301, 0
      %v2327 = vsel %vm225, %v2302, 0
      %v2330 = vsel %vm225, %v2303, 0
      %v2333 = vsel %vm225, %v2304, 0
      %v2336 = vsel %vm225, %v2305, 0
      %v2339 = vsel %vm225, %v2306, 0
      %v2342 = vsel %vm225, %v2307, 0
      %v2345 = vsel %vm225, %v2308, 0
      %2347 = vmatprep.subr.mxu0 0.0
      %2348 = vmatpush1.msra.mxu0 %v2318
      %2349 = vmatprep.subr.mxu0 0.0
      %2350 = vmatpush1.msra.mxu0 %v2319
      %2351 = vmatprep.subr.mxu0 0.0
      %2352 = vmatpush1.msra.mxu0 %v2320
      %2353 = vmatprep.subr.mxu0 0.0
      %2354 = vmatpush1.msra.mxu0 %v2321
      %2355 = vmatprep.subr.mxu0 0.0
      %2356 = vmatpush1.msra.mxu0 %v2322
      %2357 = vmatprep.subr.mxu0 0.0
      %2358 = vmatpush1.msra.mxu0 0.0
      %2359 = vmatprep.subr.mxu0 0.0
      %2360 = vmatpush1.msra.mxu0 0.0
      %2361 = vmatprep.subr.mxu0 0.0
      %2362 = vmatpush1.msra.mxu0 0.0
      %2363 = vmatprep.subr.mxu0 0.0
      %2364 = vmatpush1.msra.mxu0 0.0
      %2365 = vmatprep.subr.mxu0 0.0
      %2366 = vmatpush1.msra.mxu0 0.0
      %2367 = vmatprep.subr.mxu0 0.0
      %2368 = vmatpush1.msra.mxu0 0.0
      %2369 = vmatprep.subr.mxu0 0.0
      %2370 = vmatpush1.msra.mxu0 0.0
      %2371 = vmatprep.subr.mxu0 0.0
      %2372 = vmatpush1.msra.mxu0 0.0
      %2373 = vmatprep.subr.mxu0 0.0
      %2374 = vmatpush1.msra.mxu0 0.0
      %2375 = vmatprep.subr.mxu0 0.0
      %2376 = vmatpush1.msra.mxu0 0.0
      %2377 = vmatprep.subr.mxu0 0.0
      %2378 = vmatpush1.msra.mxu0 0.0
      %2379 = vmatprep.subr.mxu0 0.0
      %2380 = vmatpush1.msra.mxu0 0.0
      %2381 = vmatprep.subr.mxu0 0.0
      %2382 = vmatpush1.msra.mxu0 0.0
      %2383 = vmatprep.subr.mxu0 0.0
      %2384 = vmatpush1.msra.mxu0 0.0
      %2385 = vmatprep.subr.mxu0 0.0
      %2386 = vmatpush1.msra.mxu0 0.0
      %2387 = vmatprep.subr.mxu0 0.0
      %2388 = vmatpush1.msra.mxu0 0.0
      %2389 = vmatprep.subr.mxu0 0.0
      %2390 = vmatpush1.msra.mxu0 0.0
      %2391 = vmatprep.subr.mxu0 0.0
      %2392 = vmatpush1.msra.mxu0 0.0
      %2393 = vmatprep.subr.mxu0 0.0
      %2394 = vmatpush1.msra.mxu0 0.0
      %2395 = vmatprep.subr.mxu0 0.0
      %2396 = vmatpush1.msra.mxu0 0.0
      %2397 = vmatprep.subr.mxu0 0.0
      %2398 = vmatpush1.msra.mxu0 0.0
      %2399 = vmatprep.subr.mxu0 0.0
      %2400 = vmatpush1.msra.mxu0 0.0
      %2401 = vmatprep.subr.mxu0 0.0
      %2402 = vmatpush1.msra.mxu0 0.0
      %2403 = vmatprep.subr.mxu0 0.0
      %2404 = vmatpush1.msra.mxu0 0.0
      %2405 = vmatprep.subr.mxu0 0.0
      %2406 = vmatpush1.msra.mxu0 0.0
      %2407 = vmatprep.subr.mxu0 0.0
      %2408 = vmatpush1.msra.mxu0 0.0
      %2409 = vmatprep.subr.mxu0 0.0
      %2410 = vmatpush1.msra.mxu0 0.0
      %2411 = vmatprep.mubr.f32.mxu0 0.0
      %2412 = vmatmul.mubr.f32.gmra.mrb[0].mxu0 %v2324
      %v2413 = vpop.f32.mrb[0].mxu0
      %v2414 = vadd.f32 0.0, %v2413
      %v2415 = vpop.f32.mrb[0].mxu0
      %2416 = vmatprep.mubr.f32.mxu0 0.0
      %2417 = vmatmul.mubr.f32.gmra.mrb[0].mxu0 %v2327
      %v2418 = vpop.f32.mrb[0].mxu0
      %v2419 = vadd.f32 0.0, %v2418
      %v2420 = vpop.f32.mrb[0].mxu0
      %2421 = vmatprep.mubr.f32.mxu0 0.0
      %2422 = vmatmul.mubr.f32.gmra.mrb[0].mxu0 %v2330
      %v2423 = vpop.f32.mrb[0].mxu0
      %v2424 = vadd.f32 0.0, %v2423
      %v2425 = vpop.f32.mrb[0].mxu0
      %2426 = vmatprep.mubr.f32.mxu0 0.0
      %2427 = vmatmul.mubr.f32.gmra.mrb[0].mxu0 %v2333
      %v2428 = vpop.f32.mrb[0].mxu0
      %v2429 = vadd.f32 0.0, %v2428
      %v2430 = vpop.f32.mrb[0].mxu0
      %2431 = vmatprep.mubr.f32.mxu0 0.0
      %2432 = vmatmul.mubr.f32.gmra.mrb[0].mxu0 %v2336
      %v2433 = vpop.f32.mrb[0].mxu0
      %v2434 = vadd.f32 0.0, %v2433
      %v2435 = vpop.f32.mrb[0].mxu0
      %2436 = vmatprep.mubr.f32.mxu0 0.0
      %2437 = vmatmul.mubr.f32.gmra.mrb[0].mxu0 %v2339
      %v2438 = vpop.f32.mrb[0].mxu0
      %v2439 = vadd.f32 0.0, %v2438
      %v2440 = vpop.f32.mrb[0].mxu0
      %2441 = vmatprep.mubr.f32.mxu0 0.0
      %2442 = vmatmul.mubr.f32.gmra.mrb[0].mxu0 %v2342
      %v2443 = vpop.f32.mrb[0].mxu0
      %v2444 = vadd.f32 0.0, %v2443
      %v2445 = vpop.f32.mrb[0].mxu0
      %2446 = vmatprep.mubr.f32.mxu0 0.0
      %2447 = vmatmul.mubr.f32.gmra.mrb[0].mxu0 %v2345
      %v2448 = vpop.f32.mrb[0].mxu0
      %v2449 = vadd.f32 0.0, %v2448
      %v2450 = vpop.f32.mrb[0].mxu0
      %2451 = vdwg.mxu0
      %v2452 = vadd.f32 %v2309, %v2414
      %v2453 = vadd.f32 %v2310, %v2419
      %v2454 = vadd.f32 %v2311, %v2424
      %v2455 = vadd.f32 %v2312, %v2429
      %v2456 = vadd.f32 %v2313, %v2434
      %v2457 = vadd.f32 %v2314, %v2439
      %v2458 = vadd.f32 %v2315, %v2444
      %v2459 = vadd.f32 %v2316, %v2449
      %2460 = vst.msk [vmem:[#allocation3] sm:$0xff] %vm358, %v2452
      %2461 = vst.msk [vmem:[#allocation3 + $0x8] sm:$0xff] %vm358, %v2453
      %2462 = vst.msk [vmem:[#allocation3 + $0x10] sm:$0xff] %vm358, %v2454
      %2463 = vst.msk [vmem:[#allocation3 + $0x18] sm:$0xff] %vm358, %v2455
      %2464 = vst.msk [vmem:[#allocation3 + $0x20] sm:$0xff] %vm358, %v2456
      %2465 = vst.msk [vmem:[#allocation3 + $0x28] sm:$0xff] %vm358, %v2457
      %2466 = vst.msk [vmem:[#allocation3 + $0x30] sm:$0xff] %vm358, %v2458
      %2467 = vst.msk [vmem:[#allocation3 + $0x38] sm:$0xff] %vm358, %v2459
      %v2468 = vld [vmem:[%s314] sm:$0xff]
      %v2469 = vld [vmem:[%s314 + $0x10] sm:$0xff]
      %v2470 = vld [vmem:[%s314 + $0x20] sm:$0xff]
      %v2471 = vld [vmem:[%s314 + $0x30] sm:$0xff]
      %v2472 = vld [vmem:[%s314 + $0x40] sm:$0xff]
      %v2473 = vld [vmem:[%s314 + $0x50] sm:$0xff]
      %v2474 = vld [vmem:[%s314 + $0x60] sm:$0xff]
      %v2475 = vld [vmem:[%s314 + $0x70] sm:$0xff]
      %v2476 = vld [vmem:[#allocation3] sm:$0xff]
      %v2477 = vld [vmem:[#allocation3 + $0x8] sm:$0xff]
      %v2478 = vld [vmem:[#allocation3 + $0x10] sm:$0xff]
      %v2479 = vld [vmem:[#allocation3 + $0x18] sm:$0xff]
      %v2480 = vld [vmem:[#allocation3 + $0x20] sm:$0xff]
      %v2481 = vld [vmem:[#allocation3 + $0x28] sm:$0xff]
      %v2482 = vld [vmem:[#allocation3 + $0x30] sm:$0xff]
      %v2483 = vld [vmem:[#allocation3 + $0x38] sm:$0xff]
      %s2484 = scalar_lea.vmem %s4, 120
      %v2485 = vld [vmem:[%s2484] sm:$0xff]
      %v2486 = vld [vmem:[%s2484 + $0x8] sm:$0xff]
      %v2487 = vld [vmem:[%s2484 + $0x10] sm:$0xff]
      %v2488 = vld [vmem:[%s2484 + $0x18] sm:$0xff]
      %v2489 = vld [vmem:[%s2484 + $0x20] sm:$0xff]
      %v2491 = vsel %vm225, %v2468, 0
      %v2494 = vsel %vm225, %v2469, 0
      %v2497 = vsel %vm225, %v2470, 0
      %v2500 = vsel %vm225, %v2471, 0
      %v2503 = vsel %vm225, %v2472, 0
      %v2506 = vsel %vm225, %v2473, 0
      %v2509 = vsel %vm225, %v2474, 0
      %v2512 = vsel %vm225, %v2475, 0
      %2514 = vmatprep.subr.mxu0 0.0
      %2515 = vmatpush1.msra.mxu0 %v2485
      %2516 = vmatprep.subr.mxu0 0.0
      %2517 = vmatpush1.msra.mxu0 %v2486
      %2518 = vmatprep.subr.mxu0 0.0
      %2519 = vmatpush1.msra.mxu0 %v2487
      %2520 = vmatprep.subr.mxu0 0.0
      %2521 = vmatpush1.msra.mxu0 %v2488
      %2522 = vmatprep.subr.mxu0 0.0
      %2523 = vmatpush1.msra.mxu0 %v2489
      %2524 = vmatprep.subr.mxu0 0.0
      %2525 = vmatpush1.msra.mxu0 0.0
      %2526 = vmatprep.subr.mxu0 0.0
      %2527 = vmatpush1.msra.mxu0 0.0
      %2528 = vmatprep.subr.mxu0 0.0
      %2529 = vmatpush1.msra.mxu0 0.0
      %2530 = vmatprep.subr.mxu0 0.0
      %2531 = vmatpush1.msra.mxu0 0.0
      %2532 = vmatprep.subr.mxu0 0.0
      %2533 = vmatpush1.msra.mxu0 0.0
      %2534 = vmatprep.subr.mxu0 0.0
      %2535 = vmatpush1.msra.mxu0 0.0
      %2536 = vmatprep.subr.mxu0 0.0
      %2537 = vmatpush1.msra.mxu0 0.0
      %2538 = vmatprep.subr.mxu0 0.0
      %2539 = vmatpush1.msra.mxu0 0.0
      %2540 = vmatprep.subr.mxu0 0.0
      %2541 = vmatpush1.msra.mxu0 0.0
      %2542 = vmatprep.subr.mxu0 0.0
      %2543 = vmatpush1.msra.mxu0 0.0
      %2544 = vmatprep.subr.mxu0 0.0
      %2545 = vmatpush1.msra.mxu0 0.0
      %2546 = vmatprep.subr.mxu0 0.0
      %2547 = vmatpush1.msra.mxu0 0.0
      %2548 = vmatprep.subr.mxu0 0.0
      %2549 = vmatpush1.msra.mxu0 0.0
      %2550 = vmatprep.subr.mxu0 0.0
      %2551 = vmatpush1.msra.mxu0 0.0
      %2552 = vmatprep.subr.mxu0 0.0
      %2553 = vmatpush1.msra.mxu0 0.0
      %2554 = vmatprep.subr.mxu0 0.0
      %2555 = vmatpush1.msra.mxu0 0.0
      %2556 = vmatprep.subr.mxu0 0.0
      %2557 = vmatpush1.msra.mxu0 0.0
      %2558 = vmatprep.subr.mxu0 0.0
      %2559 = vmatpush1.msra.mxu0 0.0
      %2560 = vmatprep.subr.mxu0 0.0
      %2561 = vmatpush1.msra.mxu0 0.0
      %2562 = vmatprep.subr.mxu0 0.0
      %2563 = vmatpush1.msra.mxu0 0.0
      %2564 = vmatprep.subr.mxu0 0.0
      %2565 = vmatpush1.msra.mxu0 0.0
      %2566 = vmatprep.subr.mxu0 0.0
      %2567 = vmatpush1.msra.mxu0 0.0
      %2568 = vmatprep.subr.mxu0 0.0
      %2569 = vmatpush1.msra.mxu0 0.0
      %2570 = vmatprep.subr.mxu0 0.0
      %2571 = vmatpush1.msra.mxu0 0.0
      %2572 = vmatprep.subr.mxu0 0.0
      %2573 = vmatpush1.msra.mxu0 0.0
      %2574 = vmatprep.subr.mxu0 0.0
      %2575 = vmatpush1.msra.mxu0 0.0
      %2576 = vmatprep.subr.mxu0 0.0
      %2577 = vmatpush1.msra.mxu0 0.0
      %2578 = vmatprep.mubr.f32.mxu0 0.0
      %2579 = vmatmul.mubr.f32.gmra.mrb[0].mxu0 %v2491
      %v2580 = vpop.f32.mrb[0].mxu0
      %v2581 = vadd.f32 0.0, %v2580
      %v2582 = vpop.f32.mrb[0].mxu0
      %2583 = vmatprep.mubr.f32.mxu0 0.0
      %2584 = vmatmul.mubr.f32.gmra.mrb[0].mxu0 %v2494
      %v2585 = vpop.f32.mrb[0].mxu0
      %v2586 = vadd.f32 0.0, %v2585
      %v2587 = vpop.f32.mrb[0].mxu0
      %2588 = vmatprep.mubr.f32.mxu0 0.0
      %2589 = vmatmul.mubr.f32.gmra.mrb[0].mxu0 %v2497
      %v2590 = vpop.f32.mrb[0].mxu0
      %v2591 = vadd.f32 0.0, %v2590
      %v2592 = vpop.f32.mrb[0].mxu0
      %2593 = vmatprep.mubr.f32.mxu0 0.0
      %2594 = vmatmul.mubr.f32.gmra.mrb[0].mxu0 %v2500
      %v2595 = vpop.f32.mrb[0].mxu0
      %v2596 = vadd.f32 0.0, %v2595
      %v2597 = vpop.f32.mrb[0].mxu0
      %2598 = vmatprep.mubr.f32.mxu0 0.0
      %2599 = vmatmul.mubr.f32.gmra.mrb[0].mxu0 %v2503
      %v2600 = vpop.f32.mrb[0].mxu0
      %v2601 = vadd.f32 0.0, %v2600
      %v2602 = vpop.f32.mrb[0].mxu0
      %2603 = vmatprep.mubr.f32.mxu0 0.0
      %2604 = vmatmul.mubr.f32.gmra.mrb[0].mxu0 %v2506
      %v2605 = vpop.f32.mrb[0].mxu0
      %v2606 = vadd.f32 0.0, %v2605
      %v2607 = vpop.f32.mrb[0].mxu0
      %2608 = vmatprep.mubr.f32.mxu0 0.0
      %2609 = vmatmul.mubr.f32.gmra.mrb[0].mxu0 %v2509
      %v2610 = vpop.f32.mrb[0].mxu0
      %v2611 = vadd.f32 0.0, %v2610
      %v2612 = vpop.f32.mrb[0].mxu0
      %2613 = vmatprep.mubr.f32.mxu0 0.0
      %2614 = vmatmul.mubr.f32.gmra.mrb[0].mxu0 %v2512
      %v2615 = vpop.f32.mrb[0].mxu0
      %v2616 = vadd.f32 0.0, %v2615
      %v2617 = vpop.f32.mrb[0].mxu0
      %2618 = vdwg.mxu0
      %v2619 = vadd.f32 %v2476, %v2581
      %v2620 = vadd.f32 %v2477, %v2586
      %v2621 = vadd.f32 %v2478, %v2591
      %v2622 = vadd.f32 %v2479, %v2596
      %v2623 = vadd.f32 %v2480, %v2601
      %v2624 = vadd.f32 %v2481, %v2606
      %v2625 = vadd.f32 %v2482, %v2611
      %v2626 = vadd.f32 %v2483, %v2616
      %2627 = vst.msk [vmem:[#allocation3] sm:$0xff] %vm358, %v2619
      %2628 = vst.msk [vmem:[#allocation3 + $0x8] sm:$0xff] %vm358, %v2620
      %2629 = vst.msk [vmem:[#allocation3 + $0x10] sm:$0xff] %vm358, %v2621
      %2630 = vst.msk [vmem:[#allocation3 + $0x18] sm:$0xff] %vm358, %v2622
      %2631 = vst.msk [vmem:[#allocation3 + $0x20] sm:$0xff] %vm358, %v2623
      %2632 = vst.msk [vmem:[#allocation3 + $0x28] sm:$0xff] %vm358, %v2624
      %2633 = vst.msk [vmem:[#allocation3 + $0x30] sm:$0xff] %vm358, %v2625
      %2634 = vst.msk [vmem:[#allocation3 + $0x38] sm:$0xff] %vm358, %v2626
      %v2635 = vld [vmem:[%s314 + $0x1] sm:$0xff]
      %v2636 = vld [vmem:[%s314 + $0x11] sm:$0xff]
      %v2637 = vld [vmem:[%s314 + $0x21] sm:$0xff]
      %v2638 = vld [vmem:[%s314 + $0x31] sm:$0xff]
      %v2639 = vld [vmem:[%s314 + $0x41] sm:$0xff]
      %v2640 = vld [vmem:[%s314 + $0x51] sm:$0xff]
      %v2641 = vld [vmem:[%s314 + $0x61] sm:$0xff]
      %v2642 = vld [vmem:[%s314 + $0x71] sm:$0xff]
      %v2643 = vld [vmem:[#allocation3] sm:$0xff]
      %v2644 = vld [vmem:[#allocation3 + $0x8] sm:$0xff]
      %v2645 = vld [vmem:[#allocation3 + $0x10] sm:$0xff]
      %v2646 = vld [vmem:[#allocation3 + $0x18] sm:$0xff]
      %v2647 = vld [vmem:[#allocation3 + $0x20] sm:$0xff]
      %v2648 = vld [vmem:[#allocation3 + $0x28] sm:$0xff]
      %v2649 = vld [vmem:[#allocation3 + $0x30] sm:$0xff]
      %v2650 = vld [vmem:[#allocation3 + $0x38] sm:$0xff]
      %s2651 = scalar_lea.vmem %s4, 160
      %v2652 = vld [vmem:[%s2651] sm:$0xff]
      %v2653 = vld [vmem:[%s2651 + $0x8] sm:$0xff]
      %v2654 = vld [vmem:[%s2651 + $0x10] sm:$0xff]
      %v2655 = vld [vmem:[%s2651 + $0x18] sm:$0xff]
      %v2656 = vld [vmem:[%s2651 + $0x20] sm:$0xff]
      %v2658 = vsel %vm225, %v2635, 0
      %v2661 = vsel %vm225, %v2636, 0
      %v2664 = vsel %vm225, %v2637, 0
      %v2667 = vsel %vm225, %v2638, 0
      %v2670 = vsel %vm225, %v2639, 0
      %v2673 = vsel %vm225, %v2640, 0
      %v2676 = vsel %vm225, %v2641, 0
      %v2679 = vsel %vm225, %v2642, 0
      %2681 = vmatprep.subr.mxu0 0.0
      %2682 = vmatpush1.msra.mxu0 %v2652
      %2683 = vmatprep.subr.mxu0 0.0
      %2684 = vmatpush1.msra.mxu0 %v2653
      %2685 = vmatprep.subr.mxu0 0.0
      %2686 = vmatpush1.msra.mxu0 %v2654
      %2687 = vmatprep.subr.mxu0 0.0
      %2688 = vmatpush1.msra.mxu0 %v2655
      %2689 = vmatprep.subr.mxu0 0.0
      %2690 = vmatpush1.msra.mxu0 %v2656
      %2691 = vmatprep.subr.mxu0 0.0
      %2692 = vmatpush1.msra.mxu0 0.0
      %2693 = vmatprep.subr.mxu0 0.0
      %2694 = vmatpush1.msra.mxu0 0.0
      %2695 = vmatprep.subr.mxu0 0.0
      %2696 = vmatpush1.msra.mxu0 0.0
      %2697 = vmatprep.subr.mxu0 0.0
      %2698 = vmatpush1.msra.mxu0 0.0
      %2699 = vmatprep.subr.mxu0 0.0
      %2700 = vmatpush1.msra.mxu0 0.0
      %2701 = vmatprep.subr.mxu0 0.0
      %2702 = vmatpush1.msra.mxu0 0.0
      %2703 = vmatprep.subr.mxu0 0.0
      %2704 = vmatpush1.msra.mxu0 0.0
      %2705 = vmatprep.subr.mxu0 0.0
      %2706 = vmatpush1.msra.mxu0 0.0
      %2707 = vmatprep.subr.mxu0 0.0
      %2708 = vmatpush1.msra.mxu0 0.0
      %2709 = vmatprep.subr.mxu0 0.0
      %2710 = vmatpush1.msra.mxu0 0.0
      %2711 = vmatprep.subr.mxu0 0.0
      %2712 = vmatpush1.msra.mxu0 0.0
      %2713 = vmatprep.subr.mxu0 0.0
      %2714 = vmatpush1.msra.mxu0 0.0
      %2715 = vmatprep.subr.mxu0 0.0
      %2716 = vmatpush1.msra.mxu0 0.0
      %2717 = vmatprep.subr.mxu0 0.0
      %2718 = vmatpush1.msra.mxu0 0.0
      %2719 = vmatprep.subr.mxu0 0.0
      %2720 = vmatpush1.msra.mxu0 0.0
      %2721 = vmatprep.subr.mxu0 0.0
      %2722 = vmatpush1.msra.mxu0 0.0
      %2723 = vmatprep.subr.mxu0 0.0
      %2724 = vmatpush1.msra.mxu0 0.0
      %2725 = vmatprep.subr.mxu0 0.0
      %2726 = vmatpush1.msra.mxu0 0.0
      %2727 = vmatprep.subr.mxu0 0.0
      %2728 = vmatpush1.msra.mxu0 0.0
      %2729 = vmatprep.subr.mxu0 0.0
      %2730 = vmatpush1.msra.mxu0 0.0
      %2731 = vmatprep.subr.mxu0 0.0
      %2732 = vmatpush1.msra.mxu0 0.0
      %2733 = vmatprep.subr.mxu0 0.0
      %2734 = vmatpush1.msra.mxu0 0.0
      %2735 = vmatprep.subr.mxu0 0.0
      %2736 = vmatpush1.msra.mxu0 0.0
      %2737 = vmatprep.subr.mxu0 0.0
      %2738 = vmatpush1.msra.mxu0 0.0
      %2739 = vmatprep.subr.mxu0 0.0
      %2740 = vmatpush1.msra.mxu0 0.0
      %2741 = vmatprep.subr.mxu0 0.0
      %2742 = vmatpush1.msra.mxu0 0.0
      %2743 = vmatprep.subr.mxu0 0.0
      %2744 = vmatpush1.msra.mxu0 0.0
      %2745 = vmatprep.mubr.f32.mxu0 0.0
      %2746 = vmatmul.mubr.f32.gmra.mrb[0].mxu0 %v2658
      %v2747 = vpop.f32.mrb[0].mxu0
      %v2748 = vadd.f32 0.0, %v2747
      %v2749 = vpop.f32.mrb[0].mxu0
      %2750 = vmatprep.mubr.f32.mxu0 0.0
      %2751 = vmatmul.mubr.f32.gmra.mrb[0].mxu0 %v2661
      %v2752 = vpop.f32.mrb[0].mxu0
      %v2753 = vadd.f32 0.0, %v2752
      %v2754 = vpop.f32.mrb[0].mxu0
      %2755 = vmatprep.mubr.f32.mxu0 0.0
      %2756 = vmatmul.mubr.f32.gmra.mrb[0].mxu0 %v2664
      %v2757 = vpop.f32.mrb[0].mxu0
      %v2758 = vadd.f32 0.0, %v2757
      %v2759 = vpop.f32.mrb[0].mxu0
      %2760 = vmatprep.mubr.f32.mxu0 0.0
      %2761 = vmatmul.mubr.f32.gmra.mrb[0].mxu0 %v2667
      %v2762 = vpop.f32.mrb[0].mxu0
      %v2763 = vadd.f32 0.0, %v2762
      %v2764 = vpop.f32.mrb[0].mxu0
      %2765 = vmatprep.mubr.f32.mxu0 0.0
      %2766 = vmatmul.mubr.f32.gmra.mrb[0].mxu0 %v2670
      %v2767 = vpop.f32.mrb[0].mxu0
      %v2768 = vadd.f32 0.0, %v2767
      %v2769 = vpop.f32.mrb[0].mxu0
      %2770 = vmatprep.mubr.f32.mxu0 0.0
      %2771 = vmatmul.mubr.f32.gmra.mrb[0].mxu0 %v2673
      %v2772 = vpop.f32.mrb[0].mxu0
      %v2773 = vadd.f32 0.0, %v2772
      %v2774 = vpop.f32.mrb[0].mxu0
      %2775 = vmatprep.mubr.f32.mxu0 0.0
      %2776 = vmatmul.mubr.f32.gmra.mrb[0].mxu0 %v2676
      %v2777 = vpop.f32.mrb[0].mxu0
      %v2778 = vadd.f32 0.0, %v2777
      %v2779 = vpop.f32.mrb[0].mxu0
      %2780 = vmatprep.mubr.f32.mxu0 0.0
      %2781 = vmatmul.mubr.f32.gmra.mrb[0].mxu0 %v2679
      %v2782 = vpop.f32.mrb[0].mxu0
      %v2783 = vadd.f32 0.0, %v2782
      %v2784 = vpop.f32.mrb[0].mxu0
      %2785 = vdwg.mxu0
      %v2786 = vadd.f32 %v2643, %v2748
      %v2787 = vadd.f32 %v2644, %v2753
      %v2788 = vadd.f32 %v2645, %v2758
      %v2789 = vadd.f32 %v2646, %v2763
      %v2790 = vadd.f32 %v2647, %v2768
      %v2791 = vadd.f32 %v2648, %v2773
      %v2792 = vadd.f32 %v2649, %v2778
      %v2793 = vadd.f32 %v2650, %v2783
      %2794 = vst.msk [vmem:[#allocation3] sm:$0xff] %vm358, %v2786
      %2795 = vst.msk [vmem:[#allocation3 + $0x8] sm:$0xff] %vm358, %v2787
      %2796 = vst.msk [vmem:[#allocation3 + $0x10] sm:$0xff] %vm358, %v2788
      %2797 = vst.msk [vmem:[#allocation3 + $0x18] sm:$0xff] %vm358, %v2789
      %2798 = vst.msk [vmem:[#allocation3 + $0x20] sm:$0xff] %vm358, %v2790
      %2799 = vst.msk [vmem:[#allocation3 + $0x28] sm:$0xff] %vm358, %v2791
      %2800 = vst.msk [vmem:[#allocation3 + $0x30] sm:$0xff] %vm358, %v2792
      %2801 = vst.msk [vmem:[#allocation3 + $0x38] sm:$0xff] %vm358, %v2793
      %v2802 = vld [vmem:[%s314 + $0x2] sm:$0xff]
      %v2803 = vld [vmem:[%s314 + $0x12] sm:$0xff]
      %v2804 = vld [vmem:[%s314 + $0x22] sm:$0xff]
      %v2805 = vld [vmem:[%s314 + $0x32] sm:$0xff]
      %v2806 = vld [vmem:[%s314 + $0x42] sm:$0xff]
      %v2807 = vld [vmem:[%s314 + $0x52] sm:$0xff]
      %v2808 = vld [vmem:[%s314 + $0x62] sm:$0xff]
      %v2809 = vld [vmem:[%s314 + $0x72] sm:$0xff]
      %v2810 = vld [vmem:[#allocation3] sm:$0xff]
      %v2811 = vld [vmem:[#allocation3 + $0x8] sm:$0xff]
      %v2812 = vld [vmem:[#allocation3 + $0x10] sm:$0xff]
      %v2813 = vld [vmem:[#allocation3 + $0x18] sm:$0xff]
      %v2814 = vld [vmem:[#allocation3 + $0x20] sm:$0xff]
      %v2815 = vld [vmem:[#allocation3 + $0x28] sm:$0xff]
      %v2816 = vld [vmem:[#allocation3 + $0x30] sm:$0xff]
      %v2817 = vld [vmem:[#allocation3 + $0x38] sm:$0xff]
      %s2818 = scalar_lea.vmem %s4, 200
      %v2819 = vld [vmem:[%s2818] sm:$0xff]
      %v2820 = vld [vmem:[%s2818 + $0x8] sm:$0xff]
      %v2821 = vld [vmem:[%s2818 + $0x10] sm:$0xff]
      %v2822 = vld [vmem:[%s2818 + $0x18] sm:$0xff]
      %v2823 = vld [vmem:[%s2818 + $0x20] sm:$0xff]
      %v2825 = vsel %vm225, %v2802, 0
      %v2828 = vsel %vm225, %v2803, 0
      %v2831 = vsel %vm225, %v2804, 0
      %v2834 = vsel %vm225, %v2805, 0
      %v2837 = vsel %vm225, %v2806, 0
      %v2840 = vsel %vm225, %v2807, 0
      %v2843 = vsel %vm225, %v2808, 0
      %v2846 = vsel %vm225, %v2809, 0
      %2848 = vmatprep.subr.mxu0 0.0
      %2849 = vmatpush1.msra.mxu0 %v2819
      %2850 = vmatprep.subr.mxu0 0.0
      %2851 = vmatpush1.msra.mxu0 %v2820
      %2852 = vmatprep.subr.mxu0 0.0
      %2853 = vmatpush1.msra.mxu0 %v2821
      %2854 = vmatprep.subr.mxu0 0.0
      %2855 = vmatpush1.msra.mxu0 %v2822
      %2856 = vmatprep.subr.mxu0 0.0
      %2857 = vmatpush1.msra.mxu0 %v2823
      %2858 = vmatprep.subr.mxu0 0.0
      %2859 = vmatpush1.msra.mxu0 0.0
      %2860 = vmatprep.subr.mxu0 0.0
      %2861 = vmatpush1.msra.mxu0 0.0
      %2862 = vmatprep.subr.mxu0 0.0
      %2863 = vmatpush1.msra.mxu0 0.0
      %2864 = vmatprep.subr.mxu0 0.0
      %2865 = vmatpush1.msra.mxu0 0.0
      %2866 = vmatprep.subr.mxu0 0.0
      %2867 = vmatpush1.msra.mxu0 0.0
      %2868 = vmatprep.subr.mxu0 0.0
      %2869 = vmatpush1.msra.mxu0 0.0
      %2870 = vmatprep.subr.mxu0 0.0
      %2871 = vmatpush1.msra.mxu0 0.0
      %2872 = vmatprep.subr.mxu0 0.0
      %2873 = vmatpush1.msra.mxu0 0.0
      %2874 = vmatprep.subr.mxu0 0.0
      %2875 = vmatpush1.msra.mxu0 0.0
      %2876 = vmatprep.subr.mxu0 0.0
      %2877 = vmatpush1.msra.mxu0 0.0
      %2878 = vmatprep.subr.mxu0 0.0
      %2879 = vmatpush1.msra.mxu0 0.0
      %2880 = vmatprep.subr.mxu0 0.0
      %2881 = vmatpush1.msra.mxu0 0.0
      %2882 = vmatprep.subr.mxu0 0.0
      %2883 = vmatpush1.msra.mxu0 0.0
      %2884 = vmatprep.subr.mxu0 0.0
      %2885 = vmatpush1.msra.mxu0 0.0
      %2886 = vmatprep.subr.mxu0 0.0
      %2887 = vmatpush1.msra.mxu0 0.0
      %2888 = vmatprep.subr.mxu0 0.0
      %2889 = vmatpush1.msra.mxu0 0.0
      %2890 = vmatprep.subr.mxu0 0.0
      %2891 = vmatpush1.msra.mxu0 0.0
      %2892 = vmatprep.subr.mxu0 0.0
      %2893 = vmatpush1.msra.mxu0 0.0
      %2894 = vmatprep.subr.mxu0 0.0
      %2895 = vmatpush1.msra.mxu0 0.0
      %2896 = vmatprep.subr.mxu0 0.0
      %2897 = vmatpush1.msra.mxu0 0.0
      %2898 = vmatprep.subr.mxu0 0.0
      %2899 = vmatpush1.msra.mxu0 0.0
      %2900 = vmatprep.subr.mxu0 0.0
      %2901 = vmatpush1.msra.mxu0 0.0
      %2902 = vmatprep.subr.mxu0 0.0
      %2903 = vmatpush1.msra.mxu0 0.0
      %2904 = vmatprep.subr.mxu0 0.0
      %2905 = vmatpush1.msra.mxu0 0.0
      %2906 = vmatprep.subr.mxu0 0.0
      %2907 = vmatpush1.msra.mxu0 0.0
      %2908 = vmatprep.subr.mxu0 0.0
      %2909 = vmatpush1.msra.mxu0 0.0
      %2910 = vmatprep.subr.mxu0 0.0
      %2911 = vmatpush1.msra.mxu0 0.0
      %2912 = vmatprep.mubr.f32.mxu0 0.0
      %2913 = vmatmul.mubr.f32.gmra.mrb[0].mxu0 %v2825
      %v2914 = vpop.f32.mrb[0].mxu0
      %v2915 = vadd.f32 0.0, %v2914
      %v2916 = vpop.f32.mrb[0].mxu0
      %2917 = vmatprep.mubr.f32.mxu0 0.0
      %2918 = vmatmul.mubr.f32.gmra.mrb[0].mxu0 %v2828
      %v2919 = vpop.f32.mrb[0].mxu0
      %v2920 = vadd.f32 0.0, %v2919
      %v2921 = vpop.f32.mrb[0].mxu0
      %2922 = vmatprep.mubr.f32.mxu0 0.0
      %2923 = vmatmul.mubr.f32.gmra.mrb[0].mxu0 %v2831
      %v2924 = vpop.f32.mrb[0].mxu0
      %v2925 = vadd.f32 0.0, %v2924
      %v2926 = vpop.f32.mrb[0].mxu0
      %2927 = vmatprep.mubr.f32.mxu0 0.0
      %2928 = vmatmul.mubr.f32.gmra.mrb[0].mxu0 %v2834
      %v2929 = vpop.f32.mrb[0].mxu0
      %v2930 = vadd.f32 0.0, %v2929
      %v2931 = vpop.f32.mrb[0].mxu0
      %2932 = vmatprep.mubr.f32.mxu0 0.0
      %2933 = vmatmul.mubr.f32.gmra.mrb[0].mxu0 %v2837
      %v2934 = vpop.f32.mrb[0].mxu0
      %v2935 = vadd.f32 0.0, %v2934
      %v2936 = vpop.f32.mrb[0].mxu0
      %2937 = vmatprep.mubr.f32.mxu0 0.0
      %2938 = vmatmul.mubr.f32.gmra.mrb[0].mxu0 %v2840
      %v2939 = vpop.f32.mrb[0].mxu0
      %v2940 = vadd.f32 0.0, %v2939
      %v2941 = vpop.f32.mrb[0].mxu0
      %2942 = vmatprep.mubr.f32.mxu0 0.0
      %2943 = vmatmul.mubr.f32.gmra.mrb[0].mxu0 %v2843
      %v2944 = vpop.f32.mrb[0].mxu0
      %v2945 = vadd.f32 0.0, %v2944
      %v2946 = vpop.f32.mrb[0].mxu0
      %2947 = vmatprep.mubr.f32.mxu0 0.0
      %2948 = vmatmul.mubr.f32.gmra.mrb[0].mxu0 %v2846
      %v2949 = vpop.f32.mrb[0].mxu0
      %v2950 = vadd.f32 0.0, %v2949
      %v2951 = vpop.f32.mrb[0].mxu0
      %2952 = vdwg.mxu0
      %v2953 = vadd.f32 %v2810, %v2915
      %v2954 = vadd.f32 %v2811, %v2920
      %v2955 = vadd.f32 %v2812, %v2925
      %v2956 = vadd.f32 %v2813, %v2930
      %v2957 = vadd.f32 %v2814, %v2935
      %v2958 = vadd.f32 %v2815, %v2940
      %v2959 = vadd.f32 %v2816, %v2945
      %v2960 = vadd.f32 %v2817, %v2950
      %2961 = vst.msk [vmem:[#allocation3] sm:$0xff] %vm358, %v2953
      %2962 = vst.msk [vmem:[#allocation3 + $0x8] sm:$0xff] %vm358, %v2954
      %2963 = vst.msk [vmem:[#allocation3 + $0x10] sm:$0xff] %vm358, %v2955
      %2964 = vst.msk [vmem:[#allocation3 + $0x18] sm:$0xff] %vm358, %v2956
      %2965 = vst.msk [vmem:[#allocation3 + $0x20] sm:$0xff] %vm358, %v2957
      %2966 = vst.msk [vmem:[#allocation3 + $0x28] sm:$0xff] %vm358, %v2958
      %2967 = vst.msk [vmem:[#allocation3 + $0x30] sm:$0xff] %vm358, %v2959
      %2968 = vst.msk [vmem:[#allocation3 + $0x38] sm:$0xff] %vm358, %v2960
      %v2969 = vld [vmem:[%s1368] sm:$0xff]
      %v2970 = vld [vmem:[%s1368 + $0x10] sm:$0xff]
      %v2971 = vld [vmem:[%s1368 + $0x20] sm:$0xff]
      %v2972 = vld [vmem:[%s1368 + $0x30] sm:$0xff]
      %v2973 = vld [vmem:[%s1368 + $0x40] sm:$0xff]
      %v2974 = vld [vmem:[%s1368 + $0x50] sm:$0xff]
      %v2975 = vld [vmem:[%s1368 + $0x60] sm:$0xff]
      %v2976 = vld [vmem:[%s1368 + $0x70] sm:$0xff]
      %v2977 = vld [vmem:[#allocation3] sm:$0xff]
      %v2978 = vld [vmem:[#allocation3 + $0x8] sm:$0xff]
      %v2979 = vld [vmem:[#allocation3 + $0x10] sm:$0xff]
      %v2980 = vld [vmem:[#allocation3 + $0x18] sm:$0xff]
      %v2981 = vld [vmem:[#allocation3 + $0x20] sm:$0xff]
      %v2982 = vld [vmem:[#allocation3 + $0x28] sm:$0xff]
      %v2983 = vld [vmem:[#allocation3 + $0x30] sm:$0xff]
      %v2984 = vld [vmem:[#allocation3 + $0x38] sm:$0xff]
      %s2985 = scalar_lea.vmem %s4, 240
      %v2986 = vld [vmem:[%s2985] sm:$0xff]
      %v2987 = vld [vmem:[%s2985 + $0x8] sm:$0xff]
      %v2988 = vld [vmem:[%s2985 + $0x10] sm:$0xff]
      %v2989 = vld [vmem:[%s2985 + $0x18] sm:$0xff]
      %v2990 = vld [vmem:[%s2985 + $0x20] sm:$0xff]
      %v2992 = vsel %vm225, %v2969, 0
      %v2995 = vsel %vm225, %v2970, 0
      %v2998 = vsel %vm225, %v2971, 0
      %v3001 = vsel %vm225, %v2972, 0
      %v3004 = vsel %vm225, %v2973, 0
      %v3007 = vsel %vm225, %v2974, 0
      %v3010 = vsel %vm225, %v2975, 0
      %v3013 = vsel %vm225, %v2976, 0
      %3015 = vmatprep.subr.mxu0 0.0
      %3016 = vmatpush1.msra.mxu0 %v2986
      %3017 = vmatprep.subr.mxu0 0.0
      %3018 = vmatpush1.msra.mxu0 %v2987
      %3019 = vmatprep.subr.mxu0 0.0
      %3020 = vmatpush1.msra.mxu0 %v2988
      %3021 = vmatprep.subr.mxu0 0.0
      %3022 = vmatpush1.msra.mxu0 %v2989
      %3023 = vmatprep.subr.mxu0 0.0
      %3024 = vmatpush1.msra.mxu0 %v2990
      %3025 = vmatprep.subr.mxu0 0.0
      %3026 = vmatpush1.msra.mxu0 0.0
      %3027 = vmatprep.subr.mxu0 0.0
      %3028 = vmatpush1.msra.mxu0 0.0
      %3029 = vmatprep.subr.mxu0 0.0
      %3030 = vmatpush1.msra.mxu0 0.0
      %3031 = vmatprep.subr.mxu0 0.0
      %3032 = vmatpush1.msra.mxu0 0.0
      %3033 = vmatprep.subr.mxu0 0.0
      %3034 = vmatpush1.msra.mxu0 0.0
      %3035 = vmatprep.subr.mxu0 0.0
      %3036 = vmatpush1.msra.mxu0 0.0
      %3037 = vmatprep.subr.mxu0 0.0
      %3038 = vmatpush1.msra.mxu0 0.0
      %3039 = vmatprep.subr.mxu0 0.0
      %3040 = vmatpush1.msra.mxu0 0.0
      %3041 = vmatprep.subr.mxu0 0.0
      %3042 = vmatpush1.msra.mxu0 0.0
      %3043 = vmatprep.subr.mxu0 0.0
      %3044 = vmatpush1.msra.mxu0 0.0
      %3045 = vmatprep.subr.mxu0 0.0
      %3046 = vmatpush1.msra.mxu0 0.0
      %3047 = vmatprep.subr.mxu0 0.0
      %3048 = vmatpush1.msra.mxu0 0.0
      %3049 = vmatprep.subr.mxu0 0.0
      %3050 = vmatpush1.msra.mxu0 0.0
      %3051 = vmatprep.subr.mxu0 0.0
      %3052 = vmatpush1.msra.mxu0 0.0
      %3053 = vmatprep.subr.mxu0 0.0
      %3054 = vmatpush1.msra.mxu0 0.0
      %3055 = vmatprep.subr.mxu0 0.0
      %3056 = vmatpush1.msra.mxu0 0.0
      %3057 = vmatprep.subr.mxu0 0.0
      %3058 = vmatpush1.msra.mxu0 0.0
      %3059 = vmatprep.subr.mxu0 0.0
      %3060 = vmatpush1.msra.mxu0 0.0
      %3061 = vmatprep.subr.mxu0 0.0
      %3062 = vmatpush1.msra.mxu0 0.0
      %3063 = vmatprep.subr.mxu0 0.0
      %3064 = vmatpush1.msra.mxu0 0.0
      %3065 = vmatprep.subr.mxu0 0.0
      %3066 = vmatpush1.msra.mxu0 0.0
      %3067 = vmatprep.subr.mxu0 0.0
      %3068 = vmatpush1.msra.mxu0 0.0
      %3069 = vmatprep.subr.mxu0 0.0
      %3070 = vmatpush1.msra.mxu0 0.0
      %3071 = vmatprep.subr.mxu0 0.0
      %3072 = vmatpush1.msra.mxu0 0.0
      %3073 = vmatprep.subr.mxu0 0.0
      %3074 = vmatpush1.msra.mxu0 0.0
      %3075 = vmatprep.subr.mxu0 0.0
      %3076 = vmatpush1.msra.mxu0 0.0
      %3077 = vmatprep.subr.mxu0 0.0
      %3078 = vmatpush1.msra.mxu0 0.0
      %3079 = vmatprep.mubr.f32.mxu0 0.0
      %3080 = vmatmul.mubr.f32.gmra.mrb[0].mxu0 %v2992
      %v3081 = vpop.f32.mrb[0].mxu0
      %v3082 = vadd.f32 0.0, %v3081
      %v3083 = vpop.f32.mrb[0].mxu0
      %3084 = vmatprep.mubr.f32.mxu0 0.0
      %3085 = vmatmul.mubr.f32.gmra.mrb[0].mxu0 %v2995
      %v3086 = vpop.f32.mrb[0].mxu0
      %v3087 = vadd.f32 0.0, %v3086
      %v3088 = vpop.f32.mrb[0].mxu0
      %3089 = vmatprep.mubr.f32.mxu0 0.0
      %3090 = vmatmul.mubr.f32.gmra.mrb[0].mxu0 %v2998
      %v3091 = vpop.f32.mrb[0].mxu0
      %v3092 = vadd.f32 0.0, %v3091
      %v3093 = vpop.f32.mrb[0].mxu0
      %3094 = vmatprep.mubr.f32.mxu0 0.0
      %3095 = vmatmul.mubr.f32.gmra.mrb[0].mxu0 %v3001
      %v3096 = vpop.f32.mrb[0].mxu0
      %v3097 = vadd.f32 0.0, %v3096
      %v3098 = vpop.f32.mrb[0].mxu0
      %3099 = vmatprep.mubr.f32.mxu0 0.0
      %3100 = vmatmul.mubr.f32.gmra.mrb[0].mxu0 %v3004
      %v3101 = vpop.f32.mrb[0].mxu0
      %v3102 = vadd.f32 0.0, %v3101
      %v3103 = vpop.f32.mrb[0].mxu0
      %3104 = vmatprep.mubr.f32.mxu0 0.0
      %3105 = vmatmul.mubr.f32.gmra.mrb[0].mxu0 %v3007
      %v3106 = vpop.f32.mrb[0].mxu0
      %v3107 = vadd.f32 0.0, %v3106
      %v3108 = vpop.f32.mrb[0].mxu0
      %3109 = vmatprep.mubr.f32.mxu0 0.0
      %3110 = vmatmul.mubr.f32.gmra.mrb[0].mxu0 %v3010
      %v3111 = vpop.f32.mrb[0].mxu0
      %v3112 = vadd.f32 0.0, %v3111
      %v3113 = vpop.f32.mrb[0].mxu0
      %3114 = vmatprep.mubr.f32.mxu0 0.0
      %3115 = vmatmul.mubr.f32.gmra.mrb[0].mxu0 %v3013
      %v3116 = vpop.f32.mrb[0].mxu0
      %v3117 = vadd.f32 0.0, %v3116
      %v3118 = vpop.f32.mrb[0].mxu0
      %3119 = vdwg.mxu0
      %v3120 = vadd.f32 %v2977, %v3082
      %v3121 = vadd.f32 %v2978, %v3087
      %v3122 = vadd.f32 %v2979, %v3092
      %v3123 = vadd.f32 %v2980, %v3097
      %v3124 = vadd.f32 %v2981, %v3102
      %v3125 = vadd.f32 %v2982, %v3107
      %v3126 = vadd.f32 %v2983, %v3112
      %v3127 = vadd.f32 %v2984, %v3117
      %3128 = vst.msk [vmem:[#allocation3] sm:$0xff] %vm358, %v3120
      %3129 = vst.msk [vmem:[#allocation3 + $0x8] sm:$0xff] %vm358, %v3121
      %3130 = vst.msk [vmem:[#allocation3 + $0x10] sm:$0xff] %vm358, %v3122
      %3131 = vst.msk [vmem:[#allocation3 + $0x18] sm:$0xff] %vm358, %v3123
      %3132 = vst.msk [vmem:[#allocation3 + $0x20] sm:$0xff] %vm358, %v3124
      %3133 = vst.msk [vmem:[#allocation3 + $0x28] sm:$0xff] %vm358, %v3125
      %3134 = vst.msk [vmem:[#allocation3 + $0x30] sm:$0xff] %vm358, %v3126
      %3135 = vst.msk [vmem:[#allocation3 + $0x38] sm:$0xff] %vm358, %v3127
      %v3136 = vld [vmem:[%s1368 + $0x1] sm:$0xff]
      %v3137 = vld [vmem:[%s1368 + $0x11] sm:$0xff]
      %v3138 = vld [vmem:[%s1368 + $0x21] sm:$0xff]
      %v3139 = vld [vmem:[%s1368 + $0x31] sm:$0xff]
      %v3140 = vld [vmem:[%s1368 + $0x41] sm:$0xff]
      %v3141 = vld [vmem:[%s1368 + $0x51] sm:$0xff]
      %v3142 = vld [vmem:[%s1368 + $0x61] sm:$0xff]
      %v3143 = vld [vmem:[%s1368 + $0x71] sm:$0xff]
      %v3144 = vld [vmem:[#allocation3] sm:$0xff]
      %v3145 = vld [vmem:[#allocation3 + $0x8] sm:$0xff]
      %v3146 = vld [vmem:[#allocation3 + $0x10] sm:$0xff]
      %v3147 = vld [vmem:[#allocation3 + $0x18] sm:$0xff]
      %v3148 = vld [vmem:[#allocation3 + $0x20] sm:$0xff]
      %v3149 = vld [vmem:[#allocation3 + $0x28] sm:$0xff]
      %v3150 = vld [vmem:[#allocation3 + $0x30] sm:$0xff]
      %v3151 = vld [vmem:[#allocation3 + $0x38] sm:$0xff]
      %s3152 = scalar_lea.vmem %s4, 280
      %v3153 = vld [vmem:[%s3152] sm:$0xff]
      %v3154 = vld [vmem:[%s3152 + $0x8] sm:$0xff]
      %v3155 = vld [vmem:[%s3152 + $0x10] sm:$0xff]
      %v3156 = vld [vmem:[%s3152 + $0x18] sm:$0xff]
      %v3157 = vld [vmem:[%s3152 + $0x20] sm:$0xff]
      %v3159 = vsel %vm225, %v3136, 0
      %v3162 = vsel %vm225, %v3137, 0
      %v3165 = vsel %vm225, %v3138, 0
      %v3168 = vsel %vm225, %v3139, 0
      %v3171 = vsel %vm225, %v3140, 0
      %v3174 = vsel %vm225, %v3141, 0
      %v3177 = vsel %vm225, %v3142, 0
      %v3180 = vsel %vm225, %v3143, 0
      %3182 = vmatprep.subr.mxu0 0.0
      %3183 = vmatpush1.msra.mxu0 %v3153
      %3184 = vmatprep.subr.mxu0 0.0
      %3185 = vmatpush1.msra.mxu0 %v3154
      %3186 = vmatprep.subr.mxu0 0.0
      %3187 = vmatpush1.msra.mxu0 %v3155
      %3188 = vmatprep.subr.mxu0 0.0
      %3189 = vmatpush1.msra.mxu0 %v3156
      %3190 = vmatprep.subr.mxu0 0.0
      %3191 = vmatpush1.msra.mxu0 %v3157
      %3192 = vmatprep.subr.mxu0 0.0
      %3193 = vmatpush1.msra.mxu0 0.0
      %3194 = vmatprep.subr.mxu0 0.0
      %3195 = vmatpush1.msra.mxu0 0.0
      %3196 = vmatprep.subr.mxu0 0.0
      %3197 = vmatpush1.msra.mxu0 0.0
      %3198 = vmatprep.subr.mxu0 0.0
      %3199 = vmatpush1.msra.mxu0 0.0
      %3200 = vmatprep.subr.mxu0 0.0
      %3201 = vmatpush1.msra.mxu0 0.0
      %3202 = vmatprep.subr.mxu0 0.0
      %3203 = vmatpush1.msra.mxu0 0.0
      %3204 = vmatprep.subr.mxu0 0.0
      %3205 = vmatpush1.msra.mxu0 0.0
      %3206 = vmatprep.subr.mxu0 0.0
      %3207 = vmatpush1.msra.mxu0 0.0
      %3208 = vmatprep.subr.mxu0 0.0
      %3209 = vmatpush1.msra.mxu0 0.0
      %3210 = vmatprep.subr.mxu0 0.0
      %3211 = vmatpush1.msra.mxu0 0.0
      %3212 = vmatprep.subr.mxu0 0.0
      %3213 = vmatpush1.msra.mxu0 0.0
      %3214 = vmatprep.subr.mxu0 0.0
      %3215 = vmatpush1.msra.mxu0 0.0
      %3216 = vmatprep.subr.mxu0 0.0
      %3217 = vmatpush1.msra.mxu0 0.0
      %3218 = vmatprep.subr.mxu0 0.0
      %3219 = vmatpush1.msra.mxu0 0.0
      %3220 = vmatprep.subr.mxu0 0.0
      %3221 = vmatpush1.msra.mxu0 0.0
      %3222 = vmatprep.subr.mxu0 0.0
      %3223 = vmatpush1.msra.mxu0 0.0
      %3224 = vmatprep.subr.mxu0 0.0
      %3225 = vmatpush1.msra.mxu0 0.0
      %3226 = vmatprep.subr.mxu0 0.0
      %3227 = vmatpush1.msra.mxu0 0.0
      %3228 = vmatprep.subr.mxu0 0.0
      %3229 = vmatpush1.msra.mxu0 0.0
      %3230 = vmatprep.subr.mxu0 0.0
      %3231 = vmatpush1.msra.mxu0 0.0
      %3232 = vmatprep.subr.mxu0 0.0
      %3233 = vmatpush1.msra.mxu0 0.0
      %3234 = vmatprep.subr.mxu0 0.0
      %3235 = vmatpush1.msra.mxu0 0.0
      %3236 = vmatprep.subr.mxu0 0.0
      %3237 = vmatpush1.msra.mxu0 0.0
      %3238 = vmatprep.subr.mxu0 0.0
      %3239 = vmatpush1.msra.mxu0 0.0
      %3240 = vmatprep.subr.mxu0 0.0
      %3241 = vmatpush1.msra.mxu0 0.0
      %3242 = vmatprep.subr.mxu0 0.0
      %3243 = vmatpush1.msra.mxu0 0.0
      %3244 = vmatprep.subr.mxu0 0.0
      %3245 = vmatpush1.msra.mxu0 0.0
      %3246 = vmatprep.mubr.f32.mxu0 0.0
      %3247 = vmatmul.mubr.f32.gmra.mrb[0].mxu0 %v3159
      %v3248 = vpop.f32.mrb[0].mxu0
      %v3249 = vadd.f32 0.0, %v3248
      %v3250 = vpop.f32.mrb[0].mxu0
      %3251 = vmatprep.mubr.f32.mxu0 0.0
      %3252 = vmatmul.mubr.f32.gmra.mrb[0].mxu0 %v3162
      %v3253 = vpop.f32.mrb[0].mxu0
      %v3254 = vadd.f32 0.0, %v3253
      %v3255 = vpop.f32.mrb[0].mxu0
      %3256 = vmatprep.mubr.f32.mxu0 0.0
      %3257 = vmatmul.mubr.f32.gmra.mrb[0].mxu0 %v3165
      %v3258 = vpop.f32.mrb[0].mxu0
      %v3259 = vadd.f32 0.0, %v3258
      %v3260 = vpop.f32.mrb[0].mxu0
      %3261 = vmatprep.mubr.f32.mxu0 0.0
      %3262 = vmatmul.mubr.f32.gmra.mrb[0].mxu0 %v3168
      %v3263 = vpop.f32.mrb[0].mxu0
      %v3264 = vadd.f32 0.0, %v3263
      %v3265 = vpop.f32.mrb[0].mxu0
      %3266 = vmatprep.mubr.f32.mxu0 0.0
      %3267 = vmatmul.mubr.f32.gmra.mrb[0].mxu0 %v3171
      %v3268 = vpop.f32.mrb[0].mxu0
      %v3269 = vadd.f32 0.0, %v3268
      %v3270 = vpop.f32.mrb[0].mxu0
      %3271 = vmatprep.mubr.f32.mxu0 0.0
      %3272 = vmatmul.mubr.f32.gmra.mrb[0].mxu0 %v3174
      %v3273 = vpop.f32.mrb[0].mxu0
      %v3274 = vadd.f32 0.0, %v3273
      %v3275 = vpop.f32.mrb[0].mxu0
      %3276 = vmatprep.mubr.f32.mxu0 0.0
      %3277 = vmatmul.mubr.f32.gmra.mrb[0].mxu0 %v3177
      %v3278 = vpop.f32.mrb[0].mxu0
      %v3279 = vadd.f32 0.0, %v3278
      %v3280 = vpop.f32.mrb[0].mxu0
      %3281 = vmatprep.mubr.f32.mxu0 0.0
      %3282 = vmatmul.mubr.f32.gmra.mrb[0].mxu0 %v3180
      %v3283 = vpop.f32.mrb[0].mxu0
      %v3284 = vadd.f32 0.0, %v3283
      %v3285 = vpop.f32.mrb[0].mxu0
      %3286 = vdwg.mxu0
      %v3287 = vadd.f32 %v3144, %v3249
      %v3288 = vadd.f32 %v3145, %v3254
      %v3289 = vadd.f32 %v3146, %v3259
      %v3290 = vadd.f32 %v3147, %v3264
      %v3291 = vadd.f32 %v3148, %v3269
      %v3292 = vadd.f32 %v3149, %v3274
      %v3293 = vadd.f32 %v3150, %v3279
      %v3294 = vadd.f32 %v3151, %v3284
      %3295 = vst.msk [vmem:[#allocation3] sm:$0xff] %vm358, %v3287
      %3296 = vst.msk [vmem:[#allocation3 + $0x8] sm:$0xff] %vm358, %v3288
      %3297 = vst.msk [vmem:[#allocation3 + $0x10] sm:$0xff] %vm358, %v3289
      %3298 = vst.msk [vmem:[#allocation3 + $0x18] sm:$0xff] %vm358, %v3290
      %3299 = vst.msk [vmem:[#allocation3 + $0x20] sm:$0xff] %vm358, %v3291
      %3300 = vst.msk [vmem:[#allocation3 + $0x28] sm:$0xff] %vm358, %v3292
      %3301 = vst.msk [vmem:[#allocation3 + $0x30] sm:$0xff] %vm358, %v3293
      %3302 = vst.msk [vmem:[#allocation3 + $0x38] sm:$0xff] %vm358, %v3294
      %v3303 = vld [vmem:[%s1368 + $0x2] sm:$0xff]
      %v3304 = vld [vmem:[%s1368 + $0x12] sm:$0xff]
      %v3305 = vld [vmem:[%s1368 + $0x22] sm:$0xff]
      %v3306 = vld [vmem:[%s1368 + $0x32] sm:$0xff]
      %v3307 = vld [vmem:[%s1368 + $0x42] sm:$0xff]
      %v3308 = vld [vmem:[%s1368 + $0x52] sm:$0xff]
      %v3309 = vld [vmem:[%s1368 + $0x62] sm:$0xff]
      %v3310 = vld [vmem:[%s1368 + $0x72] sm:$0xff]
      %v3311 = vld [vmem:[#allocation3] sm:$0xff]
      %v3312 = vld [vmem:[#allocation3 + $0x8] sm:$0xff]
      %v3313 = vld [vmem:[#allocation3 + $0x10] sm:$0xff]
      %v3314 = vld [vmem:[#allocation3 + $0x18] sm:$0xff]
      %v3315 = vld [vmem:[#allocation3 + $0x20] sm:$0xff]
      %v3316 = vld [vmem:[#allocation3 + $0x28] sm:$0xff]
      %v3317 = vld [vmem:[#allocation3 + $0x30] sm:$0xff]
      %v3318 = vld [vmem:[#allocation3 + $0x38] sm:$0xff]
      %s3319 = scalar_lea.vmem %s4, 320
      %v3320 = vld [vmem:[%s3319] sm:$0xff]
      %v3321 = vld [vmem:[%s3319 + $0x8] sm:$0xff]
      %v3322 = vld [vmem:[%s3319 + $0x10] sm:$0xff]
      %v3323 = vld [vmem:[%s3319 + $0x18] sm:$0xff]
      %v3324 = vld [vmem:[%s3319 + $0x20] sm:$0xff]
      %v3326 = vsel %vm225, %v3303, 0
      %v3329 = vsel %vm225, %v3304, 0
      %v3332 = vsel %vm225, %v3305, 0
      %v3335 = vsel %vm225, %v3306, 0
      %v3338 = vsel %vm225, %v3307, 0
      %v3341 = vsel %vm225, %v3308, 0
      %v3344 = vsel %vm225, %v3309, 0
      %v3347 = vsel %vm225, %v3310, 0
      %3349 = vmatprep.subr.mxu0 0.0
      %3350 = vmatpush1.msra.mxu0 %v3320
      %3351 = vmatprep.subr.mxu0 0.0
      %3352 = vmatpush1.msra.mxu0 %v3321
      %3353 = vmatprep.subr.mxu0 0.0
      %3354 = vmatpush1.msra.mxu0 %v3322
      %3355 = vmatprep.subr.mxu0 0.0
      %3356 = vmatpush1.msra.mxu0 %v3323
      %3357 = vmatprep.subr.mxu0 0.0
      %3358 = vmatpush1.msra.mxu0 %v3324
      %3359 = vmatprep.subr.mxu0 0.0
      %3360 = vmatpush1.msra.mxu0 0.0
      %3361 = vmatprep.subr.mxu0 0.0
      %3362 = vmatpush1.msra.mxu0 0.0
      %3363 = vmatprep.subr.mxu0 0.0
      %3364 = vmatpush1.msra.mxu0 0.0
      %3365 = vmatprep.subr.mxu0 0.0
      %3366 = vmatpush1.msra.mxu0 0.0
      %3367 = vmatprep.subr.mxu0 0.0
      %3368 = vmatpush1.msra.mxu0 0.0
      %3369 = vmatprep.subr.mxu0 0.0
      %3370 = vmatpush1.msra.mxu0 0.0
      %3371 = vmatprep.subr.mxu0 0.0
      %3372 = vmatpush1.msra.mxu0 0.0
      %3373 = vmatprep.subr.mxu0 0.0
      %3374 = vmatpush1.msra.mxu0 0.0
      %3375 = vmatprep.subr.mxu0 0.0
      %3376 = vmatpush1.msra.mxu0 0.0
      %3377 = vmatprep.subr.mxu0 0.0
      %3378 = vmatpush1.msra.mxu0 0.0
      %3379 = vmatprep.subr.mxu0 0.0
      %3380 = vmatpush1.msra.mxu0 0.0
      %3381 = vmatprep.subr.mxu0 0.0
      %3382 = vmatpush1.msra.mxu0 0.0
      %3383 = vmatprep.subr.mxu0 0.0
      %3384 = vmatpush1.msra.mxu0 0.0
      %3385 = vmatprep.subr.mxu0 0.0
      %3386 = vmatpush1.msra.mxu0 0.0
      %3387 = vmatprep.subr.mxu0 0.0
      %3388 = vmatpush1.msra.mxu0 0.0
      %3389 = vmatprep.subr.mxu0 0.0
      %3390 = vmatpush1.msra.mxu0 0.0
      %3391 = vmatprep.subr.mxu0 0.0
      %3392 = vmatpush1.msra.mxu0 0.0
      %3393 = vmatprep.subr.mxu0 0.0
      %3394 = vmatpush1.msra.mxu0 0.0
      %3395 = vmatprep.subr.mxu0 0.0
      %3396 = vmatpush1.msra.mxu0 0.0
      %3397 = vmatprep.subr.mxu0 0.0
      %3398 = vmatpush1.msra.mxu0 0.0
      %3399 = vmatprep.subr.mxu0 0.0
      %3400 = vmatpush1.msra.mxu0 0.0
      %3401 = vmatprep.subr.mxu0 0.0
      %3402 = vmatpush1.msra.mxu0 0.0
      %3403 = vmatprep.subr.mxu0 0.0
      %3404 = vmatpush1.msra.mxu0 0.0
      %3405 = vmatprep.subr.mxu0 0.0
      %3406 = vmatpush1.msra.mxu0 0.0
      %3407 = vmatprep.subr.mxu0 0.0
      %3408 = vmatpush1.msra.mxu0 0.0
      %3409 = vmatprep.subr.mxu0 0.0
      %3410 = vmatpush1.msra.mxu0 0.0
      %3411 = vmatprep.subr.mxu0 0.0
      %3412 = vmatpush1.msra.mxu0 0.0
      %3413 = vmatprep.mubr.f32.mxu0 0.0
      %3414 = vmatmul.mubr.f32.gmra.mrb[0].mxu0 %v3326
      %v3415 = vpop.f32.mrb[0].mxu0
      %v3416 = vadd.f32 0.0, %v3415
      %v3417 = vpop.f32.mrb[0].mxu0
      %3418 = vmatprep.mubr.f32.mxu0 0.0
      %3419 = vmatmul.mubr.f32.gmra.mrb[0].mxu0 %v3329
      %v3420 = vpop.f32.mrb[0].mxu0
      %v3421 = vadd.f32 0.0, %v3420
      %v3422 = vpop.f32.mrb[0].mxu0
      %3423 = vmatprep.mubr.f32.mxu0 0.0
      %3424 = vmatmul.mubr.f32.gmra.mrb[0].mxu0 %v3332
      %v3425 = vpop.f32.mrb[0].mxu0
      %v3426 = vadd.f32 0.0, %v3425
      %v3427 = vpop.f32.mrb[0].mxu0
      %3428 = vmatprep.mubr.f32.mxu0 0.0
      %3429 = vmatmul.mubr.f32.gmra.mrb[0].mxu0 %v3335
      %v3430 = vpop.f32.mrb[0].mxu0
      %v3431 = vadd.f32 0.0, %v3430
      %v3432 = vpop.f32.mrb[0].mxu0
      %3433 = vmatprep.mubr.f32.mxu0 0.0
      %3434 = vmatmul.mubr.f32.gmra.mrb[0].mxu0 %v3338
      %v3435 = vpop.f32.mrb[0].mxu0
      %v3436 = vadd.f32 0.0, %v3435
      %v3437 = vpop.f32.mrb[0].mxu0
      %3438 = vmatprep.mubr.f32.mxu0 0.0
      %3439 = vmatmul.mubr.f32.gmra.mrb[0].mxu0 %v3341
      %v3440 = vpop.f32.mrb[0].mxu0
      %v3441 = vadd.f32 0.0, %v3440
      %v3442 = vpop.f32.mrb[0].mxu0
      %3443 = vmatprep.mubr.f32.mxu0 0.0
      %3444 = vmatmul.mubr.f32.gmra.mrb[0].mxu0 %v3344
      %v3445 = vpop.f32.mrb[0].mxu0
      %v3446 = vadd.f32 0.0, %v3445
      %v3447 = vpop.f32.mrb[0].mxu0
      %3448 = vmatprep.mubr.f32.mxu0 0.0
      %3449 = vmatmul.mubr.f32.gmra.mrb[0].mxu0 %v3347
      %v3450 = vpop.f32.mrb[0].mxu0
      %v3451 = vadd.f32 0.0, %v3450
      %v3452 = vpop.f32.mrb[0].mxu0
      %3453 = vdwg.mxu0
      %v3454 = vadd.f32 %v3311, %v3416
      %v3455 = vadd.f32 %v3312, %v3421
      %v3456 = vadd.f32 %v3313, %v3426
      %v3457 = vadd.f32 %v3314, %v3431
      %v3458 = vadd.f32 %v3315, %v3436
      %v3459 = vadd.f32 %v3316, %v3441
      %v3460 = vadd.f32 %v3317, %v3446
      %v3461 = vadd.f32 %v3318, %v3451
      %3462 = vst.msk [vmem:[#allocation3] sm:$0xff] %vm358, %v3454
      %3463 = vst.msk [vmem:[#allocation3 + $0x8] sm:$0xff] %vm358, %v3455
      %3464 = vst.msk [vmem:[#allocation3 + $0x10] sm:$0xff] %vm358, %v3456
      %3465 = vst.msk [vmem:[#allocation3 + $0x18] sm:$0xff] %vm358, %v3457
      %3466 = vst.msk [vmem:[#allocation3 + $0x20] sm:$0xff] %vm358, %v3458
      %3467 = vst.msk [vmem:[#allocation3 + $0x28] sm:$0xff] %vm358, %v3459
      %3468 = vst.msk [vmem:[#allocation3 + $0x30] sm:$0xff] %vm358, %v3460
      %3469 = vst.msk [vmem:[#allocation3 + $0x38] sm:$0xff] %vm358, %v3461
      %v3470 = vld [vmem:[#allocation3] sm:$0xff]
      %v3471 = vld [vmem:[#allocation3 + $0x8] sm:$0xff]
      %v3472 = vld [vmem:[#allocation3 + $0x10] sm:$0xff]
      %v3473 = vld [vmem:[#allocation3 + $0x18] sm:$0xff]
      %v3474 = vld [vmem:[#allocation3 + $0x20] sm:$0xff]
      %v3475 = vld [vmem:[#allocation3 + $0x28] sm:$0xff]
      %v3476 = vld [vmem:[#allocation3 + $0x30] sm:$0xff]
      %v3477 = vld [vmem:[#allocation3 + $0x38] sm:$0xff]
      %s3478 = scalar_lea.vmem %s224, 64
      %3479 = vst.msk [vmem:[%s3478] sm:$0xff] %vm358, %v3470
      %3480 = vst.msk [vmem:[%s3478 + $0x8] sm:$0xff] %vm358, %v3471
      %3481 = vst.msk [vmem:[%s3478 + $0x10] sm:$0xff] %vm358, %v3472
      %3482 = vst.msk [vmem:[%s3478 + $0x18] sm:$0xff] %vm358, %v3473
      %3483 = vst.msk [vmem:[%s3478 + $0x20] sm:$0xff] %vm358, %v3474
      %3484 = vst.msk [vmem:[%s3478 + $0x28] sm:$0xff] %vm358, %v3475
      %3485 = vst.msk [vmem:[%s3478 + $0x30] sm:$0xff] %vm358, %v3476
      %3486 = vst.msk [vmem:[%s3478 + $0x38] sm:$0xff] %vm358, %v3477
      %p3487 = scmp.lt.s32.totalorder %s16, 1
      %s3488 = scalar_select %p3487, %s16, 1
      %s3489 = smul.addr %s3488, 16
      %s3490 = smul.addr %s3489, 8
      %s3491 = scalar_lea.vmem %s5, %s3490
      // Predicated region
      $region41: #{residual_conv_mod.3} parent=39 // pred_check
        %p3492 = pneg %p144
      $region42: #{residual_conv_mod.3} parent=39 // pred_check_branch
        %3494 = sbr.rel (%p3492) target = $region44
      $region43: #{residual_conv_mod.3} parent=39 // pred_region
        _
      $region44: #{residual_conv_mod.3} parent=39 // pred_fallthru
        _
    $region40: #{residual_conv_mod.3} parent=5 // pred_fallthru
      _
    %p3495 = scmp.le.s32.totalorder 2, %s11
    // Predicated region
    $region45: #{residual_conv_mod.3} parent=5 // pred_check
      %p3496 = pneg %p3495
    $region46: #{residual_conv_mod.3} parent=5 // pred_check_branch
      %3498 = sbr.rel (%p3496) target = $region48
    $region47: #{residual_conv_mod.3} parent=5 // pred_region
      %s3499 = ssub.s32 %s11, 2
      // Predicated region
      $region49: #{residual_conv_mod.3} parent=47 // pred_check
        %p3500 = pneg %p150
      $region50: #{residual_conv_mod.3} parent=47 // pred_check_branch
        %3502 = sbr.rel (%p3500) target = $region52
      $region51: #{residual_conv_mod.3} parent=47 // pred_region
        %p3503 = scmp.lt.s32.totalorder %s17, 1
        %s3504 = scalar_select %p3503, %s17, 1
        %s3505 = smul.addr %s3504, 16
        %s3506 = smul.addr %s3505, 8
        %s3507 = scalar_lea.vmem %s5, %s3506
      $region52: #{residual_conv_mod.3} parent=47 // pred_fallthru
        _
    $region48: #{residual_conv_mod.3} parent=5 // pred_fallthru
      _
  $region6: #{residual_conv_mod.3} parent=0 // loop_footer
    %s15 = sadd.s32 1, %s11
  $region7: #{residual_conv_mod.3} parent=0 // loop_footer_branch
    %10 = sbr.rel target = $region3
  $region8: #{residual_conv_mod.3} parent=0 // loop_exit
    _

</llo_original>
